<compile_context>
chip_gen: v5e
topology: v5e:2x2
jax: 0.10.0
libtpu: 0.0.40
codegen_flags: <defaults>
</compile_context>

<pallas_src>
import math

import jax
import jax.numpy as jnp
from jax.experimental import pallas as pl
from jax.experimental.pallas import tpu as pltpu

NEG_SLOPE = 0.01          # nn.LeakyReLU default
SIGMA = 3.0               # WP_Attention.sigma
_SQRT_D = math.sqrt(128.0)

_VMEM = pl.BlockSpec(memory_space=pltpu.MemorySpace.VMEM)
_SMEM = pl.BlockSpec(memory_space=pltpu.MemorySpace.SMEM)


def _leaky(x):
    return jnp.where(x > 0, x, NEG_SLOPE * x)


def _softplus(x):
    # F.softplus(x, beta=1), numerically stable, in f32
    return jnp.maximum(x, 0.0) + jnp.log1p(jnp.exp(-jnp.abs(x)))


def _bdot(x, w_bf16):
    # bf16 x bf16 MXU matmul with f32 accumulation (weights stored as bf16).
    return jnp.dot(x.astype(jnp.bfloat16), w_bf16,
                   preferred_element_type=jnp.float32)


# ----------------------------------------------------------------------------
# Kernel 1: fused VIB teacher+student forward_encoder + z_g_loss
# ----------------------------------------------------------------------------
def vib_fused_kernel(flt_ref, fft_ref, frt_ref, fls_ref, ffs_ref, frs_ref,
                     w1_ref, b1_ref, w2_ref, b2_ref, w3_ref, b3_ref,
                     epst_ref, epss_ref,
                     zt_ref, zs_ref, zg_ref):
    hw = flt_ref.shape[-1]

    def encode(fl_ref, ff_ref, fr_ref, eps_ref):
        # channel-mean pooling: (B, C, H*W) -> (B, H*W)
        fl = jnp.mean(fl_ref[...], axis=1)
        ff = jnp.mean(ff_ref[...], axis=1)
        fr = jnp.mean(fr_ref[...], axis=1)
        # concat([fl, ff, fr], -1) @ W1 == fl@W1[:hw] + ff@W1[hw:2hw] + fr@W1[2hw:]
        # (W1 is passed once; its 3 row-blocks are static, sublane-aligned slices)
        h = (_bdot(fl, w1_ref[0:hw, :])
             + _bdot(ff, w1_ref[hw:2 * hw, :])
             + _bdot(fr, w1_ref[2 * hw:3 * hw, :])
             + b1_ref[...])
        h = _leaky(h)
        h = _leaky(_bdot(h, w2_ref[...]) + b2_ref[...])
        stats = _bdot(h, w3_ref[...]) + b3_ref[...]            # (B, 512)
        mu = stats[:, :256]
        std = _softplus(stats[:, 256:] - 5.0)
        return mu + eps_ref[...] * std                         # reparametrize_n

    z_t = encode(flt_ref, fft_ref, frt_ref, epst_ref)          # teacher
    z_s = encode(fls_ref, ffs_ref, frs_ref, epss_ref)          # student
    zt_ref[...] = z_t
    zs_ref[...] = z_s
    zg_ref[0] = jnp.mean(jnp.abs(z_t - z_s))                   # z_g_loss (SMEM scalar)


def vib_fused(feature_list_t, feature_list_s, params, eps_t, eps_s):
    """Runs teacher+student VIB encoder and z_g_loss in a single pallas_call."""
    B = feature_list_t[0].shape[0]

    def prep(f):
        return f.reshape(B, f.shape[1], -1).astype(jnp.float32)

    ft = [prep(f) for f in feature_list_t]
    fs = [prep(f) for f in feature_list_s]
    out_shapes = (jax.ShapeDtypeStruct((B, 256), jnp.float32),
                  jax.ShapeDtypeStruct((B, 256), jnp.float32),
                  jax.ShapeDtypeStruct((1,), jnp.float32))
    z_t, z_s, zg = pl.pallas_call(
        vib_fused_kernel,
        out_shape=out_shapes,
        in_specs=[_VMEM] * 14,
        out_specs=(_VMEM, _VMEM, _SMEM),
    )(ft[0], ft[1], ft[2], fs[0], fs[1], fs[2],
      params["enc_w1"], params["enc_b1"],
      params["enc_w2"], params["enc_b2"],
      params["enc_w3"], params["enc_b3"],
      eps_t.astype(jnp.float32), eps_s.astype(jnp.float32))
    return z_t, z_s, zg[0]


# ----------------------------------------------------------------------------
# Kernel 2: WP_Attention hot path (score, entropy, rank_loss)
# ----------------------------------------------------------------------------
def wp_attention_kernel(wp3_ref, wpf_ref, bm_ref, ap_ref,
                        wq1_ref, bq1_ref, wq2_ref, bq2_ref, wQ_ref, bQ_ref,
                        wk1_ref, bk1_ref, wk2_ref, bk2_ref, wK_ref, bK_ref,
                        score_ref, ent_ref, rank_ref):
    B, N, _ = wp3_ref.shape
    # query = W_q(query_encoder(cat(bev, measurement)))
    q = _leaky(_bdot(bm_ref[...], wq1_ref[...]) + bq1_ref[...])
    q = _bdot(q, wq2_ref[...]) + bq2_ref[...]
    q = _bdot(q, wQ_ref[...]) + bQ_ref[...]                    # (B, 128)
    # key = W_k(wp_encoder(wp))
    k = _leaky(_bdot(wpf_ref[...], wk1_ref[...]) + bk1_ref[...])
    k = _bdot(k, wk2_ref[...]) + bk2_ref[...]
    k = _bdot(k, wK_ref[...]) + bK_ref[...]                    # (B*N, 128)
    k3 = k.reshape(B, N, 128)
    # attention score: (B,1,128) x (B,N,128) -> (B,N), scaled by sqrt(128)
    score = jnp.sum(q[:, None, :] * k3, axis=-1) / _SQRT_D

    # gaussian kernel density of waypoints w.r.t. (masked) actor positions
    wp = wp3_ref[...]                                          # (B, N, 2) f32
    ap = ap_ref[...]                                           # (B, M, 2) f32
    dx = wp[:, :, 0][:, :, None] - ap[:, :, 0][:, None, :]
    dy = wp[:, :, 1][:, :, None] - ap[:, :, 1][:, None, :]
    d2 = dx * dx + dy * dy                                     # squared cdist (B,N,M)
    kern = jnp.exp(-d2 / (2.0 * SIGMA * SIGMA))
    mask = ((ap[:, :, 0] + ap[:, :, 1]) != 0.0).astype(jnp.float32)   # (B, M)
    kern = kern * mask[:, None, :]
    norm_vals = jnp.sum(kern, axis=-1)                         # (B, N)

    # softmax over waypoint dim (dim=1), kept in f32 (v5e has no bf16 VPU/EUP)
    s = score - jnp.max(score, axis=1, keepdims=True)
    e = jnp.exp(s)
    sm = e / jnp.sum(e, axis=1, keepdims=True)                 # (B, N)

    # pairwise margin ranking loss
    labels = jnp.sign(norm_vals[:, :, None] - norm_vals[:, None, :])  # (B,N,N)
    sdiff = sm[:, :, None] - sm[:, None, :]                            # (B,N,N)
    rank = jnp.maximum(0.0, -labels * sdiff + 0.1)

    score_ref[...] = sm
    ent_ref[0] = jnp.mean(jnp.sum(sm * jnp.log(sm + 1e-8), axis=1))    # SMEM scalar
    rank_ref[0] = jnp.mean(rank)                                       # SMEM scalar


def wp_attention(wp, bev_feat, measurement, actor_pos, params):
    B, N, _ = wp.shape
    wp = wp.astype(jnp.float32)
    wp_flat = wp.reshape(B * N, 2)
    bev_meas = jnp.concatenate(
        [bev_feat.astype(jnp.float32), measurement.astype(jnp.float32)], axis=1)
    out_shapes = (jax.ShapeDtypeStruct((B, N), jnp.float32),
                  jax.ShapeDtypeStruct((1,), jnp.float32),
                  jax.ShapeDtypeStruct((1,), jnp.float32))
    score, ent, rank = pl.pallas_call(
        wp_attention_kernel,
        out_shape=out_shapes,
        in_specs=[_VMEM] * 16,
        out_specs=(_VMEM, _SMEM, _SMEM),
    )(wp, wp_flat, bev_meas, actor_pos.astype(jnp.float32),
      params["q_w1"], params["q_b1"], params["q_w2"], params["q_b2"],
      params["wq_w"], params["wq_b"],
      params["k_w1"], params["k_b1"], params["k_w2"], params["k_b2"],
      params["wk_w"], params["wk_b"])
    return score, ent[0], rank[0]


# ----------------------------------------------------------------------------
# Parameters (deterministic synthetic init; shapes follow the module __init__)
# Weights are stored as bf16 (HBM-bandwidth bound workload), biases stay f32.
# ----------------------------------------------------------------------------
def init_params(key, scale=0.05):
    def dense(k, fan_in, fan_out):
        kw, kb = jax.random.split(k)
        w = (scale * jax.random.normal(kw, (fan_in, fan_out), jnp.float32)
             ).astype(jnp.bfloat16)
        b = scale * jax.random.normal(kb, (1, fan_out), jnp.float32)
        return w, b

    keys = jax.random.split(key, 9)
    p = {}
    # VIB.encoder: Linear(1296,512) LeakyReLU Linear(512,512) LeakyReLU Linear(512,512)
    p["enc_w1"], p["enc_b1"] = dense(keys[0], 1296, 512)
    p["enc_w2"], p["enc_b2"] = dense(keys[1], 512, 512)
    p["enc_w3"], p["enc_b3"] = dense(keys[2], 512, 512)
    # WP_Attention.query_encoder: Linear(263,512) LeakyReLU Linear(512,256)
    p["q_w1"], p["q_b1"] = dense(keys[3], 7 + 256, 512)
    p["q_w2"], p["q_b2"] = dense(keys[4], 512, 256)
    # WP_Attention.W_q / wp_encoder / W_k
    p["wq_w"], p["wq_b"] = dense(keys[5], 256, 128)
    p["k_w1"], p["k_b1"] = dense(keys[6], 2, 128)
    p["k_w2"], p["k_b2"] = dense(keys[7], 128, 64)
    p["wk_w"], p["wk_b"] = dense(keys[8], 64, 128)
    return p


# ----------------------------------------------------------------------------
# PlanKD forward (eval mode, loss_kind == 'att', base_model == 'interfuser')
# ----------------------------------------------------------------------------
def plankd_forward(x, params, eps_t, eps_s):
    feature_list_t = [x["feat_t_left"], x["feat_t_front"], x["feat_t_right"]]
    feature_list_s = [x["feat_s_left"], x["feat_s_front"], x["feat_s_right"]]
    # teacher + student VIB encoders and z_g_loss fused into a single kernel
    _z_real, _z_fake, z_g_loss = vib_fused(
        feature_list_t, feature_list_s, params, eps_t, eps_s)
    att, entropy, rank_loss = wp_attention(
        x["gt"], x["bev_feat"], x["measurements"], x["actor_pos"], params)
    wp_g_loss = jnp.float32(0.0)     # torch.tensor(0) in the reference forward
    IB_loss = jnp.float32(0.0)       # eval mode: IB training loss not computed
    output_s = None                  # TODO(synk): external student_model(x)
    return output_s, (wp_g_loss, z_g_loss, att, entropy, rank_loss, IB_loss)


# ----------------------------------------------------------------------------
# Pure-JAX references (same bf16-weight math, for correctness check)
# ----------------------------------------------------------------------------
def _ref_vib_fused(ft, fs, p, eps_t, eps_s):
    def encode(feats, eps):
        pooled = [jnp.mean(f.reshape(f.shape[0], f.shape[1], -1), axis=1)
                  for f in feats]
        allf = jnp.concatenate(pooled, axis=1)
        h = _leaky(_bdot(allf, p["enc_w1"]) + p["enc_b1"])
        h = _leaky(_bdot(h, p["enc_w2"]) + p["enc_b2"])
        stats = _bdot(h, p["enc_w3"]) + p["enc_b3"]
        mu = stats[:, :256]
        std = _softplus(stats[:, 256:] - 5.0)
        return mu + eps * std
    z_t = encode(ft, eps_t)
    z_s = encode(fs, eps_s)
    return z_t, z_s, jnp.mean(jnp.abs(z_t - z_s))


def _ref_wp_attention(wp, bev, meas, actor_pos, p):
    B, N, _ = wp.shape
    bm = jnp.concatenate([bev, meas], axis=1)
    q = _leaky(_bdot(bm, p["q_w1"]) + p["q_b1"])
    q = _bdot(q, p["q_w2"]) + p["q_b2"]
    q = _bdot(q, p["wq_w"]) + p["wq_b"]
    k = _leaky(_bdot(wp.reshape(-1, 2), p["k_w1"]) + p["k_b1"])
    k = _bdot(k, p["k_w2"]) + p["k_b2"]
    k = (_bdot(k, p["wk_w"]) + p["wk_b"]).reshape(B, N, 128)
    score = jnp.sum(q[:, None, :] * k, axis=-1) / _SQRT_D
    d2 = jnp.sum((wp[:, :, None, :] - actor_pos[:, None, :, :]) ** 2, axis=-1)
    kern = jnp.exp(-d2 / (2.0 * SIGMA * SIGMA))
    mask = (jnp.sum(actor_pos, axis=-1) != 0).astype(jnp.float32)
    kern = kern * mask[:, None, :]
    nv = jnp.sum(kern, axis=-1)
    sm = jax.nn.softmax(score, axis=1)
    labels = jnp.sign(nv[:, :, None] - nv[:, None, :])
    sdiff = sm[:, :, None] - sm[:, None, :]
    rank = jnp.mean(jnp.maximum(0.0, -labels * sdiff + 0.1))
    ent = jnp.mean(jnp.sum(sm * jnp.log(sm + 1e-8), axis=1))
    return sm, ent, rank


# ----------------------------------------------------------------------------
if __name__ == "__main__":
    key = jax.random.PRNGKey(0)
    (k_par, k_ft, k_fs, k_gt, k_bev, k_meas, k_ap, k_et, k_es) = jax.random.split(key, 9)
    params = init_params(k_par)

    # Small shapes consistent with the module: 3 backbone feature maps with
    # H*W = 432 each so the concatenated pooled feature has dim 1296.
    B, C, H, W = 2, 4, 12, 36
    N_WP, N_ACT = 8, 4
    kf = jax.random.split(k_ft, 3)
    ks = jax.random.split(k_fs, 3)
    x = {
        "feat_t_left":  jax.random.normal(kf[0], (B, C, H, W), jnp.float32),
        "feat_t_front": jax.random.normal(kf[1], (B, C, H, W), jnp.float32),
        "feat_t_right": jax.random.normal(kf[2], (B, C, H, W), jnp.float32),
        "feat_s_left":  jax.random.normal(ks[0], (B, C, H, W), jnp.float32),
        "feat_s_front": jax.random.normal(ks[1], (B, C, H, W), jnp.float32),
        "feat_s_right": jax.random.normal(ks[2], (B, C, H, W), jnp.float32),
        "gt":           5.0 * jax.random.normal(k_gt, (B, N_WP, 2), jnp.float32),
        "bev_feat":     jax.random.normal(k_bev, (B, 256), jnp.float32),  # stand-in for resnet6e(bev)
        "measurements": jax.random.normal(k_meas, (B, 7), jnp.float32),
        "actor_pos":    5.0 * jax.random.normal(k_ap, (B, N_ACT, 2), jnp.float32),
    }
    # zero-out the last actor so the padding mask path is exercised
    x["actor_pos"] = x["actor_pos"].at[:, -1, :].set(0.0)

    eps_t = jax.random.normal(k_et, (B, 256), jnp.float32)
    eps_s = jax.random.normal(k_es, (B, 256), jnp.float32)

    output_s, (wp_g_loss, z_g_loss, att, entropy, rank_loss, IB_loss) = \
        plankd_forward(x, params, eps_t, eps_s)
    jax.block_until_ready((z_g_loss, att, entropy, rank_loss))

    # --- correctness check against a pure-JAX reference (same bf16 math) ---
    ft = [x["feat_t_left"], x["feat_t_front"], x["feat_t_right"]]
    fs = [x["feat_s_left"], x["feat_s_front"], x["feat_s_right"]]
    _, _, z_g_ref = _ref_vib_fused(ft, fs, params, eps_t, eps_s)
    att_ref, ent_ref, rank_ref = _ref_wp_attention(
        x["gt"], x["bev_feat"], x["measurements"], x["actor_pos"], params)

    tol = dict(atol=5e-3, rtol=5e-3)
    ok = bool(jnp.allclose(z_g_loss, z_g_ref, **tol)) \
        and bool(jnp.allclose(att, att_ref, **tol)) \
        and bool(jnp.allclose(entropy, ent_ref, **tol)) \
        and bool(jnp.allclose(rank_loss, rank_ref, **tol)) \
        and bool(jnp.all(jnp.isfinite(att)))
    assert ok, "Pallas output mismatch vs pure-JAX reference"
    print("KERNEL_OK")
</pallas_src>

<mosaic_0001>
module attributes {stable_mosaic.version = 11 : i64} {
  func.func @vib_fused_kernel(%arg0: memref<2x4x432xf32, #tpu.memory_space<vmem>>, %arg1: memref<2x4x432xf32, #tpu.memory_space<vmem>>, %arg2: memref<2x4x432xf32, #tpu.memory_space<vmem>>, %arg3: memref<2x4x432xf32, #tpu.memory_space<vmem>>, %arg4: memref<2x4x432xf32, #tpu.memory_space<vmem>>, %arg5: memref<2x4x432xf32, #tpu.memory_space<vmem>>, %arg6: memref<1296x512xbf16, #tpu.memory_space<vmem>>, %arg7: memref<1x512xf32, #tpu.memory_space<vmem>>, %arg8: memref<512x512xbf16, #tpu.memory_space<vmem>>, %arg9: memref<1x512xf32, #tpu.memory_space<vmem>>, %arg10: memref<512x512xbf16, #tpu.memory_space<vmem>>, %arg11: memref<1x512xf32, #tpu.memory_space<vmem>>, %arg12: memref<2x256xf32, #tpu.memory_space<vmem>>, %arg13: memref<2x256xf32, #tpu.memory_space<vmem>>, %arg14: memref<2x256xf32, #tpu.memory_space<vmem>>, %arg15: memref<2x256xf32, #tpu.memory_space<vmem>>, %arg16: memref<1xf32, #tpu.memory_space<smem>>) attributes {dimension_semantics = [], scalar_prefetch = 0 : i64, scratch_operands = 0 : i64, tpu.core_type = #tpu.core_type<tc>} {
    %c0 = arith.constant 0 : index
    %c0_0 = arith.constant 0 : index
    %c0_1 = arith.constant 0 : index
    %0 = vector.load %arg0[%c0, %c0_0, %c0_1] : memref<2x4x432xf32, #tpu.memory_space<vmem>>, vector<2x4x432xf32>
    %cst = arith.constant dense<0.000000e+00> : vector<2x432xf32>
    %1 = vector.multi_reduction <add>, %0, %cst [1] : vector<2x4x432xf32> to vector<2x432xf32>
    %cst_2 = arith.constant 4.000000e+00 : f32
    %2 = vector.broadcast %cst_2 : f32 to vector<2x432xf32>
    %3 = arith.divf %1, %2 : vector<2x432xf32>
    %c0_3 = arith.constant 0 : index
    %c0_4 = arith.constant 0 : index
    %c0_5 = arith.constant 0 : index
    %4 = vector.load %arg1[%c0_3, %c0_4, %c0_5] : memref<2x4x432xf32, #tpu.memory_space<vmem>>, vector<2x4x432xf32>
    %cst_6 = arith.constant dense<0.000000e+00> : vector<2x432xf32>
    %5 = vector.multi_reduction <add>, %4, %cst_6 [1] : vector<2x4x432xf32> to vector<2x432xf32>
    %cst_7 = arith.constant 4.000000e+00 : f32
    %6 = vector.broadcast %cst_7 : f32 to vector<2x432xf32>
    %7 = arith.divf %5, %6 : vector<2x432xf32>
    %c0_8 = arith.constant 0 : index
    %c0_9 = arith.constant 0 : index
    %c0_10 = arith.constant 0 : index
    %8 = vector.load %arg2[%c0_8, %c0_9, %c0_10] : memref<2x4x432xf32, #tpu.memory_space<vmem>>, vector<2x4x432xf32>
    %cst_11 = arith.constant dense<0.000000e+00> : vector<2x432xf32>
    %9 = vector.multi_reduction <add>, %8, %cst_11 [1] : vector<2x4x432xf32> to vector<2x432xf32>
    %cst_12 = arith.constant 4.000000e+00 : f32
    %10 = vector.broadcast %cst_12 : f32 to vector<2x432xf32>
    %11 = arith.divf %9, %10 : vector<2x432xf32>
    %c0_13 = arith.constant 0 : index
    %c0_14 = arith.constant 0 : index
    %12 = vector.load %arg6[%c0_13, %c0_14] : memref<1296x512xbf16, #tpu.memory_space<vmem>>, vector<432x512xbf16>
    %13 = arith.truncf %3 : vector<2x432xf32> to vector<2x432xbf16>
    %cst_15 = arith.constant dense<0.000000e+00> : vector<2x512xf32>
    %14 = tpu.matmul %13, %12, %cst_15 {dimension_numbers = #tpu.dot_dimension_numbers<[1], [0], [0], [1], [0, 0, 1, 1], [], []>} : vector<2x432xbf16>, vector<432x512xbf16>, vector<2x512xf32> -> vector<2x512xf32>
    %c432 = arith.constant 432 : index
    %c0_16 = arith.constant 0 : index
    %15 = vector.load %arg6[%c432, %c0_16] : memref<1296x512xbf16, #tpu.memory_space<vmem>>, vector<432x512xbf16>
    %16 = arith.truncf %7 : vector<2x432xf32> to vector<2x432xbf16>
    %cst_17 = arith.constant dense<0.000000e+00> : vector<2x512xf32>
    %17 = tpu.matmul %16, %15, %cst_17 {dimension_numbers = #tpu.dot_dimension_numbers<[1], [0], [0], [1], [0, 0, 1, 1], [], []>} : vector<2x432xbf16>, vector<432x512xbf16>, vector<2x512xf32> -> vector<2x512xf32>
    %18 = arith.addf %14, %17 : vector<2x512xf32>
    %c864 = arith.constant 864 : index
    %c0_18 = arith.constant 0 : index
    %19 = vector.load %arg6[%c864, %c0_18] : memref<1296x512xbf16, #tpu.memory_space<vmem>>, vector<432x512xbf16>
    %20 = arith.truncf %11 : vector<2x432xf32> to vector<2x432xbf16>
    %cst_19 = arith.constant dense<0.000000e+00> : vector<2x512xf32>
    %21 = tpu.matmul %20, %19, %cst_19 {dimension_numbers = #tpu.dot_dimension_numbers<[1], [0], [0], [1], [0, 0, 1, 1], [], []>} : vector<2x432xbf16>, vector<432x512xbf16>, vector<2x512xf32> -> vector<2x512xf32>
    %22 = arith.addf %18, %21 : vector<2x512xf32>
    %c0_20 = arith.constant 0 : index
    %c0_21 = arith.constant 0 : index
    %23 = vector.load %arg7[%c0_20, %c0_21] : memref<1x512xf32, #tpu.memory_space<vmem>>, vector<1x512xf32>
    %24 = vector.broadcast %23 : vector<1x512xf32> to vector<2x512xf32>
    %25 = arith.addf %22, %24 : vector<2x512xf32>
    %cst_22 = arith.constant 0.000000e+00 : f32
    %26 = vector.broadcast %cst_22 : f32 to vector<2x512xf32>
    %27 = arith.cmpf ogt, %25, %26 : vector<2x512xf32>
    %cst_23 = arith.constant 0.00999999977 : f32
    %28 = vector.broadcast %cst_23 : f32 to vector<2x512xf32>
    %29 = arith.mulf %28, %25 : vector<2x512xf32>
    %30 = arith.select %27, %25, %29 : vector<2x512xi1>, vector<2x512xf32>
    %c0_24 = arith.constant 0 : index
    %c0_25 = arith.constant 0 : index
    %31 = vector.load %arg8[%c0_24, %c0_25] : memref<512x512xbf16, #tpu.memory_space<vmem>>, vector<512x512xbf16>
    %32 = arith.truncf %30 : vector<2x512xf32> to vector<2x512xbf16>
    %cst_26 = arith.constant dense<0.000000e+00> : vector<2x512xf32>
    %33 = tpu.matmul %32, %31, %cst_26 {dimension_numbers = #tpu.dot_dimension_numbers<[1], [0], [0], [1], [0, 0, 1, 1], [], []>} : vector<2x512xbf16>, vector<512x512xbf16>, vector<2x512xf32> -> vector<2x512xf32>
    %c0_27 = arith.constant 0 : index
    %c0_28 = arith.constant 0 : index
    %34 = vector.load %arg9[%c0_27, %c0_28] : memref<1x512xf32, #tpu.memory_space<vmem>>, vector<1x512xf32>
    %35 = vector.broadcast %34 : vector<1x512xf32> to vector<2x512xf32>
    %36 = arith.addf %33, %35 : vector<2x512xf32>
    %cst_29 = arith.constant 0.000000e+00 : f32
    %37 = vector.broadcast %cst_29 : f32 to vector<2x512xf32>
    %38 = arith.cmpf ogt, %36, %37 : vector<2x512xf32>
    %cst_30 = arith.constant 0.00999999977 : f32
    %39 = vector.broadcast %cst_30 : f32 to vector<2x512xf32>
    %40 = arith.mulf %39, %36 : vector<2x512xf32>
    %41 = arith.select %38, %36, %40 : vector<2x512xi1>, vector<2x512xf32>
    %c0_31 = arith.constant 0 : index
    %c0_32 = arith.constant 0 : index
    %42 = vector.load %arg10[%c0_31, %c0_32] : memref<512x512xbf16, #tpu.memory_space<vmem>>, vector<512x512xbf16>
    %43 = arith.truncf %41 : vector<2x512xf32> to vector<2x512xbf16>
    %cst_33 = arith.constant dense<0.000000e+00> : vector<2x512xf32>
    %44 = tpu.matmul %43, %42, %cst_33 {dimension_numbers = #tpu.dot_dimension_numbers<[1], [0], [0], [1], [0, 0, 1, 1], [], []>} : vector<2x512xbf16>, vector<512x512xbf16>, vector<2x512xf32> -> vector<2x512xf32>
    %c0_34 = arith.constant 0 : index
    %c0_35 = arith.constant 0 : index
    %45 = vector.load %arg11[%c0_34, %c0_35] : memref<1x512xf32, #tpu.memory_space<vmem>>, vector<1x512xf32>
    %46 = vector.broadcast %45 : vector<1x512xf32> to vector<2x512xf32>
    %47 = arith.addf %44, %46 : vector<2x512xf32>
    %48 = vector.extract_strided_slice %47 {offsets = [0, 0], sizes = [2, 256], strides = [1, 1]} : vector<2x512xf32> to vector<2x256xf32>
    %49 = vector.extract_strided_slice %47 {offsets = [0, 256], sizes = [2, 256], strides = [1, 1]} : vector<2x512xf32> to vector<2x256xf32>
    %cst_36 = arith.constant 5.000000e+00 : f32
    %50 = vector.broadcast %cst_36 : f32 to vector<2x256xf32>
    %51 = arith.subf %49, %50 : vector<2x256xf32>
    %cst_37 = arith.constant 0.000000e+00 : f32
    %52 = vector.broadcast %cst_37 : f32 to vector<2x256xf32>
    %53 = arith.maximumf %51, %52 : vector<2x256xf32>
    %54 = math.absf %51 : vector<2x256xf32>
    %cst_38 = arith.constant 0.000000e+00 : f32
    %55 = vector.broadcast %cst_38 : f32 to vector<2x256xf32>
    %56 = arith.subf %55, %54 : vector<2x256xf32>
    %57 = math.exp %56 : vector<2x256xf32>
    %58 = math.log1p %57 : vector<2x256xf32>
    %59 = arith.addf %53, %58 : vector<2x256xf32>
    %c0_39 = arith.constant 0 : index
    %c0_40 = arith.constant 0 : index
    %60 = vector.load %arg12[%c0_39, %c0_40] : memref<2x256xf32, #tpu.memory_space<vmem>>, vector<2x256xf32>
    %61 = arith.mulf %60, %59 : vector<2x256xf32>
    %62 = arith.addf %48, %61 : vector<2x256xf32>
    %c0_41 = arith.constant 0 : index
    %c0_42 = arith.constant 0 : index
    %c0_43 = arith.constant 0 : index
    %63 = vector.load %arg3[%c0_41, %c0_42, %c0_43] : memref<2x4x432xf32, #tpu.memory_space<vmem>>, vector<2x4x432xf32>
    %cst_44 = arith.constant dense<0.000000e+00> : vector<2x432xf32>
    %64 = vector.multi_reduction <add>, %63, %cst_44 [1] : vector<2x4x432xf32> to vector<2x432xf32>
    %cst_45 = arith.constant 4.000000e+00 : f32
    %65 = vector.broadcast %cst_45 : f32 to vector<2x432xf32>
    %66 = arith.divf %64, %65 : vector<2x432xf32>
    %c0_46 = arith.constant 0 : index
    %c0_47 = arith.constant 0 : index
    %c0_48 = arith.constant 0 : index
    %67 = vector.load %arg4[%c0_46, %c0_47, %c0_48] : memref<2x4x432xf32, #tpu.memory_space<vmem>>, vector<2x4x432xf32>
    %cst_49 = arith.constant dense<0.000000e+00> : vector<2x432xf32>
    %68 = vector.multi_reduction <add>, %67, %cst_49 [1] : vector<2x4x432xf32> to vector<2x432xf32>
    %cst_50 = arith.constant 4.000000e+00 : f32
    %69 = vector.broadcast %cst_50 : f32 to vector<2x432xf32>
    %70 = arith.divf %68, %69 : vector<2x432xf32>
    %c0_51 = arith.constant 0 : index
    %c0_52 = arith.constant 0 : index
    %c0_53 = arith.constant 0 : index
    %71 = vector.load %arg5[%c0_51, %c0_52, %c0_53] : memref<2x4x432xf32, #tpu.memory_space<vmem>>, vector<2x4x432xf32>
    %cst_54 = arith.constant dense<0.000000e+00> : vector<2x432xf32>
    %72 = vector.multi_reduction <add>, %71, %cst_54 [1] : vector<2x4x432xf32> to vector<2x432xf32>
    %cst_55 = arith.constant 4.000000e+00 : f32
    %73 = vector.broadcast %cst_55 : f32 to vector<2x432xf32>
    %74 = arith.divf %72, %73 : vector<2x432xf32>
    %c0_56 = arith.constant 0 : index
    %c0_57 = arith.constant 0 : index
    %75 = vector.load %arg6[%c0_56, %c0_57] : memref<1296x512xbf16, #tpu.memory_space<vmem>>, vector<432x512xbf16>
    %76 = arith.truncf %66 : vector<2x432xf32> to vector<2x432xbf16>
    %cst_58 = arith.constant dense<0.000000e+00> : vector<2x512xf32>
    %77 = tpu.matmul %76, %75, %cst_58 {dimension_numbers = #tpu.dot_dimension_numbers<[1], [0], [0], [1], [0, 0, 1, 1], [], []>} : vector<2x432xbf16>, vector<432x512xbf16>, vector<2x512xf32> -> vector<2x512xf32>
    %c432_59 = arith.constant 432 : index
    %c0_60 = arith.constant 0 : index
    %78 = vector.load %arg6[%c432_59, %c0_60] : memref<1296x512xbf16, #tpu.memory_space<vmem>>, vector<432x512xbf16>
    %79 = arith.truncf %70 : vector<2x432xf32> to vector<2x432xbf16>
    %cst_61 = arith.constant dense<0.000000e+00> : vector<2x512xf32>
    %80 = tpu.matmul %79, %78, %cst_61 {dimension_numbers = #tpu.dot_dimension_numbers<[1], [0], [0], [1], [0, 0, 1, 1], [], []>} : vector<2x432xbf16>, vector<432x512xbf16>, vector<2x512xf32> -> vector<2x512xf32>
    %81 = arith.addf %77, %80 : vector<2x512xf32>
    %c864_62 = arith.constant 864 : index
    %c0_63 = arith.constant 0 : index
    %82 = vector.load %arg6[%c864_62, %c0_63] : memref<1296x512xbf16, #tpu.memory_space<vmem>>, vector<432x512xbf16>
    %83 = arith.truncf %74 : vector<2x432xf32> to vector<2x432xbf16>
    %cst_64 = arith.constant dense<0.000000e+00> : vector<2x512xf32>
    %84 = tpu.matmul %83, %82, %cst_64 {dimension_numbers = #tpu.dot_dimension_numbers<[1], [0], [0], [1], [0, 0, 1, 1], [], []>} : vector<2x432xbf16>, vector<432x512xbf16>, vector<2x512xf32> -> vector<2x512xf32>
    %85 = arith.addf %81, %84 : vector<2x512xf32>
    %c0_65 = arith.constant 0 : index
    %c0_66 = arith.constant 0 : index
    %86 = vector.load %arg7[%c0_65, %c0_66] : memref<1x512xf32, #tpu.memory_space<vmem>>, vector<1x512xf32>
    %87 = vector.broadcast %86 : vector<1x512xf32> to vector<2x512xf32>
    %88 = arith.addf %85, %87 : vector<2x512xf32>
    %cst_67 = arith.constant 0.000000e+00 : f32
    %89 = vector.broadcast %cst_67 : f32 to vector<2x512xf32>
    %90 = arith.cmpf ogt, %88, %89 : vector<2x512xf32>
    %cst_68 = arith.constant 0.00999999977 : f32
    %91 = vector.broadcast %cst_68 : f32 to vector<2x512xf32>
    %92 = arith.mulf %91, %88 : vector<2x512xf32>
    %93 = arith.select %90, %88, %92 : vector<2x512xi1>, vector<2x512xf32>
    %c0_69 = arith.constant 0 : index
    %c0_70 = arith.constant 0 : index
    %94 = vector.load %arg8[%c0_69, %c0_70] : memref<512x512xbf16, #tpu.memory_space<vmem>>, vector<512x512xbf16>
    %95 = arith.truncf %93 : vector<2x512xf32> to vector<2x512xbf16>
    %cst_71 = arith.constant dense<0.000000e+00> : vector<2x512xf32>
    %96 = tpu.matmul %95, %94, %cst_71 {dimension_numbers = #tpu.dot_dimension_numbers<[1], [0], [0], [1], [0, 0, 1, 1], [], []>} : vector<2x512xbf16>, vector<512x512xbf16>, vector<2x512xf32> -> vector<2x512xf32>
    %c0_72 = arith.constant 0 : index
    %c0_73 = arith.constant 0 : index
    %97 = vector.load %arg9[%c0_72, %c0_73] : memref<1x512xf32, #tpu.memory_space<vmem>>, vector<1x512xf32>
    %98 = vector.broadcast %97 : vector<1x512xf32> to vector<2x512xf32>
    %99 = arith.addf %96, %98 : vector<2x512xf32>
    %cst_74 = arith.constant 0.000000e+00 : f32
    %100 = vector.broadcast %cst_74 : f32 to vector<2x512xf32>
    %101 = arith.cmpf ogt, %99, %100 : vector<2x512xf32>
    %cst_75 = arith.constant 0.00999999977 : f32
    %102 = vector.broadcast %cst_75 : f32 to vector<2x512xf32>
    %103 = arith.mulf %102, %99 : vector<2x512xf32>
    %104 = arith.select %101, %99, %103 : vector<2x512xi1>, vector<2x512xf32>
    %c0_76 = arith.constant 0 : index
    %c0_77 = arith.constant 0 : index
    %105 = vector.load %arg10[%c0_76, %c0_77] : memref<512x512xbf16, #tpu.memory_space<vmem>>, vector<512x512xbf16>
    %106 = arith.truncf %104 : vector<2x512xf32> to vector<2x512xbf16>
    %cst_78 = arith.constant dense<0.000000e+00> : vector<2x512xf32>
    %107 = tpu.matmul %106, %105, %cst_78 {dimension_numbers = #tpu.dot_dimension_numbers<[1], [0], [0], [1], [0, 0, 1, 1], [], []>} : vector<2x512xbf16>, vector<512x512xbf16>, vector<2x512xf32> -> vector<2x512xf32>
    %c0_79 = arith.constant 0 : index
    %c0_80 = arith.constant 0 : index
    %108 = vector.load %arg11[%c0_79, %c0_80] : memref<1x512xf32, #tpu.memory_space<vmem>>, vector<1x512xf32>
    %109 = vector.broadcast %108 : vector<1x512xf32> to vector<2x512xf32>
    %110 = arith.addf %107, %109 : vector<2x512xf32>
    %111 = vector.extract_strided_slice %110 {offsets = [0, 0], sizes = [2, 256], strides = [1, 1]} : vector<2x512xf32> to vector<2x256xf32>
    %112 = vector.extract_strided_slice %110 {offsets = [0, 256], sizes = [2, 256], strides = [1, 1]} : vector<2x512xf32> to vector<2x256xf32>
    %cst_81 = arith.constant 5.000000e+00 : f32
    %113 = vector.broadcast %cst_81 : f32 to vector<2x256xf32>
    %114 = arith.subf %112, %113 : vector<2x256xf32>
    %cst_82 = arith.constant 0.000000e+00 : f32
    %115 = vector.broadcast %cst_82 : f32 to vector<2x256xf32>
    %116 = arith.maximumf %114, %115 : vector<2x256xf32>
    %117 = math.absf %114 : vector<2x256xf32>
    %cst_83 = arith.constant 0.000000e+00 : f32
    %118 = vector.broadcast %cst_83 : f32 to vector<2x256xf32>
    %119 = arith.subf %118, %117 : vector<2x256xf32>
    %120 = math.exp %119 : vector<2x256xf32>
    %121 = math.log1p %120 : vector<2x256xf32>
    %122 = arith.addf %116, %121 : vector<2x256xf32>
    %c0_84 = arith.constant 0 : index
    %c0_85 = arith.constant 0 : index
    %123 = vector.load %arg13[%c0_84, %c0_85] : memref<2x256xf32, #tpu.memory_space<vmem>>, vector<2x256xf32>
    %124 = arith.mulf %123, %122 : vector<2x256xf32>
    %125 = arith.addf %111, %124 : vector<2x256xf32>
    %c0_86 = arith.constant 0 : index
    %c0_87 = arith.constant 0 : index
    %126 = vector.load %arg14[%c0_86, %c0_87] : memref<2x256xf32, #tpu.memory_space<vmem>>, vector<2x256xf32>
    tpu.vector_store %arg14[%c0_86, %c0_87], %62 {strides = array<i32>} : memref<2x256xf32, #tpu.memory_space<vmem>>, vector<2x256xf32>,
    %c0_88 = arith.constant 0 : index
    %c0_89 = arith.constant 0 : index
    %127 = vector.load %arg15[%c0_88, %c0_89] : memref<2x256xf32, #tpu.memory_space<vmem>>, vector<2x256xf32>
    tpu.vector_store %arg15[%c0_88, %c0_89], %125 {strides = array<i32>} : memref<2x256xf32, #tpu.memory_space<vmem>>, vector<2x256xf32>,
    %128 = arith.subf %62, %125 : vector<2x256xf32>
    %129 = math.absf %128 : vector<2x256xf32>
    %130 = vector.shape_cast %129 : vector<2x256xf32> to vector<1x2x256xf32>
    %cst_90 = arith.constant dense<0.000000e+00> : vector<1xf32>
    %131 = vector.multi_reduction <add>, %130, %cst_90 [1, 2] : vector<1x2x256xf32> to vector<1xf32>
    %132 = vector.shape_cast %131 : vector<1xf32> to vector<1x1x1xf32>
    %133 = vector.extract %132[0, 0, 0] : f32 from vector<1x1x1xf32>
    %cst_91 = arith.constant 5.120000e+02 : f32
    %134 = arith.divf %133, %cst_91 : f32
    %c0_92 = arith.constant 0 : index
    %135 = memref.load %arg16[%c0_92] : memref<1xf32, #tpu.memory_space<smem>>
    memref.store %134, %arg16[%c0_92] : memref<1xf32, #tpu.memory_space<smem>>
    return
  }
}

</mosaic_0001>

<llo_original>
// kernel: tpu_custom_call.1
$region0: #{tpu_custom_call.1}
  #allocation0 [shape = 'u32[]', space=smem, size = 0x4, offset = 0x4, fixed_abs, tag = 'smem constant byte address 0x4 - core index']
  #allocation1 [shape = 'u32[72,128]{1,0:T(1,128)}', space=vmem, size = 0x9000, scoped, tag = 'internal scratch']
  %s0 = inlined_call_operand.hbm [shape: f32[2,4,432], index: 0, kind: input, shape index: {}]
  %s1 = inlined_call_operand.hbm [shape: f32[2,4,432], index: 1, kind: input, shape index: {}]
  %s2 = inlined_call_operand.hbm [shape: f32[2,4,432], index: 2, kind: input, shape index: {}]
  %s3 = inlined_call_operand.hbm [shape: f32[2,4,432], index: 3, kind: input, shape index: {}]
  %s4 = inlined_call_operand.hbm [shape: f32[2,4,432], index: 4, kind: input, shape index: {}]
  %s5 = inlined_call_operand.hbm [shape: f32[2,4,432], index: 5, kind: input, shape index: {}]
  %s6 = inlined_call_operand.hbm [shape: bf16[1296,512], index: 6, kind: input, shape index: {}]
  %s7 = inlined_call_operand.hbm [shape: f32[1,512], index: 7, kind: input, shape index: {}]
  %s8 = inlined_call_operand.hbm [shape: bf16[512,512], index: 8, kind: input, shape index: {}]
  %s9 = inlined_call_operand.hbm [shape: f32[1,512], index: 9, kind: input, shape index: {}]
  %s10 = inlined_call_operand.hbm [shape: bf16[512,512], index: 10, kind: input, shape index: {}]
  %s11 = inlined_call_operand.hbm [shape: f32[1,512], index: 11, kind: input, shape index: {}]
  %s12 = inlined_call_operand.hbm [shape: f32[2,256], index: 12, kind: input, shape index: {}]
  %s13 = inlined_call_operand.hbm [shape: f32[2,256], index: 13, kind: input, shape index: {}]
  %s14 = inlined_call_operand.hbm [shape: f32[2,256], index: 14, kind: output, shape index: {0}]
  %s15 = inlined_call_operand.hbm [shape: f32[2,256], index: 15, kind: output, shape index: {1}]
  %s16 = inlined_call_operand.hbm [shape: f32[1], index: 16, kind: output, shape index: {2}]
  %17 = xla_tuple %s14, %s15, %s16
  %s18 = sld [smem:[#allocation0]]
  $region138: #{tpu_custom_call.1} parent=0
    _
  %s20 = ssub.s32 1, %s18
  %s21 = scalar_select 0, %s20, %s18
  $region1: #{tpu_custom_call.1} parent=0
    #allocation2 [shape = 'u8[16384]{0}', space=vmem, size = 0x4000, scoped, tag = 'input window, operand 0, single buffered']
    #allocation3 [shape = 's32[1]{0}', space=sflag, size = 0x4, scoped, tag = 'scoped memory for tpu_custom_call.1']
    #allocation4 [shape = 's32[1]{0}', space=sflag, size = 0x4, scoped, tag = 'scoped memory for tpu_custom_call.1']
    #allocation5 [shape = 's32[1]{0}', space=sflag, size = 0x4, scoped, tag = 'scoped memory for tpu_custom_call.1']
    #allocation6 [shape = 'u8[16384]{0}', space=vmem, size = 0x4000, scoped, tag = 'input window, operand 1, single buffered']
    #allocation7 [shape = 's32[1]{0}', space=sflag, size = 0x4, scoped, tag = 'scoped memory for tpu_custom_call.1']
    #allocation8 [shape = 'u8[16384]{0}', space=vmem, size = 0x4000, scoped, tag = 'input window, operand 2, single buffered']
    #allocation9 [shape = 'u8[16384]{0}', space=vmem, size = 0x4000, scoped, tag = 'input window, operand 3, single buffered']
    #allocation10 [shape = 's32[1]{0}', space=sflag, size = 0x4, scoped, tag = 'scoped memory for tpu_custom_call.1']
    #allocation11 [shape = 'u8[16384]{0}', space=vmem, size = 0x4000, scoped, tag = 'input window, operand 4, single buffered']
    #allocation12 [shape = 'u8[16384]{0}', space=vmem, size = 0x4000, scoped, tag = 'input window, operand 5, single buffered']
    #allocation13 [shape = 's32[1]{0}', space=sflag, size = 0x4, scoped, tag = 'scoped memory for tpu_custom_call.1']
    #allocation14 [shape = 'u8[1327104]{0}', space=vmem, size = 0x144000, scoped, tag = 'input window, operand 6, single buffered']
    #allocation15 [shape = 'u8[2048]{0}', space=vmem, size = 0x800, scoped, tag = 'input window, operand 7, single buffered']
    #allocation16 [shape = 's32[1]{0}', space=sflag, size = 0x4, scoped, tag = 'scoped memory for tpu_custom_call.1']
    #allocation17 [shape = 'u8[524288]{0}', space=vmem, size = 0x80000, scoped, tag = 'input window, operand 8, single buffered']
    #allocation18 [shape = 'u8[2048]{0}', space=vmem, size = 0x800, scoped, tag = 'input window, operand 9, single buffered']
    #allocation19 [shape = 's32[1]{0}', space=sflag, size = 0x4, scoped, tag = 'scoped memory for tpu_custom_call.1']
    #allocation20 [shape = 'u8[524288]{0}', space=vmem, size = 0x80000, scoped, tag = 'input window, operand 10, single buffered']
    #allocation21 [shape = 'u8[2048]{0}', space=vmem, size = 0x800, scoped, tag = 'input window, operand 11, single buffered']
    #allocation22 [shape = 's32[1]{0}', space=sflag, size = 0x4, scoped, tag = 'scoped memory for tpu_custom_call.1']
    #allocation23 [shape = 'u8[2048]{0}', space=vmem, size = 0x800, scoped, tag = 'input window, operand 12, single buffered']
    #allocation24 [shape = 'u8[2048]{0}', space=vmem, size = 0x800, scoped, tag = 'input window, operand 13, single buffered']
    #allocation25 [shape = 's32[1]{0}', space=sflag, size = 0x4, scoped, tag = 'scoped memory for tpu_custom_call.1']
    #allocation26 [shape = 'u8[2048]{0}', space=vmem, size = 0x800, scoped, tag = 'output window, operand 0, single buffered']
    #allocation27 [shape = 'u8[2048]{0}', space=vmem, size = 0x800, scoped, tag = 'output window, operand 1, single buffered']
    #allocation28 [shape = 's32[1]{0}', space=sflag, size = 0x4, scoped, tag = 'scoped memory for tpu_custom_call.1']
    #allocation29 [shape = 'u8[512]{0}', space=smem, size = 0x200, scoped, tag = 'output window, operand 2, single buffered']
    %22 = vsyncpa [#allocation3], 0
    %23 = vsyncpa [#allocation7], 0
    %24 = vsyncpa [#allocation10], 0
    %25 = vsyncpa [#allocation13], 0
    %26 = vsyncpa [#allocation16], 0
    %27 = vsyncpa [#allocation19], 0
    %28 = vsyncpa [#allocation22], 0
    %29 = vsyncpa [#allocation25], 0
    %30 = vsyncpa [#allocation4], 0
    %31 = vsyncpa [#allocation28], 0
    %32 = vsyncpa [#allocation5], 0
    // Predicated region
    $region2: #{tpu_custom_call.1} parent=1 // pred_check
      _
    $region3: #{tpu_custom_call.1} parent=1 // pred_check_branch
      %34 = sbr.rel (0) target = $region5
    $region4: #{tpu_custom_call.1} parent=1 // pred_region
      %36 = vsyncadd [#allocation3], 0
      %s37 = sshll.u32 %s0, 4
      %s38 = int_to_ptr.hbm [resolvable:$true] %s37
      %s39 = sshll.u32 [#allocation2], 4
      %s40 = int_to_ptr.vmem [resolvable:$true] %s39
      %45 = dma.hbm_to_vmem [thread:$0]  %s38, 512, %s40, [#allocation3], 256, 256, 16
    $region5: #{tpu_custom_call.1} parent=1 // pred_fallthru
      _
    // Predicated region
    $region6: #{tpu_custom_call.1} parent=1 // pred_check
      _
    $region7: #{tpu_custom_call.1} parent=1 // pred_check_branch
      %47 = sbr.rel (0) target = $region9
    $region8: #{tpu_custom_call.1} parent=1 // pred_region
      %49 = vsyncadd [#allocation7], 0
      %s50 = sshll.u32 %s1, 4
      %s51 = int_to_ptr.hbm [resolvable:$true] %s50
      %s52 = sshll.u32 [#allocation6], 4
      %s53 = int_to_ptr.vmem [resolvable:$true] %s52
      %58 = dma.hbm_to_vmem [thread:$0]  %s51, 512, %s53, [#allocation7], 256, 256, 16
    $region9: #{tpu_custom_call.1} parent=1 // pred_fallthru
      _
    // Predicated region
    $region10: #{tpu_custom_call.1} parent=1 // pred_check
      _
    $region11: #{tpu_custom_call.1} parent=1 // pred_check_branch
      %60 = sbr.rel (0) target = $region13
    $region12: #{tpu_custom_call.1} parent=1 // pred_region
      %62 = vsyncadd [#allocation7], 0
      %s63 = sshll.u32 %s2, 4
      %s64 = int_to_ptr.hbm [resolvable:$true] %s63
      %s65 = sshll.u32 [#allocation8], 4
      %s66 = int_to_ptr.vmem [resolvable:$true] %s65
      %71 = dma.hbm_to_vmem [thread:$0]  %s64, 512, %s66, [#allocation7], 256, 256, 16
    $region13: #{tpu_custom_call.1} parent=1 // pred_fallthru
      _
    // Predicated region
    $region14: #{tpu_custom_call.1} parent=1 // pred_check
      _
    $region15: #{tpu_custom_call.1} parent=1 // pred_check_branch
      %73 = sbr.rel (0) target = $region17
    $region16: #{tpu_custom_call.1} parent=1 // pred_region
      %75 = vsyncadd [#allocation10], 0
      %s76 = sshll.u32 %s3, 4
      %s77 = int_to_ptr.hbm [resolvable:$true] %s76
      %s78 = sshll.u32 [#allocation9], 4
      %s79 = int_to_ptr.vmem [resolvable:$true] %s78
      %84 = dma.hbm_to_vmem [thread:$0]  %s77, 512, %s79, [#allocation10], 256, 256, 16
    $region17: #{tpu_custom_call.1} parent=1 // pred_fallthru
      _
    // Predicated region
    $region18: #{tpu_custom_call.1} parent=1 // pred_check
      _
    $region19: #{tpu_custom_call.1} parent=1 // pred_check_branch
      %86 = sbr.rel (0) target = $region21
    $region20: #{tpu_custom_call.1} parent=1 // pred_region
      %88 = vsyncadd [#allocation10], 0
      %s89 = sshll.u32 %s4, 4
      %s90 = int_to_ptr.hbm [resolvable:$true] %s89
      %s91 = sshll.u32 [#allocation11], 4
      %s92 = int_to_ptr.vmem [resolvable:$true] %s91
      %97 = dma.hbm_to_vmem [thread:$0]  %s90, 512, %s92, [#allocation10], 256, 256, 16
    $region21: #{tpu_custom_call.1} parent=1 // pred_fallthru
      _
    // Predicated region
    $region22: #{tpu_custom_call.1} parent=1 // pred_check
      _
    $region23: #{tpu_custom_call.1} parent=1 // pred_check_branch
      %99 = sbr.rel (0) target = $region25
    $region24: #{tpu_custom_call.1} parent=1 // pred_region
      %101 = vsyncadd [#allocation13], 0
      %s102 = sshll.u32 %s5, 4
      %s103 = int_to_ptr.hbm [resolvable:$true] %s102
      %s104 = sshll.u32 [#allocation12], 4
      %s105 = int_to_ptr.vmem [resolvable:$true] %s104
      %110 = dma.hbm_to_vmem [thread:$0]  %s103, 512, %s105, [#allocation13], 256, 256, 16
    $region25: #{tpu_custom_call.1} parent=1 // pred_fallthru
      _
    // Predicated region
    $region26: #{tpu_custom_call.1} parent=1 // pred_check
      _
    $region27: #{tpu_custom_call.1} parent=1 // pred_check_branch
      %112 = sbr.rel (0) target = $region29
    $region28: #{tpu_custom_call.1} parent=1 // pred_region
      %114 = vsyncadd [#allocation13], 0
      %s115 = sshll.u32 %s6, 4
      %s116 = int_to_ptr.hbm [resolvable:$true] %s115
      %s117 = sshll.u32 [#allocation14], 4
      %s118 = int_to_ptr.vmem [resolvable:$true] %s117
      %123 = dma.hbm_to_vmem [thread:$0]  %s116, 41472, %s118, [#allocation13], 256, 256, 16
    $region29: #{tpu_custom_call.1} parent=1 // pred_fallthru
      _
    // Predicated region
    $region30: #{tpu_custom_call.1} parent=1 // pred_check
      _
    $region31: #{tpu_custom_call.1} parent=1 // pred_check_branch
      %125 = sbr.rel (0) target = $region33
    $region32: #{tpu_custom_call.1} parent=1 // pred_region
      %127 = vsyncadd [#allocation16], 0
      %s129 = sshll.u32 %s7, 4
      %s130 = int_to_ptr.hbm [resolvable:$true] %s129
      %s131 = sshll.u32 [#allocation15], 4
      %s132 = int_to_ptr.vmem [resolvable:$true] %s131
      %134 = dma.hbm_to_vmem [thread:$0]  %s130, 64, %s132, [#allocation16]
    $region33: #{tpu_custom_call.1} parent=1 // pred_fallthru
      _
    // Predicated region
    $region34: #{tpu_custom_call.1} parent=1 // pred_check
      _
    $region35: #{tpu_custom_call.1} parent=1 // pred_check_branch
      %136 = sbr.rel (0) target = $region37
    $region36: #{tpu_custom_call.1} parent=1 // pred_region
      %138 = vsyncadd [#allocation16], 0
      %s139 = sshll.u32 %s8, 4
      %s140 = int_to_ptr.hbm [resolvable:$true] %s139
      %s141 = sshll.u32 [#allocation17], 4
      %s142 = int_to_ptr.vmem [resolvable:$true] %s141
      %147 = dma.hbm_to_vmem [thread:$0]  %s140, 16384, %s142, [#allocation16], 256, 256, 16
    $region37: #{tpu_custom_call.1} parent=1 // pred_fallthru
      _
    // Predicated region
    $region38: #{tpu_custom_call.1} parent=1 // pred_check
      _
    $region39: #{tpu_custom_call.1} parent=1 // pred_check_branch
      %149 = sbr.rel (0) target = $region41
    $region40: #{tpu_custom_call.1} parent=1 // pred_region
      %151 = vsyncadd [#allocation19], 0
      %s153 = sshll.u32 %s9, 4
      %s154 = int_to_ptr.hbm [resolvable:$true] %s153
      %s155 = sshll.u32 [#allocation18], 4
      %s156 = int_to_ptr.vmem [resolvable:$true] %s155
      %158 = dma.hbm_to_vmem [thread:$0]  %s154, 64, %s156, [#allocation19]
    $region41: #{tpu_custom_call.1} parent=1 // pred_fallthru
      _
    // Predicated region
    $region42: #{tpu_custom_call.1} parent=1 // pred_check
      _
    $region43: #{tpu_custom_call.1} parent=1 // pred_check_branch
      %160 = sbr.rel (0) target = $region45
    $region44: #{tpu_custom_call.1} parent=1 // pred_region
      %162 = vsyncadd [#allocation19], 0
      %s163 = sshll.u32 %s10, 4
      %s164 = int_to_ptr.hbm [resolvable:$true] %s163
      %s165 = sshll.u32 [#allocation20], 4
      %s166 = int_to_ptr.vmem [resolvable:$true] %s165
      %171 = dma.hbm_to_vmem [thread:$0]  %s164, 16384, %s166, [#allocation19], 256, 256, 16
    $region45: #{tpu_custom_call.1} parent=1 // pred_fallthru
      _
    // Predicated region
    $region46: #{tpu_custom_call.1} parent=1 // pred_check
      _
    $region47: #{tpu_custom_call.1} parent=1 // pred_check_branch
      %173 = sbr.rel (0) target = $region49
    $region48: #{tpu_custom_call.1} parent=1 // pred_region
      %175 = vsyncadd [#allocation22], 0
      %s177 = sshll.u32 %s11, 4
      %s178 = int_to_ptr.hbm [resolvable:$true] %s177
      %s179 = sshll.u32 [#allocation21], 4
      %s180 = int_to_ptr.vmem [resolvable:$true] %s179
      %182 = dma.hbm_to_vmem [thread:$0]  %s178, 64, %s180, [#allocation22]
    $region49: #{tpu_custom_call.1} parent=1 // pred_fallthru
      _
    // Predicated region
    $region50: #{tpu_custom_call.1} parent=1 // pred_check
      _
    $region51: #{tpu_custom_call.1} parent=1 // pred_check_branch
      %184 = sbr.rel (0) target = $region53
    $region52: #{tpu_custom_call.1} parent=1 // pred_region
      %186 = vsyncadd [#allocation22], 0
      %s188 = sshll.u32 %s12, 4
      %s189 = int_to_ptr.hbm [resolvable:$true] %s188
      %s190 = sshll.u32 [#allocation23], 4
      %s191 = int_to_ptr.vmem [resolvable:$true] %s190
      %193 = dma.hbm_to_vmem [thread:$0]  %s189, 64, %s191, [#allocation22]
    $region53: #{tpu_custom_call.1} parent=1 // pred_fallthru
      _
    // Predicated region
    $region54: #{tpu_custom_call.1} parent=1 // pred_check
      _
    $region55: #{tpu_custom_call.1} parent=1 // pred_check_branch
      %195 = sbr.rel (0) target = $region57
    $region56: #{tpu_custom_call.1} parent=1 // pred_region
      %197 = vsyncadd [#allocation25], 0
      %s199 = sshll.u32 %s13, 4
      %s200 = int_to_ptr.hbm [resolvable:$true] %s199
      %s201 = sshll.u32 [#allocation24], 4
      %s202 = int_to_ptr.vmem [resolvable:$true] %s201
      %204 = dma.hbm_to_vmem [thread:$0]  %s200, 64, %s202, [#allocation25]
    $region57: #{tpu_custom_call.1} parent=1 // pred_fallthru
      _
    // Predicated region
    $region58: #{tpu_custom_call.1} parent=1 // pred_check
      _
    $region59: #{tpu_custom_call.1} parent=1 // pred_check_branch
      %206 = sbr.rel (0) target = $region61
    $region60: #{tpu_custom_call.1} parent=1 // pred_region
      %208 = dma.done [#allocation3], 512
    $region61: #{tpu_custom_call.1} parent=1 // pred_fallthru
      _
    // Predicated region
    $region62: #{tpu_custom_call.1} parent=1 // pred_check
      _
    $region63: #{tpu_custom_call.1} parent=1 // pred_check_branch
      %210 = sbr.rel (0) target = $region65
    $region64: #{tpu_custom_call.1} parent=1 // pred_region
      %212 = dma.done [#allocation7], 512
    $region65: #{tpu_custom_call.1} parent=1 // pred_fallthru
      _
    // Predicated region
    $region66: #{tpu_custom_call.1} parent=1 // pred_check
      _
    $region67: #{tpu_custom_call.1} parent=1 // pred_check_branch
      %214 = sbr.rel (0) target = $region69
    $region68: #{tpu_custom_call.1} parent=1 // pred_region
      %216 = dma.done [#allocation7], 512
    $region69: #{tpu_custom_call.1} parent=1 // pred_fallthru
      _
    // Predicated region
    $region70: #{tpu_custom_call.1} parent=1 // pred_check
      _
    $region71: #{tpu_custom_call.1} parent=1 // pred_check_branch
      %218 = sbr.rel (0) target = $region73
    $region72: #{tpu_custom_call.1} parent=1 // pred_region
      %220 = dma.done [#allocation10], 512
    $region73: #{tpu_custom_call.1} parent=1 // pred_fallthru
      _
    // Predicated region
    $region74: #{tpu_custom_call.1} parent=1 // pred_check
      _
    $region75: #{tpu_custom_call.1} parent=1 // pred_check_branch
      %222 = sbr.rel (0) target = $region77
    $region76: #{tpu_custom_call.1} parent=1 // pred_region
      %224 = dma.done [#allocation10], 512
    $region77: #{tpu_custom_call.1} parent=1 // pred_fallthru
      _
    // Predicated region
    $region78: #{tpu_custom_call.1} parent=1 // pred_check
      _
    $region79: #{tpu_custom_call.1} parent=1 // pred_check_branch
      %226 = sbr.rel (0) target = $region81
    $region80: #{tpu_custom_call.1} parent=1 // pred_region
      %228 = dma.done [#allocation13], 512
    $region81: #{tpu_custom_call.1} parent=1 // pred_fallthru
      _
    // Predicated region
    $region82: #{tpu_custom_call.1} parent=1 // pred_check
      _
    $region83: #{tpu_custom_call.1} parent=1 // pred_check_branch
      %230 = sbr.rel (0) target = $region85
    $region84: #{tpu_custom_call.1} parent=1 // pred_region
      %232 = dma.done [#allocation13], 41472
    $region85: #{tpu_custom_call.1} parent=1 // pred_fallthru
      _
    // Predicated region
    $region86: #{tpu_custom_call.1} parent=1 // pred_check
      _
    $region87: #{tpu_custom_call.1} parent=1 // pred_check_branch
      %234 = sbr.rel (0) target = $region89
    $region88: #{tpu_custom_call.1} parent=1 // pred_region
      %236 = dma.done [#allocation16], 64
    $region89: #{tpu_custom_call.1} parent=1 // pred_fallthru
      _
    // Predicated region
    $region90: #{tpu_custom_call.1} parent=1 // pred_check
      _
    $region91: #{tpu_custom_call.1} parent=1 // pred_check_branch
      %238 = sbr.rel (0) target = $region93
    $region92: #{tpu_custom_call.1} parent=1 // pred_region
      %240 = dma.done [#allocation16], 16384
    $region93: #{tpu_custom_call.1} parent=1 // pred_fallthru
      _
    // Predicated region
    $region94: #{tpu_custom_call.1} parent=1 // pred_check
      _
    $region95: #{tpu_custom_call.1} parent=1 // pred_check_branch
      %242 = sbr.rel (0) target = $region97
    $region96: #{tpu_custom_call.1} parent=1 // pred_region
      %244 = dma.done [#allocation19], 64
    $region97: #{tpu_custom_call.1} parent=1 // pred_fallthru
      _
    // Predicated region
    $region98: #{tpu_custom_call.1} parent=1 // pred_check
      _
    $region99: #{tpu_custom_call.1} parent=1 // pred_check_branch
      %246 = sbr.rel (0) target = $region101
    $region100: #{tpu_custom_call.1} parent=1 // pred_region
      %248 = dma.done [#allocation19], 16384
    $region101: #{tpu_custom_call.1} parent=1 // pred_fallthru
      _
    // Predicated region
    $region102: #{tpu_custom_call.1} parent=1 // pred_check
      _
    $region103: #{tpu_custom_call.1} parent=1 // pred_check_branch
      %250 = sbr.rel (0) target = $region105
    $region104: #{tpu_custom_call.1} parent=1 // pred_region
      %252 = dma.done [#allocation22], 64
    $region105: #{tpu_custom_call.1} parent=1 // pred_fallthru
      _
    // Predicated region
    $region106: #{tpu_custom_call.1} parent=1 // pred_check
      _
    $region107: #{tpu_custom_call.1} parent=1 // pred_check_branch
      %254 = sbr.rel (0) target = $region109
    $region108: #{tpu_custom_call.1} parent=1 // pred_region
      %256 = dma.done [#allocation22], 64
    $region109: #{tpu_custom_call.1} parent=1 // pred_fallthru
      _
    // Predicated region
    $region110: #{tpu_custom_call.1} parent=1 // pred_check
      _
    $region111: #{tpu_custom_call.1} parent=1 // pred_check_branch
      %258 = sbr.rel (0) target = $region113
    $region112: #{tpu_custom_call.1} parent=1 // pred_region
      %260 = dma.done [#allocation25], 64
    $region113: #{tpu_custom_call.1} parent=1 // pred_fallthru
      _
    %v262 = vld [vmem:[#allocation2] sm:$0xff]
    %v263 = vld [vmem:[#allocation2 + $0x8] sm:$0xff]
    %v264 = vld [vmem:[#allocation2 + $0x10] sm:$0xff]
    %v265 = vld [vmem:[#allocation2 + $0x18] sm:$0xff]
    %270 = vst [vmem:[#allocation1] ss:$2 sm:$0xff] %v262
    %s271 = scalar_lea.vmem [#allocation1], 16
    %272 = vst [vmem:[%s271] ss:$2 sm:$0xff] %v263
    %v273 = vld.sshfl [vmem:[#allocation1] sm:$0xff pattern:$0x75316420]
    %v274 = vld.sshfl [vmem:[#allocation1 + $0x8] sm:$0xff pattern:$0x75316420]
    %v275 = vld.sshfl [vmem:[#allocation1 + $0x10] sm:$0xff pattern:$0x75316420]
    %v276 = vld.sshfl [vmem:[#allocation1 + $0x18] sm:$0xff pattern:$0x75316420]
    %s277 = scalar_lea.vmem [#allocation1], 32
    %278 = vst [vmem:[%s277] ss:$2 sm:$0xff] %v264
    %s279 = scalar_lea.vmem [#allocation1], 48
    %280 = vst [vmem:[%s279] ss:$2 sm:$0xff] %v265
    %v281 = vld.sshfl [vmem:[#allocation1 + $0x20] sm:$0xff pattern:$0x75316420]
    %v282 = vld.sshfl [vmem:[#allocation1 + $0x28] sm:$0xff pattern:$0x75316420]
    %v283 = vld.sshfl [vmem:[#allocation1 + $0x30] sm:$0xff pattern:$0x75316420]
    %v284 = vld.sshfl [vmem:[#allocation1 + $0x38] sm:$0xff pattern:$0x75316420]
    %vm293 = vcmask 1043456
    %v294 = vsel %vm293, %v273, 0.0
    %v295 = vrot.slane %v294, 4
    %v296 = vadd.f32 %v294, %v295
    %v297 = vrot.slane %v296, 2
    %v298 = vadd.f32 %v296, %v297
    %v299 = vrot.slane %v298, 1
    %v300 = vadd.f32 %v298, %v299
    %v301 = vsel %vm293, %v274, 0.0
    %v302 = vrot.slane %v301, 4
    %v303 = vadd.f32 %v301, %v302
    %v304 = vrot.slane %v303, 2
    %v305 = vadd.f32 %v303, %v304
    %v306 = vrot.slane %v305, 1
    %v307 = vadd.f32 %v305, %v306
    %v308 = vsel %vm293, %v275, 0.0
    %v309 = vrot.slane %v308, 4
    %v310 = vadd.f32 %v308, %v309
    %v311 = vrot.slane %v310, 2
    %v312 = vadd.f32 %v310, %v311
    %v313 = vrot.slane %v312, 1
    %v314 = vadd.f32 %v312, %v313
    %vm315 = vcmask 388096
    %v316 = vsel %vm315, %v276, 0.0
    %v317 = vrot.slane %v316, 4
    %v318 = vadd.f32 %v316, %v317
    %v319 = vrot.slane %v318, 2
    %v320 = vadd.f32 %v318, %v319
    %v321 = vrot.slane %v320, 1
    %v322 = vadd.f32 %v320, %v321
    %v323 = vsel %vm293, %v281, 0.0
    %v324 = vrot.slane %v323, 4
    %v325 = vadd.f32 %v323, %v324
    %v326 = vrot.slane %v325, 2
    %v327 = vadd.f32 %v325, %v326
    %v328 = vrot.slane %v327, 1
    %v329 = vadd.f32 %v327, %v328
    %v330 = vsel %vm293, %v282, 0.0
    %v331 = vrot.slane %v330, 4
    %v332 = vadd.f32 %v330, %v331
    %v333 = vrot.slane %v332, 2
    %v334 = vadd.f32 %v332, %v333
    %v335 = vrot.slane %v334, 1
    %v336 = vadd.f32 %v334, %v335
    %v337 = vsel %vm293, %v283, 0.0
    %v338 = vrot.slane %v337, 4
    %v339 = vadd.f32 %v337, %v338
    %v340 = vrot.slane %v339, 2
    %v341 = vadd.f32 %v339, %v340
    %v342 = vrot.slane %v341, 1
    %v343 = vadd.f32 %v341, %v342
    %v344 = vsel %vm315, %v284, 0.0
    %v345 = vrot.slane %v344, 4
    %v346 = vadd.f32 %v344, %v345
    %v347 = vrot.slane %v346, 2
    %v348 = vadd.f32 %v346, %v347
    %v349 = vrot.slane %v348, 1
    %v350 = vadd.f32 %v348, %v349
    %v351 = vrcp.pop 4.0
    %v352 = vmul.f32 4.0, %v351
    %v353 = vsub.f32 1.0, %v352
    %v354 = vmul.f32 %v351, %v353
    %v355 = vadd.f32 %v351, %v354
    %vm356 = vweird.f32 %v351
    %v357 = vsel %vm356, %v351, %v355
    %v358 = vmul.f32 %v300, %v357
    %v359 = vmul.f32 %v307, %v357
    %v360 = vmul.f32 %v314, %v357
    %v361 = vmul.f32 %v322, %v357
    %v362 = vmul.f32 %v329, %v357
    %v363 = vmul.f32 %v336, %v357
    %v364 = vmul.f32 %v343, %v357
    %v365 = vmul.f32 %v350, %v357
    %v366 = vld [vmem:[#allocation6] sm:$0xff]
    %v367 = vld [vmem:[#allocation6 + $0x8] sm:$0xff]
    %v368 = vld [vmem:[#allocation6 + $0x10] sm:$0xff]
    %v369 = vld [vmem:[#allocation6 + $0x18] sm:$0xff]
    %374 = vst [vmem:[#allocation1] ss:$2 sm:$0xff] %v366
    %s375 = scalar_lea.vmem [#allocation1], 16
    %376 = vst [vmem:[%s375] ss:$2 sm:$0xff] %v367
    %v377 = vld.sshfl [vmem:[#allocation1] sm:$0xff pattern:$0x75316420]
    %v378 = vld.sshfl [vmem:[#allocation1 + $0x8] sm:$0xff pattern:$0x75316420]
    %v379 = vld.sshfl [vmem:[#allocation1 + $0x10] sm:$0xff pattern:$0x75316420]
    %v380 = vld.sshfl [vmem:[#allocation1 + $0x18] sm:$0xff pattern:$0x75316420]
    %s381 = scalar_lea.vmem [#allocation1], 32
    %382 = vst [vmem:[%s381] ss:$2 sm:$0xff] %v368
    %s383 = scalar_lea.vmem [#allocation1], 48
    %384 = vst [vmem:[%s383] ss:$2 sm:$0xff] %v369
    %v385 = vld.sshfl [vmem:[#allocation1 + $0x20] sm:$0xff pattern:$0x75316420]
    %v386 = vld.sshfl [vmem:[#allocation1 + $0x28] sm:$0xff pattern:$0x75316420]
    %v387 = vld.sshfl [vmem:[#allocation1 + $0x30] sm:$0xff pattern:$0x75316420]
    %v388 = vld.sshfl [vmem:[#allocation1 + $0x38] sm:$0xff pattern:$0x75316420]
    %v397 = vsel %vm293, %v377, 0.0
    %v398 = vrot.slane %v397, 4
    %v399 = vadd.f32 %v397, %v398
    %v400 = vrot.slane %v399, 2
    %v401 = vadd.f32 %v399, %v400
    %v402 = vrot.slane %v401, 1
    %v403 = vadd.f32 %v401, %v402
    %v404 = vsel %vm293, %v378, 0.0
    %v405 = vrot.slane %v404, 4
    %v406 = vadd.f32 %v404, %v405
    %v407 = vrot.slane %v406, 2
    %v408 = vadd.f32 %v406, %v407
    %v409 = vrot.slane %v408, 1
    %v410 = vadd.f32 %v408, %v409
    %v411 = vsel %vm293, %v379, 0.0
    %v412 = vrot.slane %v411, 4
    %v413 = vadd.f32 %v411, %v412
    %v414 = vrot.slane %v413, 2
    %v415 = vadd.f32 %v413, %v414
    %v416 = vrot.slane %v415, 1
    %v417 = vadd.f32 %v415, %v416
    %v418 = vsel %vm315, %v380, 0.0
    %v419 = vrot.slane %v418, 4
    %v420 = vadd.f32 %v418, %v419
    %v421 = vrot.slane %v420, 2
    %v422 = vadd.f32 %v420, %v421
    %v423 = vrot.slane %v422, 1
    %v424 = vadd.f32 %v422, %v423
    %v425 = vsel %vm293, %v385, 0.0
    %v426 = vrot.slane %v425, 4
    %v427 = vadd.f32 %v425, %v426
    %v428 = vrot.slane %v427, 2
    %v429 = vadd.f32 %v427, %v428
    %v430 = vrot.slane %v429, 1
    %v431 = vadd.f32 %v429, %v430
    %v432 = vsel %vm293, %v386, 0.0
    %v433 = vrot.slane %v432, 4
    %v434 = vadd.f32 %v432, %v433
    %v435 = vrot.slane %v434, 2
    %v436 = vadd.f32 %v434, %v435
    %v437 = vrot.slane %v436, 1
    %v438 = vadd.f32 %v436, %v437
    %v439 = vsel %vm293, %v387, 0.0
    %v440 = vrot.slane %v439, 4
    %v441 = vadd.f32 %v439, %v440
    %v442 = vrot.slane %v441, 2
    %v443 = vadd.f32 %v441, %v442
    %v444 = vrot.slane %v443, 1
    %v445 = vadd.f32 %v443, %v444
    %v446 = vsel %vm315, %v388, 0.0
    %v447 = vrot.slane %v446, 4
    %v448 = vadd.f32 %v446, %v447
    %v449 = vrot.slane %v448, 2
    %v450 = vadd.f32 %v448, %v449
    %v451 = vrot.slane %v450, 1
    %v452 = vadd.f32 %v450, %v451
    %v453 = vmul.f32 %v403, %v357
    %v454 = vmul.f32 %v410, %v357
    %v455 = vmul.f32 %v417, %v357
    %v456 = vmul.f32 %v424, %v357
    %v457 = vmul.f32 %v431, %v357
    %v458 = vmul.f32 %v438, %v357
    %v459 = vmul.f32 %v445, %v357
    %v460 = vmul.f32 %v452, %v357
    %v461 = vld [vmem:[#allocation8] sm:$0xff]
    %v462 = vld [vmem:[#allocation8 + $0x8] sm:$0xff]
    %v463 = vld [vmem:[#allocation8 + $0x10] sm:$0xff]
    %v464 = vld [vmem:[#allocation8 + $0x18] sm:$0xff]
    %469 = vst [vmem:[#allocation1] ss:$2 sm:$0xff] %v461
    %s470 = scalar_lea.vmem [#allocation1], 16
    %471 = vst [vmem:[%s470] ss:$2 sm:$0xff] %v462
    %v472 = vld.sshfl [vmem:[#allocation1] sm:$0xff pattern:$0x75316420]
    %v473 = vld.sshfl [vmem:[#allocation1 + $0x8] sm:$0xff pattern:$0x75316420]
    %v474 = vld.sshfl [vmem:[#allocation1 + $0x10] sm:$0xff pattern:$0x75316420]
    %v475 = vld.sshfl [vmem:[#allocation1 + $0x18] sm:$0xff pattern:$0x75316420]
    %s476 = scalar_lea.vmem [#allocation1], 32
    %477 = vst [vmem:[%s476] ss:$2 sm:$0xff] %v463
    %s478 = scalar_lea.vmem [#allocation1], 48
    %479 = vst [vmem:[%s478] ss:$2 sm:$0xff] %v464
    %v480 = vld.sshfl [vmem:[#allocation1 + $0x20] sm:$0xff pattern:$0x75316420]
    %v481 = vld.sshfl [vmem:[#allocation1 + $0x28] sm:$0xff pattern:$0x75316420]
    %v482 = vld.sshfl [vmem:[#allocation1 + $0x30] sm:$0xff pattern:$0x75316420]
    %v483 = vld.sshfl [vmem:[#allocation1 + $0x38] sm:$0xff pattern:$0x75316420]
    %v492 = vsel %vm293, %v472, 0.0
    %v493 = vrot.slane %v492, 4
    %v494 = vadd.f32 %v492, %v493
    %v495 = vrot.slane %v494, 2
    %v496 = vadd.f32 %v494, %v495
    %v497 = vrot.slane %v496, 1
    %v498 = vadd.f32 %v496, %v497
    %v499 = vsel %vm293, %v473, 0.0
    %v500 = vrot.slane %v499, 4
    %v501 = vadd.f32 %v499, %v500
    %v502 = vrot.slane %v501, 2
    %v503 = vadd.f32 %v501, %v502
    %v504 = vrot.slane %v503, 1
    %v505 = vadd.f32 %v503, %v504
    %v506 = vsel %vm293, %v474, 0.0
    %v507 = vrot.slane %v506, 4
    %v508 = vadd.f32 %v506, %v507
    %v509 = vrot.slane %v508, 2
    %v510 = vadd.f32 %v508, %v509
    %v511 = vrot.slane %v510, 1
    %v512 = vadd.f32 %v510, %v511
    %v513 = vsel %vm315, %v475, 0.0
    %v514 = vrot.slane %v513, 4
    %v515 = vadd.f32 %v513, %v514
    %v516 = vrot.slane %v515, 2
    %v517 = vadd.f32 %v515, %v516
    %v518 = vrot.slane %v517, 1
    %v519 = vadd.f32 %v517, %v518
    %v520 = vsel %vm293, %v480, 0.0
    %v521 = vrot.slane %v520, 4
    %v522 = vadd.f32 %v520, %v521
    %v523 = vrot.slane %v522, 2
    %v524 = vadd.f32 %v522, %v523
    %v525 = vrot.slane %v524, 1
    %v526 = vadd.f32 %v524, %v525
    %v527 = vsel %vm293, %v481, 0.0
    %v528 = vrot.slane %v527, 4
    %v529 = vadd.f32 %v527, %v528
    %v530 = vrot.slane %v529, 2
    %v531 = vadd.f32 %v529, %v530
    %v532 = vrot.slane %v531, 1
    %v533 = vadd.f32 %v531, %v532
    %v534 = vsel %vm293, %v482, 0.0
    %v535 = vrot.slane %v534, 4
    %v536 = vadd.f32 %v534, %v535
    %v537 = vrot.slane %v536, 2
    %v538 = vadd.f32 %v536, %v537
    %v539 = vrot.slane %v538, 1
    %v540 = vadd.f32 %v538, %v539
    %v541 = vsel %vm315, %v483, 0.0
    %v542 = vrot.slane %v541, 4
    %v543 = vadd.f32 %v541, %v542
    %v544 = vrot.slane %v543, 2
    %v545 = vadd.f32 %v543, %v544
    %v546 = vrot.slane %v545, 1
    %v547 = vadd.f32 %v545, %v546
    %v548 = vmul.f32 %v498, %v357
    %v549 = vmul.f32 %v505, %v357
    %v550 = vmul.f32 %v512, %v357
    %v551 = vmul.f32 %v519, %v357
    %v552 = vmul.f32 %v526, %v357
    %v553 = vmul.f32 %v533, %v357
    %v554 = vmul.f32 %v540, %v357
    %v555 = vmul.f32 %v547, %v357
    %v556 = vld [vmem:[#allocation14] sm:$0xff]
    %v557 = vld [vmem:[#allocation14 + $0x8] sm:$0xff]
    %v558 = vld [vmem:[#allocation14 + $0x10] sm:$0xff]
    %v559 = vld [vmem:[#allocation14 + $0x18] sm:$0xff]
    %v560 = vld [vmem:[#allocation14 + $0x20] sm:$0xff]
    %v561 = vld [vmem:[#allocation14 + $0x28] sm:$0xff]
    %v562 = vld [vmem:[#allocation14 + $0x30] sm:$0xff]
    %v563 = vld [vmem:[#allocation14 + $0x38] sm:$0xff]
    %v564 = vld [vmem:[#allocation14 + $0x40] sm:$0xff]
    %v565 = vld [vmem:[#allocation14 + $0x48] sm:$0xff]
    %v566 = vld [vmem:[#allocation14 + $0x50] sm:$0xff]
    %v567 = vld [vmem:[#allocation14 + $0x58] sm:$0xff]
    %v568 = vld [vmem:[#allocation14 + $0x60] sm:$0xff]
    %v569 = vld [vmem:[#allocation14 + $0x68] sm:$0xff]
    %v570 = vld [vmem:[#allocation14 + $0x70] sm:$0xff]
    %v571 = vld [vmem:[#allocation14 + $0x78] sm:$0xff]
    %v572 = vld [vmem:[#allocation14 + $0x80] sm:$0xff]
    %v573 = vld [vmem:[#allocation14 + $0x88] sm:$0xff]
    %v574 = vld [vmem:[#allocation14 + $0x90] sm:$0xff]
    %v575 = vld [vmem:[#allocation14 + $0x98] sm:$0xff]
    %v576 = vld [vmem:[#allocation14 + $0xa0] sm:$0xff]
    %v577 = vld [vmem:[#allocation14 + $0xa8] sm:$0xff]
    %v578 = vld [vmem:[#allocation14 + $0xb0] sm:$0xff]
    %v579 = vld [vmem:[#allocation14 + $0xb8] sm:$0xff]
    %v580 = vld [vmem:[#allocation14 + $0xc0] sm:$0xff]
    %v581 = vld [vmem:[#allocation14 + $0xc8] sm:$0xff]
    %v582 = vld [vmem:[#allocation14 + $0xd0] sm:$0xff]
    %v583 = vld [vmem:[#allocation14 + $0xd8] sm:$0xff]
    %v584 = vld [vmem:[#allocation14 + $0xe0] sm:$0xff]
    %v585 = vld [vmem:[#allocation14 + $0xe8] sm:$0xff]
    %v586 = vld [vmem:[#allocation14 + $0xf0] sm:$0xff]
    %v587 = vld [vmem:[#allocation14 + $0xf8] sm:$0xff]
    %v588 = vld [vmem:[#allocation14 + $0x100] sm:$0xff]
    %v589 = vld [vmem:[#allocation14 + $0x108] sm:$0xff]
    %v590 = vld [vmem:[#allocation14 + $0x110] sm:$0xff]
    %v591 = vld [vmem:[#allocation14 + $0x118] sm:$0xff]
    %v592 = vld [vmem:[#allocation14 + $0x120] sm:$0xff]
    %v593 = vld [vmem:[#allocation14 + $0x128] sm:$0xff]
    %v594 = vld [vmem:[#allocation14 + $0x130] sm:$0xff]
    %v595 = vld [vmem:[#allocation14 + $0x138] sm:$0xff]
    %v596 = vld [vmem:[#allocation14 + $0x140] sm:$0xff]
    %v597 = vld [vmem:[#allocation14 + $0x148] sm:$0xff]
    %v598 = vld [vmem:[#allocation14 + $0x150] sm:$0xff]
    %v599 = vld [vmem:[#allocation14 + $0x158] sm:$0xff]
    %v600 = vld [vmem:[#allocation14 + $0x160] sm:$0xff]
    %v601 = vld [vmem:[#allocation14 + $0x168] sm:$0xff]
    %v602 = vld [vmem:[#allocation14 + $0x170] sm:$0xff]
    %v603 = vld [vmem:[#allocation14 + $0x178] sm:$0xff]
    %v604 = vld [vmem:[#allocation14 + $0x180] sm:$0xff]
    %v605 = vld [vmem:[#allocation14 + $0x188] sm:$0xff]
    %v606 = vld [vmem:[#allocation14 + $0x190] sm:$0xff]
    %v607 = vld [vmem:[#allocation14 + $0x198] sm:$0xff]
    %v608 = vld [vmem:[#allocation14 + $0x1a0] sm:$0xff]
    %v609 = vld [vmem:[#allocation14 + $0x1a8] sm:$0xff]
    %v610 = vld [vmem:[#allocation14 + $0x1b0] sm:$0xff]
    %v611 = vld [vmem:[#allocation14 + $0x1b8] sm:$0xff]
    %v612 = vld [vmem:[#allocation14 + $0x1c0] sm:$0xff]
    %v613 = vld [vmem:[#allocation14 + $0x1c8] sm:$0xff]
    %v614 = vld [vmem:[#allocation14 + $0x1d0] sm:$0xff]
    %v615 = vld [vmem:[#allocation14 + $0x1d8] sm:$0xff]
    %v616 = vld [vmem:[#allocation14 + $0x1e0] sm:$0xff]
    %v617 = vld [vmem:[#allocation14 + $0x1e8] sm:$0xff]
    %v618 = vld [vmem:[#allocation14 + $0x1f0] sm:$0xff]
    %v619 = vld [vmem:[#allocation14 + $0x1f8] sm:$0xff]
    %v620 = vld [vmem:[#allocation14 + $0x200] sm:$0xff]
    %v621 = vld [vmem:[#allocation14 + $0x208] sm:$0xff]
    %v622 = vld [vmem:[#allocation14 + $0x210] sm:$0xff]
    %v623 = vld [vmem:[#allocation14 + $0x218] sm:$0xff]
    %v624 = vld [vmem:[#allocation14 + $0x220] sm:$0xff]
    %v625 = vld [vmem:[#allocation14 + $0x228] sm:$0xff]
    %v626 = vld [vmem:[#allocation14 + $0x230] sm:$0xff]
    %v627 = vld [vmem:[#allocation14 + $0x238] sm:$0xff]
    %v628 = vld [vmem:[#allocation14 + $0x240] sm:$0xff]
    %v629 = vld [vmem:[#allocation14 + $0x248] sm:$0xff]
    %v630 = vld [vmem:[#allocation14 + $0x250] sm:$0xff]
    %v631 = vld [vmem:[#allocation14 + $0x258] sm:$0xff]
    %v632 = vld [vmem:[#allocation14 + $0x260] sm:$0xff]
    %v633 = vld [vmem:[#allocation14 + $0x268] sm:$0xff]
    %v634 = vld [vmem:[#allocation14 + $0x270] sm:$0xff]
    %v635 = vld [vmem:[#allocation14 + $0x278] sm:$0xff]
    %v636 = vld [vmem:[#allocation14 + $0x280] sm:$0xff]
    %v637 = vld [vmem:[#allocation14 + $0x288] sm:$0xff]
    %v638 = vld [vmem:[#allocation14 + $0x290] sm:$0xff]
    %v639 = vld [vmem:[#allocation14 + $0x298] sm:$0xff]
    %v640 = vld [vmem:[#allocation14 + $0x2a0] sm:$0xff]
    %v641 = vld [vmem:[#allocation14 + $0x2a8] sm:$0xff]
    %v642 = vld [vmem:[#allocation14 + $0x2b0] sm:$0xff]
    %v643 = vld [vmem:[#allocation14 + $0x2b8] sm:$0xff]
    %v644 = vld [vmem:[#allocation14 + $0x2c0] sm:$0xff]
    %v645 = vld [vmem:[#allocation14 + $0x2c8] sm:$0xff]
    %v646 = vld [vmem:[#allocation14 + $0x2d0] sm:$0xff]
    %v647 = vld [vmem:[#allocation14 + $0x2d8] sm:$0xff]
    %v648 = vld [vmem:[#allocation14 + $0x2e0] sm:$0xff]
    %v649 = vld [vmem:[#allocation14 + $0x2e8] sm:$0xff]
    %v650 = vld [vmem:[#allocation14 + $0x2f0] sm:$0xff]
    %v651 = vld [vmem:[#allocation14 + $0x2f8] sm:$0xff]
    %v652 = vld [vmem:[#allocation14 + $0x300] sm:$0xff]
    %v653 = vld [vmem:[#allocation14 + $0x308] sm:$0xff]
    %v654 = vld [vmem:[#allocation14 + $0x310] sm:$0xff]
    %v655 = vld [vmem:[#allocation14 + $0x318] sm:$0xff]
    %v656 = vld [vmem:[#allocation14 + $0x320] sm:$0xff]
    %v657 = vld [vmem:[#allocation14 + $0x328] sm:$0xff]
    %v658 = vld [vmem:[#allocation14 + $0x330] sm:$0xff]
    %v659 = vld [vmem:[#allocation14 + $0x338] sm:$0xff]
    %v660 = vld [vmem:[#allocation14 + $0x340] sm:$0xff]
    %v661 = vld [vmem:[#allocation14 + $0x348] sm:$0xff]
    %v662 = vld [vmem:[#allocation14 + $0x350] sm:$0xff]
    %v663 = vld [vmem:[#allocation14 + $0x358] sm:$0xff]
    %v664 = vpack.c.bf16 %v358, %v358
    %v665 = vpack.c.bf16 %v359, %v359
    %v666 = vpack.c.bf16 %v360, %v360
    %v667 = vpack.c.bf16 %v361, %v361
    %v668 = vpack.c.bf16 %v362, %v362
    %v669 = vpack.c.bf16 %v363, %v363
    %v670 = vpack.c.bf16 %v364, %v364
    %v671 = vpack.c.bf16 %v365, %v365
    %v672 = vld [vmem:[#allocation14 + $0x360] sm:$0xff]
    %v673 = vld [vmem:[#allocation14 + $0x368] sm:$0xff]
    %v674 = vld [vmem:[#allocation14 + $0x370] sm:$0xff]
    %v675 = vld [vmem:[#allocation14 + $0x378] sm:$0xff]
    %v676 = vld [vmem:[#allocation14 + $0x380] sm:$0xff]
    %v677 = vld [vmem:[#allocation14 + $0x388] sm:$0xff]
    %v678 = vld [vmem:[#allocation14 + $0x390] sm:$0xff]
    %v679 = vld [vmem:[#allocation14 + $0x398] sm:$0xff]
    %v680 = vld [vmem:[#allocation14 + $0x3a0] sm:$0xff]
    %v681 = vld [vmem:[#allocation14 + $0x3a8] sm:$0xff]
    %v682 = vld [vmem:[#allocation14 + $0x3b0] sm:$0xff]
    %v683 = vld [vmem:[#allocation14 + $0x3b8] sm:$0xff]
    %v684 = vld [vmem:[#allocation14 + $0x3c0] sm:$0xff]
    %v685 = vld [vmem:[#allocation14 + $0x3c8] sm:$0xff]
    %v686 = vld [vmem:[#allocation14 + $0x3d0] sm:$0xff]
    %v687 = vld [vmem:[#allocation14 + $0x3d8] sm:$0xff]
    %v688 = vld [vmem:[#allocation14 + $0x3e0] sm:$0xff]
    %v689 = vld [vmem:[#allocation14 + $0x3e8] sm:$0xff]
    %v690 = vld [vmem:[#allocation14 + $0x3f0] sm:$0xff]
    %v691 = vld [vmem:[#allocation14 + $0x3f8] sm:$0xff]
    %v692 = vld [vmem:[#allocation14 + $0x400] sm:$0xff]
    %v693 = vld [vmem:[#allocation14 + $0x408] sm:$0xff]
    %v694 = vld [vmem:[#allocation14 + $0x410] sm:$0xff]
    %v695 = vld [vmem:[#allocation14 + $0x418] sm:$0xff]
    %v696 = vld [vmem:[#allocation14 + $0x420] sm:$0xff]
    %v697 = vld [vmem:[#allocation14 + $0x428] sm:$0xff]
    %v698 = vld [vmem:[#allocation14 + $0x430] sm:$0xff]
    %v699 = vld [vmem:[#allocation14 + $0x438] sm:$0xff]
    %v700 = vld [vmem:[#allocation14 + $0x440] sm:$0xff]
    %v701 = vld [vmem:[#allocation14 + $0x448] sm:$0xff]
    %v702 = vld [vmem:[#allocation14 + $0x450] sm:$0xff]
    %v703 = vld [vmem:[#allocation14 + $0x458] sm:$0xff]
    %v704 = vld [vmem:[#allocation14 + $0x460] sm:$0xff]
    %v705 = vld [vmem:[#allocation14 + $0x468] sm:$0xff]
    %v706 = vld [vmem:[#allocation14 + $0x470] sm:$0xff]
    %v707 = vld [vmem:[#allocation14 + $0x478] sm:$0xff]
    %v708 = vld [vmem:[#allocation14 + $0x480] sm:$0xff]
    %v709 = vld [vmem:[#allocation14 + $0x488] sm:$0xff]
    %v710 = vld [vmem:[#allocation14 + $0x490] sm:$0xff]
    %v711 = vld [vmem:[#allocation14 + $0x498] sm:$0xff]
    %v712 = vld [vmem:[#allocation14 + $0x4a0] sm:$0xff]
    %v713 = vld [vmem:[#allocation14 + $0x4a8] sm:$0xff]
    %v714 = vld [vmem:[#allocation14 + $0x4b0] sm:$0xff]
    %v715 = vld [vmem:[#allocation14 + $0x4b8] sm:$0xff]
    %v716 = vld [vmem:[#allocation14 + $0x4c0] sm:$0xff]
    %v717 = vld [vmem:[#allocation14 + $0x4c8] sm:$0xff]
    %v718 = vld [vmem:[#allocation14 + $0x4d0] sm:$0xff]
    %v719 = vld [vmem:[#allocation14 + $0x4d8] sm:$0xff]
    %v720 = vld [vmem:[#allocation14 + $0x4e0] sm:$0xff]
    %v721 = vld [vmem:[#allocation14 + $0x4e8] sm:$0xff]
    %v722 = vld [vmem:[#allocation14 + $0x4f0] sm:$0xff]
    %v723 = vld [vmem:[#allocation14 + $0x4f8] sm:$0xff]
    %v724 = vld [vmem:[#allocation14 + $0x500] sm:$0xff]
    %v725 = vld [vmem:[#allocation14 + $0x508] sm:$0xff]
    %v726 = vld [vmem:[#allocation14 + $0x510] sm:$0xff]
    %v727 = vld [vmem:[#allocation14 + $0x518] sm:$0xff]
    %v728 = vld [vmem:[#allocation14 + $0x520] sm:$0xff]
    %v729 = vld [vmem:[#allocation14 + $0x528] sm:$0xff]
    %v730 = vld [vmem:[#allocation14 + $0x530] sm:$0xff]
    %v731 = vld [vmem:[#allocation14 + $0x538] sm:$0xff]
    %v732 = vld [vmem:[#allocation14 + $0x540] sm:$0xff]
    %v733 = vld [vmem:[#allocation14 + $0x548] sm:$0xff]
    %v734 = vld [vmem:[#allocation14 + $0x550] sm:$0xff]
    %v735 = vld [vmem:[#allocation14 + $0x558] sm:$0xff]
    %v736 = vld [vmem:[#allocation14 + $0x560] sm:$0xff]
    %v737 = vld [vmem:[#allocation14 + $0x568] sm:$0xff]
    %v738 = vld [vmem:[#allocation14 + $0x570] sm:$0xff]
    %v739 = vld [vmem:[#allocation14 + $0x578] sm:$0xff]
    %v740 = vld [vmem:[#allocation14 + $0x580] sm:$0xff]
    %v741 = vld [vmem:[#allocation14 + $0x588] sm:$0xff]
    %v742 = vld [vmem:[#allocation14 + $0x590] sm:$0xff]
    %v743 = vld [vmem:[#allocation14 + $0x598] sm:$0xff]
    %v744 = vld [vmem:[#allocation14 + $0x5a0] sm:$0xff]
    %v745 = vld [vmem:[#allocation14 + $0x5a8] sm:$0xff]
    %v746 = vld [vmem:[#allocation14 + $0x5b0] sm:$0xff]
    %v747 = vld [vmem:[#allocation14 + $0x5b8] sm:$0xff]
    %v748 = vld [vmem:[#allocation14 + $0x5c0] sm:$0xff]
    %v749 = vld [vmem:[#allocation14 + $0x5c8] sm:$0xff]
    %v750 = vld [vmem:[#allocation14 + $0x5d0] sm:$0xff]
    %v751 = vld [vmem:[#allocation14 + $0x5d8] sm:$0xff]
    %v752 = vld [vmem:[#allocation14 + $0x5e0] sm:$0xff]
    %v753 = vld [vmem:[#allocation14 + $0x5e8] sm:$0xff]
    %v754 = vld [vmem:[#allocation14 + $0x5f0] sm:$0xff]
    %v755 = vld [vmem:[#allocation14 + $0x5f8] sm:$0xff]
    %v756 = vld [vmem:[#allocation14 + $0x600] sm:$0xff]
    %v757 = vld [vmem:[#allocation14 + $0x608] sm:$0xff]
    %v758 = vld [vmem:[#allocation14 + $0x610] sm:$0xff]
    %v759 = vld [vmem:[#allocation14 + $0x618] sm:$0xff]
    %v760 = vld [vmem:[#allocation14 + $0x620] sm:$0xff]
    %v761 = vld [vmem:[#allocation14 + $0x628] sm:$0xff]
    %v762 = vld [vmem:[#allocation14 + $0x630] sm:$0xff]
    %v763 = vld [vmem:[#allocation14 + $0x638] sm:$0xff]
    %v764 = vld [vmem:[#allocation14 + $0x640] sm:$0xff]
    %v765 = vld [vmem:[#allocation14 + $0x648] sm:$0xff]
    %v766 = vld [vmem:[#allocation14 + $0x650] sm:$0xff]
    %v767 = vld [vmem:[#allocation14 + $0x658] sm:$0xff]
    %v768 = vld [vmem:[#allocation14 + $0x660] sm:$0xff]
    %v769 = vld [vmem:[#allocation14 + $0x668] sm:$0xff]
    %v770 = vld [vmem:[#allocation14 + $0x670] sm:$0xff]
    %v771 = vld [vmem:[#allocation14 + $0x678] sm:$0xff]
    %v772 = vld [vmem:[#allocation14 + $0x680] sm:$0xff]
    %v773 = vld [vmem:[#allocation14 + $0x688] sm:$0xff]
    %v774 = vld [vmem:[#allocation14 + $0x690] sm:$0xff]
    %v775 = vld [vmem:[#allocation14 + $0x698] sm:$0xff]
    %v776 = vld [vmem:[#allocation14 + $0x6a0] sm:$0xff]
    %v777 = vld [vmem:[#allocation14 + $0x6a8] sm:$0xff]
    %v778 = vld [vmem:[#allocation14 + $0x6b0] sm:$0xff]
    %v779 = vld [vmem:[#allocation14 + $0x6b8] sm:$0xff]
    %v780 = vpack.c.bf16 %v453, %v453
    %v781 = vpack.c.bf16 %v454, %v454
    %v782 = vpack.c.bf16 %v455, %v455
    %v783 = vpack.c.bf16 %v456, %v456
    %v784 = vpack.c.bf16 %v457, %v457
    %v785 = vpack.c.bf16 %v458, %v458
    %v786 = vpack.c.bf16 %v459, %v459
    %v787 = vpack.c.bf16 %v460, %v460
    %v796 = vunpack.c.l.b16 %v780
    %v797 = vunpack.c.l.b16 %v781
    %v798 = vunpack.c.l.b16 %v782
    %v799 = vunpack.c.l.b16 %v783
    %v800 = vunpack.c.l.b16 %v784
    %v801 = vunpack.c.l.b16 %v785
    %v802 = vunpack.c.l.b16 %v786
    %v803 = vunpack.c.l.b16 %v787
    %vm804 = vcmask 1041409
    %v805 = vsel %vm804, %v800, %v796
    %v806 = vsel %vm804, %v801, %v797
    %v807 = vsel %vm804, %v802, %v798
    %v808 = vsel %vm804, %v803, %v799
    %v809 = vpack.c.b16 %v805, %v805
    %v810 = vpack.c.b16 %v806, %v806
    %v811 = vpack.c.b16 %v807, %v807
    %v812 = vpack.c.b16 %v808, %v808
    %v924 = vunpack.c.l.b16 %v672
    %v925 = vunpack.c.h.b16 %v672
    %v926 = vunpack.c.l.b16 %v673
    %v927 = vunpack.c.h.b16 %v673
    %v928 = vunpack.c.l.b16 %v674
    %v929 = vunpack.c.h.b16 %v674
    %v930 = vunpack.c.l.b16 %v675
    %v931 = vunpack.c.h.b16 %v675
    %v932 = vunpack.c.l.b16 %v676
    %v933 = vunpack.c.h.b16 %v676
    %v934 = vunpack.c.l.b16 %v677
    %v935 = vunpack.c.h.b16 %v677
    %v936 = vunpack.c.l.b16 %v678
    %v937 = vunpack.c.h.b16 %v678
    %v938 = vunpack.c.l.b16 %v679
    %v939 = vunpack.c.h.b16 %v679
    %v940 = vunpack.c.l.b16 %v680
    %v941 = vunpack.c.h.b16 %v680
    %v942 = vunpack.c.l.b16 %v681
    %v943 = vunpack.c.h.b16 %v681
    %v944 = vunpack.c.l.b16 %v682
    %v945 = vunpack.c.h.b16 %v682
    %v946 = vunpack.c.l.b16 %v683
    %v947 = vunpack.c.h.b16 %v683
    %v948 = vunpack.c.l.b16 %v684
    %v949 = vunpack.c.h.b16 %v684
    %v950 = vunpack.c.l.b16 %v685
    %v951 = vunpack.c.h.b16 %v685
    %v952 = vunpack.c.l.b16 %v686
    %v953 = vunpack.c.h.b16 %v686
    %v954 = vunpack.c.l.b16 %v687
    %v955 = vunpack.c.h.b16 %v687
    %v956 = vunpack.c.l.b16 %v688
    %v957 = vunpack.c.h.b16 %v688
    %v958 = vunpack.c.l.b16 %v689
    %v959 = vunpack.c.h.b16 %v689
    %v960 = vunpack.c.l.b16 %v690
    %v961 = vunpack.c.h.b16 %v690
    %v962 = vunpack.c.l.b16 %v691
    %v963 = vunpack.c.h.b16 %v691
    %v964 = vunpack.c.l.b16 %v692
    %v965 = vunpack.c.h.b16 %v692
    %v966 = vunpack.c.l.b16 %v693
    %v967 = vunpack.c.h.b16 %v693
    %v968 = vunpack.c.l.b16 %v694
    %v969 = vunpack.c.h.b16 %v694
    %v970 = vunpack.c.l.b16 %v695
    %v971 = vunpack.c.h.b16 %v695
    %v972 = vunpack.c.l.b16 %v696
    %v973 = vunpack.c.h.b16 %v696
    %v974 = vunpack.c.l.b16 %v697
    %v975 = vunpack.c.h.b16 %v697
    %v976 = vunpack.c.l.b16 %v698
    %v977 = vunpack.c.h.b16 %v698
    %v978 = vunpack.c.l.b16 %v699
    %v979 = vunpack.c.h.b16 %v699
    %v980 = vunpack.c.l.b16 %v700
    %v981 = vunpack.c.h.b16 %v700
    %v982 = vunpack.c.l.b16 %v701
    %v983 = vunpack.c.h.b16 %v701
    %v984 = vunpack.c.l.b16 %v702
    %v985 = vunpack.c.h.b16 %v702
    %v986 = vunpack.c.l.b16 %v703
    %v987 = vunpack.c.h.b16 %v703
    %v988 = vunpack.c.l.b16 %v704
    %v989 = vunpack.c.h.b16 %v704
    %v990 = vunpack.c.l.b16 %v705
    %v991 = vunpack.c.h.b16 %v705
    %v992 = vunpack.c.l.b16 %v706
    %v993 = vunpack.c.h.b16 %v706
    %v994 = vunpack.c.l.b16 %v707
    %v995 = vunpack.c.h.b16 %v707
    %v996 = vunpack.c.l.b16 %v708
    %v997 = vunpack.c.h.b16 %v708
    %v998 = vunpack.c.l.b16 %v709
    %v999 = vunpack.c.h.b16 %v709
    %v1000 = vunpack.c.l.b16 %v710
    %v1001 = vunpack.c.h.b16 %v710
    %v1002 = vunpack.c.l.b16 %v711
    %v1003 = vunpack.c.h.b16 %v711
    %v1004 = vunpack.c.l.b16 %v712
    %v1005 = vunpack.c.h.b16 %v712
    %v1006 = vunpack.c.l.b16 %v713
    %v1007 = vunpack.c.h.b16 %v713
    %v1008 = vunpack.c.l.b16 %v714
    %v1009 = vunpack.c.h.b16 %v714
    %v1010 = vunpack.c.l.b16 %v715
    %v1011 = vunpack.c.h.b16 %v715
    %v1012 = vunpack.c.l.b16 %v716
    %v1013 = vunpack.c.h.b16 %v716
    %v1014 = vunpack.c.l.b16 %v717
    %v1015 = vunpack.c.h.b16 %v717
    %v1016 = vunpack.c.l.b16 %v718
    %v1017 = vunpack.c.h.b16 %v718
    %v1018 = vunpack.c.l.b16 %v719
    %v1019 = vunpack.c.h.b16 %v719
    %v1020 = vunpack.c.l.b16 %v720
    %v1021 = vunpack.c.h.b16 %v720
    %v1022 = vunpack.c.l.b16 %v721
    %v1023 = vunpack.c.h.b16 %v721
    %v1024 = vunpack.c.l.b16 %v722
    %v1025 = vunpack.c.h.b16 %v722
    %v1026 = vunpack.c.l.b16 %v723
    %v1027 = vunpack.c.h.b16 %v723
    %v1028 = vunpack.c.l.b16 %v724
    %v1029 = vunpack.c.h.b16 %v724
    %v1030 = vunpack.c.l.b16 %v725
    %v1031 = vunpack.c.h.b16 %v725
    %v1032 = vunpack.c.l.b16 %v726
    %v1033 = vunpack.c.h.b16 %v726
    %v1034 = vunpack.c.l.b16 %v727
    %v1035 = vunpack.c.h.b16 %v727
    %v1036 = vunpack.c.l.b16 %v728
    %v1037 = vunpack.c.h.b16 %v728
    %v1038 = vunpack.c.l.b16 %v729
    %v1039 = vunpack.c.h.b16 %v729
    %v1040 = vunpack.c.l.b16 %v730
    %v1041 = vunpack.c.h.b16 %v730
    %v1042 = vunpack.c.l.b16 %v731
    %v1043 = vunpack.c.h.b16 %v731
    %v1044 = vunpack.c.l.b16 %v732
    %v1045 = vunpack.c.h.b16 %v732
    %v1046 = vunpack.c.l.b16 %v733
    %v1047 = vunpack.c.h.b16 %v733
    %v1048 = vunpack.c.l.b16 %v734
    %v1049 = vunpack.c.h.b16 %v734
    %v1050 = vunpack.c.l.b16 %v735
    %v1051 = vunpack.c.h.b16 %v735
    %v1052 = vunpack.c.l.b16 %v736
    %v1053 = vunpack.c.h.b16 %v736
    %v1054 = vunpack.c.l.b16 %v737
    %v1055 = vunpack.c.h.b16 %v737
    %v1056 = vunpack.c.l.b16 %v738
    %v1057 = vunpack.c.h.b16 %v738
    %v1058 = vunpack.c.l.b16 %v739
    %v1059 = vunpack.c.h.b16 %v739
    %v1060 = vunpack.c.l.b16 %v740
    %v1061 = vunpack.c.h.b16 %v740
    %v1062 = vunpack.c.l.b16 %v741
    %v1063 = vunpack.c.h.b16 %v741
    %v1064 = vunpack.c.l.b16 %v742
    %v1065 = vunpack.c.h.b16 %v742
    %v1066 = vunpack.c.l.b16 %v743
    %v1067 = vunpack.c.h.b16 %v743
    %v1068 = vunpack.c.l.b16 %v744
    %v1069 = vunpack.c.h.b16 %v744
    %v1070 = vunpack.c.l.b16 %v745
    %v1071 = vunpack.c.h.b16 %v745
    %v1072 = vunpack.c.l.b16 %v746
    %v1073 = vunpack.c.h.b16 %v746
    %v1074 = vunpack.c.l.b16 %v747
    %v1075 = vunpack.c.h.b16 %v747
    %v1076 = vunpack.c.l.b16 %v748
    %v1077 = vunpack.c.h.b16 %v748
    %v1078 = vunpack.c.l.b16 %v749
    %v1079 = vunpack.c.h.b16 %v749
    %v1080 = vunpack.c.l.b16 %v750
    %v1081 = vunpack.c.h.b16 %v750
    %v1082 = vunpack.c.l.b16 %v751
    %v1083 = vunpack.c.h.b16 %v751
    %v1084 = vunpack.c.l.b16 %v752
    %v1085 = vunpack.c.h.b16 %v752
    %v1086 = vunpack.c.l.b16 %v753
    %v1087 = vunpack.c.h.b16 %v753
    %v1088 = vunpack.c.l.b16 %v754
    %v1089 = vunpack.c.h.b16 %v754
    %v1090 = vunpack.c.l.b16 %v755
    %v1091 = vunpack.c.h.b16 %v755
    %v1092 = vunpack.c.l.b16 %v756
    %v1093 = vunpack.c.h.b16 %v756
    %v1094 = vunpack.c.l.b16 %v757
    %v1095 = vunpack.c.h.b16 %v757
    %v1096 = vunpack.c.l.b16 %v758
    %v1097 = vunpack.c.h.b16 %v758
    %v1098 = vunpack.c.l.b16 %v759
    %v1099 = vunpack.c.h.b16 %v759
    %v1100 = vunpack.c.l.b16 %v760
    %v1101 = vunpack.c.h.b16 %v760
    %v1102 = vunpack.c.l.b16 %v761
    %v1103 = vunpack.c.h.b16 %v761
    %v1104 = vunpack.c.l.b16 %v762
    %v1105 = vunpack.c.h.b16 %v762
    %v1106 = vunpack.c.l.b16 %v763
    %v1107 = vunpack.c.h.b16 %v763
    %v1108 = vunpack.c.l.b16 %v764
    %v1109 = vunpack.c.h.b16 %v764
    %v1110 = vunpack.c.l.b16 %v765
    %v1111 = vunpack.c.h.b16 %v765
    %v1112 = vunpack.c.l.b16 %v766
    %v1113 = vunpack.c.h.b16 %v766
    %v1114 = vunpack.c.l.b16 %v767
    %v1115 = vunpack.c.h.b16 %v767
    %v1116 = vunpack.c.l.b16 %v768
    %v1117 = vunpack.c.h.b16 %v768
    %v1118 = vunpack.c.l.b16 %v769
    %v1119 = vunpack.c.h.b16 %v769
    %v1120 = vunpack.c.l.b16 %v770
    %v1121 = vunpack.c.h.b16 %v770
    %v1122 = vunpack.c.l.b16 %v771
    %v1123 = vunpack.c.h.b16 %v771
    %v1124 = vunpack.c.l.b16 %v772
    %v1125 = vunpack.c.h.b16 %v772
    %v1126 = vunpack.c.l.b16 %v773
    %v1127 = vunpack.c.h.b16 %v773
    %v1128 = vunpack.c.l.b16 %v774
    %v1129 = vunpack.c.h.b16 %v774
    %v1130 = vunpack.c.l.b16 %v775
    %v1131 = vunpack.c.h.b16 %v775
    %v1132 = vunpack.c.l.b16 %v776
    %v1133 = vunpack.c.h.b16 %v776
    %v1134 = vunpack.c.l.b16 %v777
    %v1135 = vunpack.c.h.b16 %v777
    %v1136 = vunpack.c.l.b16 %v778
    %v1137 = vunpack.c.h.b16 %v778
    %v1138 = vunpack.c.l.b16 %v779
    %v1139 = vunpack.c.h.b16 %v779
    %v1140 = vpack.c.b16 %v928, %v924
    %v1141 = vpack.c.b16 %v929, %v925
    %v1142 = vpack.c.b16 %v930, %v926
    %v1143 = vpack.c.b16 %v931, %v927
    %v1144 = vpack.c.b16 %v936, %v932
    %v1145 = vpack.c.b16 %v937, %v933
    %v1146 = vpack.c.b16 %v938, %v934
    %v1147 = vpack.c.b16 %v939, %v935
    %v1148 = vpack.c.b16 %v944, %v940
    %v1149 = vpack.c.b16 %v945, %v941
    %v1150 = vpack.c.b16 %v946, %v942
    %v1151 = vpack.c.b16 %v947, %v943
    %v1152 = vpack.c.b16 %v952, %v948
    %v1153 = vpack.c.b16 %v953, %v949
    %v1154 = vpack.c.b16 %v954, %v950
    %v1155 = vpack.c.b16 %v955, %v951
    %v1156 = vpack.c.b16 %v960, %v956
    %v1157 = vpack.c.b16 %v961, %v957
    %v1158 = vpack.c.b16 %v962, %v958
    %v1159 = vpack.c.b16 %v963, %v959
    %v1160 = vpack.c.b16 %v968, %v964
    %v1161 = vpack.c.b16 %v969, %v965
    %v1162 = vpack.c.b16 %v970, %v966
    %v1163 = vpack.c.b16 %v971, %v967
    %v1164 = vpack.c.b16 %v976, %v972
    %v1165 = vpack.c.b16 %v977, %v973
    %v1166 = vpack.c.b16 %v978, %v974
    %v1167 = vpack.c.b16 %v979, %v975
    %v1168 = vpack.c.b16 %v984, %v980
    %v1169 = vpack.c.b16 %v985, %v981
    %v1170 = vpack.c.b16 %v986, %v982
    %v1171 = vpack.c.b16 %v987, %v983
    %v1172 = vpack.c.b16 %v992, %v988
    %v1173 = vpack.c.b16 %v993, %v989
    %v1174 = vpack.c.b16 %v994, %v990
    %v1175 = vpack.c.b16 %v995, %v991
    %v1176 = vpack.c.b16 %v1000, %v996
    %v1177 = vpack.c.b16 %v1001, %v997
    %v1178 = vpack.c.b16 %v1002, %v998
    %v1179 = vpack.c.b16 %v1003, %v999
    %v1180 = vpack.c.b16 %v1008, %v1004
    %v1181 = vpack.c.b16 %v1009, %v1005
    %v1182 = vpack.c.b16 %v1010, %v1006
    %v1183 = vpack.c.b16 %v1011, %v1007
    %v1184 = vpack.c.b16 %v1016, %v1012
    %v1185 = vpack.c.b16 %v1017, %v1013
    %v1186 = vpack.c.b16 %v1018, %v1014
    %v1187 = vpack.c.b16 %v1019, %v1015
    %v1188 = vpack.c.b16 %v1024, %v1020
    %v1189 = vpack.c.b16 %v1025, %v1021
    %v1190 = vpack.c.b16 %v1026, %v1022
    %v1191 = vpack.c.b16 %v1027, %v1023
    %v1192 = vpack.c.b16 %v1032, %v1028
    %v1193 = vpack.c.b16 %v1033, %v1029
    %v1194 = vpack.c.b16 %v1034, %v1030
    %v1195 = vpack.c.b16 %v1035, %v1031
    %v1196 = vpack.c.b16 %v1040, %v1036
    %v1197 = vpack.c.b16 %v1041, %v1037
    %v1198 = vpack.c.b16 %v1042, %v1038
    %v1199 = vpack.c.b16 %v1043, %v1039
    %v1200 = vpack.c.b16 %v1048, %v1044
    %v1201 = vpack.c.b16 %v1049, %v1045
    %v1202 = vpack.c.b16 %v1050, %v1046
    %v1203 = vpack.c.b16 %v1051, %v1047
    %v1204 = vpack.c.b16 %v1056, %v1052
    %v1205 = vpack.c.b16 %v1057, %v1053
    %v1206 = vpack.c.b16 %v1058, %v1054
    %v1207 = vpack.c.b16 %v1059, %v1055
    %v1208 = vpack.c.b16 %v1064, %v1060
    %v1209 = vpack.c.b16 %v1065, %v1061
    %v1210 = vpack.c.b16 %v1066, %v1062
    %v1211 = vpack.c.b16 %v1067, %v1063
    %v1212 = vpack.c.b16 %v1072, %v1068
    %v1213 = vpack.c.b16 %v1073, %v1069
    %v1214 = vpack.c.b16 %v1074, %v1070
    %v1215 = vpack.c.b16 %v1075, %v1071
    %v1216 = vpack.c.b16 %v1080, %v1076
    %v1217 = vpack.c.b16 %v1081, %v1077
    %v1218 = vpack.c.b16 %v1082, %v1078
    %v1219 = vpack.c.b16 %v1083, %v1079
    %v1220 = vpack.c.b16 %v1088, %v1084
    %v1221 = vpack.c.b16 %v1089, %v1085
    %v1222 = vpack.c.b16 %v1090, %v1086
    %v1223 = vpack.c.b16 %v1091, %v1087
    %v1224 = vpack.c.b16 %v1096, %v1092
    %v1225 = vpack.c.b16 %v1097, %v1093
    %v1226 = vpack.c.b16 %v1098, %v1094
    %v1227 = vpack.c.b16 %v1099, %v1095
    %v1228 = vpack.c.b16 %v1104, %v1100
    %v1229 = vpack.c.b16 %v1105, %v1101
    %v1230 = vpack.c.b16 %v1106, %v1102
    %v1231 = vpack.c.b16 %v1107, %v1103
    %v1232 = vpack.c.b16 %v1112, %v1108
    %v1233 = vpack.c.b16 %v1113, %v1109
    %v1234 = vpack.c.b16 %v1114, %v1110
    %v1235 = vpack.c.b16 %v1115, %v1111
    %v1236 = vpack.c.b16 %v1120, %v1116
    %v1237 = vpack.c.b16 %v1121, %v1117
    %v1238 = vpack.c.b16 %v1122, %v1118
    %v1239 = vpack.c.b16 %v1123, %v1119
    %v1240 = vpack.c.b16 %v1128, %v1124
    %v1241 = vpack.c.b16 %v1129, %v1125
    %v1242 = vpack.c.b16 %v1130, %v1126
    %v1243 = vpack.c.b16 %v1131, %v1127
    %v1244 = vpack.c.b16 %v1136, %v1132
    %v1245 = vpack.c.b16 %v1137, %v1133
    %v1246 = vpack.c.b16 %v1138, %v1134
    %v1247 = vpack.c.b16 %v1139, %v1135
    %vm1356 = vcmask 392192
    %v1358 = vsel %vm1356, %v812, 0
    %1360 = vmatpush.bf16.msra.mxu0 %v1168
    %1361 = vmatpush.bf16.msra.mxu0 %v1164
    %1362 = vmatpush.bf16.msra.mxu0 %v1160
    %1363 = vmatpush.bf16.msra.mxu0 %v1156
    %1364 = vmatpush.bf16.msra.mxu0 %v1152
    %1365 = vmatpush.bf16.msra.mxu0 %v1148
    %1366 = vmatpush.bf16.msra.mxu0 %v1144
    %1367 = vmatpush.bf16.msra.mxu0 %v1140
    %1368 = vmatmul.bf16.gmra.mxu0 %v809
    %v1369 = vpop.f32.mrf.mxu0
    %v1370 = vadd.f32 0.0, %v1369
    %v1371 = vpop.f32.mrf.mxu0
    %1372 = vdwg.mxu0
    %1373 = vmatpush.bf16.msra.mxu0 %v1200
    %1374 = vmatpush.bf16.msra.mxu0 %v1196
    %1375 = vmatpush.bf16.msra.mxu0 %v1192
    %1376 = vmatpush.bf16.msra.mxu0 %v1188
    %1377 = vmatpush.bf16.msra.mxu0 %v1184
    %1378 = vmatpush.bf16.msra.mxu0 %v1180
    %1379 = vmatpush.bf16.msra.mxu0 %v1176
    %1380 = vmatpush.bf16.msra.mxu0 %v1172
    %1381 = vmatmul.bf16.gmra.mxu0 %v810
    %v1382 = vpop.f32.mrf.mxu0
    %v1383 = vadd.f32 %v1370, %v1382
    %v1384 = vpop.f32.mrf.mxu0
    %1385 = vdwg.mxu0
    %1386 = vmatpush.bf16.msra.mxu0 %v1232
    %1387 = vmatpush.bf16.msra.mxu0 %v1228
    %1388 = vmatpush.bf16.msra.mxu0 %v1224
    %1389 = vmatpush.bf16.msra.mxu0 %v1220
    %1390 = vmatpush.bf16.msra.mxu0 %v1216
    %1391 = vmatpush.bf16.msra.mxu0 %v1212
    %1392 = vmatpush.bf16.msra.mxu0 %v1208
    %1393 = vmatpush.bf16.msra.mxu0 %v1204
    %1394 = vmatmul.bf16.gmra.mxu0 %v811
    %v1395 = vpop.f32.mrf.mxu0
    %v1396 = vadd.f32 %v1383, %v1395
    %v1397 = vpop.f32.mrf.mxu0
    %1398 = vdwg.mxu0
    %1399 = vmatpush.bf16.msra.mxu0 0
    %1400 = vmatpush.bf16.msra.mxu0 0
    %1401 = vmatpush.bf16.msra.mxu0 0
    %1402 = vmatpush.bf16.msra.mxu0 0
    %1403 = vmatpush.bf16.msra.mxu0 0
    %1404 = vmatpush.bf16.msra.mxu0 %v1244
    %1405 = vmatpush.bf16.msra.mxu0 %v1240
    %1406 = vmatpush.bf16.msra.mxu0 %v1236
    %1407 = vmatmul.bf16.gmra.mxu0 %v1358
    %v1408 = vpop.f32.mrf.mxu0
    %v1409 = vadd.f32 %v1396, %v1408
    %v1410 = vpop.f32.mrf.mxu0
    %1411 = vdwg.mxu0
    %1412 = vmatpush.bf16.msra.mxu0 %v1169
    %1413 = vmatpush.bf16.msra.mxu0 %v1165
    %1414 = vmatpush.bf16.msra.mxu0 %v1161
    %1415 = vmatpush.bf16.msra.mxu0 %v1157
    %1416 = vmatpush.bf16.msra.mxu0 %v1153
    %1417 = vmatpush.bf16.msra.mxu0 %v1149
    %1418 = vmatpush.bf16.msra.mxu0 %v1145
    %1419 = vmatpush.bf16.msra.mxu0 %v1141
    %1420 = vmatmul.bf16.gmra.mxu0 %v809
    %v1421 = vpop.f32.mrf.mxu0
    %v1422 = vadd.f32 0.0, %v1421
    %v1423 = vpop.f32.mrf.mxu0
    %1424 = vdwg.mxu0
    %1425 = vmatpush.bf16.msra.mxu0 %v1201
    %1426 = vmatpush.bf16.msra.mxu0 %v1197
    %1427 = vmatpush.bf16.msra.mxu0 %v1193
    %1428 = vmatpush.bf16.msra.mxu0 %v1189
    %1429 = vmatpush.bf16.msra.mxu0 %v1185
    %1430 = vmatpush.bf16.msra.mxu0 %v1181
    %1431 = vmatpush.bf16.msra.mxu0 %v1177
    %1432 = vmatpush.bf16.msra.mxu0 %v1173
    %1433 = vmatmul.bf16.gmra.mxu0 %v810
    %v1434 = vpop.f32.mrf.mxu0
    %v1435 = vadd.f32 %v1422, %v1434
    %v1436 = vpop.f32.mrf.mxu0
    %1437 = vdwg.mxu0
    %1438 = vmatpush.bf16.msra.mxu0 %v1233
    %1439 = vmatpush.bf16.msra.mxu0 %v1229
    %1440 = vmatpush.bf16.msra.mxu0 %v1225
    %1441 = vmatpush.bf16.msra.mxu0 %v1221
    %1442 = vmatpush.bf16.msra.mxu0 %v1217
    %1443 = vmatpush.bf16.msra.mxu0 %v1213
    %1444 = vmatpush.bf16.msra.mxu0 %v1209
    %1445 = vmatpush.bf16.msra.mxu0 %v1205
    %1446 = vmatmul.bf16.gmra.mxu0 %v811
    %v1447 = vpop.f32.mrf.mxu0
    %v1448 = vadd.f32 %v1435, %v1447
    %v1449 = vpop.f32.mrf.mxu0
    %1450 = vdwg.mxu0
    %1451 = vmatpush.bf16.msra.mxu0 0
    %1452 = vmatpush.bf16.msra.mxu0 0
    %1453 = vmatpush.bf16.msra.mxu0 0
    %1454 = vmatpush.bf16.msra.mxu0 0
    %1455 = vmatpush.bf16.msra.mxu0 0
    %1456 = vmatpush.bf16.msra.mxu0 %v1245
    %1457 = vmatpush.bf16.msra.mxu0 %v1241
    %1458 = vmatpush.bf16.msra.mxu0 %v1237
    %1459 = vmatmul.bf16.gmra.mxu0 %v1358
    %v1460 = vpop.f32.mrf.mxu0
    %v1461 = vadd.f32 %v1448, %v1460
    %v1462 = vpop.f32.mrf.mxu0
    %1463 = vdwg.mxu0
    %1464 = vmatpush.bf16.msra.mxu0 %v1170
    %1465 = vmatpush.bf16.msra.mxu0 %v1166
    %1466 = vmatpush.bf16.msra.mxu0 %v1162
    %1467 = vmatpush.bf16.msra.mxu0 %v1158
    %1468 = vmatpush.bf16.msra.mxu0 %v1154
    %1469 = vmatpush.bf16.msra.mxu0 %v1150
    %1470 = vmatpush.bf16.msra.mxu0 %v1146
    %1471 = vmatpush.bf16.msra.mxu0 %v1142
    %1472 = vmatmul.bf16.gmra.mxu0 %v809
    %v1473 = vpop.f32.mrf.mxu0
    %v1474 = vadd.f32 0.0, %v1473
    %v1475 = vpop.f32.mrf.mxu0
    %1476 = vdwg.mxu0
    %1477 = vmatpush.bf16.msra.mxu0 %v1202
    %1478 = vmatpush.bf16.msra.mxu0 %v1198
    %1479 = vmatpush.bf16.msra.mxu0 %v1194
    %1480 = vmatpush.bf16.msra.mxu0 %v1190
    %1481 = vmatpush.bf16.msra.mxu0 %v1186
    %1482 = vmatpush.bf16.msra.mxu0 %v1182
    %1483 = vmatpush.bf16.msra.mxu0 %v1178
    %1484 = vmatpush.bf16.msra.mxu0 %v1174
    %1485 = vmatmul.bf16.gmra.mxu0 %v810
    %v1486 = vpop.f32.mrf.mxu0
    %v1487 = vadd.f32 %v1474, %v1486
    %v1488 = vpop.f32.mrf.mxu0
    %1489 = vdwg.mxu0
    %1490 = vmatpush.bf16.msra.mxu0 %v1234
    %1491 = vmatpush.bf16.msra.mxu0 %v1230
    %1492 = vmatpush.bf16.msra.mxu0 %v1226
    %1493 = vmatpush.bf16.msra.mxu0 %v1222
    %1494 = vmatpush.bf16.msra.mxu0 %v1218
    %1495 = vmatpush.bf16.msra.mxu0 %v1214
    %1496 = vmatpush.bf16.msra.mxu0 %v1210
    %1497 = vmatpush.bf16.msra.mxu0 %v1206
    %1498 = vmatmul.bf16.gmra.mxu0 %v811
    %v1499 = vpop.f32.mrf.mxu0
    %v1500 = vadd.f32 %v1487, %v1499
    %v1501 = vpop.f32.mrf.mxu0
    %1502 = vdwg.mxu0
    %1503 = vmatpush.bf16.msra.mxu0 0
    %1504 = vmatpush.bf16.msra.mxu0 0
    %1505 = vmatpush.bf16.msra.mxu0 0
    %1506 = vmatpush.bf16.msra.mxu0 0
    %1507 = vmatpush.bf16.msra.mxu0 0
    %1508 = vmatpush.bf16.msra.mxu0 %v1246
    %1509 = vmatpush.bf16.msra.mxu0 %v1242
    %1510 = vmatpush.bf16.msra.mxu0 %v1238
    %1511 = vmatmul.bf16.gmra.mxu0 %v1358
    %v1512 = vpop.f32.mrf.mxu0
    %v1513 = vadd.f32 %v1500, %v1512
    %v1514 = vpop.f32.mrf.mxu0
    %1515 = vdwg.mxu0
    %1516 = vmatpush.bf16.msra.mxu0 %v1171
    %1517 = vmatpush.bf16.msra.mxu0 %v1167
    %1518 = vmatpush.bf16.msra.mxu0 %v1163
    %1519 = vmatpush.bf16.msra.mxu0 %v1159
    %1520 = vmatpush.bf16.msra.mxu0 %v1155
    %1521 = vmatpush.bf16.msra.mxu0 %v1151
    %1522 = vmatpush.bf16.msra.mxu0 %v1147
    %1523 = vmatpush.bf16.msra.mxu0 %v1143
    %1524 = vmatmul.bf16.gmra.mxu0 %v809
    %v1525 = vpop.f32.mrf.mxu0
    %v1526 = vadd.f32 0.0, %v1525
    %v1527 = vpop.f32.mrf.mxu0
    %1528 = vdwg.mxu0
    %1529 = vmatpush.bf16.msra.mxu0 %v1203
    %1530 = vmatpush.bf16.msra.mxu0 %v1199
    %1531 = vmatpush.bf16.msra.mxu0 %v1195
    %1532 = vmatpush.bf16.msra.mxu0 %v1191
    %1533 = vmatpush.bf16.msra.mxu0 %v1187
    %1534 = vmatpush.bf16.msra.mxu0 %v1183
    %1535 = vmatpush.bf16.msra.mxu0 %v1179
    %1536 = vmatpush.bf16.msra.mxu0 %v1175
    %1537 = vmatmul.bf16.gmra.mxu0 %v810
    %v1538 = vpop.f32.mrf.mxu0
    %v1539 = vadd.f32 %v1526, %v1538
    %v1540 = vpop.f32.mrf.mxu0
    %1541 = vdwg.mxu0
    %1542 = vmatpush.bf16.msra.mxu0 %v1235
    %1543 = vmatpush.bf16.msra.mxu0 %v1231
    %1544 = vmatpush.bf16.msra.mxu0 %v1227
    %1545 = vmatpush.bf16.msra.mxu0 %v1223
    %1546 = vmatpush.bf16.msra.mxu0 %v1219
    %1547 = vmatpush.bf16.msra.mxu0 %v1215
    %1548 = vmatpush.bf16.msra.mxu0 %v1211
    %1549 = vmatpush.bf16.msra.mxu0 %v1207
    %1550 = vmatmul.bf16.gmra.mxu0 %v811
    %v1551 = vpop.f32.mrf.mxu0
    %v1552 = vadd.f32 %v1539, %v1551
    %v1553 = vpop.f32.mrf.mxu0
    %1554 = vdwg.mxu0
    %1555 = vmatpush.bf16.msra.mxu0 0
    %1556 = vmatpush.bf16.msra.mxu0 0
    %1557 = vmatpush.bf16.msra.mxu0 0
    %1558 = vmatpush.bf16.msra.mxu0 0
    %1559 = vmatpush.bf16.msra.mxu0 0
    %1560 = vmatpush.bf16.msra.mxu0 %v1247
    %1561 = vmatpush.bf16.msra.mxu0 %v1243
    %1562 = vmatpush.bf16.msra.mxu0 %v1239
    %1563 = vmatmul.bf16.gmra.mxu0 %v1358
    %v1564 = vpop.f32.mrf.mxu0
    %v1565 = vadd.f32 %v1552, %v1564
    %v1566 = vpop.f32.mrf.mxu0
    %1567 = vdwg.mxu0
    %v1576 = vunpack.c.l.b16 %v664
    %v1577 = vunpack.c.l.b16 %v665
    %v1578 = vunpack.c.l.b16 %v666
    %v1579 = vunpack.c.l.b16 %v667
    %v1580 = vunpack.c.l.b16 %v668
    %v1581 = vunpack.c.l.b16 %v669
    %v1582 = vunpack.c.l.b16 %v670
    %v1583 = vunpack.c.l.b16 %v671
    %v1584 = vsel %vm804, %v1580, %v1576
    %v1585 = vsel %vm804, %v1581, %v1577
    %v1586 = vsel %vm804, %v1582, %v1578
    %v1587 = vsel %vm804, %v1583, %v1579
    %v1588 = vpack.c.b16 %v1584, %v1584
    %v1589 = vpack.c.b16 %v1585, %v1585
    %v1590 = vpack.c.b16 %v1586, %v1586
    %v1591 = vpack.c.b16 %v1587, %v1587
    %v1703 = vunpack.c.l.b16 %v556
    %v1704 = vunpack.c.h.b16 %v556
    %v1705 = vunpack.c.l.b16 %v557
    %v1706 = vunpack.c.h.b16 %v557
    %v1707 = vunpack.c.l.b16 %v558
    %v1708 = vunpack.c.h.b16 %v558
    %v1709 = vunpack.c.l.b16 %v559
    %v1710 = vunpack.c.h.b16 %v559
    %v1711 = vunpack.c.l.b16 %v560
    %v1712 = vunpack.c.h.b16 %v560
    %v1713 = vunpack.c.l.b16 %v561
    %v1714 = vunpack.c.h.b16 %v561
    %v1715 = vunpack.c.l.b16 %v562
    %v1716 = vunpack.c.h.b16 %v562
    %v1717 = vunpack.c.l.b16 %v563
    %v1718 = vunpack.c.h.b16 %v563
    %v1719 = vunpack.c.l.b16 %v564
    %v1720 = vunpack.c.h.b16 %v564
    %v1721 = vunpack.c.l.b16 %v565
    %v1722 = vunpack.c.h.b16 %v565
    %v1723 = vunpack.c.l.b16 %v566
    %v1724 = vunpack.c.h.b16 %v566
    %v1725 = vunpack.c.l.b16 %v567
    %v1726 = vunpack.c.h.b16 %v567
    %v1727 = vunpack.c.l.b16 %v568
    %v1728 = vunpack.c.h.b16 %v568
    %v1729 = vunpack.c.l.b16 %v569
    %v1730 = vunpack.c.h.b16 %v569
    %v1731 = vunpack.c.l.b16 %v570
    %v1732 = vunpack.c.h.b16 %v570
    %v1733 = vunpack.c.l.b16 %v571
    %v1734 = vunpack.c.h.b16 %v571
    %v1735 = vunpack.c.l.b16 %v572
    %v1736 = vunpack.c.h.b16 %v572
    %v1737 = vunpack.c.l.b16 %v573
    %v1738 = vunpack.c.h.b16 %v573
    %v1739 = vunpack.c.l.b16 %v574
    %v1740 = vunpack.c.h.b16 %v574
    %v1741 = vunpack.c.l.b16 %v575
    %v1742 = vunpack.c.h.b16 %v575
    %v1743 = vunpack.c.l.b16 %v576
    %v1744 = vunpack.c.h.b16 %v576
    %v1745 = vunpack.c.l.b16 %v577
    %v1746 = vunpack.c.h.b16 %v577
    %v1747 = vunpack.c.l.b16 %v578
    %v1748 = vunpack.c.h.b16 %v578
    %v1749 = vunpack.c.l.b16 %v579
    %v1750 = vunpack.c.h.b16 %v579
    %v1751 = vunpack.c.l.b16 %v580
    %v1752 = vunpack.c.h.b16 %v580
    %v1753 = vunpack.c.l.b16 %v581
    %v1754 = vunpack.c.h.b16 %v581
    %v1755 = vunpack.c.l.b16 %v582
    %v1756 = vunpack.c.h.b16 %v582
    %v1757 = vunpack.c.l.b16 %v583
    %v1758 = vunpack.c.h.b16 %v583
    %v1759 = vunpack.c.l.b16 %v584
    %v1760 = vunpack.c.h.b16 %v584
    %v1761 = vunpack.c.l.b16 %v585
    %v1762 = vunpack.c.h.b16 %v585
    %v1763 = vunpack.c.l.b16 %v586
    %v1764 = vunpack.c.h.b16 %v586
    %v1765 = vunpack.c.l.b16 %v587
    %v1766 = vunpack.c.h.b16 %v587
    %v1767 = vunpack.c.l.b16 %v588
    %v1768 = vunpack.c.h.b16 %v588
    %v1769 = vunpack.c.l.b16 %v589
    %v1770 = vunpack.c.h.b16 %v589
    %v1771 = vunpack.c.l.b16 %v590
    %v1772 = vunpack.c.h.b16 %v590
    %v1773 = vunpack.c.l.b16 %v591
    %v1774 = vunpack.c.h.b16 %v591
    %v1775 = vunpack.c.l.b16 %v592
    %v1776 = vunpack.c.h.b16 %v592
    %v1777 = vunpack.c.l.b16 %v593
    %v1778 = vunpack.c.h.b16 %v593
    %v1779 = vunpack.c.l.b16 %v594
    %v1780 = vunpack.c.h.b16 %v594
    %v1781 = vunpack.c.l.b16 %v595
    %v1782 = vunpack.c.h.b16 %v595
    %v1783 = vunpack.c.l.b16 %v596
    %v1784 = vunpack.c.h.b16 %v596
    %v1785 = vunpack.c.l.b16 %v597
    %v1786 = vunpack.c.h.b16 %v597
    %v1787 = vunpack.c.l.b16 %v598
    %v1788 = vunpack.c.h.b16 %v598
    %v1789 = vunpack.c.l.b16 %v599
    %v1790 = vunpack.c.h.b16 %v599
    %v1791 = vunpack.c.l.b16 %v600
    %v1792 = vunpack.c.h.b16 %v600
    %v1793 = vunpack.c.l.b16 %v601
    %v1794 = vunpack.c.h.b16 %v601
    %v1795 = vunpack.c.l.b16 %v602
    %v1796 = vunpack.c.h.b16 %v602
    %v1797 = vunpack.c.l.b16 %v603
    %v1798 = vunpack.c.h.b16 %v603
    %v1799 = vunpack.c.l.b16 %v604
    %v1800 = vunpack.c.h.b16 %v604
    %v1801 = vunpack.c.l.b16 %v605
    %v1802 = vunpack.c.h.b16 %v605
    %v1803 = vunpack.c.l.b16 %v606
    %v1804 = vunpack.c.h.b16 %v606
    %v1805 = vunpack.c.l.b16 %v607
    %v1806 = vunpack.c.h.b16 %v607
    %v1807 = vunpack.c.l.b16 %v608
    %v1808 = vunpack.c.h.b16 %v608
    %v1809 = vunpack.c.l.b16 %v609
    %v1810 = vunpack.c.h.b16 %v609
    %v1811 = vunpack.c.l.b16 %v610
    %v1812 = vunpack.c.h.b16 %v610
    %v1813 = vunpack.c.l.b16 %v611
    %v1814 = vunpack.c.h.b16 %v611
    %v1815 = vunpack.c.l.b16 %v612
    %v1816 = vunpack.c.h.b16 %v612
    %v1817 = vunpack.c.l.b16 %v613
    %v1818 = vunpack.c.h.b16 %v613
    %v1819 = vunpack.c.l.b16 %v614
    %v1820 = vunpack.c.h.b16 %v614
    %v1821 = vunpack.c.l.b16 %v615
    %v1822 = vunpack.c.h.b16 %v615
    %v1823 = vunpack.c.l.b16 %v616
    %v1824 = vunpack.c.h.b16 %v616
    %v1825 = vunpack.c.l.b16 %v617
    %v1826 = vunpack.c.h.b16 %v617
    %v1827 = vunpack.c.l.b16 %v618
    %v1828 = vunpack.c.h.b16 %v618
    %v1829 = vunpack.c.l.b16 %v619
    %v1830 = vunpack.c.h.b16 %v619
    %v1831 = vunpack.c.l.b16 %v620
    %v1832 = vunpack.c.h.b16 %v620
    %v1833 = vunpack.c.l.b16 %v621
    %v1834 = vunpack.c.h.b16 %v621
    %v1835 = vunpack.c.l.b16 %v622
    %v1836 = vunpack.c.h.b16 %v622
    %v1837 = vunpack.c.l.b16 %v623
    %v1838 = vunpack.c.h.b16 %v623
    %v1839 = vunpack.c.l.b16 %v624
    %v1840 = vunpack.c.h.b16 %v624
    %v1841 = vunpack.c.l.b16 %v625
    %v1842 = vunpack.c.h.b16 %v625
    %v1843 = vunpack.c.l.b16 %v626
    %v1844 = vunpack.c.h.b16 %v626
    %v1845 = vunpack.c.l.b16 %v627
    %v1846 = vunpack.c.h.b16 %v627
    %v1847 = vunpack.c.l.b16 %v628
    %v1848 = vunpack.c.h.b16 %v628
    %v1849 = vunpack.c.l.b16 %v629
    %v1850 = vunpack.c.h.b16 %v629
    %v1851 = vunpack.c.l.b16 %v630
    %v1852 = vunpack.c.h.b16 %v630
    %v1853 = vunpack.c.l.b16 %v631
    %v1854 = vunpack.c.h.b16 %v631
    %v1855 = vunpack.c.l.b16 %v632
    %v1856 = vunpack.c.h.b16 %v632
    %v1857 = vunpack.c.l.b16 %v633
    %v1858 = vunpack.c.h.b16 %v633
    %v1859 = vunpack.c.l.b16 %v634
    %v1860 = vunpack.c.h.b16 %v634
    %v1861 = vunpack.c.l.b16 %v635
    %v1862 = vunpack.c.h.b16 %v635
    %v1863 = vunpack.c.l.b16 %v636
    %v1864 = vunpack.c.h.b16 %v636
    %v1865 = vunpack.c.l.b16 %v637
    %v1866 = vunpack.c.h.b16 %v637
    %v1867 = vunpack.c.l.b16 %v638
    %v1868 = vunpack.c.h.b16 %v638
    %v1869 = vunpack.c.l.b16 %v639
    %v1870 = vunpack.c.h.b16 %v639
    %v1871 = vunpack.c.l.b16 %v640
    %v1872 = vunpack.c.h.b16 %v640
    %v1873 = vunpack.c.l.b16 %v641
    %v1874 = vunpack.c.h.b16 %v641
    %v1875 = vunpack.c.l.b16 %v642
    %v1876 = vunpack.c.h.b16 %v642
    %v1877 = vunpack.c.l.b16 %v643
    %v1878 = vunpack.c.h.b16 %v643
    %v1879 = vunpack.c.l.b16 %v644
    %v1880 = vunpack.c.h.b16 %v644
    %v1881 = vunpack.c.l.b16 %v645
    %v1882 = vunpack.c.h.b16 %v645
    %v1883 = vunpack.c.l.b16 %v646
    %v1884 = vunpack.c.h.b16 %v646
    %v1885 = vunpack.c.l.b16 %v647
    %v1886 = vunpack.c.h.b16 %v647
    %v1887 = vunpack.c.l.b16 %v648
    %v1888 = vunpack.c.h.b16 %v648
    %v1889 = vunpack.c.l.b16 %v649
    %v1890 = vunpack.c.h.b16 %v649
    %v1891 = vunpack.c.l.b16 %v650
    %v1892 = vunpack.c.h.b16 %v650
    %v1893 = vunpack.c.l.b16 %v651
    %v1894 = vunpack.c.h.b16 %v651
    %v1895 = vunpack.c.l.b16 %v652
    %v1896 = vunpack.c.h.b16 %v652
    %v1897 = vunpack.c.l.b16 %v653
    %v1898 = vunpack.c.h.b16 %v653
    %v1899 = vunpack.c.l.b16 %v654
    %v1900 = vunpack.c.h.b16 %v654
    %v1901 = vunpack.c.l.b16 %v655
    %v1902 = vunpack.c.h.b16 %v655
    %v1903 = vunpack.c.l.b16 %v656
    %v1904 = vunpack.c.h.b16 %v656
    %v1905 = vunpack.c.l.b16 %v657
    %v1906 = vunpack.c.h.b16 %v657
    %v1907 = vunpack.c.l.b16 %v658
    %v1908 = vunpack.c.h.b16 %v658
    %v1909 = vunpack.c.l.b16 %v659
    %v1910 = vunpack.c.h.b16 %v659
    %v1911 = vunpack.c.l.b16 %v660
    %v1912 = vunpack.c.h.b16 %v660
    %v1913 = vunpack.c.l.b16 %v661
    %v1914 = vunpack.c.h.b16 %v661
    %v1915 = vunpack.c.l.b16 %v662
    %v1916 = vunpack.c.h.b16 %v662
    %v1917 = vunpack.c.l.b16 %v663
    %v1918 = vunpack.c.h.b16 %v663
    %v1919 = vpack.c.b16 %v1707, %v1703
    %v1920 = vpack.c.b16 %v1708, %v1704
    %v1921 = vpack.c.b16 %v1709, %v1705
    %v1922 = vpack.c.b16 %v1710, %v1706
    %v1923 = vpack.c.b16 %v1715, %v1711
    %v1924 = vpack.c.b16 %v1716, %v1712
    %v1925 = vpack.c.b16 %v1717, %v1713
    %v1926 = vpack.c.b16 %v1718, %v1714
    %v1927 = vpack.c.b16 %v1723, %v1719
    %v1928 = vpack.c.b16 %v1724, %v1720
    %v1929 = vpack.c.b16 %v1725, %v1721
    %v1930 = vpack.c.b16 %v1726, %v1722
    %v1931 = vpack.c.b16 %v1731, %v1727
    %v1932 = vpack.c.b16 %v1732, %v1728
    %v1933 = vpack.c.b16 %v1733, %v1729
    %v1934 = vpack.c.b16 %v1734, %v1730
    %v1935 = vpack.c.b16 %v1739, %v1735
    %v1936 = vpack.c.b16 %v1740, %v1736
    %v1937 = vpack.c.b16 %v1741, %v1737
    %v1938 = vpack.c.b16 %v1742, %v1738
    %v1939 = vpack.c.b16 %v1747, %v1743
    %v1940 = vpack.c.b16 %v1748, %v1744
    %v1941 = vpack.c.b16 %v1749, %v1745
    %v1942 = vpack.c.b16 %v1750, %v1746
    %v1943 = vpack.c.b16 %v1755, %v1751
    %v1944 = vpack.c.b16 %v1756, %v1752
    %v1945 = vpack.c.b16 %v1757, %v1753
    %v1946 = vpack.c.b16 %v1758, %v1754
    %v1947 = vpack.c.b16 %v1763, %v1759
    %v1948 = vpack.c.b16 %v1764, %v1760
    %v1949 = vpack.c.b16 %v1765, %v1761
    %v1950 = vpack.c.b16 %v1766, %v1762
    %v1951 = vpack.c.b16 %v1771, %v1767
    %v1952 = vpack.c.b16 %v1772, %v1768
    %v1953 = vpack.c.b16 %v1773, %v1769
    %v1954 = vpack.c.b16 %v1774, %v1770
    %v1955 = vpack.c.b16 %v1779, %v1775
    %v1956 = vpack.c.b16 %v1780, %v1776
    %v1957 = vpack.c.b16 %v1781, %v1777
    %v1958 = vpack.c.b16 %v1782, %v1778
    %v1959 = vpack.c.b16 %v1787, %v1783
    %v1960 = vpack.c.b16 %v1788, %v1784
    %v1961 = vpack.c.b16 %v1789, %v1785
    %v1962 = vpack.c.b16 %v1790, %v1786
    %v1963 = vpack.c.b16 %v1795, %v1791
    %v1964 = vpack.c.b16 %v1796, %v1792
    %v1965 = vpack.c.b16 %v1797, %v1793
    %v1966 = vpack.c.b16 %v1798, %v1794
    %v1967 = vpack.c.b16 %v1803, %v1799
    %v1968 = vpack.c.b16 %v1804, %v1800
    %v1969 = vpack.c.b16 %v1805, %v1801
    %v1970 = vpack.c.b16 %v1806, %v1802
    %v1971 = vpack.c.b16 %v1811, %v1807
    %v1972 = vpack.c.b16 %v1812, %v1808
    %v1973 = vpack.c.b16 %v1813, %v1809
    %v1974 = vpack.c.b16 %v1814, %v1810
    %v1975 = vpack.c.b16 %v1819, %v1815
    %v1976 = vpack.c.b16 %v1820, %v1816
    %v1977 = vpack.c.b16 %v1821, %v1817
    %v1978 = vpack.c.b16 %v1822, %v1818
    %v1979 = vpack.c.b16 %v1827, %v1823
    %v1980 = vpack.c.b16 %v1828, %v1824
    %v1981 = vpack.c.b16 %v1829, %v1825
    %v1982 = vpack.c.b16 %v1830, %v1826
    %v1983 = vpack.c.b16 %v1835, %v1831
    %v1984 = vpack.c.b16 %v1836, %v1832
    %v1985 = vpack.c.b16 %v1837, %v1833
    %v1986 = vpack.c.b16 %v1838, %v1834
    %v1987 = vpack.c.b16 %v1843, %v1839
    %v1988 = vpack.c.b16 %v1844, %v1840
    %v1989 = vpack.c.b16 %v1845, %v1841
    %v1990 = vpack.c.b16 %v1846, %v1842
    %v1991 = vpack.c.b16 %v1851, %v1847
    %v1992 = vpack.c.b16 %v1852, %v1848
    %v1993 = vpack.c.b16 %v1853, %v1849
    %v1994 = vpack.c.b16 %v1854, %v1850
    %v1995 = vpack.c.b16 %v1859, %v1855
    %v1996 = vpack.c.b16 %v1860, %v1856
    %v1997 = vpack.c.b16 %v1861, %v1857
    %v1998 = vpack.c.b16 %v1862, %v1858
    %v1999 = vpack.c.b16 %v1867, %v1863
    %v2000 = vpack.c.b16 %v1868, %v1864
    %v2001 = vpack.c.b16 %v1869, %v1865
    %v2002 = vpack.c.b16 %v1870, %v1866
    %v2003 = vpack.c.b16 %v1875, %v1871
    %v2004 = vpack.c.b16 %v1876, %v1872
    %v2005 = vpack.c.b16 %v1877, %v1873
    %v2006 = vpack.c.b16 %v1878, %v1874
    %v2007 = vpack.c.b16 %v1883, %v1879
    %v2008 = vpack.c.b16 %v1884, %v1880
    %v2009 = vpack.c.b16 %v1885, %v1881
    %v2010 = vpack.c.b16 %v1886, %v1882
    %v2011 = vpack.c.b16 %v1891, %v1887
    %v2012 = vpack.c.b16 %v1892, %v1888
    %v2013 = vpack.c.b16 %v1893, %v1889
    %v2014 = vpack.c.b16 %v1894, %v1890
    %v2015 = vpack.c.b16 %v1899, %v1895
    %v2016 = vpack.c.b16 %v1900, %v1896
    %v2017 = vpack.c.b16 %v1901, %v1897
    %v2018 = vpack.c.b16 %v1902, %v1898
    %v2019 = vpack.c.b16 %v1907, %v1903
    %v2020 = vpack.c.b16 %v1908, %v1904
    %v2021 = vpack.c.b16 %v1909, %v1905
    %v2022 = vpack.c.b16 %v1910, %v1906
    %v2023 = vpack.c.b16 %v1915, %v1911
    %v2024 = vpack.c.b16 %v1916, %v1912
    %v2025 = vpack.c.b16 %v1917, %v1913
    %v2026 = vpack.c.b16 %v1918, %v1914
    %v2136 = vsel %vm1356, %v1591, 0
    %2138 = vmatpush.bf16.msra.mxu0 %v1947
    %2139 = vmatpush.bf16.msra.mxu0 %v1943
    %2140 = vmatpush.bf16.msra.mxu0 %v1939
    %2141 = vmatpush.bf16.msra.mxu0 %v1935
    %2142 = vmatpush.bf16.msra.mxu0 %v1931
    %2143 = vmatpush.bf16.msra.mxu0 %v1927
    %2144 = vmatpush.bf16.msra.mxu0 %v1923
    %2145 = vmatpush.bf16.msra.mxu0 %v1919
    %2146 = vmatmul.bf16.gmra.mxu0 %v1588
    %v2147 = vpop.f32.mrf.mxu0
    %v2148 = vadd.f32 %v1409, %v2147
    %v2149 = vpop.f32.mrf.mxu0
    %2150 = vdwg.mxu0
    %2151 = vmatpush.bf16.msra.mxu0 %v1979
    %2152 = vmatpush.bf16.msra.mxu0 %v1975
    %2153 = vmatpush.bf16.msra.mxu0 %v1971
    %2154 = vmatpush.bf16.msra.mxu0 %v1967
    %2155 = vmatpush.bf16.msra.mxu0 %v1963
    %2156 = vmatpush.bf16.msra.mxu0 %v1959
    %2157 = vmatpush.bf16.msra.mxu0 %v1955
    %2158 = vmatpush.bf16.msra.mxu0 %v1951
    %2159 = vmatmul.bf16.gmra.mxu0 %v1589
    %v2160 = vpop.f32.mrf.mxu0
    %v2161 = vadd.f32 %v2148, %v2160
    %v2162 = vpop.f32.mrf.mxu0
    %2163 = vdwg.mxu0
    %2164 = vmatpush.bf16.msra.mxu0 %v2011
    %2165 = vmatpush.bf16.msra.mxu0 %v2007
    %2166 = vmatpush.bf16.msra.mxu0 %v2003
    %2167 = vmatpush.bf16.msra.mxu0 %v1999
    %2168 = vmatpush.bf16.msra.mxu0 %v1995
    %2169 = vmatpush.bf16.msra.mxu0 %v1991
    %2170 = vmatpush.bf16.msra.mxu0 %v1987
    %2171 = vmatpush.bf16.msra.mxu0 %v1983
    %2172 = vmatmul.bf16.gmra.mxu0 %v1590
    %v2173 = vpop.f32.mrf.mxu0
    %v2174 = vadd.f32 %v2161, %v2173
    %v2175 = vpop.f32.mrf.mxu0
    %2176 = vdwg.mxu0
    %2177 = vmatpush.bf16.msra.mxu0 0
    %2178 = vmatpush.bf16.msra.mxu0 0
    %2179 = vmatpush.bf16.msra.mxu0 0
    %2180 = vmatpush.bf16.msra.mxu0 0
    %2181 = vmatpush.bf16.msra.mxu0 0
    %2182 = vmatpush.bf16.msra.mxu0 %v2023
    %2183 = vmatpush.bf16.msra.mxu0 %v2019
    %2184 = vmatpush.bf16.msra.mxu0 %v2015
    %2185 = vmatmul.bf16.gmra.mxu0 %v2136
    %v2186 = vpop.f32.mrf.mxu0
    %v2187 = vadd.f32 %v2174, %v2186
    %v2188 = vpop.f32.mrf.mxu0
    %2189 = vdwg.mxu0
    %2190 = vmatpush.bf16.msra.mxu0 %v1948
    %2191 = vmatpush.bf16.msra.mxu0 %v1944
    %2192 = vmatpush.bf16.msra.mxu0 %v1940
    %2193 = vmatpush.bf16.msra.mxu0 %v1936
    %2194 = vmatpush.bf16.msra.mxu0 %v1932
    %2195 = vmatpush.bf16.msra.mxu0 %v1928
    %2196 = vmatpush.bf16.msra.mxu0 %v1924
    %2197 = vmatpush.bf16.msra.mxu0 %v1920
    %2198 = vmatmul.bf16.gmra.mxu0 %v1588
    %v2199 = vpop.f32.mrf.mxu0
    %v2200 = vadd.f32 %v1461, %v2199
    %v2201 = vpop.f32.mrf.mxu0
    %2202 = vdwg.mxu0
    %2203 = vmatpush.bf16.msra.mxu0 %v1980
    %2204 = vmatpush.bf16.msra.mxu0 %v1976
    %2205 = vmatpush.bf16.msra.mxu0 %v1972
    %2206 = vmatpush.bf16.msra.mxu0 %v1968
    %2207 = vmatpush.bf16.msra.mxu0 %v1964
    %2208 = vmatpush.bf16.msra.mxu0 %v1960
    %2209 = vmatpush.bf16.msra.mxu0 %v1956
    %2210 = vmatpush.bf16.msra.mxu0 %v1952
    %2211 = vmatmul.bf16.gmra.mxu0 %v1589
    %v2212 = vpop.f32.mrf.mxu0
    %v2213 = vadd.f32 %v2200, %v2212
    %v2214 = vpop.f32.mrf.mxu0
    %2215 = vdwg.mxu0
    %2216 = vmatpush.bf16.msra.mxu0 %v2012
    %2217 = vmatpush.bf16.msra.mxu0 %v2008
    %2218 = vmatpush.bf16.msra.mxu0 %v2004
    %2219 = vmatpush.bf16.msra.mxu0 %v2000
    %2220 = vmatpush.bf16.msra.mxu0 %v1996
    %2221 = vmatpush.bf16.msra.mxu0 %v1992
    %2222 = vmatpush.bf16.msra.mxu0 %v1988
    %2223 = vmatpush.bf16.msra.mxu0 %v1984
    %2224 = vmatmul.bf16.gmra.mxu0 %v1590
    %v2225 = vpop.f32.mrf.mxu0
    %v2226 = vadd.f32 %v2213, %v2225
    %v2227 = vpop.f32.mrf.mxu0
    %2228 = vdwg.mxu0
    %2229 = vmatpush.bf16.msra.mxu0 0
    %2230 = vmatpush.bf16.msra.mxu0 0
    %2231 = vmatpush.bf16.msra.mxu0 0
    %2232 = vmatpush.bf16.msra.mxu0 0
    %2233 = vmatpush.bf16.msra.mxu0 0
    %2234 = vmatpush.bf16.msra.mxu0 %v2024
    %2235 = vmatpush.bf16.msra.mxu0 %v2020
    %2236 = vmatpush.bf16.msra.mxu0 %v2016
    %2237 = vmatmul.bf16.gmra.mxu0 %v2136
    %v2238 = vpop.f32.mrf.mxu0
    %v2239 = vadd.f32 %v2226, %v2238
    %v2240 = vpop.f32.mrf.mxu0
    %2241 = vdwg.mxu0
    %2242 = vmatpush.bf16.msra.mxu0 %v1949
    %2243 = vmatpush.bf16.msra.mxu0 %v1945
    %2244 = vmatpush.bf16.msra.mxu0 %v1941
    %2245 = vmatpush.bf16.msra.mxu0 %v1937
    %2246 = vmatpush.bf16.msra.mxu0 %v1933
    %2247 = vmatpush.bf16.msra.mxu0 %v1929
    %2248 = vmatpush.bf16.msra.mxu0 %v1925
    %2249 = vmatpush.bf16.msra.mxu0 %v1921
    %2250 = vmatmul.bf16.gmra.mxu0 %v1588
    %v2251 = vpop.f32.mrf.mxu0
    %v2252 = vadd.f32 %v1513, %v2251
    %v2253 = vpop.f32.mrf.mxu0
    %2254 = vdwg.mxu0
    %2255 = vmatpush.bf16.msra.mxu0 %v1981
    %2256 = vmatpush.bf16.msra.mxu0 %v1977
    %2257 = vmatpush.bf16.msra.mxu0 %v1973
    %2258 = vmatpush.bf16.msra.mxu0 %v1969
    %2259 = vmatpush.bf16.msra.mxu0 %v1965
    %2260 = vmatpush.bf16.msra.mxu0 %v1961
    %2261 = vmatpush.bf16.msra.mxu0 %v1957
    %2262 = vmatpush.bf16.msra.mxu0 %v1953
    %2263 = vmatmul.bf16.gmra.mxu0 %v1589
    %v2264 = vpop.f32.mrf.mxu0
    %v2265 = vadd.f32 %v2252, %v2264
    %v2266 = vpop.f32.mrf.mxu0
    %2267 = vdwg.mxu0
    %2268 = vmatpush.bf16.msra.mxu0 %v2013
    %2269 = vmatpush.bf16.msra.mxu0 %v2009
    %2270 = vmatpush.bf16.msra.mxu0 %v2005
    %2271 = vmatpush.bf16.msra.mxu0 %v2001
    %2272 = vmatpush.bf16.msra.mxu0 %v1997
    %2273 = vmatpush.bf16.msra.mxu0 %v1993
    %2274 = vmatpush.bf16.msra.mxu0 %v1989
    %2275 = vmatpush.bf16.msra.mxu0 %v1985
    %2276 = vmatmul.bf16.gmra.mxu0 %v1590
    %v2277 = vpop.f32.mrf.mxu0
    %v2278 = vadd.f32 %v2265, %v2277
    %v2279 = vpop.f32.mrf.mxu0
    %2280 = vdwg.mxu0
    %2281 = vmatpush.bf16.msra.mxu0 0
    %2282 = vmatpush.bf16.msra.mxu0 0
    %2283 = vmatpush.bf16.msra.mxu0 0
    %2284 = vmatpush.bf16.msra.mxu0 0
    %2285 = vmatpush.bf16.msra.mxu0 0
    %2286 = vmatpush.bf16.msra.mxu0 %v2025
    %2287 = vmatpush.bf16.msra.mxu0 %v2021
    %2288 = vmatpush.bf16.msra.mxu0 %v2017
    %2289 = vmatmul.bf16.gmra.mxu0 %v2136
    %v2290 = vpop.f32.mrf.mxu0
    %v2291 = vadd.f32 %v2278, %v2290
    %v2292 = vpop.f32.mrf.mxu0
    %2293 = vdwg.mxu0
    %2294 = vmatpush.bf16.msra.mxu0 %v1950
    %2295 = vmatpush.bf16.msra.mxu0 %v1946
    %2296 = vmatpush.bf16.msra.mxu0 %v1942
    %2297 = vmatpush.bf16.msra.mxu0 %v1938
    %2298 = vmatpush.bf16.msra.mxu0 %v1934
    %2299 = vmatpush.bf16.msra.mxu0 %v1930
    %2300 = vmatpush.bf16.msra.mxu0 %v1926
    %2301 = vmatpush.bf16.msra.mxu0 %v1922
    %2302 = vmatmul.bf16.gmra.mxu0 %v1588
    %v2303 = vpop.f32.mrf.mxu0
    %v2304 = vadd.f32 %v1565, %v2303
    %v2305 = vpop.f32.mrf.mxu0
    %2306 = vdwg.mxu0
    %2307 = vmatpush.bf16.msra.mxu0 %v1982
    %2308 = vmatpush.bf16.msra.mxu0 %v1978
    %2309 = vmatpush.bf16.msra.mxu0 %v1974
    %2310 = vmatpush.bf16.msra.mxu0 %v1970
    %2311 = vmatpush.bf16.msra.mxu0 %v1966
    %2312 = vmatpush.bf16.msra.mxu0 %v1962
    %2313 = vmatpush.bf16.msra.mxu0 %v1958
    %2314 = vmatpush.bf16.msra.mxu0 %v1954
    %2315 = vmatmul.bf16.gmra.mxu0 %v1589
    %v2316 = vpop.f32.mrf.mxu0
    %v2317 = vadd.f32 %v2304, %v2316
    %v2318 = vpop.f32.mrf.mxu0
    %2319 = vdwg.mxu0
    %2320 = vmatpush.bf16.msra.mxu0 %v2014
    %2321 = vmatpush.bf16.msra.mxu0 %v2010
    %2322 = vmatpush.bf16.msra.mxu0 %v2006
    %2323 = vmatpush.bf16.msra.mxu0 %v2002
    %2324 = vmatpush.bf16.msra.mxu0 %v1998
    %2325 = vmatpush.bf16.msra.mxu0 %v1994
    %2326 = vmatpush.bf16.msra.mxu0 %v1990
    %2327 = vmatpush.bf16.msra.mxu0 %v1986
    %2328 = vmatmul.bf16.gmra.mxu0 %v1590
    %v2329 = vpop.f32.mrf.mxu0
    %v2330 = vadd.f32 %v2317, %v2329
    %v2331 = vpop.f32.mrf.mxu0
    %2332 = vdwg.mxu0
    %2333 = vmatpush.bf16.msra.mxu0 0
    %2334 = vmatpush.bf16.msra.mxu0 0
    %2335 = vmatpush.bf16.msra.mxu0 0
    %2336 = vmatpush.bf16.msra.mxu0 0
    %2337 = vmatpush.bf16.msra.mxu0 0
    %2338 = vmatpush.bf16.msra.mxu0 %v2026
    %2339 = vmatpush.bf16.msra.mxu0 %v2022
    %2340 = vmatpush.bf16.msra.mxu0 %v2018
    %2341 = vmatmul.bf16.gmra.mxu0 %v2136
    %v2342 = vpop.f32.mrf.mxu0
    %v2343 = vadd.f32 %v2330, %v2342
    %v2344 = vpop.f32.mrf.mxu0
    %2345 = vdwg.mxu0
    %v2346 = vld [vmem:[#allocation14 + $0x6c0] sm:$0xff]
    %v2347 = vld [vmem:[#allocation14 + $0x6c8] sm:$0xff]
    %v2348 = vld [vmem:[#allocation14 + $0x6d0] sm:$0xff]
    %v2349 = vld [vmem:[#allocation14 + $0x6d8] sm:$0xff]
    %v2350 = vld [vmem:[#allocation14 + $0x6e0] sm:$0xff]
    %v2351 = vld [vmem:[#allocation14 + $0x6e8] sm:$0xff]
    %v2352 = vld [vmem:[#allocation14 + $0x6f0] sm:$0xff]
    %v2353 = vld [vmem:[#allocation14 + $0x6f8] sm:$0xff]
    %v2354 = vld [vmem:[#allocation14 + $0x700] sm:$0xff]
    %v2355 = vld [vmem:[#allocation14 + $0x708] sm:$0xff]
    %v2356 = vld [vmem:[#allocation14 + $0x710] sm:$0xff]
    %v2357 = vld [vmem:[#allocation14 + $0x718] sm:$0xff]
    %v2358 = vld [vmem:[#allocation14 + $0x720] sm:$0xff]
    %v2359 = vld [vmem:[#allocation14 + $0x728] sm:$0xff]
    %v2360 = vld [vmem:[#allocation14 + $0x730] sm:$0xff]
    %v2361 = vld [vmem:[#allocation14 + $0x738] sm:$0xff]
    %v2362 = vld [vmem:[#allocation14 + $0x740] sm:$0xff]
    %v2363 = vld [vmem:[#allocation14 + $0x748] sm:$0xff]
    %v2364 = vld [vmem:[#allocation14 + $0x750] sm:$0xff]
    %v2365 = vld [vmem:[#allocation14 + $0x758] sm:$0xff]
    %v2366 = vld [vmem:[#allocation14 + $0x760] sm:$0xff]
    %v2367 = vld [vmem:[#allocation14 + $0x768] sm:$0xff]
    %v2368 = vld [vmem:[#allocation14 + $0x770] sm:$0xff]
    %v2369 = vld [vmem:[#allocation14 + $0x778] sm:$0xff]
    %v2370 = vld [vmem:[#allocation14 + $0x780] sm:$0xff]
    %v2371 = vld [vmem:[#allocation14 + $0x788] sm:$0xff]
    %v2372 = vld [vmem:[#allocation14 + $0x790] sm:$0xff]
    %v2373 = vld [vmem:[#allocation14 + $0x798] sm:$0xff]
    %v2374 = vld [vmem:[#allocation14 + $0x7a0] sm:$0xff]
    %v2375 = vld [vmem:[#allocation14 + $0x7a8] sm:$0xff]
    %v2376 = vld [vmem:[#allocation14 + $0x7b0] sm:$0xff]
    %v2377 = vld [vmem:[#allocation14 + $0x7b8] sm:$0xff]
    %v2378 = vld [vmem:[#allocation14 + $0x7c0] sm:$0xff]
    %v2379 = vld [vmem:[#allocation14 + $0x7c8] sm:$0xff]
    %v2380 = vld [vmem:[#allocation14 + $0x7d0] sm:$0xff]
    %v2381 = vld [vmem:[#allocation14 + $0x7d8] sm:$0xff]
    %v2382 = vld [vmem:[#allocation14 + $0x7e0] sm:$0xff]
    %v2383 = vld [vmem:[#allocation14 + $0x7e8] sm:$0xff]
    %v2384 = vld [vmem:[#allocation14 + $0x7f0] sm:$0xff]
    %v2385 = vld [vmem:[#allocation14 + $0x7f8] sm:$0xff]
    %v2386 = vld [vmem:[#allocation14 + $0x800] sm:$0xff]
    %v2387 = vld [vmem:[#allocation14 + $0x808] sm:$0xff]
    %v2388 = vld [vmem:[#allocation14 + $0x810] sm:$0xff]
    %v2389 = vld [vmem:[#allocation14 + $0x818] sm:$0xff]
    %v2390 = vld [vmem:[#allocation14 + $0x820] sm:$0xff]
    %v2391 = vld [vmem:[#allocation14 + $0x828] sm:$0xff]
    %v2392 = vld [vmem:[#allocation14 + $0x830] sm:$0xff]
    %v2393 = vld [vmem:[#allocation14 + $0x838] sm:$0xff]
    %v2394 = vld [vmem:[#allocation14 + $0x840] sm:$0xff]
    %v2395 = vld [vmem:[#allocation14 + $0x848] sm:$0xff]
    %v2396 = vld [vmem:[#allocation14 + $0x850] sm:$0xff]
    %v2397 = vld [vmem:[#allocation14 + $0x858] sm:$0xff]
    %v2398 = vld [vmem:[#allocation14 + $0x860] sm:$0xff]
    %v2399 = vld [vmem:[#allocation14 + $0x868] sm:$0xff]
    %v2400 = vld [vmem:[#allocation14 + $0x870] sm:$0xff]
    %v2401 = vld [vmem:[#allocation14 + $0x878] sm:$0xff]
    %v2402 = vld [vmem:[#allocation14 + $0x880] sm:$0xff]
    %v2403 = vld [vmem:[#allocation14 + $0x888] sm:$0xff]
    %v2404 = vld [vmem:[#allocation14 + $0x890] sm:$0xff]
    %v2405 = vld [vmem:[#allocation14 + $0x898] sm:$0xff]
    %v2406 = vld [vmem:[#allocation14 + $0x8a0] sm:$0xff]
    %v2407 = vld [vmem:[#allocation14 + $0x8a8] sm:$0xff]
    %v2408 = vld [vmem:[#allocation14 + $0x8b0] sm:$0xff]
    %v2409 = vld [vmem:[#allocation14 + $0x8b8] sm:$0xff]
    %v2410 = vld [vmem:[#allocation14 + $0x8c0] sm:$0xff]
    %v2411 = vld [vmem:[#allocation14 + $0x8c8] sm:$0xff]
    %v2412 = vld [vmem:[#allocation14 + $0x8d0] sm:$0xff]
    %v2413 = vld [vmem:[#allocation14 + $0x8d8] sm:$0xff]
    %v2414 = vld [vmem:[#allocation14 + $0x8e0] sm:$0xff]
    %v2415 = vld [vmem:[#allocation14 + $0x8e8] sm:$0xff]
    %v2416 = vld [vmem:[#allocation14 + $0x8f0] sm:$0xff]
    %v2417 = vld [vmem:[#allocation14 + $0x8f8] sm:$0xff]
    %v2418 = vld [vmem:[#allocation14 + $0x900] sm:$0xff]
    %v2419 = vld [vmem:[#allocation14 + $0x908] sm:$0xff]
    %v2420 = vld [vmem:[#allocation14 + $0x910] sm:$0xff]
    %v2421 = vld [vmem:[#allocation14 + $0x918] sm:$0xff]
    %v2422 = vld [vmem:[#allocation14 + $0x920] sm:$0xff]
    %v2423 = vld [vmem:[#allocation14 + $0x928] sm:$0xff]
    %v2424 = vld [vmem:[#allocation14 + $0x930] sm:$0xff]
    %v2425 = vld [vmem:[#allocation14 + $0x938] sm:$0xff]
    %v2426 = vld [vmem:[#allocation14 + $0x940] sm:$0xff]
    %v2427 = vld [vmem:[#allocation14 + $0x948] sm:$0xff]
    %v2428 = vld [vmem:[#allocation14 + $0x950] sm:$0xff]
    %v2429 = vld [vmem:[#allocation14 + $0x958] sm:$0xff]
    %v2430 = vld [vmem:[#allocation14 + $0x960] sm:$0xff]
    %v2431 = vld [vmem:[#allocation14 + $0x968] sm:$0xff]
    %v2432 = vld [vmem:[#allocation14 + $0x970] sm:$0xff]
    %v2433 = vld [vmem:[#allocation14 + $0x978] sm:$0xff]
    %v2434 = vld [vmem:[#allocation14 + $0x980] sm:$0xff]
    %v2435 = vld [vmem:[#allocation14 + $0x988] sm:$0xff]
    %v2436 = vld [vmem:[#allocation14 + $0x990] sm:$0xff]
    %v2437 = vld [vmem:[#allocation14 + $0x998] sm:$0xff]
    %v2438 = vld [vmem:[#allocation14 + $0x9a0] sm:$0xff]
    %v2439 = vld [vmem:[#allocation14 + $0x9a8] sm:$0xff]
    %v2440 = vld [vmem:[#allocation14 + $0x9b0] sm:$0xff]
    %v2441 = vld [vmem:[#allocation14 + $0x9b8] sm:$0xff]
    %v2442 = vld [vmem:[#allocation14 + $0x9c0] sm:$0xff]
    %v2443 = vld [vmem:[#allocation14 + $0x9c8] sm:$0xff]
    %v2444 = vld [vmem:[#allocation14 + $0x9d0] sm:$0xff]
    %v2445 = vld [vmem:[#allocation14 + $0x9d8] sm:$0xff]
    %v2446 = vld [vmem:[#allocation14 + $0x9e0] sm:$0xff]
    %v2447 = vld [vmem:[#allocation14 + $0x9e8] sm:$0xff]
    %v2448 = vld [vmem:[#allocation14 + $0x9f0] sm:$0xff]
    %v2449 = vld [vmem:[#allocation14 + $0x9f8] sm:$0xff]
    %v2450 = vld [vmem:[#allocation14 + $0xa00] sm:$0xff]
    %v2451 = vld [vmem:[#allocation14 + $0xa08] sm:$0xff]
    %v2452 = vld [vmem:[#allocation14 + $0xa10] sm:$0xff]
    %v2453 = vld [vmem:[#allocation14 + $0xa18] sm:$0xff]
    %v2454 = vpack.c.bf16 %v548, %v548
    %v2455 = vpack.c.bf16 %v549, %v549
    %v2456 = vpack.c.bf16 %v550, %v550
    %v2457 = vpack.c.bf16 %v551, %v551
    %v2458 = vpack.c.bf16 %v552, %v552
    %v2459 = vpack.c.bf16 %v553, %v553
    %v2460 = vpack.c.bf16 %v554, %v554
    %v2461 = vpack.c.bf16 %v555, %v555
    %v2470 = vunpack.c.l.b16 %v2454
    %v2471 = vunpack.c.l.b16 %v2455
    %v2472 = vunpack.c.l.b16 %v2456
    %v2473 = vunpack.c.l.b16 %v2457
    %v2474 = vunpack.c.l.b16 %v2458
    %v2475 = vunpack.c.l.b16 %v2459
    %v2476 = vunpack.c.l.b16 %v2460
    %v2477 = vunpack.c.l.b16 %v2461
    %v2478 = vsel %vm804, %v2474, %v2470
    %v2479 = vsel %vm804, %v2475, %v2471
    %v2480 = vsel %vm804, %v2476, %v2472
    %v2481 = vsel %vm804, %v2477, %v2473
    %v2482 = vpack.c.b16 %v2478, %v2478
    %v2483 = vpack.c.b16 %v2479, %v2479
    %v2484 = vpack.c.b16 %v2480, %v2480
    %v2485 = vpack.c.b16 %v2481, %v2481
    %v2597 = vunpack.c.l.b16 %v2346
    %v2598 = vunpack.c.h.b16 %v2346
    %v2599 = vunpack.c.l.b16 %v2347
    %v2600 = vunpack.c.h.b16 %v2347
    %v2601 = vunpack.c.l.b16 %v2348
    %v2602 = vunpack.c.h.b16 %v2348
    %v2603 = vunpack.c.l.b16 %v2349
    %v2604 = vunpack.c.h.b16 %v2349
    %v2605 = vunpack.c.l.b16 %v2350
    %v2606 = vunpack.c.h.b16 %v2350
    %v2607 = vunpack.c.l.b16 %v2351
    %v2608 = vunpack.c.h.b16 %v2351
    %v2609 = vunpack.c.l.b16 %v2352
    %v2610 = vunpack.c.h.b16 %v2352
    %v2611 = vunpack.c.l.b16 %v2353
    %v2612 = vunpack.c.h.b16 %v2353
    %v2613 = vunpack.c.l.b16 %v2354
    %v2614 = vunpack.c.h.b16 %v2354
    %v2615 = vunpack.c.l.b16 %v2355
    %v2616 = vunpack.c.h.b16 %v2355
    %v2617 = vunpack.c.l.b16 %v2356
    %v2618 = vunpack.c.h.b16 %v2356
    %v2619 = vunpack.c.l.b16 %v2357
    %v2620 = vunpack.c.h.b16 %v2357
    %v2621 = vunpack.c.l.b16 %v2358
    %v2622 = vunpack.c.h.b16 %v2358
    %v2623 = vunpack.c.l.b16 %v2359
    %v2624 = vunpack.c.h.b16 %v2359
    %v2625 = vunpack.c.l.b16 %v2360
    %v2626 = vunpack.c.h.b16 %v2360
    %v2627 = vunpack.c.l.b16 %v2361
    %v2628 = vunpack.c.h.b16 %v2361
    %v2629 = vunpack.c.l.b16 %v2362
    %v2630 = vunpack.c.h.b16 %v2362
    %v2631 = vunpack.c.l.b16 %v2363
    %v2632 = vunpack.c.h.b16 %v2363
    %v2633 = vunpack.c.l.b16 %v2364
    %v2634 = vunpack.c.h.b16 %v2364
    %v2635 = vunpack.c.l.b16 %v2365
    %v2636 = vunpack.c.h.b16 %v2365
    %v2637 = vunpack.c.l.b16 %v2366
    %v2638 = vunpack.c.h.b16 %v2366
    %v2639 = vunpack.c.l.b16 %v2367
    %v2640 = vunpack.c.h.b16 %v2367
    %v2641 = vunpack.c.l.b16 %v2368
    %v2642 = vunpack.c.h.b16 %v2368
    %v2643 = vunpack.c.l.b16 %v2369
    %v2644 = vunpack.c.h.b16 %v2369
    %v2645 = vunpack.c.l.b16 %v2370
    %v2646 = vunpack.c.h.b16 %v2370
    %v2647 = vunpack.c.l.b16 %v2371
    %v2648 = vunpack.c.h.b16 %v2371
    %v2649 = vunpack.c.l.b16 %v2372
    %v2650 = vunpack.c.h.b16 %v2372
    %v2651 = vunpack.c.l.b16 %v2373
    %v2652 = vunpack.c.h.b16 %v2373
    %v2653 = vunpack.c.l.b16 %v2374
    %v2654 = vunpack.c.h.b16 %v2374
    %v2655 = vunpack.c.l.b16 %v2375
    %v2656 = vunpack.c.h.b16 %v2375
    %v2657 = vunpack.c.l.b16 %v2376
    %v2658 = vunpack.c.h.b16 %v2376
    %v2659 = vunpack.c.l.b16 %v2377
    %v2660 = vunpack.c.h.b16 %v2377
    %v2661 = vunpack.c.l.b16 %v2378
    %v2662 = vunpack.c.h.b16 %v2378
    %v2663 = vunpack.c.l.b16 %v2379
    %v2664 = vunpack.c.h.b16 %v2379
    %v2665 = vunpack.c.l.b16 %v2380
    %v2666 = vunpack.c.h.b16 %v2380
    %v2667 = vunpack.c.l.b16 %v2381
    %v2668 = vunpack.c.h.b16 %v2381
    %v2669 = vunpack.c.l.b16 %v2382
    %v2670 = vunpack.c.h.b16 %v2382
    %v2671 = vunpack.c.l.b16 %v2383
    %v2672 = vunpack.c.h.b16 %v2383
    %v2673 = vunpack.c.l.b16 %v2384
    %v2674 = vunpack.c.h.b16 %v2384
    %v2675 = vunpack.c.l.b16 %v2385
    %v2676 = vunpack.c.h.b16 %v2385
    %v2677 = vunpack.c.l.b16 %v2386
    %v2678 = vunpack.c.h.b16 %v2386
    %v2679 = vunpack.c.l.b16 %v2387
    %v2680 = vunpack.c.h.b16 %v2387
    %v2681 = vunpack.c.l.b16 %v2388
    %v2682 = vunpack.c.h.b16 %v2388
    %v2683 = vunpack.c.l.b16 %v2389
    %v2684 = vunpack.c.h.b16 %v2389
    %v2685 = vunpack.c.l.b16 %v2390
    %v2686 = vunpack.c.h.b16 %v2390
    %v2687 = vunpack.c.l.b16 %v2391
    %v2688 = vunpack.c.h.b16 %v2391
    %v2689 = vunpack.c.l.b16 %v2392
    %v2690 = vunpack.c.h.b16 %v2392
    %v2691 = vunpack.c.l.b16 %v2393
    %v2692 = vunpack.c.h.b16 %v2393
    %v2693 = vunpack.c.l.b16 %v2394
    %v2694 = vunpack.c.h.b16 %v2394
    %v2695 = vunpack.c.l.b16 %v2395
    %v2696 = vunpack.c.h.b16 %v2395
    %v2697 = vunpack.c.l.b16 %v2396
    %v2698 = vunpack.c.h.b16 %v2396
    %v2699 = vunpack.c.l.b16 %v2397
    %v2700 = vunpack.c.h.b16 %v2397
    %v2701 = vunpack.c.l.b16 %v2398
    %v2702 = vunpack.c.h.b16 %v2398
    %v2703 = vunpack.c.l.b16 %v2399
    %v2704 = vunpack.c.h.b16 %v2399
    %v2705 = vunpack.c.l.b16 %v2400
    %v2706 = vunpack.c.h.b16 %v2400
    %v2707 = vunpack.c.l.b16 %v2401
    %v2708 = vunpack.c.h.b16 %v2401
    %v2709 = vunpack.c.l.b16 %v2402
    %v2710 = vunpack.c.h.b16 %v2402
    %v2711 = vunpack.c.l.b16 %v2403
    %v2712 = vunpack.c.h.b16 %v2403
    %v2713 = vunpack.c.l.b16 %v2404
    %v2714 = vunpack.c.h.b16 %v2404
    %v2715 = vunpack.c.l.b16 %v2405
    %v2716 = vunpack.c.h.b16 %v2405
    %v2717 = vunpack.c.l.b16 %v2406
    %v2718 = vunpack.c.h.b16 %v2406
    %v2719 = vunpack.c.l.b16 %v2407
    %v2720 = vunpack.c.h.b16 %v2407
    %v2721 = vunpack.c.l.b16 %v2408
    %v2722 = vunpack.c.h.b16 %v2408
    %v2723 = vunpack.c.l.b16 %v2409
    %v2724 = vunpack.c.h.b16 %v2409
    %v2725 = vunpack.c.l.b16 %v2410
    %v2726 = vunpack.c.h.b16 %v2410
    %v2727 = vunpack.c.l.b16 %v2411
    %v2728 = vunpack.c.h.b16 %v2411
    %v2729 = vunpack.c.l.b16 %v2412
    %v2730 = vunpack.c.h.b16 %v2412
    %v2731 = vunpack.c.l.b16 %v2413
    %v2732 = vunpack.c.h.b16 %v2413
    %v2733 = vunpack.c.l.b16 %v2414
    %v2734 = vunpack.c.h.b16 %v2414
    %v2735 = vunpack.c.l.b16 %v2415
    %v2736 = vunpack.c.h.b16 %v2415
    %v2737 = vunpack.c.l.b16 %v2416
    %v2738 = vunpack.c.h.b16 %v2416
    %v2739 = vunpack.c.l.b16 %v2417
    %v2740 = vunpack.c.h.b16 %v2417
    %v2741 = vunpack.c.l.b16 %v2418
    %v2742 = vunpack.c.h.b16 %v2418
    %v2743 = vunpack.c.l.b16 %v2419
    %v2744 = vunpack.c.h.b16 %v2419
    %v2745 = vunpack.c.l.b16 %v2420
    %v2746 = vunpack.c.h.b16 %v2420
    %v2747 = vunpack.c.l.b16 %v2421
    %v2748 = vunpack.c.h.b16 %v2421
    %v2749 = vunpack.c.l.b16 %v2422
    %v2750 = vunpack.c.h.b16 %v2422
    %v2751 = vunpack.c.l.b16 %v2423
    %v2752 = vunpack.c.h.b16 %v2423
    %v2753 = vunpack.c.l.b16 %v2424
    %v2754 = vunpack.c.h.b16 %v2424
    %v2755 = vunpack.c.l.b16 %v2425
    %v2756 = vunpack.c.h.b16 %v2425
    %v2757 = vunpack.c.l.b16 %v2426
    %v2758 = vunpack.c.h.b16 %v2426
    %v2759 = vunpack.c.l.b16 %v2427
    %v2760 = vunpack.c.h.b16 %v2427
    %v2761 = vunpack.c.l.b16 %v2428
    %v2762 = vunpack.c.h.b16 %v2428
    %v2763 = vunpack.c.l.b16 %v2429
    %v2764 = vunpack.c.h.b16 %v2429
    %v2765 = vunpack.c.l.b16 %v2430
    %v2766 = vunpack.c.h.b16 %v2430
    %v2767 = vunpack.c.l.b16 %v2431
    %v2768 = vunpack.c.h.b16 %v2431
    %v2769 = vunpack.c.l.b16 %v2432
    %v2770 = vunpack.c.h.b16 %v2432
    %v2771 = vunpack.c.l.b16 %v2433
    %v2772 = vunpack.c.h.b16 %v2433
    %v2773 = vunpack.c.l.b16 %v2434
    %v2774 = vunpack.c.h.b16 %v2434
    %v2775 = vunpack.c.l.b16 %v2435
    %v2776 = vunpack.c.h.b16 %v2435
    %v2777 = vunpack.c.l.b16 %v2436
    %v2778 = vunpack.c.h.b16 %v2436
    %v2779 = vunpack.c.l.b16 %v2437
    %v2780 = vunpack.c.h.b16 %v2437
    %v2781 = vunpack.c.l.b16 %v2438
    %v2782 = vunpack.c.h.b16 %v2438
    %v2783 = vunpack.c.l.b16 %v2439
    %v2784 = vunpack.c.h.b16 %v2439
    %v2785 = vunpack.c.l.b16 %v2440
    %v2786 = vunpack.c.h.b16 %v2440
    %v2787 = vunpack.c.l.b16 %v2441
    %v2788 = vunpack.c.h.b16 %v2441
    %v2789 = vunpack.c.l.b16 %v2442
    %v2790 = vunpack.c.h.b16 %v2442
    %v2791 = vunpack.c.l.b16 %v2443
    %v2792 = vunpack.c.h.b16 %v2443
    %v2793 = vunpack.c.l.b16 %v2444
    %v2794 = vunpack.c.h.b16 %v2444
    %v2795 = vunpack.c.l.b16 %v2445
    %v2796 = vunpack.c.h.b16 %v2445
    %v2797 = vunpack.c.l.b16 %v2446
    %v2798 = vunpack.c.h.b16 %v2446
    %v2799 = vunpack.c.l.b16 %v2447
    %v2800 = vunpack.c.h.b16 %v2447
    %v2801 = vunpack.c.l.b16 %v2448
    %v2802 = vunpack.c.h.b16 %v2448
    %v2803 = vunpack.c.l.b16 %v2449
    %v2804 = vunpack.c.h.b16 %v2449
    %v2805 = vunpack.c.l.b16 %v2450
    %v2806 = vunpack.c.h.b16 %v2450
    %v2807 = vunpack.c.l.b16 %v2451
    %v2808 = vunpack.c.h.b16 %v2451
    %v2809 = vunpack.c.l.b16 %v2452
    %v2810 = vunpack.c.h.b16 %v2452
    %v2811 = vunpack.c.l.b16 %v2453
    %v2812 = vunpack.c.h.b16 %v2453
    %v2813 = vpack.c.b16 %v2601, %v2597
    %v2814 = vpack.c.b16 %v2602, %v2598
    %v2815 = vpack.c.b16 %v2603, %v2599
    %v2816 = vpack.c.b16 %v2604, %v2600
    %v2817 = vpack.c.b16 %v2609, %v2605
    %v2818 = vpack.c.b16 %v2610, %v2606
    %v2819 = vpack.c.b16 %v2611, %v2607
    %v2820 = vpack.c.b16 %v2612, %v2608
    %v2821 = vpack.c.b16 %v2617, %v2613
    %v2822 = vpack.c.b16 %v2618, %v2614
    %v2823 = vpack.c.b16 %v2619, %v2615
    %v2824 = vpack.c.b16 %v2620, %v2616
    %v2825 = vpack.c.b16 %v2625, %v2621
    %v2826 = vpack.c.b16 %v2626, %v2622
    %v2827 = vpack.c.b16 %v2627, %v2623
    %v2828 = vpack.c.b16 %v2628, %v2624
    %v2829 = vpack.c.b16 %v2633, %v2629
    %v2830 = vpack.c.b16 %v2634, %v2630
    %v2831 = vpack.c.b16 %v2635, %v2631
    %v2832 = vpack.c.b16 %v2636, %v2632
    %v2833 = vpack.c.b16 %v2641, %v2637
    %v2834 = vpack.c.b16 %v2642, %v2638
    %v2835 = vpack.c.b16 %v2643, %v2639
    %v2836 = vpack.c.b16 %v2644, %v2640
    %v2837 = vpack.c.b16 %v2649, %v2645
    %v2838 = vpack.c.b16 %v2650, %v2646
    %v2839 = vpack.c.b16 %v2651, %v2647
    %v2840 = vpack.c.b16 %v2652, %v2648
    %v2841 = vpack.c.b16 %v2657, %v2653
    %v2842 = vpack.c.b16 %v2658, %v2654
    %v2843 = vpack.c.b16 %v2659, %v2655
    %v2844 = vpack.c.b16 %v2660, %v2656
    %v2845 = vpack.c.b16 %v2665, %v2661
    %v2846 = vpack.c.b16 %v2666, %v2662
    %v2847 = vpack.c.b16 %v2667, %v2663
    %v2848 = vpack.c.b16 %v2668, %v2664
    %v2849 = vpack.c.b16 %v2673, %v2669
    %v2850 = vpack.c.b16 %v2674, %v2670
    %v2851 = vpack.c.b16 %v2675, %v2671
    %v2852 = vpack.c.b16 %v2676, %v2672
    %v2853 = vpack.c.b16 %v2681, %v2677
    %v2854 = vpack.c.b16 %v2682, %v2678
    %v2855 = vpack.c.b16 %v2683, %v2679
    %v2856 = vpack.c.b16 %v2684, %v2680
    %v2857 = vpack.c.b16 %v2689, %v2685
    %v2858 = vpack.c.b16 %v2690, %v2686
    %v2859 = vpack.c.b16 %v2691, %v2687
    %v2860 = vpack.c.b16 %v2692, %v2688
    %v2861 = vpack.c.b16 %v2697, %v2693
    %v2862 = vpack.c.b16 %v2698, %v2694
    %v2863 = vpack.c.b16 %v2699, %v2695
    %v2864 = vpack.c.b16 %v2700, %v2696
    %v2865 = vpack.c.b16 %v2705, %v2701
    %v2866 = vpack.c.b16 %v2706, %v2702
    %v2867 = vpack.c.b16 %v2707, %v2703
    %v2868 = vpack.c.b16 %v2708, %v2704
    %v2869 = vpack.c.b16 %v2713, %v2709
    %v2870 = vpack.c.b16 %v2714, %v2710
    %v2871 = vpack.c.b16 %v2715, %v2711
    %v2872 = vpack.c.b16 %v2716, %v2712
    %v2873 = vpack.c.b16 %v2721, %v2717
    %v2874 = vpack.c.b16 %v2722, %v2718
    %v2875 = vpack.c.b16 %v2723, %v2719
    %v2876 = vpack.c.b16 %v2724, %v2720
    %v2877 = vpack.c.b16 %v2729, %v2725
    %v2878 = vpack.c.b16 %v2730, %v2726
    %v2879 = vpack.c.b16 %v2731, %v2727
    %v2880 = vpack.c.b16 %v2732, %v2728
    %v2881 = vpack.c.b16 %v2737, %v2733
    %v2882 = vpack.c.b16 %v2738, %v2734
    %v2883 = vpack.c.b16 %v2739, %v2735
    %v2884 = vpack.c.b16 %v2740, %v2736
    %v2885 = vpack.c.b16 %v2745, %v2741
    %v2886 = vpack.c.b16 %v2746, %v2742
    %v2887 = vpack.c.b16 %v2747, %v2743
    %v2888 = vpack.c.b16 %v2748, %v2744
    %v2889 = vpack.c.b16 %v2753, %v2749
    %v2890 = vpack.c.b16 %v2754, %v2750
    %v2891 = vpack.c.b16 %v2755, %v2751
    %v2892 = vpack.c.b16 %v2756, %v2752
    %v2893 = vpack.c.b16 %v2761, %v2757
    %v2894 = vpack.c.b16 %v2762, %v2758
    %v2895 = vpack.c.b16 %v2763, %v2759
    %v2896 = vpack.c.b16 %v2764, %v2760
    %v2897 = vpack.c.b16 %v2769, %v2765
    %v2898 = vpack.c.b16 %v2770, %v2766
    %v2899 = vpack.c.b16 %v2771, %v2767
    %v2900 = vpack.c.b16 %v2772, %v2768
    %v2901 = vpack.c.b16 %v2777, %v2773
    %v2902 = vpack.c.b16 %v2778, %v2774
    %v2903 = vpack.c.b16 %v2779, %v2775
    %v2904 = vpack.c.b16 %v2780, %v2776
    %v2905 = vpack.c.b16 %v2785, %v2781
    %v2906 = vpack.c.b16 %v2786, %v2782
    %v2907 = vpack.c.b16 %v2787, %v2783
    %v2908 = vpack.c.b16 %v2788, %v2784
    %v2909 = vpack.c.b16 %v2793, %v2789
    %v2910 = vpack.c.b16 %v2794, %v2790
    %v2911 = vpack.c.b16 %v2795, %v2791
    %v2912 = vpack.c.b16 %v2796, %v2792
    %v2913 = vpack.c.b16 %v2801, %v2797
    %v2914 = vpack.c.b16 %v2802, %v2798
    %v2915 = vpack.c.b16 %v2803, %v2799
    %v2916 = vpack.c.b16 %v2804, %v2800
    %v2917 = vpack.c.b16 %v2809, %v2805
    %v2918 = vpack.c.b16 %v2810, %v2806
    %v2919 = vpack.c.b16 %v2811, %v2807
    %v2920 = vpack.c.b16 %v2812, %v2808
    %v3030 = vsel %vm1356, %v2485, 0
    %3032 = vmatpush.bf16.msra.mxu0 %v2841
    %3033 = vmatpush.bf16.msra.mxu0 %v2837
    %3034 = vmatpush.bf16.msra.mxu0 %v2833
    %3035 = vmatpush.bf16.msra.mxu0 %v2829
    %3036 = vmatpush.bf16.msra.mxu0 %v2825
    %3037 = vmatpush.bf16.msra.mxu0 %v2821
    %3038 = vmatpush.bf16.msra.mxu0 %v2817
    %3039 = vmatpush.bf16.msra.mxu0 %v2813
    %3040 = vmatmul.bf16.gmra.mxu0 %v2482
    %v3041 = vpop.f32.mrf.mxu0
    %v3042 = vadd.f32 0.0, %v3041
    %v3043 = vpop.f32.mrf.mxu0
    %3044 = vdwg.mxu0
    %3045 = vmatpush.bf16.msra.mxu0 %v2873
    %3046 = vmatpush.bf16.msra.mxu0 %v2869
    %3047 = vmatpush.bf16.msra.mxu0 %v2865
    %3048 = vmatpush.bf16.msra.mxu0 %v2861
    %3049 = vmatpush.bf16.msra.mxu0 %v2857
    %3050 = vmatpush.bf16.msra.mxu0 %v2853
    %3051 = vmatpush.bf16.msra.mxu0 %v2849
    %3052 = vmatpush.bf16.msra.mxu0 %v2845
    %3053 = vmatmul.bf16.gmra.mxu0 %v2483
    %v3054 = vpop.f32.mrf.mxu0
    %v3055 = vadd.f32 %v3042, %v3054
    %v3056 = vpop.f32.mrf.mxu0
    %3057 = vdwg.mxu0
    %3058 = vmatpush.bf16.msra.mxu0 %v2905
    %3059 = vmatpush.bf16.msra.mxu0 %v2901
    %3060 = vmatpush.bf16.msra.mxu0 %v2897
    %3061 = vmatpush.bf16.msra.mxu0 %v2893
    %3062 = vmatpush.bf16.msra.mxu0 %v2889
    %3063 = vmatpush.bf16.msra.mxu0 %v2885
    %3064 = vmatpush.bf16.msra.mxu0 %v2881
    %3065 = vmatpush.bf16.msra.mxu0 %v2877
    %3066 = vmatmul.bf16.gmra.mxu0 %v2484
    %v3067 = vpop.f32.mrf.mxu0
    %v3068 = vadd.f32 %v3055, %v3067
    %v3069 = vpop.f32.mrf.mxu0
    %3070 = vdwg.mxu0
    %3071 = vmatpush.bf16.msra.mxu0 0
    %3072 = vmatpush.bf16.msra.mxu0 0
    %3073 = vmatpush.bf16.msra.mxu0 0
    %3074 = vmatpush.bf16.msra.mxu0 0
    %3075 = vmatpush.bf16.msra.mxu0 0
    %3076 = vmatpush.bf16.msra.mxu0 %v2917
    %3077 = vmatpush.bf16.msra.mxu0 %v2913
    %3078 = vmatpush.bf16.msra.mxu0 %v2909
    %3079 = vmatmul.bf16.gmra.mxu0 %v3030
    %v3080 = vpop.f32.mrf.mxu0
    %v3081 = vadd.f32 %v3068, %v3080
    %v3082 = vpop.f32.mrf.mxu0
    %3083 = vdwg.mxu0
    %3084 = vmatpush.bf16.msra.mxu0 %v2842
    %3085 = vmatpush.bf16.msra.mxu0 %v2838
    %3086 = vmatpush.bf16.msra.mxu0 %v2834
    %3087 = vmatpush.bf16.msra.mxu0 %v2830
    %3088 = vmatpush.bf16.msra.mxu0 %v2826
    %3089 = vmatpush.bf16.msra.mxu0 %v2822
    %3090 = vmatpush.bf16.msra.mxu0 %v2818
    %3091 = vmatpush.bf16.msra.mxu0 %v2814
    %3092 = vmatmul.bf16.gmra.mxu0 %v2482
    %v3093 = vpop.f32.mrf.mxu0
    %v3094 = vadd.f32 0.0, %v3093
    %v3095 = vpop.f32.mrf.mxu0
    %3096 = vdwg.mxu0
    %3097 = vmatpush.bf16.msra.mxu0 %v2874
    %3098 = vmatpush.bf16.msra.mxu0 %v2870
    %3099 = vmatpush.bf16.msra.mxu0 %v2866
    %3100 = vmatpush.bf16.msra.mxu0 %v2862
    %3101 = vmatpush.bf16.msra.mxu0 %v2858
    %3102 = vmatpush.bf16.msra.mxu0 %v2854
    %3103 = vmatpush.bf16.msra.mxu0 %v2850
    %3104 = vmatpush.bf16.msra.mxu0 %v2846
    %3105 = vmatmul.bf16.gmra.mxu0 %v2483
    %v3106 = vpop.f32.mrf.mxu0
    %v3107 = vadd.f32 %v3094, %v3106
    %v3108 = vpop.f32.mrf.mxu0
    %3109 = vdwg.mxu0
    %3110 = vmatpush.bf16.msra.mxu0 %v2906
    %3111 = vmatpush.bf16.msra.mxu0 %v2902
    %3112 = vmatpush.bf16.msra.mxu0 %v2898
    %3113 = vmatpush.bf16.msra.mxu0 %v2894
    %3114 = vmatpush.bf16.msra.mxu0 %v2890
    %3115 = vmatpush.bf16.msra.mxu0 %v2886
    %3116 = vmatpush.bf16.msra.mxu0 %v2882
    %3117 = vmatpush.bf16.msra.mxu0 %v2878
    %3118 = vmatmul.bf16.gmra.mxu0 %v2484
    %v3119 = vpop.f32.mrf.mxu0
    %v3120 = vadd.f32 %v3107, %v3119
    %v3121 = vpop.f32.mrf.mxu0
    %3122 = vdwg.mxu0
    %3123 = vmatpush.bf16.msra.mxu0 0
    %3124 = vmatpush.bf16.msra.mxu0 0
    %3125 = vmatpush.bf16.msra.mxu0 0
    %3126 = vmatpush.bf16.msra.mxu0 0
    %3127 = vmatpush.bf16.msra.mxu0 0
    %3128 = vmatpush.bf16.msra.mxu0 %v2918
    %3129 = vmatpush.bf16.msra.mxu0 %v2914
    %3130 = vmatpush.bf16.msra.mxu0 %v2910
    %3131 = vmatmul.bf16.gmra.mxu0 %v3030
    %v3132 = vpop.f32.mrf.mxu0
    %v3133 = vadd.f32 %v3120, %v3132
    %v3134 = vpop.f32.mrf.mxu0
    %3135 = vdwg.mxu0
    %3136 = vmatpush.bf16.msra.mxu0 %v2843
    %3137 = vmatpush.bf16.msra.mxu0 %v2839
    %3138 = vmatpush.bf16.msra.mxu0 %v2835
    %3139 = vmatpush.bf16.msra.mxu0 %v2831
    %3140 = vmatpush.bf16.msra.mxu0 %v2827
    %3141 = vmatpush.bf16.msra.mxu0 %v2823
    %3142 = vmatpush.bf16.msra.mxu0 %v2819
    %3143 = vmatpush.bf16.msra.mxu0 %v2815
    %3144 = vmatmul.bf16.gmra.mxu0 %v2482
    %v3145 = vpop.f32.mrf.mxu0
    %v3146 = vadd.f32 0.0, %v3145
    %v3147 = vpop.f32.mrf.mxu0
    %3148 = vdwg.mxu0
    %3149 = vmatpush.bf16.msra.mxu0 %v2875
    %3150 = vmatpush.bf16.msra.mxu0 %v2871
    %3151 = vmatpush.bf16.msra.mxu0 %v2867
    %3152 = vmatpush.bf16.msra.mxu0 %v2863
    %3153 = vmatpush.bf16.msra.mxu0 %v2859
    %3154 = vmatpush.bf16.msra.mxu0 %v2855
    %3155 = vmatpush.bf16.msra.mxu0 %v2851
    %3156 = vmatpush.bf16.msra.mxu0 %v2847
    %3157 = vmatmul.bf16.gmra.mxu0 %v2483
    %v3158 = vpop.f32.mrf.mxu0
    %v3159 = vadd.f32 %v3146, %v3158
    %v3160 = vpop.f32.mrf.mxu0
    %3161 = vdwg.mxu0
    %3162 = vmatpush.bf16.msra.mxu0 %v2907
    %3163 = vmatpush.bf16.msra.mxu0 %v2903
    %3164 = vmatpush.bf16.msra.mxu0 %v2899
    %3165 = vmatpush.bf16.msra.mxu0 %v2895
    %3166 = vmatpush.bf16.msra.mxu0 %v2891
    %3167 = vmatpush.bf16.msra.mxu0 %v2887
    %3168 = vmatpush.bf16.msra.mxu0 %v2883
    %3169 = vmatpush.bf16.msra.mxu0 %v2879
    %3170 = vmatmul.bf16.gmra.mxu0 %v2484
    %v3171 = vpop.f32.mrf.mxu0
    %v3172 = vadd.f32 %v3159, %v3171
    %v3173 = vpop.f32.mrf.mxu0
    %3174 = vdwg.mxu0
    %3175 = vmatpush.bf16.msra.mxu0 0
    %3176 = vmatpush.bf16.msra.mxu0 0
    %3177 = vmatpush.bf16.msra.mxu0 0
    %3178 = vmatpush.bf16.msra.mxu0 0
    %3179 = vmatpush.bf16.msra.mxu0 0
    %3180 = vmatpush.bf16.msra.mxu0 %v2919
    %3181 = vmatpush.bf16.msra.mxu0 %v2915
    %3182 = vmatpush.bf16.msra.mxu0 %v2911
    %3183 = vmatmul.bf16.gmra.mxu0 %v3030
    %v3184 = vpop.f32.mrf.mxu0
    %v3185 = vadd.f32 %v3172, %v3184
    %v3186 = vpop.f32.mrf.mxu0
    %3187 = vdwg.mxu0
    %3188 = vmatpush.bf16.msra.mxu0 %v2844
    %3189 = vmatpush.bf16.msra.mxu0 %v2840
    %3190 = vmatpush.bf16.msra.mxu0 %v2836
    %3191 = vmatpush.bf16.msra.mxu0 %v2832
    %3192 = vmatpush.bf16.msra.mxu0 %v2828
    %3193 = vmatpush.bf16.msra.mxu0 %v2824
    %3194 = vmatpush.bf16.msra.mxu0 %v2820
    %3195 = vmatpush.bf16.msra.mxu0 %v2816
    %3196 = vmatmul.bf16.gmra.mxu0 %v2482
    %v3197 = vpop.f32.mrf.mxu0
    %v3198 = vadd.f32 0.0, %v3197
    %v3199 = vpop.f32.mrf.mxu0
    %3200 = vdwg.mxu0
    %3201 = vmatpush.bf16.msra.mxu0 %v2876
    %3202 = vmatpush.bf16.msra.mxu0 %v2872
    %3203 = vmatpush.bf16.msra.mxu0 %v2868
    %3204 = vmatpush.bf16.msra.mxu0 %v2864
    %3205 = vmatpush.bf16.msra.mxu0 %v2860
    %3206 = vmatpush.bf16.msra.mxu0 %v2856
    %3207 = vmatpush.bf16.msra.mxu0 %v2852
    %3208 = vmatpush.bf16.msra.mxu0 %v2848
    %3209 = vmatmul.bf16.gmra.mxu0 %v2483
    %v3210 = vpop.f32.mrf.mxu0
    %v3211 = vadd.f32 %v3198, %v3210
    %v3212 = vpop.f32.mrf.mxu0
    %3213 = vdwg.mxu0
    %3214 = vmatpush.bf16.msra.mxu0 %v2908
    %3215 = vmatpush.bf16.msra.mxu0 %v2904
    %3216 = vmatpush.bf16.msra.mxu0 %v2900
    %3217 = vmatpush.bf16.msra.mxu0 %v2896
    %3218 = vmatpush.bf16.msra.mxu0 %v2892
    %3219 = vmatpush.bf16.msra.mxu0 %v2888
    %3220 = vmatpush.bf16.msra.mxu0 %v2884
    %3221 = vmatpush.bf16.msra.mxu0 %v2880
    %3222 = vmatmul.bf16.gmra.mxu0 %v2484
    %v3223 = vpop.f32.mrf.mxu0
    %v3224 = vadd.f32 %v3211, %v3223
    %v3225 = vpop.f32.mrf.mxu0
    %3226 = vdwg.mxu0
    %3227 = vmatpush.bf16.msra.mxu0 0
    %3228 = vmatpush.bf16.msra.mxu0 0
    %3229 = vmatpush.bf16.msra.mxu0 0
    %3230 = vmatpush.bf16.msra.mxu0 0
    %3231 = vmatpush.bf16.msra.mxu0 0
    %3232 = vmatpush.bf16.msra.mxu0 %v2920
    %3233 = vmatpush.bf16.msra.mxu0 %v2916
    %3234 = vmatpush.bf16.msra.mxu0 %v2912
    %3235 = vmatmul.bf16.gmra.mxu0 %v3030
    %v3236 = vpop.f32.mrf.mxu0
    %v3237 = vadd.f32 %v3224, %v3236
    %v3238 = vpop.f32.mrf.mxu0
    %3239 = vdwg.mxu0
    %v3240 = vadd.f32 %v2187, %v3081
    %v3241 = vadd.f32 %v2239, %v3133
    %v3242 = vadd.f32 %v2291, %v3185
    %v3243 = vadd.f32 %v2343, %v3237
    %v3244 = vld [vmem:[#allocation15] sm:$0xf]
    %v3246 = vperm.slane %v3244, 0
    %v3247 = vperm.slane %v3244, 1
    %v3248 = vperm.slane %v3244, 2
    %v3249 = vperm.slane %v3244, 3
    %v3254 = vadd.f32 %v3240, %v3246
    %v3255 = vadd.f32 %v3241, %v3247
    %v3256 = vadd.f32 %v3242, %v3248
    %v3257 = vadd.f32 %v3243, %v3249
    %vm3258 = vcmp.gt.f32.partialorder %v3254, 0.0
    %vm3259 = vcmp.gt.f32.partialorder %v3255, 0.0
    %vm3260 = vcmp.gt.f32.partialorder %v3256, 0.0
    %vm3261 = vcmp.gt.f32.partialorder %v3257, 0.0
    %v3262 = vmul.f32 %v3254, 0.01
    %v3263 = vmul.f32 %v3255, 0.01
    %v3264 = vmul.f32 %v3256, 0.01
    %v3265 = vmul.f32 %v3257, 0.01
    %v3266 = vsel %vm3258, %v3254, %v3262
    %v3267 = vsel %vm3259, %v3255, %v3263
    %v3268 = vsel %vm3260, %v3256, %v3264
    %v3269 = vsel %vm3261, %v3257, %v3265
    %v3270 = vld [vmem:[#allocation17] sm:$0xff]
    %v3271 = vld [vmem:[#allocation17 + $0x8] sm:$0xff]
    %v3272 = vld [vmem:[#allocation17 + $0x10] sm:$0xff]
    %v3273 = vld [vmem:[#allocation17 + $0x18] sm:$0xff]
    %v3274 = vld [vmem:[#allocation17 + $0x20] sm:$0xff]
    %v3275 = vld [vmem:[#allocation17 + $0x28] sm:$0xff]
    %v3276 = vld [vmem:[#allocation17 + $0x30] sm:$0xff]
    %v3277 = vld [vmem:[#allocation17 + $0x38] sm:$0xff]
    %v3278 = vld [vmem:[#allocation17 + $0x40] sm:$0xff]
    %v3279 = vld [vmem:[#allocation17 + $0x48] sm:$0xff]
    %v3280 = vld [vmem:[#allocation17 + $0x50] sm:$0xff]
    %v3281 = vld [vmem:[#allocation17 + $0x58] sm:$0xff]
    %v3282 = vld [vmem:[#allocation17 + $0x60] sm:$0xff]
    %v3283 = vld [vmem:[#allocation17 + $0x68] sm:$0xff]
    %v3284 = vld [vmem:[#allocation17 + $0x70] sm:$0xff]
    %v3285 = vld [vmem:[#allocation17 + $0x78] sm:$0xff]
    %v3286 = vld [vmem:[#allocation17 + $0x80] sm:$0xff]
    %v3287 = vld [vmem:[#allocation17 + $0x88] sm:$0xff]
    %v3288 = vld [vmem:[#allocation17 + $0x90] sm:$0xff]
    %v3289 = vld [vmem:[#allocation17 + $0x98] sm:$0xff]
    %v3290 = vld [vmem:[#allocation17 + $0xa0] sm:$0xff]
    %v3291 = vld [vmem:[#allocation17 + $0xa8] sm:$0xff]
    %v3292 = vld [vmem:[#allocation17 + $0xb0] sm:$0xff]
    %v3293 = vld [vmem:[#allocation17 + $0xb8] sm:$0xff]
    %v3294 = vld [vmem:[#allocation17 + $0xc0] sm:$0xff]
    %v3295 = vld [vmem:[#allocation17 + $0xc8] sm:$0xff]
    %v3296 = vld [vmem:[#allocation17 + $0xd0] sm:$0xff]
    %v3297 = vld [vmem:[#allocation17 + $0xd8] sm:$0xff]
    %v3298 = vld [vmem:[#allocation17 + $0xe0] sm:$0xff]
    %v3299 = vld [vmem:[#allocation17 + $0xe8] sm:$0xff]
    %v3300 = vld [vmem:[#allocation17 + $0xf0] sm:$0xff]
    %v3301 = vld [vmem:[#allocation17 + $0xf8] sm:$0xff]
    %v3302 = vld [vmem:[#allocation17 + $0x100] sm:$0xff]
    %v3303 = vld [vmem:[#allocation17 + $0x108] sm:$0xff]
    %v3304 = vld [vmem:[#allocation17 + $0x110] sm:$0xff]
    %v3305 = vld [vmem:[#allocation17 + $0x118] sm:$0xff]
    %v3306 = vld [vmem:[#allocation17 + $0x120] sm:$0xff]
    %v3307 = vld [vmem:[#allocation17 + $0x128] sm:$0xff]
    %v3308 = vld [vmem:[#allocation17 + $0x130] sm:$0xff]
    %v3309 = vld [vmem:[#allocation17 + $0x138] sm:$0xff]
    %v3310 = vld [vmem:[#allocation17 + $0x140] sm:$0xff]
    %v3311 = vld [vmem:[#allocation17 + $0x148] sm:$0xff]
    %v3312 = vld [vmem:[#allocation17 + $0x150] sm:$0xff]
    %v3313 = vld [vmem:[#allocation17 + $0x158] sm:$0xff]
    %v3314 = vld [vmem:[#allocation17 + $0x160] sm:$0xff]
    %v3315 = vld [vmem:[#allocation17 + $0x168] sm:$0xff]
    %v3316 = vld [vmem:[#allocation17 + $0x170] sm:$0xff]
    %v3317 = vld [vmem:[#allocation17 + $0x178] sm:$0xff]
    %v3318 = vld [vmem:[#allocation17 + $0x180] sm:$0xff]
    %v3319 = vld [vmem:[#allocation17 + $0x188] sm:$0xff]
    %v3320 = vld [vmem:[#allocation17 + $0x190] sm:$0xff]
    %v3321 = vld [vmem:[#allocation17 + $0x198] sm:$0xff]
    %v3322 = vld [vmem:[#allocation17 + $0x1a0] sm:$0xff]
    %v3323 = vld [vmem:[#allocation17 + $0x1a8] sm:$0xff]
    %v3324 = vld [vmem:[#allocation17 + $0x1b0] sm:$0xff]
    %v3325 = vld [vmem:[#allocation17 + $0x1b8] sm:$0xff]
    %v3326 = vld [vmem:[#allocation17 + $0x1c0] sm:$0xff]
    %v3327 = vld [vmem:[#allocation17 + $0x1c8] sm:$0xff]
    %v3328 = vld [vmem:[#allocation17 + $0x1d0] sm:$0xff]
    %v3329 = vld [vmem:[#allocation17 + $0x1d8] sm:$0xff]
    %v3330 = vld [vmem:[#allocation17 + $0x1e0] sm:$0xff]
    %v3331 = vld [vmem:[#allocation17 + $0x1e8] sm:$0xff]
    %v3332 = vld [vmem:[#allocation17 + $0x1f0] sm:$0xff]
    %v3333 = vld [vmem:[#allocation17 + $0x1f8] sm:$0xff]
    %v3334 = vld [vmem:[#allocation17 + $0x200] sm:$0xff]
    %v3335 = vld [vmem:[#allocation17 + $0x208] sm:$0xff]
    %v3336 = vld [vmem:[#allocation17 + $0x210] sm:$0xff]
    %v3337 = vld [vmem:[#allocation17 + $0x218] sm:$0xff]
    %v3338 = vld [vmem:[#allocation17 + $0x220] sm:$0xff]
    %v3339 = vld [vmem:[#allocation17 + $0x228] sm:$0xff]
    %v3340 = vld [vmem:[#allocation17 + $0x230] sm:$0xff]
    %v3341 = vld [vmem:[#allocation17 + $0x238] sm:$0xff]
    %v3342 = vld [vmem:[#allocation17 + $0x240] sm:$0xff]
    %v3343 = vld [vmem:[#allocation17 + $0x248] sm:$0xff]
    %v3344 = vld [vmem:[#allocation17 + $0x250] sm:$0xff]
    %v3345 = vld [vmem:[#allocation17 + $0x258] sm:$0xff]
    %v3346 = vld [vmem:[#allocation17 + $0x260] sm:$0xff]
    %v3347 = vld [vmem:[#allocation17 + $0x268] sm:$0xff]
    %v3348 = vld [vmem:[#allocation17 + $0x270] sm:$0xff]
    %v3349 = vld [vmem:[#allocation17 + $0x278] sm:$0xff]
    %v3350 = vld [vmem:[#allocation17 + $0x280] sm:$0xff]
    %v3351 = vld [vmem:[#allocation17 + $0x288] sm:$0xff]
    %v3352 = vld [vmem:[#allocation17 + $0x290] sm:$0xff]
    %v3353 = vld [vmem:[#allocation17 + $0x298] sm:$0xff]
    %v3354 = vld [vmem:[#allocation17 + $0x2a0] sm:$0xff]
    %v3355 = vld [vmem:[#allocation17 + $0x2a8] sm:$0xff]
    %v3356 = vld [vmem:[#allocation17 + $0x2b0] sm:$0xff]
    %v3357 = vld [vmem:[#allocation17 + $0x2b8] sm:$0xff]
    %v3358 = vld [vmem:[#allocation17 + $0x2c0] sm:$0xff]
    %v3359 = vld [vmem:[#allocation17 + $0x2c8] sm:$0xff]
    %v3360 = vld [vmem:[#allocation17 + $0x2d0] sm:$0xff]
    %v3361 = vld [vmem:[#allocation17 + $0x2d8] sm:$0xff]
    %v3362 = vld [vmem:[#allocation17 + $0x2e0] sm:$0xff]
    %v3363 = vld [vmem:[#allocation17 + $0x2e8] sm:$0xff]
    %v3364 = vld [vmem:[#allocation17 + $0x2f0] sm:$0xff]
    %v3365 = vld [vmem:[#allocation17 + $0x2f8] sm:$0xff]
    %v3366 = vld [vmem:[#allocation17 + $0x300] sm:$0xff]
    %v3367 = vld [vmem:[#allocation17 + $0x308] sm:$0xff]
    %v3368 = vld [vmem:[#allocation17 + $0x310] sm:$0xff]
    %v3369 = vld [vmem:[#allocation17 + $0x318] sm:$0xff]
    %v3370 = vld [vmem:[#allocation17 + $0x320] sm:$0xff]
    %v3371 = vld [vmem:[#allocation17 + $0x328] sm:$0xff]
    %v3372 = vld [vmem:[#allocation17 + $0x330] sm:$0xff]
    %v3373 = vld [vmem:[#allocation17 + $0x338] sm:$0xff]
    %v3374 = vld [vmem:[#allocation17 + $0x340] sm:$0xff]
    %v3375 = vld [vmem:[#allocation17 + $0x348] sm:$0xff]
    %v3376 = vld [vmem:[#allocation17 + $0x350] sm:$0xff]
    %v3377 = vld [vmem:[#allocation17 + $0x358] sm:$0xff]
    %v3378 = vld [vmem:[#allocation17 + $0x360] sm:$0xff]
    %v3379 = vld [vmem:[#allocation17 + $0x368] sm:$0xff]
    %v3380 = vld [vmem:[#allocation17 + $0x370] sm:$0xff]
    %v3381 = vld [vmem:[#allocation17 + $0x378] sm:$0xff]
    %v3382 = vld [vmem:[#allocation17 + $0x380] sm:$0xff]
    %v3383 = vld [vmem:[#allocation17 + $0x388] sm:$0xff]
    %v3384 = vld [vmem:[#allocation17 + $0x390] sm:$0xff]
    %v3385 = vld [vmem:[#allocation17 + $0x398] sm:$0xff]
    %v3386 = vld [vmem:[#allocation17 + $0x3a0] sm:$0xff]
    %v3387 = vld [vmem:[#allocation17 + $0x3a8] sm:$0xff]
    %v3388 = vld [vmem:[#allocation17 + $0x3b0] sm:$0xff]
    %v3389 = vld [vmem:[#allocation17 + $0x3b8] sm:$0xff]
    %v3390 = vld [vmem:[#allocation17 + $0x3c0] sm:$0xff]
    %v3391 = vld [vmem:[#allocation17 + $0x3c8] sm:$0xff]
    %v3392 = vld [vmem:[#allocation17 + $0x3d0] sm:$0xff]
    %v3393 = vld [vmem:[#allocation17 + $0x3d8] sm:$0xff]
    %v3394 = vld [vmem:[#allocation17 + $0x3e0] sm:$0xff]
    %v3395 = vld [vmem:[#allocation17 + $0x3e8] sm:$0xff]
    %v3396 = vld [vmem:[#allocation17 + $0x3f0] sm:$0xff]
    %v3397 = vld [vmem:[#allocation17 + $0x3f8] sm:$0xff]
    %v3398 = vpack.c.bf16 %v3266, %v3266
    %v3399 = vpack.c.bf16 %v3267, %v3267
    %v3400 = vpack.c.bf16 %v3268, %v3268
    %v3401 = vpack.c.bf16 %v3269, %v3269
    %v3402 = vld [vmem:[#allocation18] sm:$0xf]
    %v3404 = vperm.slane %v3402, 0
    %v3405 = vperm.slane %v3402, 1
    %v3406 = vperm.slane %v3402, 2
    %v3407 = vperm.slane %v3402, 3
    %v3540 = vunpack.c.l.b16 %v3270
    %v3541 = vunpack.c.h.b16 %v3270
    %v3542 = vunpack.c.l.b16 %v3271
    %v3543 = vunpack.c.h.b16 %v3271
    %v3544 = vunpack.c.l.b16 %v3272
    %v3545 = vunpack.c.h.b16 %v3272
    %v3546 = vunpack.c.l.b16 %v3273
    %v3547 = vunpack.c.h.b16 %v3273
    %v3548 = vunpack.c.l.b16 %v3274
    %v3549 = vunpack.c.h.b16 %v3274
    %v3550 = vunpack.c.l.b16 %v3275
    %v3551 = vunpack.c.h.b16 %v3275
    %v3552 = vunpack.c.l.b16 %v3276
    %v3553 = vunpack.c.h.b16 %v3276
    %v3554 = vunpack.c.l.b16 %v3277
    %v3555 = vunpack.c.h.b16 %v3277
    %v3556 = vunpack.c.l.b16 %v3278
    %v3557 = vunpack.c.h.b16 %v3278
    %v3558 = vunpack.c.l.b16 %v3279
    %v3559 = vunpack.c.h.b16 %v3279
    %v3560 = vunpack.c.l.b16 %v3280
    %v3561 = vunpack.c.h.b16 %v3280
    %v3562 = vunpack.c.l.b16 %v3281
    %v3563 = vunpack.c.h.b16 %v3281
    %v3564 = vunpack.c.l.b16 %v3282
    %v3565 = vunpack.c.h.b16 %v3282
    %v3566 = vunpack.c.l.b16 %v3283
    %v3567 = vunpack.c.h.b16 %v3283
    %v3568 = vunpack.c.l.b16 %v3284
    %v3569 = vunpack.c.h.b16 %v3284
    %v3570 = vunpack.c.l.b16 %v3285
    %v3571 = vunpack.c.h.b16 %v3285
    %v3572 = vunpack.c.l.b16 %v3286
    %v3573 = vunpack.c.h.b16 %v3286
    %v3574 = vunpack.c.l.b16 %v3287
    %v3575 = vunpack.c.h.b16 %v3287
    %v3576 = vunpack.c.l.b16 %v3288
    %v3577 = vunpack.c.h.b16 %v3288
    %v3578 = vunpack.c.l.b16 %v3289
    %v3579 = vunpack.c.h.b16 %v3289
    %v3580 = vunpack.c.l.b16 %v3290
    %v3581 = vunpack.c.h.b16 %v3290
    %v3582 = vunpack.c.l.b16 %v3291
    %v3583 = vunpack.c.h.b16 %v3291
    %v3584 = vunpack.c.l.b16 %v3292
    %v3585 = vunpack.c.h.b16 %v3292
    %v3586 = vunpack.c.l.b16 %v3293
    %v3587 = vunpack.c.h.b16 %v3293
    %v3588 = vunpack.c.l.b16 %v3294
    %v3589 = vunpack.c.h.b16 %v3294
    %v3590 = vunpack.c.l.b16 %v3295
    %v3591 = vunpack.c.h.b16 %v3295
    %v3592 = vunpack.c.l.b16 %v3296
    %v3593 = vunpack.c.h.b16 %v3296
    %v3594 = vunpack.c.l.b16 %v3297
    %v3595 = vunpack.c.h.b16 %v3297
    %v3596 = vunpack.c.l.b16 %v3298
    %v3597 = vunpack.c.h.b16 %v3298
    %v3598 = vunpack.c.l.b16 %v3299
    %v3599 = vunpack.c.h.b16 %v3299
    %v3600 = vunpack.c.l.b16 %v3300
    %v3601 = vunpack.c.h.b16 %v3300
    %v3602 = vunpack.c.l.b16 %v3301
    %v3603 = vunpack.c.h.b16 %v3301
    %v3604 = vunpack.c.l.b16 %v3302
    %v3605 = vunpack.c.h.b16 %v3302
    %v3606 = vunpack.c.l.b16 %v3303
    %v3607 = vunpack.c.h.b16 %v3303
    %v3608 = vunpack.c.l.b16 %v3304
    %v3609 = vunpack.c.h.b16 %v3304
    %v3610 = vunpack.c.l.b16 %v3305
    %v3611 = vunpack.c.h.b16 %v3305
    %v3612 = vunpack.c.l.b16 %v3306
    %v3613 = vunpack.c.h.b16 %v3306
    %v3614 = vunpack.c.l.b16 %v3307
    %v3615 = vunpack.c.h.b16 %v3307
    %v3616 = vunpack.c.l.b16 %v3308
    %v3617 = vunpack.c.h.b16 %v3308
    %v3618 = vunpack.c.l.b16 %v3309
    %v3619 = vunpack.c.h.b16 %v3309
    %v3620 = vunpack.c.l.b16 %v3310
    %v3621 = vunpack.c.h.b16 %v3310
    %v3622 = vunpack.c.l.b16 %v3311
    %v3623 = vunpack.c.h.b16 %v3311
    %v3624 = vunpack.c.l.b16 %v3312
    %v3625 = vunpack.c.h.b16 %v3312
    %v3626 = vunpack.c.l.b16 %v3313
    %v3627 = vunpack.c.h.b16 %v3313
    %v3628 = vunpack.c.l.b16 %v3314
    %v3629 = vunpack.c.h.b16 %v3314
    %v3630 = vunpack.c.l.b16 %v3315
    %v3631 = vunpack.c.h.b16 %v3315
    %v3632 = vunpack.c.l.b16 %v3316
    %v3633 = vunpack.c.h.b16 %v3316
    %v3634 = vunpack.c.l.b16 %v3317
    %v3635 = vunpack.c.h.b16 %v3317
    %v3636 = vunpack.c.l.b16 %v3318
    %v3637 = vunpack.c.h.b16 %v3318
    %v3638 = vunpack.c.l.b16 %v3319
    %v3639 = vunpack.c.h.b16 %v3319
    %v3640 = vunpack.c.l.b16 %v3320
    %v3641 = vunpack.c.h.b16 %v3320
    %v3642 = vunpack.c.l.b16 %v3321
    %v3643 = vunpack.c.h.b16 %v3321
    %v3644 = vunpack.c.l.b16 %v3322
    %v3645 = vunpack.c.h.b16 %v3322
    %v3646 = vunpack.c.l.b16 %v3323
    %v3647 = vunpack.c.h.b16 %v3323
    %v3648 = vunpack.c.l.b16 %v3324
    %v3649 = vunpack.c.h.b16 %v3324
    %v3650 = vunpack.c.l.b16 %v3325
    %v3651 = vunpack.c.h.b16 %v3325
    %v3652 = vunpack.c.l.b16 %v3326
    %v3653 = vunpack.c.h.b16 %v3326
    %v3654 = vunpack.c.l.b16 %v3327
    %v3655 = vunpack.c.h.b16 %v3327
    %v3656 = vunpack.c.l.b16 %v3328
    %v3657 = vunpack.c.h.b16 %v3328
    %v3658 = vunpack.c.l.b16 %v3329
    %v3659 = vunpack.c.h.b16 %v3329
    %v3660 = vunpack.c.l.b16 %v3330
    %v3661 = vunpack.c.h.b16 %v3330
    %v3662 = vunpack.c.l.b16 %v3331
    %v3663 = vunpack.c.h.b16 %v3331
    %v3664 = vunpack.c.l.b16 %v3332
    %v3665 = vunpack.c.h.b16 %v3332
    %v3666 = vunpack.c.l.b16 %v3333
    %v3667 = vunpack.c.h.b16 %v3333
    %v3668 = vunpack.c.l.b16 %v3334
    %v3669 = vunpack.c.h.b16 %v3334
    %v3670 = vunpack.c.l.b16 %v3335
    %v3671 = vunpack.c.h.b16 %v3335
    %v3672 = vunpack.c.l.b16 %v3336
    %v3673 = vunpack.c.h.b16 %v3336
    %v3674 = vunpack.c.l.b16 %v3337
    %v3675 = vunpack.c.h.b16 %v3337
    %v3676 = vunpack.c.l.b16 %v3338
    %v3677 = vunpack.c.h.b16 %v3338
    %v3678 = vunpack.c.l.b16 %v3339
    %v3679 = vunpack.c.h.b16 %v3339
    %v3680 = vunpack.c.l.b16 %v3340
    %v3681 = vunpack.c.h.b16 %v3340
    %v3682 = vunpack.c.l.b16 %v3341
    %v3683 = vunpack.c.h.b16 %v3341
    %v3684 = vunpack.c.l.b16 %v3342
    %v3685 = vunpack.c.h.b16 %v3342
    %v3686 = vunpack.c.l.b16 %v3343
    %v3687 = vunpack.c.h.b16 %v3343
    %v3688 = vunpack.c.l.b16 %v3344
    %v3689 = vunpack.c.h.b16 %v3344
    %v3690 = vunpack.c.l.b16 %v3345
    %v3691 = vunpack.c.h.b16 %v3345
    %v3692 = vunpack.c.l.b16 %v3346
    %v3693 = vunpack.c.h.b16 %v3346
    %v3694 = vunpack.c.l.b16 %v3347
    %v3695 = vunpack.c.h.b16 %v3347
    %v3696 = vunpack.c.l.b16 %v3348
    %v3697 = vunpack.c.h.b16 %v3348
    %v3698 = vunpack.c.l.b16 %v3349
    %v3699 = vunpack.c.h.b16 %v3349
    %v3700 = vunpack.c.l.b16 %v3350
    %v3701 = vunpack.c.h.b16 %v3350
    %v3702 = vunpack.c.l.b16 %v3351
    %v3703 = vunpack.c.h.b16 %v3351
    %v3704 = vunpack.c.l.b16 %v3352
    %v3705 = vunpack.c.h.b16 %v3352
    %v3706 = vunpack.c.l.b16 %v3353
    %v3707 = vunpack.c.h.b16 %v3353
    %v3708 = vunpack.c.l.b16 %v3354
    %v3709 = vunpack.c.h.b16 %v3354
    %v3710 = vunpack.c.l.b16 %v3355
    %v3711 = vunpack.c.h.b16 %v3355
    %v3712 = vunpack.c.l.b16 %v3356
    %v3713 = vunpack.c.h.b16 %v3356
    %v3714 = vunpack.c.l.b16 %v3357
    %v3715 = vunpack.c.h.b16 %v3357
    %v3716 = vunpack.c.l.b16 %v3358
    %v3717 = vunpack.c.h.b16 %v3358
    %v3718 = vunpack.c.l.b16 %v3359
    %v3719 = vunpack.c.h.b16 %v3359
    %v3720 = vunpack.c.l.b16 %v3360
    %v3721 = vunpack.c.h.b16 %v3360
    %v3722 = vunpack.c.l.b16 %v3361
    %v3723 = vunpack.c.h.b16 %v3361
    %v3724 = vunpack.c.l.b16 %v3362
    %v3725 = vunpack.c.h.b16 %v3362
    %v3726 = vunpack.c.l.b16 %v3363
    %v3727 = vunpack.c.h.b16 %v3363
    %v3728 = vunpack.c.l.b16 %v3364
    %v3729 = vunpack.c.h.b16 %v3364
    %v3730 = vunpack.c.l.b16 %v3365
    %v3731 = vunpack.c.h.b16 %v3365
    %v3732 = vunpack.c.l.b16 %v3366
    %v3733 = vunpack.c.h.b16 %v3366
    %v3734 = vunpack.c.l.b16 %v3367
    %v3735 = vunpack.c.h.b16 %v3367
    %v3736 = vunpack.c.l.b16 %v3368
    %v3737 = vunpack.c.h.b16 %v3368
    %v3738 = vunpack.c.l.b16 %v3369
    %v3739 = vunpack.c.h.b16 %v3369
    %v3740 = vunpack.c.l.b16 %v3370
    %v3741 = vunpack.c.h.b16 %v3370
    %v3742 = vunpack.c.l.b16 %v3371
    %v3743 = vunpack.c.h.b16 %v3371
    %v3744 = vunpack.c.l.b16 %v3372
    %v3745 = vunpack.c.h.b16 %v3372
    %v3746 = vunpack.c.l.b16 %v3373
    %v3747 = vunpack.c.h.b16 %v3373
    %v3748 = vunpack.c.l.b16 %v3374
    %v3749 = vunpack.c.h.b16 %v3374
    %v3750 = vunpack.c.l.b16 %v3375
    %v3751 = vunpack.c.h.b16 %v3375
    %v3752 = vunpack.c.l.b16 %v3376
    %v3753 = vunpack.c.h.b16 %v3376
    %v3754 = vunpack.c.l.b16 %v3377
    %v3755 = vunpack.c.h.b16 %v3377
    %v3756 = vunpack.c.l.b16 %v3378
    %v3757 = vunpack.c.h.b16 %v3378
    %v3758 = vunpack.c.l.b16 %v3379
    %v3759 = vunpack.c.h.b16 %v3379
    %v3760 = vunpack.c.l.b16 %v3380
    %v3761 = vunpack.c.h.b16 %v3380
    %v3762 = vunpack.c.l.b16 %v3381
    %v3763 = vunpack.c.h.b16 %v3381
    %v3764 = vunpack.c.l.b16 %v3382
    %v3765 = vunpack.c.h.b16 %v3382
    %v3766 = vunpack.c.l.b16 %v3383
    %v3767 = vunpack.c.h.b16 %v3383
    %v3768 = vunpack.c.l.b16 %v3384
    %v3769 = vunpack.c.h.b16 %v3384
    %v3770 = vunpack.c.l.b16 %v3385
    %v3771 = vunpack.c.h.b16 %v3385
    %v3772 = vunpack.c.l.b16 %v3386
    %v3773 = vunpack.c.h.b16 %v3386
    %v3774 = vunpack.c.l.b16 %v3387
    %v3775 = vunpack.c.h.b16 %v3387
    %v3776 = vunpack.c.l.b16 %v3388
    %v3777 = vunpack.c.h.b16 %v3388
    %v3778 = vunpack.c.l.b16 %v3389
    %v3779 = vunpack.c.h.b16 %v3389
    %v3780 = vunpack.c.l.b16 %v3390
    %v3781 = vunpack.c.h.b16 %v3390
    %v3782 = vunpack.c.l.b16 %v3391
    %v3783 = vunpack.c.h.b16 %v3391
    %v3784 = vunpack.c.l.b16 %v3392
    %v3785 = vunpack.c.h.b16 %v3392
    %v3786 = vunpack.c.l.b16 %v3393
    %v3787 = vunpack.c.h.b16 %v3393
    %v3788 = vunpack.c.l.b16 %v3394
    %v3789 = vunpack.c.h.b16 %v3394
    %v3790 = vunpack.c.l.b16 %v3395
    %v3791 = vunpack.c.h.b16 %v3395
    %v3792 = vunpack.c.l.b16 %v3396
    %v3793 = vunpack.c.h.b16 %v3396
    %v3794 = vunpack.c.l.b16 %v3397
    %v3795 = vunpack.c.h.b16 %v3397
    %v3796 = vpack.c.b16 %v3544, %v3540
    %v3797 = vpack.c.b16 %v3545, %v3541
    %v3798 = vpack.c.b16 %v3546, %v3542
    %v3799 = vpack.c.b16 %v3547, %v3543
    %v3800 = vpack.c.b16 %v3552, %v3548
    %v3801 = vpack.c.b16 %v3553, %v3549
    %v3802 = vpack.c.b16 %v3554, %v3550
    %v3803 = vpack.c.b16 %v3555, %v3551
    %v3804 = vpack.c.b16 %v3560, %v3556
    %v3805 = vpack.c.b16 %v3561, %v3557
    %v3806 = vpack.c.b16 %v3562, %v3558
    %v3807 = vpack.c.b16 %v3563, %v3559
    %v3808 = vpack.c.b16 %v3568, %v3564
    %v3809 = vpack.c.b16 %v3569, %v3565
    %v3810 = vpack.c.b16 %v3570, %v3566
    %v3811 = vpack.c.b16 %v3571, %v3567
    %v3812 = vpack.c.b16 %v3576, %v3572
    %v3813 = vpack.c.b16 %v3577, %v3573
    %v3814 = vpack.c.b16 %v3578, %v3574
    %v3815 = vpack.c.b16 %v3579, %v3575
    %v3816 = vpack.c.b16 %v3584, %v3580
    %v3817 = vpack.c.b16 %v3585, %v3581
    %v3818 = vpack.c.b16 %v3586, %v3582
    %v3819 = vpack.c.b16 %v3587, %v3583
    %v3820 = vpack.c.b16 %v3592, %v3588
    %v3821 = vpack.c.b16 %v3593, %v3589
    %v3822 = vpack.c.b16 %v3594, %v3590
    %v3823 = vpack.c.b16 %v3595, %v3591
    %v3824 = vpack.c.b16 %v3600, %v3596
    %v3825 = vpack.c.b16 %v3601, %v3597
    %v3826 = vpack.c.b16 %v3602, %v3598
    %v3827 = vpack.c.b16 %v3603, %v3599
    %v3828 = vpack.c.b16 %v3608, %v3604
    %v3829 = vpack.c.b16 %v3609, %v3605
    %v3830 = vpack.c.b16 %v3610, %v3606
    %v3831 = vpack.c.b16 %v3611, %v3607
    %v3832 = vpack.c.b16 %v3616, %v3612
    %v3833 = vpack.c.b16 %v3617, %v3613
    %v3834 = vpack.c.b16 %v3618, %v3614
    %v3835 = vpack.c.b16 %v3619, %v3615
    %v3836 = vpack.c.b16 %v3624, %v3620
    %v3837 = vpack.c.b16 %v3625, %v3621
    %v3838 = vpack.c.b16 %v3626, %v3622
    %v3839 = vpack.c.b16 %v3627, %v3623
    %v3840 = vpack.c.b16 %v3632, %v3628
    %v3841 = vpack.c.b16 %v3633, %v3629
    %v3842 = vpack.c.b16 %v3634, %v3630
    %v3843 = vpack.c.b16 %v3635, %v3631
    %v3844 = vpack.c.b16 %v3640, %v3636
    %v3845 = vpack.c.b16 %v3641, %v3637
    %v3846 = vpack.c.b16 %v3642, %v3638
    %v3847 = vpack.c.b16 %v3643, %v3639
    %v3848 = vpack.c.b16 %v3648, %v3644
    %v3849 = vpack.c.b16 %v3649, %v3645
    %v3850 = vpack.c.b16 %v3650, %v3646
    %v3851 = vpack.c.b16 %v3651, %v3647
    %v3852 = vpack.c.b16 %v3656, %v3652
    %v3853 = vpack.c.b16 %v3657, %v3653
    %v3854 = vpack.c.b16 %v3658, %v3654
    %v3855 = vpack.c.b16 %v3659, %v3655
    %v3856 = vpack.c.b16 %v3664, %v3660
    %v3857 = vpack.c.b16 %v3665, %v3661
    %v3858 = vpack.c.b16 %v3666, %v3662
    %v3859 = vpack.c.b16 %v3667, %v3663
    %v3860 = vpack.c.b16 %v3672, %v3668
    %v3861 = vpack.c.b16 %v3673, %v3669
    %v3862 = vpack.c.b16 %v3674, %v3670
    %v3863 = vpack.c.b16 %v3675, %v3671
    %v3864 = vpack.c.b16 %v3680, %v3676
    %v3865 = vpack.c.b16 %v3681, %v3677
    %v3866 = vpack.c.b16 %v3682, %v3678
    %v3867 = vpack.c.b16 %v3683, %v3679
    %v3868 = vpack.c.b16 %v3688, %v3684
    %v3869 = vpack.c.b16 %v3689, %v3685
    %v3870 = vpack.c.b16 %v3690, %v3686
    %v3871 = vpack.c.b16 %v3691, %v3687
    %v3872 = vpack.c.b16 %v3696, %v3692
    %v3873 = vpack.c.b16 %v3697, %v3693
    %v3874 = vpack.c.b16 %v3698, %v3694
    %v3875 = vpack.c.b16 %v3699, %v3695
    %v3876 = vpack.c.b16 %v3704, %v3700
    %v3877 = vpack.c.b16 %v3705, %v3701
    %v3878 = vpack.c.b16 %v3706, %v3702
    %v3879 = vpack.c.b16 %v3707, %v3703
    %v3880 = vpack.c.b16 %v3712, %v3708
    %v3881 = vpack.c.b16 %v3713, %v3709
    %v3882 = vpack.c.b16 %v3714, %v3710
    %v3883 = vpack.c.b16 %v3715, %v3711
    %v3884 = vpack.c.b16 %v3720, %v3716
    %v3885 = vpack.c.b16 %v3721, %v3717
    %v3886 = vpack.c.b16 %v3722, %v3718
    %v3887 = vpack.c.b16 %v3723, %v3719
    %v3888 = vpack.c.b16 %v3728, %v3724
    %v3889 = vpack.c.b16 %v3729, %v3725
    %v3890 = vpack.c.b16 %v3730, %v3726
    %v3891 = vpack.c.b16 %v3731, %v3727
    %v3892 = vpack.c.b16 %v3736, %v3732
    %v3893 = vpack.c.b16 %v3737, %v3733
    %v3894 = vpack.c.b16 %v3738, %v3734
    %v3895 = vpack.c.b16 %v3739, %v3735
    %v3896 = vpack.c.b16 %v3744, %v3740
    %v3897 = vpack.c.b16 %v3745, %v3741
    %v3898 = vpack.c.b16 %v3746, %v3742
    %v3899 = vpack.c.b16 %v3747, %v3743
    %v3900 = vpack.c.b16 %v3752, %v3748
    %v3901 = vpack.c.b16 %v3753, %v3749
    %v3902 = vpack.c.b16 %v3754, %v3750
    %v3903 = vpack.c.b16 %v3755, %v3751
    %v3904 = vpack.c.b16 %v3760, %v3756
    %v3905 = vpack.c.b16 %v3761, %v3757
    %v3906 = vpack.c.b16 %v3762, %v3758
    %v3907 = vpack.c.b16 %v3763, %v3759
    %v3908 = vpack.c.b16 %v3768, %v3764
    %v3909 = vpack.c.b16 %v3769, %v3765
    %v3910 = vpack.c.b16 %v3770, %v3766
    %v3911 = vpack.c.b16 %v3771, %v3767
    %v3912 = vpack.c.b16 %v3776, %v3772
    %v3913 = vpack.c.b16 %v3777, %v3773
    %v3914 = vpack.c.b16 %v3778, %v3774
    %v3915 = vpack.c.b16 %v3779, %v3775
    %v3916 = vpack.c.b16 %v3784, %v3780
    %v3917 = vpack.c.b16 %v3785, %v3781
    %v3918 = vpack.c.b16 %v3786, %v3782
    %v3919 = vpack.c.b16 %v3787, %v3783
    %v3920 = vpack.c.b16 %v3792, %v3788
    %v3921 = vpack.c.b16 %v3793, %v3789
    %v3922 = vpack.c.b16 %v3794, %v3790
    %v3923 = vpack.c.b16 %v3795, %v3791
    %4052 = vmatpush.bf16.msra.mxu0 %v3824
    %4053 = vmatpush.bf16.msra.mxu0 %v3820
    %4054 = vmatpush.bf16.msra.mxu0 %v3816
    %4055 = vmatpush.bf16.msra.mxu0 %v3812
    %4056 = vmatpush.bf16.msra.mxu0 %v3808
    %4057 = vmatpush.bf16.msra.mxu0 %v3804
    %4058 = vmatpush.bf16.msra.mxu0 %v3800
    %4059 = vmatpush.bf16.msra.mxu0 %v3796
    %4060 = vmatmul.bf16.gmra.mxu0 %v3398
    %v4061 = vpop.f32.mrf.mxu0
    %v4062 = vadd.f32 %v3404, %v4061
    %v4063 = vpop.f32.mrf.mxu0
    %4064 = vdwg.mxu0
    %4065 = vmatpush.bf16.msra.mxu0 %v3856
    %4066 = vmatpush.bf16.msra.mxu0 %v3852
    %4067 = vmatpush.bf16.msra.mxu0 %v3848
    %4068 = vmatpush.bf16.msra.mxu0 %v3844
    %4069 = vmatpush.bf16.msra.mxu0 %v3840
    %4070 = vmatpush.bf16.msra.mxu0 %v3836
    %4071 = vmatpush.bf16.msra.mxu0 %v3832
    %4072 = vmatpush.bf16.msra.mxu0 %v3828
    %4073 = vmatmul.bf16.gmra.mxu0 %v3399
    %v4074 = vpop.f32.mrf.mxu0
    %v4075 = vadd.f32 %v4062, %v4074
    %v4076 = vpop.f32.mrf.mxu0
    %4077 = vdwg.mxu0
    %4078 = vmatpush.bf16.msra.mxu0 %v3888
    %4079 = vmatpush.bf16.msra.mxu0 %v3884
    %4080 = vmatpush.bf16.msra.mxu0 %v3880
    %4081 = vmatpush.bf16.msra.mxu0 %v3876
    %4082 = vmatpush.bf16.msra.mxu0 %v3872
    %4083 = vmatpush.bf16.msra.mxu0 %v3868
    %4084 = vmatpush.bf16.msra.mxu0 %v3864
    %4085 = vmatpush.bf16.msra.mxu0 %v3860
    %4086 = vmatmul.bf16.gmra.mxu0 %v3400
    %v4087 = vpop.f32.mrf.mxu0
    %v4088 = vadd.f32 %v4075, %v4087
    %v4089 = vpop.f32.mrf.mxu0
    %4090 = vdwg.mxu0
    %4091 = vmatpush.bf16.msra.mxu0 %v3920
    %4092 = vmatpush.bf16.msra.mxu0 %v3916
    %4093 = vmatpush.bf16.msra.mxu0 %v3912
    %4094 = vmatpush.bf16.msra.mxu0 %v3908
    %4095 = vmatpush.bf16.msra.mxu0 %v3904
    %4096 = vmatpush.bf16.msra.mxu0 %v3900
    %4097 = vmatpush.bf16.msra.mxu0 %v3896
    %4098 = vmatpush.bf16.msra.mxu0 %v3892
    %4099 = vmatmul.bf16.gmra.mxu0 %v3401
    %v4100 = vpop.f32.mrf.mxu0
    %v4101 = vadd.f32 %v4088, %v4100
    %v4102 = vpop.f32.mrf.mxu0
    %4103 = vdwg.mxu0
    %4104 = vmatpush.bf16.msra.mxu0 %v3825
    %4105 = vmatpush.bf16.msra.mxu0 %v3821
    %4106 = vmatpush.bf16.msra.mxu0 %v3817
    %4107 = vmatpush.bf16.msra.mxu0 %v3813
    %4108 = vmatpush.bf16.msra.mxu0 %v3809
    %4109 = vmatpush.bf16.msra.mxu0 %v3805
    %4110 = vmatpush.bf16.msra.mxu0 %v3801
    %4111 = vmatpush.bf16.msra.mxu0 %v3797
    %4112 = vmatmul.bf16.gmra.mxu0 %v3398
    %v4113 = vpop.f32.mrf.mxu0
    %v4114 = vadd.f32 %v3405, %v4113
    %v4115 = vpop.f32.mrf.mxu0
    %4116 = vdwg.mxu0
    %4117 = vmatpush.bf16.msra.mxu0 %v3857
    %4118 = vmatpush.bf16.msra.mxu0 %v3853
    %4119 = vmatpush.bf16.msra.mxu0 %v3849
    %4120 = vmatpush.bf16.msra.mxu0 %v3845
    %4121 = vmatpush.bf16.msra.mxu0 %v3841
    %4122 = vmatpush.bf16.msra.mxu0 %v3837
    %4123 = vmatpush.bf16.msra.mxu0 %v3833
    %4124 = vmatpush.bf16.msra.mxu0 %v3829
    %4125 = vmatmul.bf16.gmra.mxu0 %v3399
    %v4126 = vpop.f32.mrf.mxu0
    %v4127 = vadd.f32 %v4114, %v4126
    %v4128 = vpop.f32.mrf.mxu0
    %4129 = vdwg.mxu0
    %4130 = vmatpush.bf16.msra.mxu0 %v3889
    %4131 = vmatpush.bf16.msra.mxu0 %v3885
    %4132 = vmatpush.bf16.msra.mxu0 %v3881
    %4133 = vmatpush.bf16.msra.mxu0 %v3877
    %4134 = vmatpush.bf16.msra.mxu0 %v3873
    %4135 = vmatpush.bf16.msra.mxu0 %v3869
    %4136 = vmatpush.bf16.msra.mxu0 %v3865
    %4137 = vmatpush.bf16.msra.mxu0 %v3861
    %4138 = vmatmul.bf16.gmra.mxu0 %v3400
    %v4139 = vpop.f32.mrf.mxu0
    %v4140 = vadd.f32 %v4127, %v4139
    %v4141 = vpop.f32.mrf.mxu0
    %4142 = vdwg.mxu0
    %4143 = vmatpush.bf16.msra.mxu0 %v3921
    %4144 = vmatpush.bf16.msra.mxu0 %v3917
    %4145 = vmatpush.bf16.msra.mxu0 %v3913
    %4146 = vmatpush.bf16.msra.mxu0 %v3909
    %4147 = vmatpush.bf16.msra.mxu0 %v3905
    %4148 = vmatpush.bf16.msra.mxu0 %v3901
    %4149 = vmatpush.bf16.msra.mxu0 %v3897
    %4150 = vmatpush.bf16.msra.mxu0 %v3893
    %4151 = vmatmul.bf16.gmra.mxu0 %v3401
    %v4152 = vpop.f32.mrf.mxu0
    %v4153 = vadd.f32 %v4140, %v4152
    %v4154 = vpop.f32.mrf.mxu0
    %4155 = vdwg.mxu0
    %4156 = vmatpush.bf16.msra.mxu0 %v3826
    %4157 = vmatpush.bf16.msra.mxu0 %v3822
    %4158 = vmatpush.bf16.msra.mxu0 %v3818
    %4159 = vmatpush.bf16.msra.mxu0 %v3814
    %4160 = vmatpush.bf16.msra.mxu0 %v3810
    %4161 = vmatpush.bf16.msra.mxu0 %v3806
    %4162 = vmatpush.bf16.msra.mxu0 %v3802
    %4163 = vmatpush.bf16.msra.mxu0 %v3798
    %4164 = vmatmul.bf16.gmra.mxu0 %v3398
    %v4165 = vpop.f32.mrf.mxu0
    %v4166 = vadd.f32 %v3406, %v4165
    %v4167 = vpop.f32.mrf.mxu0
    %4168 = vdwg.mxu0
    %4169 = vmatpush.bf16.msra.mxu0 %v3858
    %4170 = vmatpush.bf16.msra.mxu0 %v3854
    %4171 = vmatpush.bf16.msra.mxu0 %v3850
    %4172 = vmatpush.bf16.msra.mxu0 %v3846
    %4173 = vmatpush.bf16.msra.mxu0 %v3842
    %4174 = vmatpush.bf16.msra.mxu0 %v3838
    %4175 = vmatpush.bf16.msra.mxu0 %v3834
    %4176 = vmatpush.bf16.msra.mxu0 %v3830
    %4177 = vmatmul.bf16.gmra.mxu0 %v3399
    %v4178 = vpop.f32.mrf.mxu0
    %v4179 = vadd.f32 %v4166, %v4178
    %v4180 = vpop.f32.mrf.mxu0
    %4181 = vdwg.mxu0
    %4182 = vmatpush.bf16.msra.mxu0 %v3890
    %4183 = vmatpush.bf16.msra.mxu0 %v3886
    %4184 = vmatpush.bf16.msra.mxu0 %v3882
    %4185 = vmatpush.bf16.msra.mxu0 %v3878
    %4186 = vmatpush.bf16.msra.mxu0 %v3874
    %4187 = vmatpush.bf16.msra.mxu0 %v3870
    %4188 = vmatpush.bf16.msra.mxu0 %v3866
    %4189 = vmatpush.bf16.msra.mxu0 %v3862
    %4190 = vmatmul.bf16.gmra.mxu0 %v3400
    %v4191 = vpop.f32.mrf.mxu0
    %v4192 = vadd.f32 %v4179, %v4191
    %v4193 = vpop.f32.mrf.mxu0
    %4194 = vdwg.mxu0
    %4195 = vmatpush.bf16.msra.mxu0 %v3922
    %4196 = vmatpush.bf16.msra.mxu0 %v3918
    %4197 = vmatpush.bf16.msra.mxu0 %v3914
    %4198 = vmatpush.bf16.msra.mxu0 %v3910
    %4199 = vmatpush.bf16.msra.mxu0 %v3906
    %4200 = vmatpush.bf16.msra.mxu0 %v3902
    %4201 = vmatpush.bf16.msra.mxu0 %v3898
    %4202 = vmatpush.bf16.msra.mxu0 %v3894
    %4203 = vmatmul.bf16.gmra.mxu0 %v3401
    %v4204 = vpop.f32.mrf.mxu0
    %v4205 = vadd.f32 %v4192, %v4204
    %v4206 = vpop.f32.mrf.mxu0
    %4207 = vdwg.mxu0
    %4208 = vmatpush.bf16.msra.mxu0 %v3827
    %4209 = vmatpush.bf16.msra.mxu0 %v3823
    %4210 = vmatpush.bf16.msra.mxu0 %v3819
    %4211 = vmatpush.bf16.msra.mxu0 %v3815
    %4212 = vmatpush.bf16.msra.mxu0 %v3811
    %4213 = vmatpush.bf16.msra.mxu0 %v3807
    %4214 = vmatpush.bf16.msra.mxu0 %v3803
    %4215 = vmatpush.bf16.msra.mxu0 %v3799
    %4216 = vmatmul.bf16.gmra.mxu0 %v3398
    %v4217 = vpop.f32.mrf.mxu0
    %v4218 = vadd.f32 %v3407, %v4217
    %v4219 = vpop.f32.mrf.mxu0
    %4220 = vdwg.mxu0
    %4221 = vmatpush.bf16.msra.mxu0 %v3859
    %4222 = vmatpush.bf16.msra.mxu0 %v3855
    %4223 = vmatpush.bf16.msra.mxu0 %v3851
    %4224 = vmatpush.bf16.msra.mxu0 %v3847
    %4225 = vmatpush.bf16.msra.mxu0 %v3843
    %4226 = vmatpush.bf16.msra.mxu0 %v3839
    %4227 = vmatpush.bf16.msra.mxu0 %v3835
    %4228 = vmatpush.bf16.msra.mxu0 %v3831
    %4229 = vmatmul.bf16.gmra.mxu0 %v3399
    %v4230 = vpop.f32.mrf.mxu0
    %v4231 = vadd.f32 %v4218, %v4230
    %v4232 = vpop.f32.mrf.mxu0
    %4233 = vdwg.mxu0
    %4234 = vmatpush.bf16.msra.mxu0 %v3891
    %4235 = vmatpush.bf16.msra.mxu0 %v3887
    %4236 = vmatpush.bf16.msra.mxu0 %v3883
    %4237 = vmatpush.bf16.msra.mxu0 %v3879
    %4238 = vmatpush.bf16.msra.mxu0 %v3875
    %4239 = vmatpush.bf16.msra.mxu0 %v3871
    %4240 = vmatpush.bf16.msra.mxu0 %v3867
    %4241 = vmatpush.bf16.msra.mxu0 %v3863
    %4242 = vmatmul.bf16.gmra.mxu0 %v3400
    %v4243 = vpop.f32.mrf.mxu0
    %v4244 = vadd.f32 %v4231, %v4243
    %v4245 = vpop.f32.mrf.mxu0
    %4246 = vdwg.mxu0
    %4247 = vmatpush.bf16.msra.mxu0 %v3923
    %4248 = vmatpush.bf16.msra.mxu0 %v3919
    %4249 = vmatpush.bf16.msra.mxu0 %v3915
    %4250 = vmatpush.bf16.msra.mxu0 %v3911
    %4251 = vmatpush.bf16.msra.mxu0 %v3907
    %4252 = vmatpush.bf16.msra.mxu0 %v3903
    %4253 = vmatpush.bf16.msra.mxu0 %v3899
    %4254 = vmatpush.bf16.msra.mxu0 %v3895
    %4255 = vmatmul.bf16.gmra.mxu0 %v3401
    %v4256 = vpop.f32.mrf.mxu0
    %v4257 = vadd.f32 %v4244, %v4256
    %v4258 = vpop.f32.mrf.mxu0
    %4259 = vdwg.mxu0
    %vm4260 = vcmp.gt.f32.partialorder %v4101, 0.0
    %vm4261 = vcmp.gt.f32.partialorder %v4153, 0.0
    %vm4262 = vcmp.gt.f32.partialorder %v4205, 0.0
    %vm4263 = vcmp.gt.f32.partialorder %v4257, 0.0
    %v4264 = vmul.f32 %v4101, 0.01
    %v4265 = vmul.f32 %v4153, 0.01
    %v4266 = vmul.f32 %v4205, 0.01
    %v4267 = vmul.f32 %v4257, 0.01
    %v4268 = vsel %vm4260, %v4101, %v4264
    %v4269 = vsel %vm4261, %v4153, %v4265
    %v4270 = vsel %vm4262, %v4205, %v4266
    %v4271 = vsel %vm4263, %v4257, %v4267
    %v4272 = vld [vmem:[#allocation20] sm:$0xff]
    %v4273 = vld [vmem:[#allocation20 + $0x8] sm:$0xff]
    %v4274 = vld [vmem:[#allocation20 + $0x10] sm:$0xff]
    %v4275 = vld [vmem:[#allocation20 + $0x18] sm:$0xff]
    %v4276 = vld [vmem:[#allocation20 + $0x20] sm:$0xff]
    %v4277 = vld [vmem:[#allocation20 + $0x28] sm:$0xff]
    %v4278 = vld [vmem:[#allocation20 + $0x30] sm:$0xff]
    %v4279 = vld [vmem:[#allocation20 + $0x38] sm:$0xff]
    %v4280 = vld [vmem:[#allocation20 + $0x40] sm:$0xff]
    %v4281 = vld [vmem:[#allocation20 + $0x48] sm:$0xff]
    %v4282 = vld [vmem:[#allocation20 + $0x50] sm:$0xff]
    %v4283 = vld [vmem:[#allocation20 + $0x58] sm:$0xff]
    %v4284 = vld [vmem:[#allocation20 + $0x60] sm:$0xff]
    %v4285 = vld [vmem:[#allocation20 + $0x68] sm:$0xff]
    %v4286 = vld [vmem:[#allocation20 + $0x70] sm:$0xff]
    %v4287 = vld [vmem:[#allocation20 + $0x78] sm:$0xff]
    %v4288 = vld [vmem:[#allocation20 + $0x80] sm:$0xff]
    %v4289 = vld [vmem:[#allocation20 + $0x88] sm:$0xff]
    %v4290 = vld [vmem:[#allocation20 + $0x90] sm:$0xff]
    %v4291 = vld [vmem:[#allocation20 + $0x98] sm:$0xff]
    %v4292 = vld [vmem:[#allocation20 + $0xa0] sm:$0xff]
    %v4293 = vld [vmem:[#allocation20 + $0xa8] sm:$0xff]
    %v4294 = vld [vmem:[#allocation20 + $0xb0] sm:$0xff]
    %v4295 = vld [vmem:[#allocation20 + $0xb8] sm:$0xff]
    %v4296 = vld [vmem:[#allocation20 + $0xc0] sm:$0xff]
    %v4297 = vld [vmem:[#allocation20 + $0xc8] sm:$0xff]
    %v4298 = vld [vmem:[#allocation20 + $0xd0] sm:$0xff]
    %v4299 = vld [vmem:[#allocation20 + $0xd8] sm:$0xff]
    %v4300 = vld [vmem:[#allocation20 + $0xe0] sm:$0xff]
    %v4301 = vld [vmem:[#allocation20 + $0xe8] sm:$0xff]
    %v4302 = vld [vmem:[#allocation20 + $0xf0] sm:$0xff]
    %v4303 = vld [vmem:[#allocation20 + $0xf8] sm:$0xff]
    %v4304 = vld [vmem:[#allocation20 + $0x100] sm:$0xff]
    %v4305 = vld [vmem:[#allocation20 + $0x108] sm:$0xff]
    %v4306 = vld [vmem:[#allocation20 + $0x110] sm:$0xff]
    %v4307 = vld [vmem:[#allocation20 + $0x118] sm:$0xff]
    %v4308 = vld [vmem:[#allocation20 + $0x120] sm:$0xff]
    %v4309 = vld [vmem:[#allocation20 + $0x128] sm:$0xff]
    %v4310 = vld [vmem:[#allocation20 + $0x130] sm:$0xff]
    %v4311 = vld [vmem:[#allocation20 + $0x138] sm:$0xff]
    %v4312 = vld [vmem:[#allocation20 + $0x140] sm:$0xff]
    %v4313 = vld [vmem:[#allocation20 + $0x148] sm:$0xff]
    %v4314 = vld [vmem:[#allocation20 + $0x150] sm:$0xff]
    %v4315 = vld [vmem:[#allocation20 + $0x158] sm:$0xff]
    %v4316 = vld [vmem:[#allocation20 + $0x160] sm:$0xff]
    %v4317 = vld [vmem:[#allocation20 + $0x168] sm:$0xff]
    %v4318 = vld [vmem:[#allocation20 + $0x170] sm:$0xff]
    %v4319 = vld [vmem:[#allocation20 + $0x178] sm:$0xff]
    %v4320 = vld [vmem:[#allocation20 + $0x180] sm:$0xff]
    %v4321 = vld [vmem:[#allocation20 + $0x188] sm:$0xff]
    %v4322 = vld [vmem:[#allocation20 + $0x190] sm:$0xff]
    %v4323 = vld [vmem:[#allocation20 + $0x198] sm:$0xff]
    %v4324 = vld [vmem:[#allocation20 + $0x1a0] sm:$0xff]
    %v4325 = vld [vmem:[#allocation20 + $0x1a8] sm:$0xff]
    %v4326 = vld [vmem:[#allocation20 + $0x1b0] sm:$0xff]
    %v4327 = vld [vmem:[#allocation20 + $0x1b8] sm:$0xff]
    %v4328 = vld [vmem:[#allocation20 + $0x1c0] sm:$0xff]
    %v4329 = vld [vmem:[#allocation20 + $0x1c8] sm:$0xff]
    %v4330 = vld [vmem:[#allocation20 + $0x1d0] sm:$0xff]
    %v4331 = vld [vmem:[#allocation20 + $0x1d8] sm:$0xff]
    %v4332 = vld [vmem:[#allocation20 + $0x1e0] sm:$0xff]
    %v4333 = vld [vmem:[#allocation20 + $0x1e8] sm:$0xff]
    %v4334 = vld [vmem:[#allocation20 + $0x1f0] sm:$0xff]
    %v4335 = vld [vmem:[#allocation20 + $0x1f8] sm:$0xff]
    %v4336 = vld [vmem:[#allocation20 + $0x200] sm:$0xff]
    %v4337 = vld [vmem:[#allocation20 + $0x208] sm:$0xff]
    %v4338 = vld [vmem:[#allocation20 + $0x210] sm:$0xff]
    %v4339 = vld [vmem:[#allocation20 + $0x218] sm:$0xff]
    %v4340 = vld [vmem:[#allocation20 + $0x220] sm:$0xff]
    %v4341 = vld [vmem:[#allocation20 + $0x228] sm:$0xff]
    %v4342 = vld [vmem:[#allocation20 + $0x230] sm:$0xff]
    %v4343 = vld [vmem:[#allocation20 + $0x238] sm:$0xff]
    %v4344 = vld [vmem:[#allocation20 + $0x240] sm:$0xff]
    %v4345 = vld [vmem:[#allocation20 + $0x248] sm:$0xff]
    %v4346 = vld [vmem:[#allocation20 + $0x250] sm:$0xff]
    %v4347 = vld [vmem:[#allocation20 + $0x258] sm:$0xff]
    %v4348 = vld [vmem:[#allocation20 + $0x260] sm:$0xff]
    %v4349 = vld [vmem:[#allocation20 + $0x268] sm:$0xff]
    %v4350 = vld [vmem:[#allocation20 + $0x270] sm:$0xff]
    %v4351 = vld [vmem:[#allocation20 + $0x278] sm:$0xff]
    %v4352 = vld [vmem:[#allocation20 + $0x280] sm:$0xff]
    %v4353 = vld [vmem:[#allocation20 + $0x288] sm:$0xff]
    %v4354 = vld [vmem:[#allocation20 + $0x290] sm:$0xff]
    %v4355 = vld [vmem:[#allocation20 + $0x298] sm:$0xff]
    %v4356 = vld [vmem:[#allocation20 + $0x2a0] sm:$0xff]
    %v4357 = vld [vmem:[#allocation20 + $0x2a8] sm:$0xff]
    %v4358 = vld [vmem:[#allocation20 + $0x2b0] sm:$0xff]
    %v4359 = vld [vmem:[#allocation20 + $0x2b8] sm:$0xff]
    %v4360 = vld [vmem:[#allocation20 + $0x2c0] sm:$0xff]
    %v4361 = vld [vmem:[#allocation20 + $0x2c8] sm:$0xff]
    %v4362 = vld [vmem:[#allocation20 + $0x2d0] sm:$0xff]
    %v4363 = vld [vmem:[#allocation20 + $0x2d8] sm:$0xff]
    %v4364 = vld [vmem:[#allocation20 + $0x2e0] sm:$0xff]
    %v4365 = vld [vmem:[#allocation20 + $0x2e8] sm:$0xff]
    %v4366 = vld [vmem:[#allocation20 + $0x2f0] sm:$0xff]
    %v4367 = vld [vmem:[#allocation20 + $0x2f8] sm:$0xff]
    %v4368 = vld [vmem:[#allocation20 + $0x300] sm:$0xff]
    %v4369 = vld [vmem:[#allocation20 + $0x308] sm:$0xff]
    %v4370 = vld [vmem:[#allocation20 + $0x310] sm:$0xff]
    %v4371 = vld [vmem:[#allocation20 + $0x318] sm:$0xff]
    %v4372 = vld [vmem:[#allocation20 + $0x320] sm:$0xff]
    %v4373 = vld [vmem:[#allocation20 + $0x328] sm:$0xff]
    %v4374 = vld [vmem:[#allocation20 + $0x330] sm:$0xff]
    %v4375 = vld [vmem:[#allocation20 + $0x338] sm:$0xff]
    %v4376 = vld [vmem:[#allocation20 + $0x340] sm:$0xff]
    %v4377 = vld [vmem:[#allocation20 + $0x348] sm:$0xff]
    %v4378 = vld [vmem:[#allocation20 + $0x350] sm:$0xff]
    %v4379 = vld [vmem:[#allocation20 + $0x358] sm:$0xff]
    %v4380 = vld [vmem:[#allocation20 + $0x360] sm:$0xff]
    %v4381 = vld [vmem:[#allocation20 + $0x368] sm:$0xff]
    %v4382 = vld [vmem:[#allocation20 + $0x370] sm:$0xff]
    %v4383 = vld [vmem:[#allocation20 + $0x378] sm:$0xff]
    %v4384 = vld [vmem:[#allocation20 + $0x380] sm:$0xff]
    %v4385 = vld [vmem:[#allocation20 + $0x388] sm:$0xff]
    %v4386 = vld [vmem:[#allocation20 + $0x390] sm:$0xff]
    %v4387 = vld [vmem:[#allocation20 + $0x398] sm:$0xff]
    %v4388 = vld [vmem:[#allocation20 + $0x3a0] sm:$0xff]
    %v4389 = vld [vmem:[#allocation20 + $0x3a8] sm:$0xff]
    %v4390 = vld [vmem:[#allocation20 + $0x3b0] sm:$0xff]
    %v4391 = vld [vmem:[#allocation20 + $0x3b8] sm:$0xff]
    %v4392 = vld [vmem:[#allocation20 + $0x3c0] sm:$0xff]
    %v4393 = vld [vmem:[#allocation20 + $0x3c8] sm:$0xff]
    %v4394 = vld [vmem:[#allocation20 + $0x3d0] sm:$0xff]
    %v4395 = vld [vmem:[#allocation20 + $0x3d8] sm:$0xff]
    %v4396 = vld [vmem:[#allocation20 + $0x3e0] sm:$0xff]
    %v4397 = vld [vmem:[#allocation20 + $0x3e8] sm:$0xff]
    %v4398 = vld [vmem:[#allocation20 + $0x3f0] sm:$0xff]
    %v4399 = vld [vmem:[#allocation20 + $0x3f8] sm:$0xff]
    %v4400 = vpack.c.bf16 %v4268, %v4268
    %v4401 = vpack.c.bf16 %v4269, %v4269
    %v4402 = vpack.c.bf16 %v4270, %v4270
    %v4403 = vpack.c.bf16 %v4271, %v4271
    %v4404 = vld [vmem:[#allocation21] sm:$0xf]
    %v4406 = vperm.slane %v4404, 0
    %v4407 = vperm.slane %v4404, 1
    %v4408 = vperm.slane %v4404, 2
    %v4409 = vperm.slane %v4404, 3
    %v4542 = vunpack.c.l.b16 %v4272
    %v4543 = vunpack.c.h.b16 %v4272
    %v4544 = vunpack.c.l.b16 %v4273
    %v4545 = vunpack.c.h.b16 %v4273
    %v4546 = vunpack.c.l.b16 %v4274
    %v4547 = vunpack.c.h.b16 %v4274
    %v4548 = vunpack.c.l.b16 %v4275
    %v4549 = vunpack.c.h.b16 %v4275
    %v4550 = vunpack.c.l.b16 %v4276
    %v4551 = vunpack.c.h.b16 %v4276
    %v4552 = vunpack.c.l.b16 %v4277
    %v4553 = vunpack.c.h.b16 %v4277
    %v4554 = vunpack.c.l.b16 %v4278
    %v4555 = vunpack.c.h.b16 %v4278
    %v4556 = vunpack.c.l.b16 %v4279
    %v4557 = vunpack.c.h.b16 %v4279
    %v4558 = vunpack.c.l.b16 %v4280
    %v4559 = vunpack.c.h.b16 %v4280
    %v4560 = vunpack.c.l.b16 %v4281
    %v4561 = vunpack.c.h.b16 %v4281
    %v4562 = vunpack.c.l.b16 %v4282
    %v4563 = vunpack.c.h.b16 %v4282
    %v4564 = vunpack.c.l.b16 %v4283
    %v4565 = vunpack.c.h.b16 %v4283
    %v4566 = vunpack.c.l.b16 %v4284
    %v4567 = vunpack.c.h.b16 %v4284
    %v4568 = vunpack.c.l.b16 %v4285
    %v4569 = vunpack.c.h.b16 %v4285
    %v4570 = vunpack.c.l.b16 %v4286
    %v4571 = vunpack.c.h.b16 %v4286
    %v4572 = vunpack.c.l.b16 %v4287
    %v4573 = vunpack.c.h.b16 %v4287
    %v4574 = vunpack.c.l.b16 %v4288
    %v4575 = vunpack.c.h.b16 %v4288
    %v4576 = vunpack.c.l.b16 %v4289
    %v4577 = vunpack.c.h.b16 %v4289
    %v4578 = vunpack.c.l.b16 %v4290
    %v4579 = vunpack.c.h.b16 %v4290
    %v4580 = vunpack.c.l.b16 %v4291
    %v4581 = vunpack.c.h.b16 %v4291
    %v4582 = vunpack.c.l.b16 %v4292
    %v4583 = vunpack.c.h.b16 %v4292
    %v4584 = vunpack.c.l.b16 %v4293
    %v4585 = vunpack.c.h.b16 %v4293
    %v4586 = vunpack.c.l.b16 %v4294
    %v4587 = vunpack.c.h.b16 %v4294
    %v4588 = vunpack.c.l.b16 %v4295
    %v4589 = vunpack.c.h.b16 %v4295
    %v4590 = vunpack.c.l.b16 %v4296
    %v4591 = vunpack.c.h.b16 %v4296
    %v4592 = vunpack.c.l.b16 %v4297
    %v4593 = vunpack.c.h.b16 %v4297
    %v4594 = vunpack.c.l.b16 %v4298
    %v4595 = vunpack.c.h.b16 %v4298
    %v4596 = vunpack.c.l.b16 %v4299
    %v4597 = vunpack.c.h.b16 %v4299
    %v4598 = vunpack.c.l.b16 %v4300
    %v4599 = vunpack.c.h.b16 %v4300
    %v4600 = vunpack.c.l.b16 %v4301
    %v4601 = vunpack.c.h.b16 %v4301
    %v4602 = vunpack.c.l.b16 %v4302
    %v4603 = vunpack.c.h.b16 %v4302
    %v4604 = vunpack.c.l.b16 %v4303
    %v4605 = vunpack.c.h.b16 %v4303
    %v4606 = vunpack.c.l.b16 %v4304
    %v4607 = vunpack.c.h.b16 %v4304
    %v4608 = vunpack.c.l.b16 %v4305
    %v4609 = vunpack.c.h.b16 %v4305
    %v4610 = vunpack.c.l.b16 %v4306
    %v4611 = vunpack.c.h.b16 %v4306
    %v4612 = vunpack.c.l.b16 %v4307
    %v4613 = vunpack.c.h.b16 %v4307
    %v4614 = vunpack.c.l.b16 %v4308
    %v4615 = vunpack.c.h.b16 %v4308
    %v4616 = vunpack.c.l.b16 %v4309
    %v4617 = vunpack.c.h.b16 %v4309
    %v4618 = vunpack.c.l.b16 %v4310
    %v4619 = vunpack.c.h.b16 %v4310
    %v4620 = vunpack.c.l.b16 %v4311
    %v4621 = vunpack.c.h.b16 %v4311
    %v4622 = vunpack.c.l.b16 %v4312
    %v4623 = vunpack.c.h.b16 %v4312
    %v4624 = vunpack.c.l.b16 %v4313
    %v4625 = vunpack.c.h.b16 %v4313
    %v4626 = vunpack.c.l.b16 %v4314
    %v4627 = vunpack.c.h.b16 %v4314
    %v4628 = vunpack.c.l.b16 %v4315
    %v4629 = vunpack.c.h.b16 %v4315
    %v4630 = vunpack.c.l.b16 %v4316
    %v4631 = vunpack.c.h.b16 %v4316
    %v4632 = vunpack.c.l.b16 %v4317
    %v4633 = vunpack.c.h.b16 %v4317
    %v4634 = vunpack.c.l.b16 %v4318
    %v4635 = vunpack.c.h.b16 %v4318
    %v4636 = vunpack.c.l.b16 %v4319
    %v4637 = vunpack.c.h.b16 %v4319
    %v4638 = vunpack.c.l.b16 %v4320
    %v4639 = vunpack.c.h.b16 %v4320
    %v4640 = vunpack.c.l.b16 %v4321
    %v4641 = vunpack.c.h.b16 %v4321
    %v4642 = vunpack.c.l.b16 %v4322
    %v4643 = vunpack.c.h.b16 %v4322
    %v4644 = vunpack.c.l.b16 %v4323
    %v4645 = vunpack.c.h.b16 %v4323
    %v4646 = vunpack.c.l.b16 %v4324
    %v4647 = vunpack.c.h.b16 %v4324
    %v4648 = vunpack.c.l.b16 %v4325
    %v4649 = vunpack.c.h.b16 %v4325
    %v4650 = vunpack.c.l.b16 %v4326
    %v4651 = vunpack.c.h.b16 %v4326
    %v4652 = vunpack.c.l.b16 %v4327
    %v4653 = vunpack.c.h.b16 %v4327
    %v4654 = vunpack.c.l.b16 %v4328
    %v4655 = vunpack.c.h.b16 %v4328
    %v4656 = vunpack.c.l.b16 %v4329
    %v4657 = vunpack.c.h.b16 %v4329
    %v4658 = vunpack.c.l.b16 %v4330
    %v4659 = vunpack.c.h.b16 %v4330
    %v4660 = vunpack.c.l.b16 %v4331
    %v4661 = vunpack.c.h.b16 %v4331
    %v4662 = vunpack.c.l.b16 %v4332
    %v4663 = vunpack.c.h.b16 %v4332
    %v4664 = vunpack.c.l.b16 %v4333
    %v4665 = vunpack.c.h.b16 %v4333
    %v4666 = vunpack.c.l.b16 %v4334
    %v4667 = vunpack.c.h.b16 %v4334
    %v4668 = vunpack.c.l.b16 %v4335
    %v4669 = vunpack.c.h.b16 %v4335
    %v4670 = vunpack.c.l.b16 %v4336
    %v4671 = vunpack.c.h.b16 %v4336
    %v4672 = vunpack.c.l.b16 %v4337
    %v4673 = vunpack.c.h.b16 %v4337
    %v4674 = vunpack.c.l.b16 %v4338
    %v4675 = vunpack.c.h.b16 %v4338
    %v4676 = vunpack.c.l.b16 %v4339
    %v4677 = vunpack.c.h.b16 %v4339
    %v4678 = vunpack.c.l.b16 %v4340
    %v4679 = vunpack.c.h.b16 %v4340
    %v4680 = vunpack.c.l.b16 %v4341
    %v4681 = vunpack.c.h.b16 %v4341
    %v4682 = vunpack.c.l.b16 %v4342
    %v4683 = vunpack.c.h.b16 %v4342
    %v4684 = vunpack.c.l.b16 %v4343
    %v4685 = vunpack.c.h.b16 %v4343
    %v4686 = vunpack.c.l.b16 %v4344
    %v4687 = vunpack.c.h.b16 %v4344
    %v4688 = vunpack.c.l.b16 %v4345
    %v4689 = vunpack.c.h.b16 %v4345
    %v4690 = vunpack.c.l.b16 %v4346
    %v4691 = vunpack.c.h.b16 %v4346
    %v4692 = vunpack.c.l.b16 %v4347
    %v4693 = vunpack.c.h.b16 %v4347
    %v4694 = vunpack.c.l.b16 %v4348
    %v4695 = vunpack.c.h.b16 %v4348
    %v4696 = vunpack.c.l.b16 %v4349
    %v4697 = vunpack.c.h.b16 %v4349
    %v4698 = vunpack.c.l.b16 %v4350
    %v4699 = vunpack.c.h.b16 %v4350
    %v4700 = vunpack.c.l.b16 %v4351
    %v4701 = vunpack.c.h.b16 %v4351
    %v4702 = vunpack.c.l.b16 %v4352
    %v4703 = vunpack.c.h.b16 %v4352
    %v4704 = vunpack.c.l.b16 %v4353
    %v4705 = vunpack.c.h.b16 %v4353
    %v4706 = vunpack.c.l.b16 %v4354
    %v4707 = vunpack.c.h.b16 %v4354
    %v4708 = vunpack.c.l.b16 %v4355
    %v4709 = vunpack.c.h.b16 %v4355
    %v4710 = vunpack.c.l.b16 %v4356
    %v4711 = vunpack.c.h.b16 %v4356
    %v4712 = vunpack.c.l.b16 %v4357
    %v4713 = vunpack.c.h.b16 %v4357
    %v4714 = vunpack.c.l.b16 %v4358
    %v4715 = vunpack.c.h.b16 %v4358
    %v4716 = vunpack.c.l.b16 %v4359
    %v4717 = vunpack.c.h.b16 %v4359
    %v4718 = vunpack.c.l.b16 %v4360
    %v4719 = vunpack.c.h.b16 %v4360
    %v4720 = vunpack.c.l.b16 %v4361
    %v4721 = vunpack.c.h.b16 %v4361
    %v4722 = vunpack.c.l.b16 %v4362
    %v4723 = vunpack.c.h.b16 %v4362
    %v4724 = vunpack.c.l.b16 %v4363
    %v4725 = vunpack.c.h.b16 %v4363
    %v4726 = vunpack.c.l.b16 %v4364
    %v4727 = vunpack.c.h.b16 %v4364
    %v4728 = vunpack.c.l.b16 %v4365
    %v4729 = vunpack.c.h.b16 %v4365
    %v4730 = vunpack.c.l.b16 %v4366
    %v4731 = vunpack.c.h.b16 %v4366
    %v4732 = vunpack.c.l.b16 %v4367
    %v4733 = vunpack.c.h.b16 %v4367
    %v4734 = vunpack.c.l.b16 %v4368
    %v4735 = vunpack.c.h.b16 %v4368
    %v4736 = vunpack.c.l.b16 %v4369
    %v4737 = vunpack.c.h.b16 %v4369
    %v4738 = vunpack.c.l.b16 %v4370
    %v4739 = vunpack.c.h.b16 %v4370
    %v4740 = vunpack.c.l.b16 %v4371
    %v4741 = vunpack.c.h.b16 %v4371
    %v4742 = vunpack.c.l.b16 %v4372
    %v4743 = vunpack.c.h.b16 %v4372
    %v4744 = vunpack.c.l.b16 %v4373
    %v4745 = vunpack.c.h.b16 %v4373
    %v4746 = vunpack.c.l.b16 %v4374
    %v4747 = vunpack.c.h.b16 %v4374
    %v4748 = vunpack.c.l.b16 %v4375
    %v4749 = vunpack.c.h.b16 %v4375
    %v4750 = vunpack.c.l.b16 %v4376
    %v4751 = vunpack.c.h.b16 %v4376
    %v4752 = vunpack.c.l.b16 %v4377
    %v4753 = vunpack.c.h.b16 %v4377
    %v4754 = vunpack.c.l.b16 %v4378
    %v4755 = vunpack.c.h.b16 %v4378
    %v4756 = vunpack.c.l.b16 %v4379
    %v4757 = vunpack.c.h.b16 %v4379
    %v4758 = vunpack.c.l.b16 %v4380
    %v4759 = vunpack.c.h.b16 %v4380
    %v4760 = vunpack.c.l.b16 %v4381
    %v4761 = vunpack.c.h.b16 %v4381
    %v4762 = vunpack.c.l.b16 %v4382
    %v4763 = vunpack.c.h.b16 %v4382
    %v4764 = vunpack.c.l.b16 %v4383
    %v4765 = vunpack.c.h.b16 %v4383
    %v4766 = vunpack.c.l.b16 %v4384
    %v4767 = vunpack.c.h.b16 %v4384
    %v4768 = vunpack.c.l.b16 %v4385
    %v4769 = vunpack.c.h.b16 %v4385
    %v4770 = vunpack.c.l.b16 %v4386
    %v4771 = vunpack.c.h.b16 %v4386
    %v4772 = vunpack.c.l.b16 %v4387
    %v4773 = vunpack.c.h.b16 %v4387
    %v4774 = vunpack.c.l.b16 %v4388
    %v4775 = vunpack.c.h.b16 %v4388
    %v4776 = vunpack.c.l.b16 %v4389
    %v4777 = vunpack.c.h.b16 %v4389
    %v4778 = vunpack.c.l.b16 %v4390
    %v4779 = vunpack.c.h.b16 %v4390
    %v4780 = vunpack.c.l.b16 %v4391
    %v4781 = vunpack.c.h.b16 %v4391
    %v4782 = vunpack.c.l.b16 %v4392
    %v4783 = vunpack.c.h.b16 %v4392
    %v4784 = vunpack.c.l.b16 %v4393
    %v4785 = vunpack.c.h.b16 %v4393
    %v4786 = vunpack.c.l.b16 %v4394
    %v4787 = vunpack.c.h.b16 %v4394
    %v4788 = vunpack.c.l.b16 %v4395
    %v4789 = vunpack.c.h.b16 %v4395
    %v4790 = vunpack.c.l.b16 %v4396
    %v4791 = vunpack.c.h.b16 %v4396
    %v4792 = vunpack.c.l.b16 %v4397
    %v4793 = vunpack.c.h.b16 %v4397
    %v4794 = vunpack.c.l.b16 %v4398
    %v4795 = vunpack.c.h.b16 %v4398
    %v4796 = vunpack.c.l.b16 %v4399
    %v4797 = vunpack.c.h.b16 %v4399
    %v4798 = vpack.c.b16 %v4546, %v4542
    %v4799 = vpack.c.b16 %v4547, %v4543
    %v4800 = vpack.c.b16 %v4548, %v4544
    %v4801 = vpack.c.b16 %v4549, %v4545
    %v4802 = vpack.c.b16 %v4554, %v4550
    %v4803 = vpack.c.b16 %v4555, %v4551
    %v4804 = vpack.c.b16 %v4556, %v4552
    %v4805 = vpack.c.b16 %v4557, %v4553
    %v4806 = vpack.c.b16 %v4562, %v4558
    %v4807 = vpack.c.b16 %v4563, %v4559
    %v4808 = vpack.c.b16 %v4564, %v4560
    %v4809 = vpack.c.b16 %v4565, %v4561
    %v4810 = vpack.c.b16 %v4570, %v4566
    %v4811 = vpack.c.b16 %v4571, %v4567
    %v4812 = vpack.c.b16 %v4572, %v4568
    %v4813 = vpack.c.b16 %v4573, %v4569
    %v4814 = vpack.c.b16 %v4578, %v4574
    %v4815 = vpack.c.b16 %v4579, %v4575
    %v4816 = vpack.c.b16 %v4580, %v4576
    %v4817 = vpack.c.b16 %v4581, %v4577
    %v4818 = vpack.c.b16 %v4586, %v4582
    %v4819 = vpack.c.b16 %v4587, %v4583
    %v4820 = vpack.c.b16 %v4588, %v4584
    %v4821 = vpack.c.b16 %v4589, %v4585
    %v4822 = vpack.c.b16 %v4594, %v4590
    %v4823 = vpack.c.b16 %v4595, %v4591
    %v4824 = vpack.c.b16 %v4596, %v4592
    %v4825 = vpack.c.b16 %v4597, %v4593
    %v4826 = vpack.c.b16 %v4602, %v4598
    %v4827 = vpack.c.b16 %v4603, %v4599
    %v4828 = vpack.c.b16 %v4604, %v4600
    %v4829 = vpack.c.b16 %v4605, %v4601
    %v4830 = vpack.c.b16 %v4610, %v4606
    %v4831 = vpack.c.b16 %v4611, %v4607
    %v4832 = vpack.c.b16 %v4612, %v4608
    %v4833 = vpack.c.b16 %v4613, %v4609
    %v4834 = vpack.c.b16 %v4618, %v4614
    %v4835 = vpack.c.b16 %v4619, %v4615
    %v4836 = vpack.c.b16 %v4620, %v4616
    %v4837 = vpack.c.b16 %v4621, %v4617
    %v4838 = vpack.c.b16 %v4626, %v4622
    %v4839 = vpack.c.b16 %v4627, %v4623
    %v4840 = vpack.c.b16 %v4628, %v4624
    %v4841 = vpack.c.b16 %v4629, %v4625
    %v4842 = vpack.c.b16 %v4634, %v4630
    %v4843 = vpack.c.b16 %v4635, %v4631
    %v4844 = vpack.c.b16 %v4636, %v4632
    %v4845 = vpack.c.b16 %v4637, %v4633
    %v4846 = vpack.c.b16 %v4642, %v4638
    %v4847 = vpack.c.b16 %v4643, %v4639
    %v4848 = vpack.c.b16 %v4644, %v4640
    %v4849 = vpack.c.b16 %v4645, %v4641
    %v4850 = vpack.c.b16 %v4650, %v4646
    %v4851 = vpack.c.b16 %v4651, %v4647
    %v4852 = vpack.c.b16 %v4652, %v4648
    %v4853 = vpack.c.b16 %v4653, %v4649
    %v4854 = vpack.c.b16 %v4658, %v4654
    %v4855 = vpack.c.b16 %v4659, %v4655
    %v4856 = vpack.c.b16 %v4660, %v4656
    %v4857 = vpack.c.b16 %v4661, %v4657
    %v4858 = vpack.c.b16 %v4666, %v4662
    %v4859 = vpack.c.b16 %v4667, %v4663
    %v4860 = vpack.c.b16 %v4668, %v4664
    %v4861 = vpack.c.b16 %v4669, %v4665
    %v4862 = vpack.c.b16 %v4674, %v4670
    %v4863 = vpack.c.b16 %v4675, %v4671
    %v4864 = vpack.c.b16 %v4676, %v4672
    %v4865 = vpack.c.b16 %v4677, %v4673
    %v4866 = vpack.c.b16 %v4682, %v4678
    %v4867 = vpack.c.b16 %v4683, %v4679
    %v4868 = vpack.c.b16 %v4684, %v4680
    %v4869 = vpack.c.b16 %v4685, %v4681
    %v4870 = vpack.c.b16 %v4690, %v4686
    %v4871 = vpack.c.b16 %v4691, %v4687
    %v4872 = vpack.c.b16 %v4692, %v4688
    %v4873 = vpack.c.b16 %v4693, %v4689
    %v4874 = vpack.c.b16 %v4698, %v4694
    %v4875 = vpack.c.b16 %v4699, %v4695
    %v4876 = vpack.c.b16 %v4700, %v4696
    %v4877 = vpack.c.b16 %v4701, %v4697
    %v4878 = vpack.c.b16 %v4706, %v4702
    %v4879 = vpack.c.b16 %v4707, %v4703
    %v4880 = vpack.c.b16 %v4708, %v4704
    %v4881 = vpack.c.b16 %v4709, %v4705
    %v4882 = vpack.c.b16 %v4714, %v4710
    %v4883 = vpack.c.b16 %v4715, %v4711
    %v4884 = vpack.c.b16 %v4716, %v4712
    %v4885 = vpack.c.b16 %v4717, %v4713
    %v4886 = vpack.c.b16 %v4722, %v4718
    %v4887 = vpack.c.b16 %v4723, %v4719
    %v4888 = vpack.c.b16 %v4724, %v4720
    %v4889 = vpack.c.b16 %v4725, %v4721
    %v4890 = vpack.c.b16 %v4730, %v4726
    %v4891 = vpack.c.b16 %v4731, %v4727
    %v4892 = vpack.c.b16 %v4732, %v4728
    %v4893 = vpack.c.b16 %v4733, %v4729
    %v4894 = vpack.c.b16 %v4738, %v4734
    %v4895 = vpack.c.b16 %v4739, %v4735
    %v4896 = vpack.c.b16 %v4740, %v4736
    %v4897 = vpack.c.b16 %v4741, %v4737
    %v4898 = vpack.c.b16 %v4746, %v4742
    %v4899 = vpack.c.b16 %v4747, %v4743
    %v4900 = vpack.c.b16 %v4748, %v4744
    %v4901 = vpack.c.b16 %v4749, %v4745
    %v4902 = vpack.c.b16 %v4754, %v4750
    %v4903 = vpack.c.b16 %v4755, %v4751
    %v4904 = vpack.c.b16 %v4756, %v4752
    %v4905 = vpack.c.b16 %v4757, %v4753
    %v4906 = vpack.c.b16 %v4762, %v4758
    %v4907 = vpack.c.b16 %v4763, %v4759
    %v4908 = vpack.c.b16 %v4764, %v4760
    %v4909 = vpack.c.b16 %v4765, %v4761
    %v4910 = vpack.c.b16 %v4770, %v4766
    %v4911 = vpack.c.b16 %v4771, %v4767
    %v4912 = vpack.c.b16 %v4772, %v4768
    %v4913 = vpack.c.b16 %v4773, %v4769
    %v4914 = vpack.c.b16 %v4778, %v4774
    %v4915 = vpack.c.b16 %v4779, %v4775
    %v4916 = vpack.c.b16 %v4780, %v4776
    %v4917 = vpack.c.b16 %v4781, %v4777
    %v4918 = vpack.c.b16 %v4786, %v4782
    %v4919 = vpack.c.b16 %v4787, %v4783
    %v4920 = vpack.c.b16 %v4788, %v4784
    %v4921 = vpack.c.b16 %v4789, %v4785
    %v4922 = vpack.c.b16 %v4794, %v4790
    %v4923 = vpack.c.b16 %v4795, %v4791
    %v4924 = vpack.c.b16 %v4796, %v4792
    %v4925 = vpack.c.b16 %v4797, %v4793
    %5054 = vmatpush.bf16.msra.mxu0 %v4826
    %5055 = vmatpush.bf16.msra.mxu0 %v4822
    %5056 = vmatpush.bf16.msra.mxu0 %v4818
    %5057 = vmatpush.bf16.msra.mxu0 %v4814
    %5058 = vmatpush.bf16.msra.mxu0 %v4810
    %5059 = vmatpush.bf16.msra.mxu0 %v4806
    %5060 = vmatpush.bf16.msra.mxu0 %v4802
    %5061 = vmatpush.bf16.msra.mxu0 %v4798
    %5062 = vmatmul.bf16.gmra.mxu0 %v4400
    %v5063 = vpop.f32.mrf.mxu0
    %v5064 = vadd.f32 %v4406, %v5063
    %v5065 = vpop.f32.mrf.mxu0
    %5066 = vdwg.mxu0
    %5067 = vmatpush.bf16.msra.mxu0 %v4858
    %5068 = vmatpush.bf16.msra.mxu0 %v4854
    %5069 = vmatpush.bf16.msra.mxu0 %v4850
    %5070 = vmatpush.bf16.msra.mxu0 %v4846
    %5071 = vmatpush.bf16.msra.mxu0 %v4842
    %5072 = vmatpush.bf16.msra.mxu0 %v4838
    %5073 = vmatpush.bf16.msra.mxu0 %v4834
    %5074 = vmatpush.bf16.msra.mxu0 %v4830
    %5075 = vmatmul.bf16.gmra.mxu0 %v4401
    %v5076 = vpop.f32.mrf.mxu0
    %v5077 = vadd.f32 %v5064, %v5076
    %v5078 = vpop.f32.mrf.mxu0
    %5079 = vdwg.mxu0
    %5080 = vmatpush.bf16.msra.mxu0 %v4890
    %5081 = vmatpush.bf16.msra.mxu0 %v4886
    %5082 = vmatpush.bf16.msra.mxu0 %v4882
    %5083 = vmatpush.bf16.msra.mxu0 %v4878
    %5084 = vmatpush.bf16.msra.mxu0 %v4874
    %5085 = vmatpush.bf16.msra.mxu0 %v4870
    %5086 = vmatpush.bf16.msra.mxu0 %v4866
    %5087 = vmatpush.bf16.msra.mxu0 %v4862
    %5088 = vmatmul.bf16.gmra.mxu0 %v4402
    %v5089 = vpop.f32.mrf.mxu0
    %v5090 = vadd.f32 %v5077, %v5089
    %v5091 = vpop.f32.mrf.mxu0
    %5092 = vdwg.mxu0
    %5093 = vmatpush.bf16.msra.mxu0 %v4922
    %5094 = vmatpush.bf16.msra.mxu0 %v4918
    %5095 = vmatpush.bf16.msra.mxu0 %v4914
    %5096 = vmatpush.bf16.msra.mxu0 %v4910
    %5097 = vmatpush.bf16.msra.mxu0 %v4906
    %5098 = vmatpush.bf16.msra.mxu0 %v4902
    %5099 = vmatpush.bf16.msra.mxu0 %v4898
    %5100 = vmatpush.bf16.msra.mxu0 %v4894
    %5101 = vmatmul.bf16.gmra.mxu0 %v4403
    %v5102 = vpop.f32.mrf.mxu0
    %v5103 = vadd.f32 %v5090, %v5102
    %v5104 = vpop.f32.mrf.mxu0
    %5105 = vdwg.mxu0
    %5106 = vmatpush.bf16.msra.mxu0 %v4827
    %5107 = vmatpush.bf16.msra.mxu0 %v4823
    %5108 = vmatpush.bf16.msra.mxu0 %v4819
    %5109 = vmatpush.bf16.msra.mxu0 %v4815
    %5110 = vmatpush.bf16.msra.mxu0 %v4811
    %5111 = vmatpush.bf16.msra.mxu0 %v4807
    %5112 = vmatpush.bf16.msra.mxu0 %v4803
    %5113 = vmatpush.bf16.msra.mxu0 %v4799
    %5114 = vmatmul.bf16.gmra.mxu0 %v4400
    %v5115 = vpop.f32.mrf.mxu0
    %v5116 = vadd.f32 %v4407, %v5115
    %v5117 = vpop.f32.mrf.mxu0
    %5118 = vdwg.mxu0
    %5119 = vmatpush.bf16.msra.mxu0 %v4859
    %5120 = vmatpush.bf16.msra.mxu0 %v4855
    %5121 = vmatpush.bf16.msra.mxu0 %v4851
    %5122 = vmatpush.bf16.msra.mxu0 %v4847
    %5123 = vmatpush.bf16.msra.mxu0 %v4843
    %5124 = vmatpush.bf16.msra.mxu0 %v4839
    %5125 = vmatpush.bf16.msra.mxu0 %v4835
    %5126 = vmatpush.bf16.msra.mxu0 %v4831
    %5127 = vmatmul.bf16.gmra.mxu0 %v4401
    %v5128 = vpop.f32.mrf.mxu0
    %v5129 = vadd.f32 %v5116, %v5128
    %v5130 = vpop.f32.mrf.mxu0
    %5131 = vdwg.mxu0
    %5132 = vmatpush.bf16.msra.mxu0 %v4891
    %5133 = vmatpush.bf16.msra.mxu0 %v4887
    %5134 = vmatpush.bf16.msra.mxu0 %v4883
    %5135 = vmatpush.bf16.msra.mxu0 %v4879
    %5136 = vmatpush.bf16.msra.mxu0 %v4875
    %5137 = vmatpush.bf16.msra.mxu0 %v4871
    %5138 = vmatpush.bf16.msra.mxu0 %v4867
    %5139 = vmatpush.bf16.msra.mxu0 %v4863
    %5140 = vmatmul.bf16.gmra.mxu0 %v4402
    %v5141 = vpop.f32.mrf.mxu0
    %v5142 = vadd.f32 %v5129, %v5141
    %v5143 = vpop.f32.mrf.mxu0
    %5144 = vdwg.mxu0
    %5145 = vmatpush.bf16.msra.mxu0 %v4923
    %5146 = vmatpush.bf16.msra.mxu0 %v4919
    %5147 = vmatpush.bf16.msra.mxu0 %v4915
    %5148 = vmatpush.bf16.msra.mxu0 %v4911
    %5149 = vmatpush.bf16.msra.mxu0 %v4907
    %5150 = vmatpush.bf16.msra.mxu0 %v4903
    %5151 = vmatpush.bf16.msra.mxu0 %v4899
    %5152 = vmatpush.bf16.msra.mxu0 %v4895
    %5153 = vmatmul.bf16.gmra.mxu0 %v4403
    %v5154 = vpop.f32.mrf.mxu0
    %v5155 = vadd.f32 %v5142, %v5154
    %v5156 = vpop.f32.mrf.mxu0
    %5157 = vdwg.mxu0
    %5158 = vmatpush.bf16.msra.mxu0 %v4828
    %5159 = vmatpush.bf16.msra.mxu0 %v4824
    %5160 = vmatpush.bf16.msra.mxu0 %v4820
    %5161 = vmatpush.bf16.msra.mxu0 %v4816
    %5162 = vmatpush.bf16.msra.mxu0 %v4812
    %5163 = vmatpush.bf16.msra.mxu0 %v4808
    %5164 = vmatpush.bf16.msra.mxu0 %v4804
    %5165 = vmatpush.bf16.msra.mxu0 %v4800
    %5166 = vmatmul.bf16.gmra.mxu0 %v4400
    %v5167 = vpop.f32.mrf.mxu0
    %v5168 = vadd.f32 %v4408, %v5167
    %v5169 = vpop.f32.mrf.mxu0
    %5170 = vdwg.mxu0
    %5171 = vmatpush.bf16.msra.mxu0 %v4860
    %5172 = vmatpush.bf16.msra.mxu0 %v4856
    %5173 = vmatpush.bf16.msra.mxu0 %v4852
    %5174 = vmatpush.bf16.msra.mxu0 %v4848
    %5175 = vmatpush.bf16.msra.mxu0 %v4844
    %5176 = vmatpush.bf16.msra.mxu0 %v4840
    %5177 = vmatpush.bf16.msra.mxu0 %v4836
    %5178 = vmatpush.bf16.msra.mxu0 %v4832
    %5179 = vmatmul.bf16.gmra.mxu0 %v4401
    %v5180 = vpop.f32.mrf.mxu0
    %v5181 = vadd.f32 %v5168, %v5180
    %v5182 = vpop.f32.mrf.mxu0
    %5183 = vdwg.mxu0
    %5184 = vmatpush.bf16.msra.mxu0 %v4892
    %5185 = vmatpush.bf16.msra.mxu0 %v4888
    %5186 = vmatpush.bf16.msra.mxu0 %v4884
    %5187 = vmatpush.bf16.msra.mxu0 %v4880
    %5188 = vmatpush.bf16.msra.mxu0 %v4876
    %5189 = vmatpush.bf16.msra.mxu0 %v4872
    %5190 = vmatpush.bf16.msra.mxu0 %v4868
    %5191 = vmatpush.bf16.msra.mxu0 %v4864
    %5192 = vmatmul.bf16.gmra.mxu0 %v4402
    %v5193 = vpop.f32.mrf.mxu0
    %v5194 = vadd.f32 %v5181, %v5193
    %v5195 = vpop.f32.mrf.mxu0
    %5196 = vdwg.mxu0
    %5197 = vmatpush.bf16.msra.mxu0 %v4924
    %5198 = vmatpush.bf16.msra.mxu0 %v4920
    %5199 = vmatpush.bf16.msra.mxu0 %v4916
    %5200 = vmatpush.bf16.msra.mxu0 %v4912
    %5201 = vmatpush.bf16.msra.mxu0 %v4908
    %5202 = vmatpush.bf16.msra.mxu0 %v4904
    %5203 = vmatpush.bf16.msra.mxu0 %v4900
    %5204 = vmatpush.bf16.msra.mxu0 %v4896
    %5205 = vmatmul.bf16.gmra.mxu0 %v4403
    %v5206 = vpop.f32.mrf.mxu0
    %v5207 = vadd.f32 %v5194, %v5206
    %v5208 = vpop.f32.mrf.mxu0
    %5209 = vdwg.mxu0
    %5210 = vmatpush.bf16.msra.mxu0 %v4829
    %5211 = vmatpush.bf16.msra.mxu0 %v4825
    %5212 = vmatpush.bf16.msra.mxu0 %v4821
    %5213 = vmatpush.bf16.msra.mxu0 %v4817
    %5214 = vmatpush.bf16.msra.mxu0 %v4813
    %5215 = vmatpush.bf16.msra.mxu0 %v4809
    %5216 = vmatpush.bf16.msra.mxu0 %v4805
    %5217 = vmatpush.bf16.msra.mxu0 %v4801
    %5218 = vmatmul.bf16.gmra.mxu0 %v4400
    %v5219 = vpop.f32.mrf.mxu0
    %v5220 = vadd.f32 %v4409, %v5219
    %v5221 = vpop.f32.mrf.mxu0
    %5222 = vdwg.mxu0
    %5223 = vmatpush.bf16.msra.mxu0 %v4861
    %5224 = vmatpush.bf16.msra.mxu0 %v4857
    %5225 = vmatpush.bf16.msra.mxu0 %v4853
    %5226 = vmatpush.bf16.msra.mxu0 %v4849
    %5227 = vmatpush.bf16.msra.mxu0 %v4845
    %5228 = vmatpush.bf16.msra.mxu0 %v4841
    %5229 = vmatpush.bf16.msra.mxu0 %v4837
    %5230 = vmatpush.bf16.msra.mxu0 %v4833
    %5231 = vmatmul.bf16.gmra.mxu0 %v4401
    %v5232 = vpop.f32.mrf.mxu0
    %v5233 = vadd.f32 %v5220, %v5232
    %v5234 = vpop.f32.mrf.mxu0
    %5235 = vdwg.mxu0
    %5236 = vmatpush.bf16.msra.mxu0 %v4893
    %5237 = vmatpush.bf16.msra.mxu0 %v4889
    %5238 = vmatpush.bf16.msra.mxu0 %v4885
    %5239 = vmatpush.bf16.msra.mxu0 %v4881
    %5240 = vmatpush.bf16.msra.mxu0 %v4877
    %5241 = vmatpush.bf16.msra.mxu0 %v4873
    %5242 = vmatpush.bf16.msra.mxu0 %v4869
    %5243 = vmatpush.bf16.msra.mxu0 %v4865
    %5244 = vmatmul.bf16.gmra.mxu0 %v4402
    %v5245 = vpop.f32.mrf.mxu0
    %v5246 = vadd.f32 %v5233, %v5245
    %v5247 = vpop.f32.mrf.mxu0
    %5248 = vdwg.mxu0
    %5249 = vmatpush.bf16.msra.mxu0 %v4925
    %5250 = vmatpush.bf16.msra.mxu0 %v4921
    %5251 = vmatpush.bf16.msra.mxu0 %v4917
    %5252 = vmatpush.bf16.msra.mxu0 %v4913
    %5253 = vmatpush.bf16.msra.mxu0 %v4909
    %5254 = vmatpush.bf16.msra.mxu0 %v4905
    %5255 = vmatpush.bf16.msra.mxu0 %v4901
    %5256 = vmatpush.bf16.msra.mxu0 %v4897
    %5257 = vmatmul.bf16.gmra.mxu0 %v4403
    %v5258 = vpop.f32.mrf.mxu0
    %v5259 = vadd.f32 %v5246, %v5258
    %v5260 = vpop.f32.mrf.mxu0
    %5261 = vdwg.mxu0
    %v5262 = vsub.f32 %v5207, 5.0
    %v5263 = vsub.f32 %v5259, 5.0
    %v5264 = vmax.f32 %v5262, 0.0
    %v5265 = vmax.f32 %v5263, 0.0
    %v5266 = vand.u32 2147483647, %v5262
    %v5267 = vand.u32 2147483647, %v5263
    %v5268 = vsub.f32 0.0, %v5266
    %v5269 = vsub.f32 0.0, %v5267
    %v5270 = vmul.f32 %v5268, 1.442695
    %v5271 = vpow.pop %v5270
    %v5272 = vmul.f32 %v5269, 1.442695
    %v5273 = vpow.pop %v5272
    %v5274 = vadd.f32 %v5271, 1.0
    %v5275 = vlog2.pop %v5274
    %v5276 = vmul.f32 %v5275, 0.6931472
    %v5277 = vmul.f32 -0.5, %v5271
    %v5278 = vadd.f32 %v5277, 1.0
    %v5279 = vmul.f32 %v5278, %v5271
    %v5280 = vand.u32 2147483647, %v5271
    %vm5281 = vcmp.lt.f32.partialorder %v5280, 0.0004427343
    %v5282 = vsel %vm5281, %v5279, %v5276
    %v5283 = vadd.f32 %v5273, 1.0
    %v5284 = vlog2.pop %v5283
    %v5285 = vmul.f32 %v5284, 0.6931472
    %v5286 = vmul.f32 -0.5, %v5273
    %v5287 = vadd.f32 %v5286, 1.0
    %v5288 = vmul.f32 %v5287, %v5273
    %v5289 = vand.u32 2147483647, %v5273
    %vm5290 = vcmp.lt.f32.partialorder %v5289, 0.0004427343
    %v5291 = vsel %vm5290, %v5288, %v5285
    %v5292 = vadd.f32 %v5264, %v5282
    %v5293 = vadd.f32 %v5265, %v5291
    %v5294 = vld [vmem:[#allocation23] sm:$0xf]
    %v5297 = vrot.slane %v5293, 6
    %vm5298 = vcmask 1041408
    %v5299 = vsel %vm5298, %v5292, %v5297
    %v5301 = vmul.f32 %v5294, %v5299
    %5303 = vst [vmem:[#allocation1] ss:$4 sm:$0xff] %v5301
    %v5304 = vld.sshfl [vmem:[#allocation1] sm:$0xff pattern:$0x73625140]
    %v5305 = vld.sshfl [vmem:[#allocation1 + $0x8] sm:$0xff pattern:$0x73625140]
    %v5308 = vadd.f32 %v5103, %v5304
    %v5309 = vadd.f32 %v5155, %v5305
    %v5310 = vld [vmem:[#allocation9] sm:$0xff]
    %v5311 = vld [vmem:[#allocation9 + $0x8] sm:$0xff]
    %v5312 = vld [vmem:[#allocation9 + $0x10] sm:$0xff]
    %v5313 = vld [vmem:[#allocation9 + $0x18] sm:$0xff]
    %5318 = vst [vmem:[#allocation1] ss:$2 sm:$0xff] %v5310
    %s5319 = scalar_lea.vmem [#allocation1], 16
    %5320 = vst [vmem:[%s5319] ss:$2 sm:$0xff] %v5311
    %v5321 = vld.sshfl [vmem:[#allocation1] sm:$0xff pattern:$0x75316420]
    %v5322 = vld.sshfl [vmem:[#allocation1 + $0x8] sm:$0xff pattern:$0x75316420]
    %v5323 = vld.sshfl [vmem:[#allocation1 + $0x10] sm:$0xff pattern:$0x75316420]
    %v5324 = vld.sshfl [vmem:[#allocation1 + $0x18] sm:$0xff pattern:$0x75316420]
    %s5325 = scalar_lea.vmem [#allocation1], 32
    %5326 = vst [vmem:[%s5325] ss:$2 sm:$0xff] %v5312
    %s5327 = scalar_lea.vmem [#allocation1], 48
    %5328 = vst [vmem:[%s5327] ss:$2 sm:$0xff] %v5313
    %v5329 = vld.sshfl [vmem:[#allocation1 + $0x20] sm:$0xff pattern:$0x75316420]
    %v5330 = vld.sshfl [vmem:[#allocation1 + $0x28] sm:$0xff pattern:$0x75316420]
    %v5331 = vld.sshfl [vmem:[#allocation1 + $0x30] sm:$0xff pattern:$0x75316420]
    %v5332 = vld.sshfl [vmem:[#allocation1 + $0x38] sm:$0xff pattern:$0x75316420]
    %v5341 = vsel %vm293, %v5321, 0.0
    %v5342 = vrot.slane %v5341, 4
    %v5343 = vadd.f32 %v5341, %v5342
    %v5344 = vrot.slane %v5343, 2
    %v5345 = vadd.f32 %v5343, %v5344
    %v5346 = vrot.slane %v5345, 1
    %v5347 = vadd.f32 %v5345, %v5346
    %v5348 = vsel %vm293, %v5322, 0.0
    %v5349 = vrot.slane %v5348, 4
    %v5350 = vadd.f32 %v5348, %v5349
    %v5351 = vrot.slane %v5350, 2
    %v5352 = vadd.f32 %v5350, %v5351
    %v5353 = vrot.slane %v5352, 1
    %v5354 = vadd.f32 %v5352, %v5353
    %v5355 = vsel %vm293, %v5323, 0.0
    %v5356 = vrot.slane %v5355, 4
    %v5357 = vadd.f32 %v5355, %v5356
    %v5358 = vrot.slane %v5357, 2
    %v5359 = vadd.f32 %v5357, %v5358
    %v5360 = vrot.slane %v5359, 1
    %v5361 = vadd.f32 %v5359, %v5360
    %v5362 = vsel %vm315, %v5324, 0.0
    %v5363 = vrot.slane %v5362, 4
    %v5364 = vadd.f32 %v5362, %v5363
    %v5365 = vrot.slane %v5364, 2
    %v5366 = vadd.f32 %v5364, %v5365
    %v5367 = vrot.slane %v5366, 1
    %v5368 = vadd.f32 %v5366, %v5367
    %v5369 = vsel %vm293, %v5329, 0.0
    %v5370 = vrot.slane %v5369, 4
    %v5371 = vadd.f32 %v5369, %v5370
    %v5372 = vrot.slane %v5371, 2
    %v5373 = vadd.f32 %v5371, %v5372
    %v5374 = vrot.slane %v5373, 1
    %v5375 = vadd.f32 %v5373, %v5374
    %v5376 = vsel %vm293, %v5330, 0.0
    %v5377 = vrot.slane %v5376, 4
    %v5378 = vadd.f32 %v5376, %v5377
    %v5379 = vrot.slane %v5378, 2
    %v5380 = vadd.f32 %v5378, %v5379
    %v5381 = vrot.slane %v5380, 1
    %v5382 = vadd.f32 %v5380, %v5381
    %v5383 = vsel %vm293, %v5331, 0.0
    %v5384 = vrot.slane %v5383, 4
    %v5385 = vadd.f32 %v5383, %v5384
    %v5386 = vrot.slane %v5385, 2
    %v5387 = vadd.f32 %v5385, %v5386
    %v5388 = vrot.slane %v5387, 1
    %v5389 = vadd.f32 %v5387, %v5388
    %v5390 = vsel %vm315, %v5332, 0.0
    %v5391 = vrot.slane %v5390, 4
    %v5392 = vadd.f32 %v5390, %v5391
    %v5393 = vrot.slane %v5392, 2
    %v5394 = vadd.f32 %v5392, %v5393
    %v5395 = vrot.slane %v5394, 1
    %v5396 = vadd.f32 %v5394, %v5395
    %v5397 = vmul.f32 %v5347, %v357
    %v5398 = vmul.f32 %v5354, %v357
    %v5399 = vmul.f32 %v5361, %v357
    %v5400 = vmul.f32 %v5368, %v357
    %v5401 = vmul.f32 %v5375, %v357
    %v5402 = vmul.f32 %v5382, %v357
    %v5403 = vmul.f32 %v5389, %v357
    %v5404 = vmul.f32 %v5396, %v357
    %v5405 = vld [vmem:[#allocation11] sm:$0xff]
    %v5406 = vld [vmem:[#allocation11 + $0x8] sm:$0xff]
    %v5407 = vld [vmem:[#allocation11 + $0x10] sm:$0xff]
    %v5408 = vld [vmem:[#allocation11 + $0x18] sm:$0xff]
    %5413 = vst [vmem:[#allocation1] ss:$2 sm:$0xff] %v5405
    %s5414 = scalar_lea.vmem [#allocation1], 16
    %5415 = vst [vmem:[%s5414] ss:$2 sm:$0xff] %v5406
    %v5416 = vld.sshfl [vmem:[#allocation1] sm:$0xff pattern:$0x75316420]
    %v5417 = vld.sshfl [vmem:[#allocation1 + $0x8] sm:$0xff pattern:$0x75316420]
    %v5418 = vld.sshfl [vmem:[#allocation1 + $0x10] sm:$0xff pattern:$0x75316420]
    %v5419 = vld.sshfl [vmem:[#allocation1 + $0x18] sm:$0xff pattern:$0x75316420]
    %s5420 = scalar_lea.vmem [#allocation1], 32
    %5421 = vst [vmem:[%s5420] ss:$2 sm:$0xff] %v5407
    %s5422 = scalar_lea.vmem [#allocation1], 48
    %5423 = vst [vmem:[%s5422] ss:$2 sm:$0xff] %v5408
    %v5424 = vld.sshfl [vmem:[#allocation1 + $0x20] sm:$0xff pattern:$0x75316420]
    %v5425 = vld.sshfl [vmem:[#allocation1 + $0x28] sm:$0xff pattern:$0x75316420]
    %v5426 = vld.sshfl [vmem:[#allocation1 + $0x30] sm:$0xff pattern:$0x75316420]
    %v5427 = vld.sshfl [vmem:[#allocation1 + $0x38] sm:$0xff pattern:$0x75316420]
    %v5436 = vsel %vm293, %v5416, 0.0
    %v5437 = vrot.slane %v5436, 4
    %v5438 = vadd.f32 %v5436, %v5437
    %v5439 = vrot.slane %v5438, 2
    %v5440 = vadd.f32 %v5438, %v5439
    %v5441 = vrot.slane %v5440, 1
    %v5442 = vadd.f32 %v5440, %v5441
    %v5443 = vsel %vm293, %v5417, 0.0
    %v5444 = vrot.slane %v5443, 4
    %v5445 = vadd.f32 %v5443, %v5444
    %v5446 = vrot.slane %v5445, 2
    %v5447 = vadd.f32 %v5445, %v5446
    %v5448 = vrot.slane %v5447, 1
    %v5449 = vadd.f32 %v5447, %v5448
    %v5450 = vsel %vm293, %v5418, 0.0
    %v5451 = vrot.slane %v5450, 4
    %v5452 = vadd.f32 %v5450, %v5451
    %v5453 = vrot.slane %v5452, 2
    %v5454 = vadd.f32 %v5452, %v5453
    %v5455 = vrot.slane %v5454, 1
    %v5456 = vadd.f32 %v5454, %v5455
    %v5457 = vsel %vm315, %v5419, 0.0
    %v5458 = vrot.slane %v5457, 4
    %v5459 = vadd.f32 %v5457, %v5458
    %v5460 = vrot.slane %v5459, 2
    %v5461 = vadd.f32 %v5459, %v5460
    %v5462 = vrot.slane %v5461, 1
    %v5463 = vadd.f32 %v5461, %v5462
    %v5464 = vsel %vm293, %v5424, 0.0
    %v5465 = vrot.slane %v5464, 4
    %v5466 = vadd.f32 %v5464, %v5465
    %v5467 = vrot.slane %v5466, 2
    %v5468 = vadd.f32 %v5466, %v5467
    %v5469 = vrot.slane %v5468, 1
    %v5470 = vadd.f32 %v5468, %v5469
    %v5471 = vsel %vm293, %v5425, 0.0
    %v5472 = vrot.slane %v5471, 4
    %v5473 = vadd.f32 %v5471, %v5472
    %v5474 = vrot.slane %v5473, 2
    %v5475 = vadd.f32 %v5473, %v5474
    %v5476 = vrot.slane %v5475, 1
    %v5477 = vadd.f32 %v5475, %v5476
    %v5478 = vsel %vm293, %v5426, 0.0
    %v5479 = vrot.slane %v5478, 4
    %v5480 = vadd.f32 %v5478, %v5479
    %v5481 = vrot.slane %v5480, 2
    %v5482 = vadd.f32 %v5480, %v5481
    %v5483 = vrot.slane %v5482, 1
    %v5484 = vadd.f32 %v5482, %v5483
    %v5485 = vsel %vm315, %v5427, 0.0
    %v5486 = vrot.slane %v5485, 4
    %v5487 = vadd.f32 %v5485, %v5486
    %v5488 = vrot.slane %v5487, 2
    %v5489 = vadd.f32 %v5487, %v5488
    %v5490 = vrot.slane %v5489, 1
    %v5491 = vadd.f32 %v5489, %v5490
    %v5492 = vmul.f32 %v5442, %v357
    %v5493 = vmul.f32 %v5449, %v357
    %v5494 = vmul.f32 %v5456, %v357
    %v5495 = vmul.f32 %v5463, %v357
    %v5496 = vmul.f32 %v5470, %v357
    %v5497 = vmul.f32 %v5477, %v357
    %v5498 = vmul.f32 %v5484, %v357
    %v5499 = vmul.f32 %v5491, %v357
    %v5500 = vld [vmem:[#allocation12] sm:$0xff]
    %v5501 = vld [vmem:[#allocation12 + $0x8] sm:$0xff]
    %v5502 = vld [vmem:[#allocation12 + $0x10] sm:$0xff]
    %v5503 = vld [vmem:[#allocation12 + $0x18] sm:$0xff]
    %5508 = vst [vmem:[#allocation1] ss:$2 sm:$0xff] %v5500
    %s5509 = scalar_lea.vmem [#allocation1], 16
    %5510 = vst [vmem:[%s5509] ss:$2 sm:$0xff] %v5501
    %v5511 = vld.sshfl [vmem:[#allocation1] sm:$0xff pattern:$0x75316420]
    %v5512 = vld.sshfl [vmem:[#allocation1 + $0x8] sm:$0xff pattern:$0x75316420]
    %v5513 = vld.sshfl [vmem:[#allocation1 + $0x10] sm:$0xff pattern:$0x75316420]
    %v5514 = vld.sshfl [vmem:[#allocation1 + $0x18] sm:$0xff pattern:$0x75316420]
    %s5515 = scalar_lea.vmem [#allocation1], 32
    %5516 = vst [vmem:[%s5515] ss:$2 sm:$0xff] %v5502
    %s5517 = scalar_lea.vmem [#allocation1], 48
    %5518 = vst [vmem:[%s5517] ss:$2 sm:$0xff] %v5503
    %v5519 = vld.sshfl [vmem:[#allocation1 + $0x20] sm:$0xff pattern:$0x75316420]
    %v5520 = vld.sshfl [vmem:[#allocation1 + $0x28] sm:$0xff pattern:$0x75316420]
    %v5521 = vld.sshfl [vmem:[#allocation1 + $0x30] sm:$0xff pattern:$0x75316420]
    %v5522 = vld.sshfl [vmem:[#allocation1 + $0x38] sm:$0xff pattern:$0x75316420]
    %v5531 = vsel %vm293, %v5511, 0.0
    %v5532 = vrot.slane %v5531, 4
    %v5533 = vadd.f32 %v5531, %v5532
    %v5534 = vrot.slane %v5533, 2
    %v5535 = vadd.f32 %v5533, %v5534
    %v5536 = vrot.slane %v5535, 1
    %v5537 = vadd.f32 %v5535, %v5536
    %v5538 = vsel %vm293, %v5512, 0.0
    %v5539 = vrot.slane %v5538, 4
    %v5540 = vadd.f32 %v5538, %v5539
    %v5541 = vrot.slane %v5540, 2
    %v5542 = vadd.f32 %v5540, %v5541
    %v5543 = vrot.slane %v5542, 1
    %v5544 = vadd.f32 %v5542, %v5543
    %v5545 = vsel %vm293, %v5513, 0.0
    %v5546 = vrot.slane %v5545, 4
    %v5547 = vadd.f32 %v5545, %v5546
    %v5548 = vrot.slane %v5547, 2
    %v5549 = vadd.f32 %v5547, %v5548
    %v5550 = vrot.slane %v5549, 1
    %v5551 = vadd.f32 %v5549, %v5550
    %v5552 = vsel %vm315, %v5514, 0.0
    %v5553 = vrot.slane %v5552, 4
    %v5554 = vadd.f32 %v5552, %v5553
    %v5555 = vrot.slane %v5554, 2
    %v5556 = vadd.f32 %v5554, %v5555
    %v5557 = vrot.slane %v5556, 1
    %v5558 = vadd.f32 %v5556, %v5557
    %v5559 = vsel %vm293, %v5519, 0.0
    %v5560 = vrot.slane %v5559, 4
    %v5561 = vadd.f32 %v5559, %v5560
    %v5562 = vrot.slane %v5561, 2
    %v5563 = vadd.f32 %v5561, %v5562
    %v5564 = vrot.slane %v5563, 1
    %v5565 = vadd.f32 %v5563, %v5564
    %v5566 = vsel %vm293, %v5520, 0.0
    %v5567 = vrot.slane %v5566, 4
    %v5568 = vadd.f32 %v5566, %v5567
    %v5569 = vrot.slane %v5568, 2
    %v5570 = vadd.f32 %v5568, %v5569
    %v5571 = vrot.slane %v5570, 1
    %v5572 = vadd.f32 %v5570, %v5571
    %v5573 = vsel %vm293, %v5521, 0.0
    %v5574 = vrot.slane %v5573, 4
    %v5575 = vadd.f32 %v5573, %v5574
    %v5576 = vrot.slane %v5575, 2
    %v5577 = vadd.f32 %v5575, %v5576
    %v5578 = vrot.slane %v5577, 1
    %v5579 = vadd.f32 %v5577, %v5578
    %v5580 = vsel %vm315, %v5522, 0.0
    %v5581 = vrot.slane %v5580, 4
    %v5582 = vadd.f32 %v5580, %v5581
    %v5583 = vrot.slane %v5582, 2
    %v5584 = vadd.f32 %v5582, %v5583
    %v5585 = vrot.slane %v5584, 1
    %v5586 = vadd.f32 %v5584, %v5585
    %v5587 = vmul.f32 %v5537, %v357
    %v5588 = vmul.f32 %v5544, %v357
    %v5589 = vmul.f32 %v5551, %v357
    %v5590 = vmul.f32 %v5558, %v357
    %v5591 = vmul.f32 %v5565, %v357
    %v5592 = vmul.f32 %v5572, %v357
    %v5593 = vmul.f32 %v5579, %v357
    %v5594 = vmul.f32 %v5586, %v357
    %v5595 = vpack.c.bf16 %v5397, %v5397
    %v5596 = vpack.c.bf16 %v5398, %v5398
    %v5597 = vpack.c.bf16 %v5399, %v5399
    %v5598 = vpack.c.bf16 %v5400, %v5400
    %v5599 = vpack.c.bf16 %v5401, %v5401
    %v5600 = vpack.c.bf16 %v5402, %v5402
    %v5601 = vpack.c.bf16 %v5403, %v5403
    %v5602 = vpack.c.bf16 %v5404, %v5404
    %v5603 = vpack.c.bf16 %v5492, %v5492
    %v5604 = vpack.c.bf16 %v5493, %v5493
    %v5605 = vpack.c.bf16 %v5494, %v5494
    %v5606 = vpack.c.bf16 %v5495, %v5495
    %v5607 = vpack.c.bf16 %v5496, %v5496
    %v5608 = vpack.c.bf16 %v5497, %v5497
    %v5609 = vpack.c.bf16 %v5498, %v5498
    %v5610 = vpack.c.bf16 %v5499, %v5499
    %v5619 = vunpack.c.l.b16 %v5603
    %v5620 = vunpack.c.l.b16 %v5604
    %v5621 = vunpack.c.l.b16 %v5605
    %v5622 = vunpack.c.l.b16 %v5606
    %v5623 = vunpack.c.l.b16 %v5607
    %v5624 = vunpack.c.l.b16 %v5608
    %v5625 = vunpack.c.l.b16 %v5609
    %v5626 = vunpack.c.l.b16 %v5610
    %v5627 = vsel %vm804, %v5623, %v5619
    %v5628 = vsel %vm804, %v5624, %v5620
    %v5629 = vsel %vm804, %v5625, %v5621
    %v5630 = vsel %vm804, %v5626, %v5622
    %v5631 = vpack.c.b16 %v5627, %v5627
    %v5632 = vpack.c.b16 %v5628, %v5628
    %v5633 = vpack.c.b16 %v5629, %v5629
    %v5634 = vpack.c.b16 %v5630, %v5630
    %v5639 = vsel %vm1356, %v5634, 0
    %5641 = vmatpush.bf16.msra.mxu0 %v1168
    %5642 = vmatpush.bf16.msra.mxu0 %v1164
    %5643 = vmatpush.bf16.msra.mxu0 %v1160
    %5644 = vmatpush.bf16.msra.mxu0 %v1156
    %5645 = vmatpush.bf16.msra.mxu0 %v1152
    %5646 = vmatpush.bf16.msra.mxu0 %v1148
    %5647 = vmatpush.bf16.msra.mxu0 %v1144
    %5648 = vmatpush.bf16.msra.mxu0 %v1140
    %5649 = vmatmul.bf16.gmra.mxu0 %v5631
    %v5650 = vpop.f32.mrf.mxu0
    %v5651 = vadd.f32 0.0, %v5650
    %v5652 = vpop.f32.mrf.mxu0
    %5653 = vdwg.mxu0
    %5654 = vmatpush.bf16.msra.mxu0 %v1200
    %5655 = vmatpush.bf16.msra.mxu0 %v1196
    %5656 = vmatpush.bf16.msra.mxu0 %v1192
    %5657 = vmatpush.bf16.msra.mxu0 %v1188
    %5658 = vmatpush.bf16.msra.mxu0 %v1184
    %5659 = vmatpush.bf16.msra.mxu0 %v1180
    %5660 = vmatpush.bf16.msra.mxu0 %v1176
    %5661 = vmatpush.bf16.msra.mxu0 %v1172
    %5662 = vmatmul.bf16.gmra.mxu0 %v5632
    %v5663 = vpop.f32.mrf.mxu0
    %v5664 = vadd.f32 %v5651, %v5663
    %v5665 = vpop.f32.mrf.mxu0
    %5666 = vdwg.mxu0
    %5667 = vmatpush.bf16.msra.mxu0 %v1232
    %5668 = vmatpush.bf16.msra.mxu0 %v1228
    %5669 = vmatpush.bf16.msra.mxu0 %v1224
    %5670 = vmatpush.bf16.msra.mxu0 %v1220
    %5671 = vmatpush.bf16.msra.mxu0 %v1216
    %5672 = vmatpush.bf16.msra.mxu0 %v1212
    %5673 = vmatpush.bf16.msra.mxu0 %v1208
    %5674 = vmatpush.bf16.msra.mxu0 %v1204
    %5675 = vmatmul.bf16.gmra.mxu0 %v5633
    %v5676 = vpop.f32.mrf.mxu0
    %v5677 = vadd.f32 %v5664, %v5676
    %v5678 = vpop.f32.mrf.mxu0
    %5679 = vdwg.mxu0
    %5680 = vmatpush.bf16.msra.mxu0 0
    %5681 = vmatpush.bf16.msra.mxu0 0
    %5682 = vmatpush.bf16.msra.mxu0 0
    %5683 = vmatpush.bf16.msra.mxu0 0
    %5684 = vmatpush.bf16.msra.mxu0 0
    %5685 = vmatpush.bf16.msra.mxu0 %v1244
    %5686 = vmatpush.bf16.msra.mxu0 %v1240
    %5687 = vmatpush.bf16.msra.mxu0 %v1236
    %5688 = vmatmul.bf16.gmra.mxu0 %v5639
    %v5689 = vpop.f32.mrf.mxu0
    %v5690 = vadd.f32 %v5677, %v5689
    %v5691 = vpop.f32.mrf.mxu0
    %5692 = vdwg.mxu0
    %5693 = vmatpush.bf16.msra.mxu0 %v1169
    %5694 = vmatpush.bf16.msra.mxu0 %v1165
    %5695 = vmatpush.bf16.msra.mxu0 %v1161
    %5696 = vmatpush.bf16.msra.mxu0 %v1157
    %5697 = vmatpush.bf16.msra.mxu0 %v1153
    %5698 = vmatpush.bf16.msra.mxu0 %v1149
    %5699 = vmatpush.bf16.msra.mxu0 %v1145
    %5700 = vmatpush.bf16.msra.mxu0 %v1141
    %5701 = vmatmul.bf16.gmra.mxu0 %v5631
    %v5702 = vpop.f32.mrf.mxu0
    %v5703 = vadd.f32 0.0, %v5702
    %v5704 = vpop.f32.mrf.mxu0
    %5705 = vdwg.mxu0
    %5706 = vmatpush.bf16.msra.mxu0 %v1201
    %5707 = vmatpush.bf16.msra.mxu0 %v1197
    %5708 = vmatpush.bf16.msra.mxu0 %v1193
    %5709 = vmatpush.bf16.msra.mxu0 %v1189
    %5710 = vmatpush.bf16.msra.mxu0 %v1185
    %5711 = vmatpush.bf16.msra.mxu0 %v1181
    %5712 = vmatpush.bf16.msra.mxu0 %v1177
    %5713 = vmatpush.bf16.msra.mxu0 %v1173
    %5714 = vmatmul.bf16.gmra.mxu0 %v5632
    %v5715 = vpop.f32.mrf.mxu0
    %v5716 = vadd.f32 %v5703, %v5715
    %v5717 = vpop.f32.mrf.mxu0
    %5718 = vdwg.mxu0
    %5719 = vmatpush.bf16.msra.mxu0 %v1233
    %5720 = vmatpush.bf16.msra.mxu0 %v1229
    %5721 = vmatpush.bf16.msra.mxu0 %v1225
    %5722 = vmatpush.bf16.msra.mxu0 %v1221
    %5723 = vmatpush.bf16.msra.mxu0 %v1217
    %5724 = vmatpush.bf16.msra.mxu0 %v1213
    %5725 = vmatpush.bf16.msra.mxu0 %v1209
    %5726 = vmatpush.bf16.msra.mxu0 %v1205
    %5727 = vmatmul.bf16.gmra.mxu0 %v5633
    %v5728 = vpop.f32.mrf.mxu0
    %v5729 = vadd.f32 %v5716, %v5728
    %v5730 = vpop.f32.mrf.mxu0
    %5731 = vdwg.mxu0
    %5732 = vmatpush.bf16.msra.mxu0 0
    %5733 = vmatpush.bf16.msra.mxu0 0
    %5734 = vmatpush.bf16.msra.mxu0 0
    %5735 = vmatpush.bf16.msra.mxu0 0
    %5736 = vmatpush.bf16.msra.mxu0 0
    %5737 = vmatpush.bf16.msra.mxu0 %v1245
    %5738 = vmatpush.bf16.msra.mxu0 %v1241
    %5739 = vmatpush.bf16.msra.mxu0 %v1237
    %5740 = vmatmul.bf16.gmra.mxu0 %v5639
    %v5741 = vpop.f32.mrf.mxu0
    %v5742 = vadd.f32 %v5729, %v5741
    %v5743 = vpop.f32.mrf.mxu0
    %5744 = vdwg.mxu0
    %5745 = vmatpush.bf16.msra.mxu0 %v1170
    %5746 = vmatpush.bf16.msra.mxu0 %v1166
    %5747 = vmatpush.bf16.msra.mxu0 %v1162
    %5748 = vmatpush.bf16.msra.mxu0 %v1158
    %5749 = vmatpush.bf16.msra.mxu0 %v1154
    %5750 = vmatpush.bf16.msra.mxu0 %v1150
    %5751 = vmatpush.bf16.msra.mxu0 %v1146
    %5752 = vmatpush.bf16.msra.mxu0 %v1142
    %5753 = vmatmul.bf16.gmra.mxu0 %v5631
    %v5754 = vpop.f32.mrf.mxu0
    %v5755 = vadd.f32 0.0, %v5754
    %v5756 = vpop.f32.mrf.mxu0
    %5757 = vdwg.mxu0
    %5758 = vmatpush.bf16.msra.mxu0 %v1202
    %5759 = vmatpush.bf16.msra.mxu0 %v1198
    %5760 = vmatpush.bf16.msra.mxu0 %v1194
    %5761 = vmatpush.bf16.msra.mxu0 %v1190
    %5762 = vmatpush.bf16.msra.mxu0 %v1186
    %5763 = vmatpush.bf16.msra.mxu0 %v1182
    %5764 = vmatpush.bf16.msra.mxu0 %v1178
    %5765 = vmatpush.bf16.msra.mxu0 %v1174
    %5766 = vmatmul.bf16.gmra.mxu0 %v5632
    %v5767 = vpop.f32.mrf.mxu0
    %v5768 = vadd.f32 %v5755, %v5767
    %v5769 = vpop.f32.mrf.mxu0
    %5770 = vdwg.mxu0
    %5771 = vmatpush.bf16.msra.mxu0 %v1234
    %5772 = vmatpush.bf16.msra.mxu0 %v1230
    %5773 = vmatpush.bf16.msra.mxu0 %v1226
    %5774 = vmatpush.bf16.msra.mxu0 %v1222
    %5775 = vmatpush.bf16.msra.mxu0 %v1218
    %5776 = vmatpush.bf16.msra.mxu0 %v1214
    %5777 = vmatpush.bf16.msra.mxu0 %v1210
    %5778 = vmatpush.bf16.msra.mxu0 %v1206
    %5779 = vmatmul.bf16.gmra.mxu0 %v5633
    %v5780 = vpop.f32.mrf.mxu0
    %v5781 = vadd.f32 %v5768, %v5780
    %v5782 = vpop.f32.mrf.mxu0
    %5783 = vdwg.mxu0
    %5784 = vmatpush.bf16.msra.mxu0 0
    %5785 = vmatpush.bf16.msra.mxu0 0
    %5786 = vmatpush.bf16.msra.mxu0 0
    %5787 = vmatpush.bf16.msra.mxu0 0
    %5788 = vmatpush.bf16.msra.mxu0 0
    %5789 = vmatpush.bf16.msra.mxu0 %v1246
    %5790 = vmatpush.bf16.msra.mxu0 %v1242
    %5791 = vmatpush.bf16.msra.mxu0 %v1238
    %5792 = vmatmul.bf16.gmra.mxu0 %v5639
    %v5793 = vpop.f32.mrf.mxu0
    %v5794 = vadd.f32 %v5781, %v5793
    %v5795 = vpop.f32.mrf.mxu0
    %5796 = vdwg.mxu0
    %5797 = vmatpush.bf16.msra.mxu0 %v1171
    %5798 = vmatpush.bf16.msra.mxu0 %v1167
    %5799 = vmatpush.bf16.msra.mxu0 %v1163
    %5800 = vmatpush.bf16.msra.mxu0 %v1159
    %5801 = vmatpush.bf16.msra.mxu0 %v1155
    %5802 = vmatpush.bf16.msra.mxu0 %v1151
    %5803 = vmatpush.bf16.msra.mxu0 %v1147
    %5804 = vmatpush.bf16.msra.mxu0 %v1143
    %5805 = vmatmul.bf16.gmra.mxu0 %v5631
    %v5806 = vpop.f32.mrf.mxu0
    %v5807 = vadd.f32 0.0, %v5806
    %v5808 = vpop.f32.mrf.mxu0
    %5809 = vdwg.mxu0
    %5810 = vmatpush.bf16.msra.mxu0 %v1203
    %5811 = vmatpush.bf16.msra.mxu0 %v1199
    %5812 = vmatpush.bf16.msra.mxu0 %v1195
    %5813 = vmatpush.bf16.msra.mxu0 %v1191
    %5814 = vmatpush.bf16.msra.mxu0 %v1187
    %5815 = vmatpush.bf16.msra.mxu0 %v1183
    %5816 = vmatpush.bf16.msra.mxu0 %v1179
    %5817 = vmatpush.bf16.msra.mxu0 %v1175
    %5818 = vmatmul.bf16.gmra.mxu0 %v5632
    %v5819 = vpop.f32.mrf.mxu0
    %v5820 = vadd.f32 %v5807, %v5819
    %v5821 = vpop.f32.mrf.mxu0
    %5822 = vdwg.mxu0
    %5823 = vmatpush.bf16.msra.mxu0 %v1235
    %5824 = vmatpush.bf16.msra.mxu0 %v1231
    %5825 = vmatpush.bf16.msra.mxu0 %v1227
    %5826 = vmatpush.bf16.msra.mxu0 %v1223
    %5827 = vmatpush.bf16.msra.mxu0 %v1219
    %5828 = vmatpush.bf16.msra.mxu0 %v1215
    %5829 = vmatpush.bf16.msra.mxu0 %v1211
    %5830 = vmatpush.bf16.msra.mxu0 %v1207
    %5831 = vmatmul.bf16.gmra.mxu0 %v5633
    %v5832 = vpop.f32.mrf.mxu0
    %v5833 = vadd.f32 %v5820, %v5832
    %v5834 = vpop.f32.mrf.mxu0
    %5835 = vdwg.mxu0
    %5836 = vmatpush.bf16.msra.mxu0 0
    %5837 = vmatpush.bf16.msra.mxu0 0
    %5838 = vmatpush.bf16.msra.mxu0 0
    %5839 = vmatpush.bf16.msra.mxu0 0
    %5840 = vmatpush.bf16.msra.mxu0 0
    %5841 = vmatpush.bf16.msra.mxu0 %v1247
    %5842 = vmatpush.bf16.msra.mxu0 %v1243
    %5843 = vmatpush.bf16.msra.mxu0 %v1239
    %5844 = vmatmul.bf16.gmra.mxu0 %v5639
    %v5845 = vpop.f32.mrf.mxu0
    %v5846 = vadd.f32 %v5833, %v5845
    %v5847 = vpop.f32.mrf.mxu0
    %5848 = vdwg.mxu0
    %v5857 = vunpack.c.l.b16 %v5595
    %v5858 = vunpack.c.l.b16 %v5596
    %v5859 = vunpack.c.l.b16 %v5597
    %v5860 = vunpack.c.l.b16 %v5598
    %v5861 = vunpack.c.l.b16 %v5599
    %v5862 = vunpack.c.l.b16 %v5600
    %v5863 = vunpack.c.l.b16 %v5601
    %v5864 = vunpack.c.l.b16 %v5602
    %v5865 = vsel %vm804, %v5861, %v5857
    %v5866 = vsel %vm804, %v5862, %v5858
    %v5867 = vsel %vm804, %v5863, %v5859
    %v5868 = vsel %vm804, %v5864, %v5860
    %v5869 = vpack.c.b16 %v5865, %v5865
    %v5870 = vpack.c.b16 %v5866, %v5866
    %v5871 = vpack.c.b16 %v5867, %v5867
    %v5872 = vpack.c.b16 %v5868, %v5868
    %v5877 = vsel %vm1356, %v5872, 0
    %5879 = vmatpush.bf16.msra.mxu0 %v1947
    %5880 = vmatpush.bf16.msra.mxu0 %v1943
    %5881 = vmatpush.bf16.msra.mxu0 %v1939
    %5882 = vmatpush.bf16.msra.mxu0 %v1935
    %5883 = vmatpush.bf16.msra.mxu0 %v1931
    %5884 = vmatpush.bf16.msra.mxu0 %v1927
    %5885 = vmatpush.bf16.msra.mxu0 %v1923
    %5886 = vmatpush.bf16.msra.mxu0 %v1919
    %5887 = vmatmul.bf16.gmra.mxu0 %v5869
    %v5888 = vpop.f32.mrf.mxu0
    %v5889 = vadd.f32 %v5690, %v5888
    %v5890 = vpop.f32.mrf.mxu0
    %5891 = vdwg.mxu0
    %5892 = vmatpush.bf16.msra.mxu0 %v1979
    %5893 = vmatpush.bf16.msra.mxu0 %v1975
    %5894 = vmatpush.bf16.msra.mxu0 %v1971
    %5895 = vmatpush.bf16.msra.mxu0 %v1967
    %5896 = vmatpush.bf16.msra.mxu0 %v1963
    %5897 = vmatpush.bf16.msra.mxu0 %v1959
    %5898 = vmatpush.bf16.msra.mxu0 %v1955
    %5899 = vmatpush.bf16.msra.mxu0 %v1951
    %5900 = vmatmul.bf16.gmra.mxu0 %v5870
    %v5901 = vpop.f32.mrf.mxu0
    %v5902 = vadd.f32 %v5889, %v5901
    %v5903 = vpop.f32.mrf.mxu0
    %5904 = vdwg.mxu0
    %5905 = vmatpush.bf16.msra.mxu0 %v2011
    %5906 = vmatpush.bf16.msra.mxu0 %v2007
    %5907 = vmatpush.bf16.msra.mxu0 %v2003
    %5908 = vmatpush.bf16.msra.mxu0 %v1999
    %5909 = vmatpush.bf16.msra.mxu0 %v1995
    %5910 = vmatpush.bf16.msra.mxu0 %v1991
    %5911 = vmatpush.bf16.msra.mxu0 %v1987
    %5912 = vmatpush.bf16.msra.mxu0 %v1983
    %5913 = vmatmul.bf16.gmra.mxu0 %v5871
    %v5914 = vpop.f32.mrf.mxu0
    %v5915 = vadd.f32 %v5902, %v5914
    %v5916 = vpop.f32.mrf.mxu0
    %5917 = vdwg.mxu0
    %5918 = vmatpush.bf16.msra.mxu0 0
    %5919 = vmatpush.bf16.msra.mxu0 0
    %5920 = vmatpush.bf16.msra.mxu0 0
    %5921 = vmatpush.bf16.msra.mxu0 0
    %5922 = vmatpush.bf16.msra.mxu0 0
    %5923 = vmatpush.bf16.msra.mxu0 %v2023
    %5924 = vmatpush.bf16.msra.mxu0 %v2019
    %5925 = vmatpush.bf16.msra.mxu0 %v2015
    %5926 = vmatmul.bf16.gmra.mxu0 %v5877
    %v5927 = vpop.f32.mrf.mxu0
    %v5928 = vadd.f32 %v5915, %v5927
    %v5929 = vpop.f32.mrf.mxu0
    %5930 = vdwg.mxu0
    %5931 = vmatpush.bf16.msra.mxu0 %v1948
    %5932 = vmatpush.bf16.msra.mxu0 %v1944
    %5933 = vmatpush.bf16.msra.mxu0 %v1940
    %5934 = vmatpush.bf16.msra.mxu0 %v1936
    %5935 = vmatpush.bf16.msra.mxu0 %v1932
    %5936 = vmatpush.bf16.msra.mxu0 %v1928
    %5937 = vmatpush.bf16.msra.mxu0 %v1924
    %5938 = vmatpush.bf16.msra.mxu0 %v1920
    %5939 = vmatmul.bf16.gmra.mxu0 %v5869
    %v5940 = vpop.f32.mrf.mxu0
    %v5941 = vadd.f32 %v5742, %v5940
    %v5942 = vpop.f32.mrf.mxu0
    %5943 = vdwg.mxu0
    %5944 = vmatpush.bf16.msra.mxu0 %v1980
    %5945 = vmatpush.bf16.msra.mxu0 %v1976
    %5946 = vmatpush.bf16.msra.mxu0 %v1972
    %5947 = vmatpush.bf16.msra.mxu0 %v1968
    %5948 = vmatpush.bf16.msra.mxu0 %v1964
    %5949 = vmatpush.bf16.msra.mxu0 %v1960
    %5950 = vmatpush.bf16.msra.mxu0 %v1956
    %5951 = vmatpush.bf16.msra.mxu0 %v1952
    %5952 = vmatmul.bf16.gmra.mxu0 %v5870
    %v5953 = vpop.f32.mrf.mxu0
    %v5954 = vadd.f32 %v5941, %v5953
    %v5955 = vpop.f32.mrf.mxu0
    %5956 = vdwg.mxu0
    %5957 = vmatpush.bf16.msra.mxu0 %v2012
    %5958 = vmatpush.bf16.msra.mxu0 %v2008
    %5959 = vmatpush.bf16.msra.mxu0 %v2004
    %5960 = vmatpush.bf16.msra.mxu0 %v2000
    %5961 = vmatpush.bf16.msra.mxu0 %v1996
    %5962 = vmatpush.bf16.msra.mxu0 %v1992
    %5963 = vmatpush.bf16.msra.mxu0 %v1988
    %5964 = vmatpush.bf16.msra.mxu0 %v1984
    %5965 = vmatmul.bf16.gmra.mxu0 %v5871
    %v5966 = vpop.f32.mrf.mxu0
    %v5967 = vadd.f32 %v5954, %v5966
    %v5968 = vpop.f32.mrf.mxu0
    %5969 = vdwg.mxu0
    %5970 = vmatpush.bf16.msra.mxu0 0
    %5971 = vmatpush.bf16.msra.mxu0 0
    %5972 = vmatpush.bf16.msra.mxu0 0
    %5973 = vmatpush.bf16.msra.mxu0 0
    %5974 = vmatpush.bf16.msra.mxu0 0
    %5975 = vmatpush.bf16.msra.mxu0 %v2024
    %5976 = vmatpush.bf16.msra.mxu0 %v2020
    %5977 = vmatpush.bf16.msra.mxu0 %v2016
    %5978 = vmatmul.bf16.gmra.mxu0 %v5877
    %v5979 = vpop.f32.mrf.mxu0
    %v5980 = vadd.f32 %v5967, %v5979
    %v5981 = vpop.f32.mrf.mxu0
    %5982 = vdwg.mxu0
    %5983 = vmatpush.bf16.msra.mxu0 %v1949
    %5984 = vmatpush.bf16.msra.mxu0 %v1945
    %5985 = vmatpush.bf16.msra.mxu0 %v1941
    %5986 = vmatpush.bf16.msra.mxu0 %v1937
    %5987 = vmatpush.bf16.msra.mxu0 %v1933
    %5988 = vmatpush.bf16.msra.mxu0 %v1929
    %5989 = vmatpush.bf16.msra.mxu0 %v1925
    %5990 = vmatpush.bf16.msra.mxu0 %v1921
    %5991 = vmatmul.bf16.gmra.mxu0 %v5869
    %v5992 = vpop.f32.mrf.mxu0
    %v5993 = vadd.f32 %v5794, %v5992
    %v5994 = vpop.f32.mrf.mxu0
    %5995 = vdwg.mxu0
    %5996 = vmatpush.bf16.msra.mxu0 %v1981
    %5997 = vmatpush.bf16.msra.mxu0 %v1977
    %5998 = vmatpush.bf16.msra.mxu0 %v1973
    %5999 = vmatpush.bf16.msra.mxu0 %v1969
    %6000 = vmatpush.bf16.msra.mxu0 %v1965
    %6001 = vmatpush.bf16.msra.mxu0 %v1961
    %6002 = vmatpush.bf16.msra.mxu0 %v1957
    %6003 = vmatpush.bf16.msra.mxu0 %v1953
    %6004 = vmatmul.bf16.gmra.mxu0 %v5870
    %v6005 = vpop.f32.mrf.mxu0
    %v6006 = vadd.f32 %v5993, %v6005
    %v6007 = vpop.f32.mrf.mxu0
    %6008 = vdwg.mxu0
    %6009 = vmatpush.bf16.msra.mxu0 %v2013
    %6010 = vmatpush.bf16.msra.mxu0 %v2009
    %6011 = vmatpush.bf16.msra.mxu0 %v2005
    %6012 = vmatpush.bf16.msra.mxu0 %v2001
    %6013 = vmatpush.bf16.msra.mxu0 %v1997
    %6014 = vmatpush.bf16.msra.mxu0 %v1993
    %6015 = vmatpush.bf16.msra.mxu0 %v1989
    %6016 = vmatpush.bf16.msra.mxu0 %v1985
    %6017 = vmatmul.bf16.gmra.mxu0 %v5871
    %v6018 = vpop.f32.mrf.mxu0
    %v6019 = vadd.f32 %v6006, %v6018
    %v6020 = vpop.f32.mrf.mxu0
    %6021 = vdwg.mxu0
    %6022 = vmatpush.bf16.msra.mxu0 0
    %6023 = vmatpush.bf16.msra.mxu0 0
    %6024 = vmatpush.bf16.msra.mxu0 0
    %6025 = vmatpush.bf16.msra.mxu0 0
    %6026 = vmatpush.bf16.msra.mxu0 0
    %6027 = vmatpush.bf16.msra.mxu0 %v2025
    %6028 = vmatpush.bf16.msra.mxu0 %v2021
    %6029 = vmatpush.bf16.msra.mxu0 %v2017
    %6030 = vmatmul.bf16.gmra.mxu0 %v5877
    %v6031 = vpop.f32.mrf.mxu0
    %v6032 = vadd.f32 %v6019, %v6031
    %v6033 = vpop.f32.mrf.mxu0
    %6034 = vdwg.mxu0
    %6035 = vmatpush.bf16.msra.mxu0 %v1950
    %6036 = vmatpush.bf16.msra.mxu0 %v1946
    %6037 = vmatpush.bf16.msra.mxu0 %v1942
    %6038 = vmatpush.bf16.msra.mxu0 %v1938
    %6039 = vmatpush.bf16.msra.mxu0 %v1934
    %6040 = vmatpush.bf16.msra.mxu0 %v1930
    %6041 = vmatpush.bf16.msra.mxu0 %v1926
    %6042 = vmatpush.bf16.msra.mxu0 %v1922
    %6043 = vmatmul.bf16.gmra.mxu0 %v5869
    %v6044 = vpop.f32.mrf.mxu0
    %v6045 = vadd.f32 %v5846, %v6044
    %v6046 = vpop.f32.mrf.mxu0
    %6047 = vdwg.mxu0
    %6048 = vmatpush.bf16.msra.mxu0 %v1982
    %6049 = vmatpush.bf16.msra.mxu0 %v1978
    %6050 = vmatpush.bf16.msra.mxu0 %v1974
    %6051 = vmatpush.bf16.msra.mxu0 %v1970
    %6052 = vmatpush.bf16.msra.mxu0 %v1966
    %6053 = vmatpush.bf16.msra.mxu0 %v1962
    %6054 = vmatpush.bf16.msra.mxu0 %v1958
    %6055 = vmatpush.bf16.msra.mxu0 %v1954
    %6056 = vmatmul.bf16.gmra.mxu0 %v5870
    %v6057 = vpop.f32.mrf.mxu0
    %v6058 = vadd.f32 %v6045, %v6057
    %v6059 = vpop.f32.mrf.mxu0
    %6060 = vdwg.mxu0
    %6061 = vmatpush.bf16.msra.mxu0 %v2014
    %6062 = vmatpush.bf16.msra.mxu0 %v2010
    %6063 = vmatpush.bf16.msra.mxu0 %v2006
    %6064 = vmatpush.bf16.msra.mxu0 %v2002
    %6065 = vmatpush.bf16.msra.mxu0 %v1998
    %6066 = vmatpush.bf16.msra.mxu0 %v1994
    %6067 = vmatpush.bf16.msra.mxu0 %v1990
    %6068 = vmatpush.bf16.msra.mxu0 %v1986
    %6069 = vmatmul.bf16.gmra.mxu0 %v5871
    %v6070 = vpop.f32.mrf.mxu0
    %v6071 = vadd.f32 %v6058, %v6070
    %v6072 = vpop.f32.mrf.mxu0
    %6073 = vdwg.mxu0
    %6074 = vmatpush.bf16.msra.mxu0 0
    %6075 = vmatpush.bf16.msra.mxu0 0
    %6076 = vmatpush.bf16.msra.mxu0 0
    %6077 = vmatpush.bf16.msra.mxu0 0
    %6078 = vmatpush.bf16.msra.mxu0 0
    %6079 = vmatpush.bf16.msra.mxu0 %v2026
    %6080 = vmatpush.bf16.msra.mxu0 %v2022
    %6081 = vmatpush.bf16.msra.mxu0 %v2018
    %6082 = vmatmul.bf16.gmra.mxu0 %v5877
    %v6083 = vpop.f32.mrf.mxu0
    %v6084 = vadd.f32 %v6071, %v6083
    %v6085 = vpop.f32.mrf.mxu0
    %6086 = vdwg.mxu0
    %v6087 = vpack.c.bf16 %v5587, %v5587
    %v6088 = vpack.c.bf16 %v5588, %v5588
    %v6089 = vpack.c.bf16 %v5589, %v5589
    %v6090 = vpack.c.bf16 %v5590, %v5590
    %v6091 = vpack.c.bf16 %v5591, %v5591
    %v6092 = vpack.c.bf16 %v5592, %v5592
    %v6093 = vpack.c.bf16 %v5593, %v5593
    %v6094 = vpack.c.bf16 %v5594, %v5594
    %v6103 = vunpack.c.l.b16 %v6087
    %v6104 = vunpack.c.l.b16 %v6088
    %v6105 = vunpack.c.l.b16 %v6089
    %v6106 = vunpack.c.l.b16 %v6090
    %v6107 = vunpack.c.l.b16 %v6091
    %v6108 = vunpack.c.l.b16 %v6092
    %v6109 = vunpack.c.l.b16 %v6093
    %v6110 = vunpack.c.l.b16 %v6094
    %v6111 = vsel %vm804, %v6107, %v6103
    %v6112 = vsel %vm804, %v6108, %v6104
    %v6113 = vsel %vm804, %v6109, %v6105
    %v6114 = vsel %vm804, %v6110, %v6106
    %v6115 = vpack.c.b16 %v6111, %v6111
    %v6116 = vpack.c.b16 %v6112, %v6112
    %v6117 = vpack.c.b16 %v6113, %v6113
    %v6118 = vpack.c.b16 %v6114, %v6114
    %v6123 = vsel %vm1356, %v6118, 0
    %6125 = vmatpush.bf16.msra.mxu0 %v2841
    %6126 = vmatpush.bf16.msra.mxu0 %v2837
    %6127 = vmatpush.bf16.msra.mxu0 %v2833
    %6128 = vmatpush.bf16.msra.mxu0 %v2829
    %6129 = vmatpush.bf16.msra.mxu0 %v2825
    %6130 = vmatpush.bf16.msra.mxu0 %v2821
    %6131 = vmatpush.bf16.msra.mxu0 %v2817
    %6132 = vmatpush.bf16.msra.mxu0 %v2813
    %6133 = vmatmul.bf16.gmra.mxu0 %v6115
    %v6134 = vpop.f32.mrf.mxu0
    %v6135 = vadd.f32 0.0, %v6134
    %v6136 = vpop.f32.mrf.mxu0
    %6137 = vdwg.mxu0
    %6138 = vmatpush.bf16.msra.mxu0 %v2873
    %6139 = vmatpush.bf16.msra.mxu0 %v2869
    %6140 = vmatpush.bf16.msra.mxu0 %v2865
    %6141 = vmatpush.bf16.msra.mxu0 %v2861
    %6142 = vmatpush.bf16.msra.mxu0 %v2857
    %6143 = vmatpush.bf16.msra.mxu0 %v2853
    %6144 = vmatpush.bf16.msra.mxu0 %v2849
    %6145 = vmatpush.bf16.msra.mxu0 %v2845
    %6146 = vmatmul.bf16.gmra.mxu0 %v6116
    %v6147 = vpop.f32.mrf.mxu0
    %v6148 = vadd.f32 %v6135, %v6147
    %v6149 = vpop.f32.mrf.mxu0
    %6150 = vdwg.mxu0
    %6151 = vmatpush.bf16.msra.mxu0 %v2905
    %6152 = vmatpush.bf16.msra.mxu0 %v2901
    %6153 = vmatpush.bf16.msra.mxu0 %v2897
    %6154 = vmatpush.bf16.msra.mxu0 %v2893
    %6155 = vmatpush.bf16.msra.mxu0 %v2889
    %6156 = vmatpush.bf16.msra.mxu0 %v2885
    %6157 = vmatpush.bf16.msra.mxu0 %v2881
    %6158 = vmatpush.bf16.msra.mxu0 %v2877
    %6159 = vmatmul.bf16.gmra.mxu0 %v6117
    %v6160 = vpop.f32.mrf.mxu0
    %v6161 = vadd.f32 %v6148, %v6160
    %v6162 = vpop.f32.mrf.mxu0
    %6163 = vdwg.mxu0
    %6164 = vmatpush.bf16.msra.mxu0 0
    %6165 = vmatpush.bf16.msra.mxu0 0
    %6166 = vmatpush.bf16.msra.mxu0 0
    %6167 = vmatpush.bf16.msra.mxu0 0
    %6168 = vmatpush.bf16.msra.mxu0 0
    %6169 = vmatpush.bf16.msra.mxu0 %v2917
    %6170 = vmatpush.bf16.msra.mxu0 %v2913
    %6171 = vmatpush.bf16.msra.mxu0 %v2909
    %6172 = vmatmul.bf16.gmra.mxu0 %v6123
    %v6173 = vpop.f32.mrf.mxu0
    %v6174 = vadd.f32 %v6161, %v6173
    %v6175 = vpop.f32.mrf.mxu0
    %6176 = vdwg.mxu0
    %6177 = vmatpush.bf16.msra.mxu0 %v2842
    %6178 = vmatpush.bf16.msra.mxu0 %v2838
    %6179 = vmatpush.bf16.msra.mxu0 %v2834
    %6180 = vmatpush.bf16.msra.mxu0 %v2830
    %6181 = vmatpush.bf16.msra.mxu0 %v2826
    %6182 = vmatpush.bf16.msra.mxu0 %v2822
    %6183 = vmatpush.bf16.msra.mxu0 %v2818
    %6184 = vmatpush.bf16.msra.mxu0 %v2814
    %6185 = vmatmul.bf16.gmra.mxu0 %v6115
    %v6186 = vpop.f32.mrf.mxu0
    %v6187 = vadd.f32 0.0, %v6186
    %v6188 = vpop.f32.mrf.mxu0
    %6189 = vdwg.mxu0
    %6190 = vmatpush.bf16.msra.mxu0 %v2874
    %6191 = vmatpush.bf16.msra.mxu0 %v2870
    %6192 = vmatpush.bf16.msra.mxu0 %v2866
    %6193 = vmatpush.bf16.msra.mxu0 %v2862
    %6194 = vmatpush.bf16.msra.mxu0 %v2858
    %6195 = vmatpush.bf16.msra.mxu0 %v2854
    %6196 = vmatpush.bf16.msra.mxu0 %v2850
    %6197 = vmatpush.bf16.msra.mxu0 %v2846
    %6198 = vmatmul.bf16.gmra.mxu0 %v6116
    %v6199 = vpop.f32.mrf.mxu0
    %v6200 = vadd.f32 %v6187, %v6199
    %v6201 = vpop.f32.mrf.mxu0
    %6202 = vdwg.mxu0
    %6203 = vmatpush.bf16.msra.mxu0 %v2906
    %6204 = vmatpush.bf16.msra.mxu0 %v2902
    %6205 = vmatpush.bf16.msra.mxu0 %v2898
    %6206 = vmatpush.bf16.msra.mxu0 %v2894
    %6207 = vmatpush.bf16.msra.mxu0 %v2890
    %6208 = vmatpush.bf16.msra.mxu0 %v2886
    %6209 = vmatpush.bf16.msra.mxu0 %v2882
    %6210 = vmatpush.bf16.msra.mxu0 %v2878
    %6211 = vmatmul.bf16.gmra.mxu0 %v6117
    %v6212 = vpop.f32.mrf.mxu0
    %v6213 = vadd.f32 %v6200, %v6212
    %v6214 = vpop.f32.mrf.mxu0
    %6215 = vdwg.mxu0
    %6216 = vmatpush.bf16.msra.mxu0 0
    %6217 = vmatpush.bf16.msra.mxu0 0
    %6218 = vmatpush.bf16.msra.mxu0 0
    %6219 = vmatpush.bf16.msra.mxu0 0
    %6220 = vmatpush.bf16.msra.mxu0 0
    %6221 = vmatpush.bf16.msra.mxu0 %v2918
    %6222 = vmatpush.bf16.msra.mxu0 %v2914
    %6223 = vmatpush.bf16.msra.mxu0 %v2910
    %6224 = vmatmul.bf16.gmra.mxu0 %v6123
    %v6225 = vpop.f32.mrf.mxu0
    %v6226 = vadd.f32 %v6213, %v6225
    %v6227 = vpop.f32.mrf.mxu0
    %6228 = vdwg.mxu0
    %6229 = vmatpush.bf16.msra.mxu0 %v2843
    %6230 = vmatpush.bf16.msra.mxu0 %v2839
    %6231 = vmatpush.bf16.msra.mxu0 %v2835
    %6232 = vmatpush.bf16.msra.mxu0 %v2831
    %6233 = vmatpush.bf16.msra.mxu0 %v2827
    %6234 = vmatpush.bf16.msra.mxu0 %v2823
    %6235 = vmatpush.bf16.msra.mxu0 %v2819
    %6236 = vmatpush.bf16.msra.mxu0 %v2815
    %6237 = vmatmul.bf16.gmra.mxu0 %v6115
    %v6238 = vpop.f32.mrf.mxu0
    %v6239 = vadd.f32 0.0, %v6238
    %v6240 = vpop.f32.mrf.mxu0
    %6241 = vdwg.mxu0
    %6242 = vmatpush.bf16.msra.mxu0 %v2875
    %6243 = vmatpush.bf16.msra.mxu0 %v2871
    %6244 = vmatpush.bf16.msra.mxu0 %v2867
    %6245 = vmatpush.bf16.msra.mxu0 %v2863
    %6246 = vmatpush.bf16.msra.mxu0 %v2859
    %6247 = vmatpush.bf16.msra.mxu0 %v2855
    %6248 = vmatpush.bf16.msra.mxu0 %v2851
    %6249 = vmatpush.bf16.msra.mxu0 %v2847
    %6250 = vmatmul.bf16.gmra.mxu0 %v6116
    %v6251 = vpop.f32.mrf.mxu0
    %v6252 = vadd.f32 %v6239, %v6251
    %v6253 = vpop.f32.mrf.mxu0
    %6254 = vdwg.mxu0
    %6255 = vmatpush.bf16.msra.mxu0 %v2907
    %6256 = vmatpush.bf16.msra.mxu0 %v2903
    %6257 = vmatpush.bf16.msra.mxu0 %v2899
    %6258 = vmatpush.bf16.msra.mxu0 %v2895
    %6259 = vmatpush.bf16.msra.mxu0 %v2891
    %6260 = vmatpush.bf16.msra.mxu0 %v2887
    %6261 = vmatpush.bf16.msra.mxu0 %v2883
    %6262 = vmatpush.bf16.msra.mxu0 %v2879
    %6263 = vmatmul.bf16.gmra.mxu0 %v6117
    %v6264 = vpop.f32.mrf.mxu0
    %v6265 = vadd.f32 %v6252, %v6264
    %v6266 = vpop.f32.mrf.mxu0
    %6267 = vdwg.mxu0
    %6268 = vmatpush.bf16.msra.mxu0 0
    %6269 = vmatpush.bf16.msra.mxu0 0
    %6270 = vmatpush.bf16.msra.mxu0 0
    %6271 = vmatpush.bf16.msra.mxu0 0
    %6272 = vmatpush.bf16.msra.mxu0 0
    %6273 = vmatpush.bf16.msra.mxu0 %v2919
    %6274 = vmatpush.bf16.msra.mxu0 %v2915
    %6275 = vmatpush.bf16.msra.mxu0 %v2911
    %6276 = vmatmul.bf16.gmra.mxu0 %v6123
    %v6277 = vpop.f32.mrf.mxu0
    %v6278 = vadd.f32 %v6265, %v6277
    %v6279 = vpop.f32.mrf.mxu0
    %6280 = vdwg.mxu0
    %6281 = vmatpush.bf16.msra.mxu0 %v2844
    %6282 = vmatpush.bf16.msra.mxu0 %v2840
    %6283 = vmatpush.bf16.msra.mxu0 %v2836
    %6284 = vmatpush.bf16.msra.mxu0 %v2832
    %6285 = vmatpush.bf16.msra.mxu0 %v2828
    %6286 = vmatpush.bf16.msra.mxu0 %v2824
    %6287 = vmatpush.bf16.msra.mxu0 %v2820
    %6288 = vmatpush.bf16.msra.mxu0 %v2816
    %6289 = vmatmul.bf16.gmra.mxu0 %v6115
    %v6290 = vpop.f32.mrf.mxu0
    %v6291 = vadd.f32 0.0, %v6290
    %v6292 = vpop.f32.mrf.mxu0
    %6293 = vdwg.mxu0
    %6294 = vmatpush.bf16.msra.mxu0 %v2876
    %6295 = vmatpush.bf16.msra.mxu0 %v2872
    %6296 = vmatpush.bf16.msra.mxu0 %v2868
    %6297 = vmatpush.bf16.msra.mxu0 %v2864
    %6298 = vmatpush.bf16.msra.mxu0 %v2860
    %6299 = vmatpush.bf16.msra.mxu0 %v2856
    %6300 = vmatpush.bf16.msra.mxu0 %v2852
    %6301 = vmatpush.bf16.msra.mxu0 %v2848
    %6302 = vmatmul.bf16.gmra.mxu0 %v6116
    %v6303 = vpop.f32.mrf.mxu0
    %v6304 = vadd.f32 %v6291, %v6303
    %v6305 = vpop.f32.mrf.mxu0
    %6306 = vdwg.mxu0
    %6307 = vmatpush.bf16.msra.mxu0 %v2908
    %6308 = vmatpush.bf16.msra.mxu0 %v2904
    %6309 = vmatpush.bf16.msra.mxu0 %v2900
    %6310 = vmatpush.bf16.msra.mxu0 %v2896
    %6311 = vmatpush.bf16.msra.mxu0 %v2892
    %6312 = vmatpush.bf16.msra.mxu0 %v2888
    %6313 = vmatpush.bf16.msra.mxu0 %v2884
    %6314 = vmatpush.bf16.msra.mxu0 %v2880
    %6315 = vmatmul.bf16.gmra.mxu0 %v6117
    %v6316 = vpop.f32.mrf.mxu0
    %v6317 = vadd.f32 %v6304, %v6316
    %v6318 = vpop.f32.mrf.mxu0
    %6319 = vdwg.mxu0
    %6320 = vmatpush.bf16.msra.mxu0 0
    %6321 = vmatpush.bf16.msra.mxu0 0
    %6322 = vmatpush.bf16.msra.mxu0 0
    %6323 = vmatpush.bf16.msra.mxu0 0
    %6324 = vmatpush.bf16.msra.mxu0 0
    %6325 = vmatpush.bf16.msra.mxu0 %v2920
    %6326 = vmatpush.bf16.msra.mxu0 %v2916
    %6327 = vmatpush.bf16.msra.mxu0 %v2912
    %6328 = vmatmul.bf16.gmra.mxu0 %v6123
    %v6329 = vpop.f32.mrf.mxu0
    %v6330 = vadd.f32 %v6317, %v6329
    %v6331 = vpop.f32.mrf.mxu0
    %6332 = vdwg.mxu0
    %v6333 = vadd.f32 %v5928, %v6174
    %v6334 = vadd.f32 %v5980, %v6226
    %v6335 = vadd.f32 %v6032, %v6278
    %v6336 = vadd.f32 %v6084, %v6330
    %v6337 = vadd.f32 %v6333, %v3246
    %v6338 = vadd.f32 %v6334, %v3247
    %v6339 = vadd.f32 %v6335, %v3248
    %v6340 = vadd.f32 %v6336, %v3249
    %vm6341 = vcmp.gt.f32.partialorder %v6337, 0.0
    %vm6342 = vcmp.gt.f32.partialorder %v6338, 0.0
    %vm6343 = vcmp.gt.f32.partialorder %v6339, 0.0
    %vm6344 = vcmp.gt.f32.partialorder %v6340, 0.0
    %v6345 = vmul.f32 %v6337, 0.01
    %v6346 = vmul.f32 %v6338, 0.01
    %v6347 = vmul.f32 %v6339, 0.01
    %v6348 = vmul.f32 %v6340, 0.01
    %v6349 = vsel %vm6341, %v6337, %v6345
    %v6350 = vsel %vm6342, %v6338, %v6346
    %v6351 = vsel %vm6343, %v6339, %v6347
    %v6352 = vsel %vm6344, %v6340, %v6348
    %v6353 = vpack.c.bf16 %v6349, %v6349
    %v6354 = vpack.c.bf16 %v6350, %v6350
    %v6355 = vpack.c.bf16 %v6351, %v6351
    %v6356 = vpack.c.bf16 %v6352, %v6352
    %6357 = vmatpush.bf16.msra.mxu0 %v3824
    %6358 = vmatpush.bf16.msra.mxu0 %v3820
    %6359 = vmatpush.bf16.msra.mxu0 %v3816
    %6360 = vmatpush.bf16.msra.mxu0 %v3812
    %6361 = vmatpush.bf16.msra.mxu0 %v3808
    %6362 = vmatpush.bf16.msra.mxu0 %v3804
    %6363 = vmatpush.bf16.msra.mxu0 %v3800
    %6364 = vmatpush.bf16.msra.mxu0 %v3796
    %6365 = vmatmul.bf16.gmra.mxu0 %v6353
    %v6366 = vpop.f32.mrf.mxu0
    %v6367 = vadd.f32 %v3404, %v6366
    %v6368 = vpop.f32.mrf.mxu0
    %6369 = vdwg.mxu0
    %6370 = vmatpush.bf16.msra.mxu0 %v3856
    %6371 = vmatpush.bf16.msra.mxu0 %v3852
    %6372 = vmatpush.bf16.msra.mxu0 %v3848
    %6373 = vmatpush.bf16.msra.mxu0 %v3844
    %6374 = vmatpush.bf16.msra.mxu0 %v3840
    %6375 = vmatpush.bf16.msra.mxu0 %v3836
    %6376 = vmatpush.bf16.msra.mxu0 %v3832
    %6377 = vmatpush.bf16.msra.mxu0 %v3828
    %6378 = vmatmul.bf16.gmra.mxu0 %v6354
    %v6379 = vpop.f32.mrf.mxu0
    %v6380 = vadd.f32 %v6367, %v6379
    %v6381 = vpop.f32.mrf.mxu0
    %6382 = vdwg.mxu0
    %6383 = vmatpush.bf16.msra.mxu0 %v3888
    %6384 = vmatpush.bf16.msra.mxu0 %v3884
    %6385 = vmatpush.bf16.msra.mxu0 %v3880
    %6386 = vmatpush.bf16.msra.mxu0 %v3876
    %6387 = vmatpush.bf16.msra.mxu0 %v3872
    %6388 = vmatpush.bf16.msra.mxu0 %v3868
    %6389 = vmatpush.bf16.msra.mxu0 %v3864
    %6390 = vmatpush.bf16.msra.mxu0 %v3860
    %6391 = vmatmul.bf16.gmra.mxu0 %v6355
    %v6392 = vpop.f32.mrf.mxu0
    %v6393 = vadd.f32 %v6380, %v6392
    %v6394 = vpop.f32.mrf.mxu0
    %6395 = vdwg.mxu0
    %6396 = vmatpush.bf16.msra.mxu0 %v3920
    %6397 = vmatpush.bf16.msra.mxu0 %v3916
    %6398 = vmatpush.bf16.msra.mxu0 %v3912
    %6399 = vmatpush.bf16.msra.mxu0 %v3908
    %6400 = vmatpush.bf16.msra.mxu0 %v3904
    %6401 = vmatpush.bf16.msra.mxu0 %v3900
    %6402 = vmatpush.bf16.msra.mxu0 %v3896
    %6403 = vmatpush.bf16.msra.mxu0 %v3892
    %6404 = vmatmul.bf16.gmra.mxu0 %v6356
    %v6405 = vpop.f32.mrf.mxu0
    %v6406 = vadd.f32 %v6393, %v6405
    %v6407 = vpop.f32.mrf.mxu0
    %6408 = vdwg.mxu0
    %6409 = vmatpush.bf16.msra.mxu0 %v3825
    %6410 = vmatpush.bf16.msra.mxu0 %v3821
    %6411 = vmatpush.bf16.msra.mxu0 %v3817
    %6412 = vmatpush.bf16.msra.mxu0 %v3813
    %6413 = vmatpush.bf16.msra.mxu0 %v3809
    %6414 = vmatpush.bf16.msra.mxu0 %v3805
    %6415 = vmatpush.bf16.msra.mxu0 %v3801
    %6416 = vmatpush.bf16.msra.mxu0 %v3797
    %6417 = vmatmul.bf16.gmra.mxu0 %v6353
    %v6418 = vpop.f32.mrf.mxu0
    %v6419 = vadd.f32 %v3405, %v6418
    %v6420 = vpop.f32.mrf.mxu0
    %6421 = vdwg.mxu0
    %6422 = vmatpush.bf16.msra.mxu0 %v3857
    %6423 = vmatpush.bf16.msra.mxu0 %v3853
    %6424 = vmatpush.bf16.msra.mxu0 %v3849
    %6425 = vmatpush.bf16.msra.mxu0 %v3845
    %6426 = vmatpush.bf16.msra.mxu0 %v3841
    %6427 = vmatpush.bf16.msra.mxu0 %v3837
    %6428 = vmatpush.bf16.msra.mxu0 %v3833
    %6429 = vmatpush.bf16.msra.mxu0 %v3829
    %6430 = vmatmul.bf16.gmra.mxu0 %v6354
    %v6431 = vpop.f32.mrf.mxu0
    %v6432 = vadd.f32 %v6419, %v6431
    %v6433 = vpop.f32.mrf.mxu0
    %6434 = vdwg.mxu0
    %6435 = vmatpush.bf16.msra.mxu0 %v3889
    %6436 = vmatpush.bf16.msra.mxu0 %v3885
    %6437 = vmatpush.bf16.msra.mxu0 %v3881
    %6438 = vmatpush.bf16.msra.mxu0 %v3877
    %6439 = vmatpush.bf16.msra.mxu0 %v3873
    %6440 = vmatpush.bf16.msra.mxu0 %v3869
    %6441 = vmatpush.bf16.msra.mxu0 %v3865
    %6442 = vmatpush.bf16.msra.mxu0 %v3861
    %6443 = vmatmul.bf16.gmra.mxu0 %v6355
    %v6444 = vpop.f32.mrf.mxu0
    %v6445 = vadd.f32 %v6432, %v6444
    %v6446 = vpop.f32.mrf.mxu0
    %6447 = vdwg.mxu0
    %6448 = vmatpush.bf16.msra.mxu0 %v3921
    %6449 = vmatpush.bf16.msra.mxu0 %v3917
    %6450 = vmatpush.bf16.msra.mxu0 %v3913
    %6451 = vmatpush.bf16.msra.mxu0 %v3909
    %6452 = vmatpush.bf16.msra.mxu0 %v3905
    %6453 = vmatpush.bf16.msra.mxu0 %v3901
    %6454 = vmatpush.bf16.msra.mxu0 %v3897
    %6455 = vmatpush.bf16.msra.mxu0 %v3893
    %6456 = vmatmul.bf16.gmra.mxu0 %v6356
    %v6457 = vpop.f32.mrf.mxu0
    %v6458 = vadd.f32 %v6445, %v6457
    %v6459 = vpop.f32.mrf.mxu0
    %6460 = vdwg.mxu0
    %6461 = vmatpush.bf16.msra.mxu0 %v3826
    %6462 = vmatpush.bf16.msra.mxu0 %v3822
    %6463 = vmatpush.bf16.msra.mxu0 %v3818
    %6464 = vmatpush.bf16.msra.mxu0 %v3814
    %6465 = vmatpush.bf16.msra.mxu0 %v3810
    %6466 = vmatpush.bf16.msra.mxu0 %v3806
    %6467 = vmatpush.bf16.msra.mxu0 %v3802
    %6468 = vmatpush.bf16.msra.mxu0 %v3798
    %6469 = vmatmul.bf16.gmra.mxu0 %v6353
    %v6470 = vpop.f32.mrf.mxu0
    %v6471 = vadd.f32 %v3406, %v6470
    %v6472 = vpop.f32.mrf.mxu0
    %6473 = vdwg.mxu0
    %6474 = vmatpush.bf16.msra.mxu0 %v3858
    %6475 = vmatpush.bf16.msra.mxu0 %v3854
    %6476 = vmatpush.bf16.msra.mxu0 %v3850
    %6477 = vmatpush.bf16.msra.mxu0 %v3846
    %6478 = vmatpush.bf16.msra.mxu0 %v3842
    %6479 = vmatpush.bf16.msra.mxu0 %v3838
    %6480 = vmatpush.bf16.msra.mxu0 %v3834
    %6481 = vmatpush.bf16.msra.mxu0 %v3830
    %6482 = vmatmul.bf16.gmra.mxu0 %v6354
    %v6483 = vpop.f32.mrf.mxu0
    %v6484 = vadd.f32 %v6471, %v6483
    %v6485 = vpop.f32.mrf.mxu0
    %6486 = vdwg.mxu0
    %6487 = vmatpush.bf16.msra.mxu0 %v3890
    %6488 = vmatpush.bf16.msra.mxu0 %v3886
    %6489 = vmatpush.bf16.msra.mxu0 %v3882
    %6490 = vmatpush.bf16.msra.mxu0 %v3878
    %6491 = vmatpush.bf16.msra.mxu0 %v3874
    %6492 = vmatpush.bf16.msra.mxu0 %v3870
    %6493 = vmatpush.bf16.msra.mxu0 %v3866
    %6494 = vmatpush.bf16.msra.mxu0 %v3862
    %6495 = vmatmul.bf16.gmra.mxu0 %v6355
    %v6496 = vpop.f32.mrf.mxu0
    %v6497 = vadd.f32 %v6484, %v6496
    %v6498 = vpop.f32.mrf.mxu0
    %6499 = vdwg.mxu0
    %6500 = vmatpush.bf16.msra.mxu0 %v3922
    %6501 = vmatpush.bf16.msra.mxu0 %v3918
    %6502 = vmatpush.bf16.msra.mxu0 %v3914
    %6503 = vmatpush.bf16.msra.mxu0 %v3910
    %6504 = vmatpush.bf16.msra.mxu0 %v3906
    %6505 = vmatpush.bf16.msra.mxu0 %v3902
    %6506 = vmatpush.bf16.msra.mxu0 %v3898
    %6507 = vmatpush.bf16.msra.mxu0 %v3894
    %6508 = vmatmul.bf16.gmra.mxu0 %v6356
    %v6509 = vpop.f32.mrf.mxu0
    %v6510 = vadd.f32 %v6497, %v6509
    %v6511 = vpop.f32.mrf.mxu0
    %6512 = vdwg.mxu0
    %6513 = vmatpush.bf16.msra.mxu0 %v3827
    %6514 = vmatpush.bf16.msra.mxu0 %v3823
    %6515 = vmatpush.bf16.msra.mxu0 %v3819
    %6516 = vmatpush.bf16.msra.mxu0 %v3815
    %6517 = vmatpush.bf16.msra.mxu0 %v3811
    %6518 = vmatpush.bf16.msra.mxu0 %v3807
    %6519 = vmatpush.bf16.msra.mxu0 %v3803
    %6520 = vmatpush.bf16.msra.mxu0 %v3799
    %6521 = vmatmul.bf16.gmra.mxu0 %v6353
    %v6522 = vpop.f32.mrf.mxu0
    %v6523 = vadd.f32 %v3407, %v6522
    %v6524 = vpop.f32.mrf.mxu0
    %6525 = vdwg.mxu0
    %6526 = vmatpush.bf16.msra.mxu0 %v3859
    %6527 = vmatpush.bf16.msra.mxu0 %v3855
    %6528 = vmatpush.bf16.msra.mxu0 %v3851
    %6529 = vmatpush.bf16.msra.mxu0 %v3847
    %6530 = vmatpush.bf16.msra.mxu0 %v3843
    %6531 = vmatpush.bf16.msra.mxu0 %v3839
    %6532 = vmatpush.bf16.msra.mxu0 %v3835
    %6533 = vmatpush.bf16.msra.mxu0 %v3831
    %6534 = vmatmul.bf16.gmra.mxu0 %v6354
    %v6535 = vpop.f32.mrf.mxu0
    %v6536 = vadd.f32 %v6523, %v6535
    %v6537 = vpop.f32.mrf.mxu0
    %6538 = vdwg.mxu0
    %6539 = vmatpush.bf16.msra.mxu0 %v3891
    %6540 = vmatpush.bf16.msra.mxu0 %v3887
    %6541 = vmatpush.bf16.msra.mxu0 %v3883
    %6542 = vmatpush.bf16.msra.mxu0 %v3879
    %6543 = vmatpush.bf16.msra.mxu0 %v3875
    %6544 = vmatpush.bf16.msra.mxu0 %v3871
    %6545 = vmatpush.bf16.msra.mxu0 %v3867
    %6546 = vmatpush.bf16.msra.mxu0 %v3863
    %6547 = vmatmul.bf16.gmra.mxu0 %v6355
    %v6548 = vpop.f32.mrf.mxu0
    %v6549 = vadd.f32 %v6536, %v6548
    %v6550 = vpop.f32.mrf.mxu0
    %6551 = vdwg.mxu0
    %6552 = vmatpush.bf16.msra.mxu0 %v3923
    %6553 = vmatpush.bf16.msra.mxu0 %v3919
    %6554 = vmatpush.bf16.msra.mxu0 %v3915
    %6555 = vmatpush.bf16.msra.mxu0 %v3911
    %6556 = vmatpush.bf16.msra.mxu0 %v3907
    %6557 = vmatpush.bf16.msra.mxu0 %v3903
    %6558 = vmatpush.bf16.msra.mxu0 %v3899
    %6559 = vmatpush.bf16.msra.mxu0 %v3895
    %6560 = vmatmul.bf16.gmra.mxu0 %v6356
    %v6561 = vpop.f32.mrf.mxu0
    %v6562 = vadd.f32 %v6549, %v6561
    %v6563 = vpop.f32.mrf.mxu0
    %6564 = vdwg.mxu0
    %vm6565 = vcmp.gt.f32.partialorder %v6406, 0.0
    %vm6566 = vcmp.gt.f32.partialorder %v6458, 0.0
    %vm6567 = vcmp.gt.f32.partialorder %v6510, 0.0
    %vm6568 = vcmp.gt.f32.partialorder %v6562, 0.0
    %v6569 = vmul.f32 %v6406, 0.01
    %v6570 = vmul.f32 %v6458, 0.01
    %v6571 = vmul.f32 %v6510, 0.01
    %v6572 = vmul.f32 %v6562, 0.01
    %v6573 = vsel %vm6565, %v6406, %v6569
    %v6574 = vsel %vm6566, %v6458, %v6570
    %v6575 = vsel %vm6567, %v6510, %v6571
    %v6576 = vsel %vm6568, %v6562, %v6572
    %v6577 = vpack.c.bf16 %v6573, %v6573
    %v6578 = vpack.c.bf16 %v6574, %v6574
    %v6579 = vpack.c.bf16 %v6575, %v6575
    %v6580 = vpack.c.bf16 %v6576, %v6576
    %6581 = vmatpush.bf16.msra.mxu0 %v4826
    %6582 = vmatpush.bf16.msra.mxu0 %v4822
    %6583 = vmatpush.bf16.msra.mxu0 %v4818
    %6584 = vmatpush.bf16.msra.mxu0 %v4814
    %6585 = vmatpush.bf16.msra.mxu0 %v4810
    %6586 = vmatpush.bf16.msra.mxu0 %v4806
    %6587 = vmatpush.bf16.msra.mxu0 %v4802
    %6588 = vmatpush.bf16.msra.mxu0 %v4798
    %6589 = vmatmul.bf16.gmra.mxu0 %v6577
    %v6590 = vpop.f32.mrf.mxu0
    %v6591 = vadd.f32 %v4406, %v6590
    %v6592 = vpop.f32.mrf.mxu0
    %6593 = vdwg.mxu0
    %6594 = vmatpush.bf16.msra.mxu0 %v4858
    %6595 = vmatpush.bf16.msra.mxu0 %v4854
    %6596 = vmatpush.bf16.msra.mxu0 %v4850
    %6597 = vmatpush.bf16.msra.mxu0 %v4846
    %6598 = vmatpush.bf16.msra.mxu0 %v4842
    %6599 = vmatpush.bf16.msra.mxu0 %v4838
    %6600 = vmatpush.bf16.msra.mxu0 %v4834
    %6601 = vmatpush.bf16.msra.mxu0 %v4830
    %6602 = vmatmul.bf16.gmra.mxu0 %v6578
    %v6603 = vpop.f32.mrf.mxu0
    %v6604 = vadd.f32 %v6591, %v6603
    %v6605 = vpop.f32.mrf.mxu0
    %6606 = vdwg.mxu0
    %6607 = vmatpush.bf16.msra.mxu0 %v4890
    %6608 = vmatpush.bf16.msra.mxu0 %v4886
    %6609 = vmatpush.bf16.msra.mxu0 %v4882
    %6610 = vmatpush.bf16.msra.mxu0 %v4878
    %6611 = vmatpush.bf16.msra.mxu0 %v4874
    %6612 = vmatpush.bf16.msra.mxu0 %v4870
    %6613 = vmatpush.bf16.msra.mxu0 %v4866
    %6614 = vmatpush.bf16.msra.mxu0 %v4862
    %6615 = vmatmul.bf16.gmra.mxu0 %v6579
    %v6616 = vpop.f32.mrf.mxu0
    %v6617 = vadd.f32 %v6604, %v6616
    %v6618 = vpop.f32.mrf.mxu0
    %6619 = vdwg.mxu0
    %6620 = vmatpush.bf16.msra.mxu0 %v4922
    %6621 = vmatpush.bf16.msra.mxu0 %v4918
    %6622 = vmatpush.bf16.msra.mxu0 %v4914
    %6623 = vmatpush.bf16.msra.mxu0 %v4910
    %6624 = vmatpush.bf16.msra.mxu0 %v4906
    %6625 = vmatpush.bf16.msra.mxu0 %v4902
    %6626 = vmatpush.bf16.msra.mxu0 %v4898
    %6627 = vmatpush.bf16.msra.mxu0 %v4894
    %6628 = vmatmul.bf16.gmra.mxu0 %v6580
    %v6629 = vpop.f32.mrf.mxu0
    %v6630 = vadd.f32 %v6617, %v6629
    %v6631 = vpop.f32.mrf.mxu0
    %6632 = vdwg.mxu0
    %6633 = vmatpush.bf16.msra.mxu0 %v4827
    %6634 = vmatpush.bf16.msra.mxu0 %v4823
    %6635 = vmatpush.bf16.msra.mxu0 %v4819
    %6636 = vmatpush.bf16.msra.mxu0 %v4815
    %6637 = vmatpush.bf16.msra.mxu0 %v4811
    %6638 = vmatpush.bf16.msra.mxu0 %v4807
    %6639 = vmatpush.bf16.msra.mxu0 %v4803
    %6640 = vmatpush.bf16.msra.mxu0 %v4799
    %6641 = vmatmul.bf16.gmra.mxu0 %v6577
    %v6642 = vpop.f32.mrf.mxu0
    %v6643 = vadd.f32 %v4407, %v6642
    %v6644 = vpop.f32.mrf.mxu0
    %6645 = vdwg.mxu0
    %6646 = vmatpush.bf16.msra.mxu0 %v4859
    %6647 = vmatpush.bf16.msra.mxu0 %v4855
    %6648 = vmatpush.bf16.msra.mxu0 %v4851
    %6649 = vmatpush.bf16.msra.mxu0 %v4847
    %6650 = vmatpush.bf16.msra.mxu0 %v4843
    %6651 = vmatpush.bf16.msra.mxu0 %v4839
    %6652 = vmatpush.bf16.msra.mxu0 %v4835
    %6653 = vmatpush.bf16.msra.mxu0 %v4831
    %6654 = vmatmul.bf16.gmra.mxu0 %v6578
    %v6655 = vpop.f32.mrf.mxu0
    %v6656 = vadd.f32 %v6643, %v6655
    %v6657 = vpop.f32.mrf.mxu0
    %6658 = vdwg.mxu0
    %6659 = vmatpush.bf16.msra.mxu0 %v4891
    %6660 = vmatpush.bf16.msra.mxu0 %v4887
    %6661 = vmatpush.bf16.msra.mxu0 %v4883
    %6662 = vmatpush.bf16.msra.mxu0 %v4879
    %6663 = vmatpush.bf16.msra.mxu0 %v4875
    %6664 = vmatpush.bf16.msra.mxu0 %v4871
    %6665 = vmatpush.bf16.msra.mxu0 %v4867
    %6666 = vmatpush.bf16.msra.mxu0 %v4863
    %6667 = vmatmul.bf16.gmra.mxu0 %v6579
    %v6668 = vpop.f32.mrf.mxu0
    %v6669 = vadd.f32 %v6656, %v6668
    %v6670 = vpop.f32.mrf.mxu0
    %6671 = vdwg.mxu0
    %6672 = vmatpush.bf16.msra.mxu0 %v4923
    %6673 = vmatpush.bf16.msra.mxu0 %v4919
    %6674 = vmatpush.bf16.msra.mxu0 %v4915
    %6675 = vmatpush.bf16.msra.mxu0 %v4911
    %6676 = vmatpush.bf16.msra.mxu0 %v4907
    %6677 = vmatpush.bf16.msra.mxu0 %v4903
    %6678 = vmatpush.bf16.msra.mxu0 %v4899
    %6679 = vmatpush.bf16.msra.mxu0 %v4895
    %6680 = vmatmul.bf16.gmra.mxu0 %v6580
    %v6681 = vpop.f32.mrf.mxu0
    %v6682 = vadd.f32 %v6669, %v6681
    %v6683 = vpop.f32.mrf.mxu0
    %6684 = vdwg.mxu0
    %6685 = vmatpush.bf16.msra.mxu0 %v4828
    %6686 = vmatpush.bf16.msra.mxu0 %v4824
    %6687 = vmatpush.bf16.msra.mxu0 %v4820
    %6688 = vmatpush.bf16.msra.mxu0 %v4816
    %6689 = vmatpush.bf16.msra.mxu0 %v4812
    %6690 = vmatpush.bf16.msra.mxu0 %v4808
    %6691 = vmatpush.bf16.msra.mxu0 %v4804
    %6692 = vmatpush.bf16.msra.mxu0 %v4800
    %6693 = vmatmul.bf16.gmra.mxu0 %v6577
    %v6694 = vpop.f32.mrf.mxu0
    %v6695 = vadd.f32 %v4408, %v6694
    %v6696 = vpop.f32.mrf.mxu0
    %6697 = vdwg.mxu0
    %6698 = vmatpush.bf16.msra.mxu0 %v4860
    %6699 = vmatpush.bf16.msra.mxu0 %v4856
    %6700 = vmatpush.bf16.msra.mxu0 %v4852
    %6701 = vmatpush.bf16.msra.mxu0 %v4848
    %6702 = vmatpush.bf16.msra.mxu0 %v4844
    %6703 = vmatpush.bf16.msra.mxu0 %v4840
    %6704 = vmatpush.bf16.msra.mxu0 %v4836
    %6705 = vmatpush.bf16.msra.mxu0 %v4832
    %6706 = vmatmul.bf16.gmra.mxu0 %v6578
    %v6707 = vpop.f32.mrf.mxu0
    %v6708 = vadd.f32 %v6695, %v6707
    %v6709 = vpop.f32.mrf.mxu0
    %6710 = vdwg.mxu0
    %6711 = vmatpush.bf16.msra.mxu0 %v4892
    %6712 = vmatpush.bf16.msra.mxu0 %v4888
    %6713 = vmatpush.bf16.msra.mxu0 %v4884
    %6714 = vmatpush.bf16.msra.mxu0 %v4880
    %6715 = vmatpush.bf16.msra.mxu0 %v4876
    %6716 = vmatpush.bf16.msra.mxu0 %v4872
    %6717 = vmatpush.bf16.msra.mxu0 %v4868
    %6718 = vmatpush.bf16.msra.mxu0 %v4864
    %6719 = vmatmul.bf16.gmra.mxu0 %v6579
    %v6720 = vpop.f32.mrf.mxu0
    %v6721 = vadd.f32 %v6708, %v6720
    %v6722 = vpop.f32.mrf.mxu0
    %6723 = vdwg.mxu0
    %6724 = vmatpush.bf16.msra.mxu0 %v4924
    %6725 = vmatpush.bf16.msra.mxu0 %v4920
    %6726 = vmatpush.bf16.msra.mxu0 %v4916
    %6727 = vmatpush.bf16.msra.mxu0 %v4912
    %6728 = vmatpush.bf16.msra.mxu0 %v4908
    %6729 = vmatpush.bf16.msra.mxu0 %v4904
    %6730 = vmatpush.bf16.msra.mxu0 %v4900
    %6731 = vmatpush.bf16.msra.mxu0 %v4896
    %6732 = vmatmul.bf16.gmra.mxu0 %v6580
    %v6733 = vpop.f32.mrf.mxu0
    %v6734 = vadd.f32 %v6721, %v6733
    %v6735 = vpop.f32.mrf.mxu0
    %6736 = vdwg.mxu0
    %6737 = vmatpush.bf16.msra.mxu0 %v4829
    %6738 = vmatpush.bf16.msra.mxu0 %v4825
    %6739 = vmatpush.bf16.msra.mxu0 %v4821
    %6740 = vmatpush.bf16.msra.mxu0 %v4817
    %6741 = vmatpush.bf16.msra.mxu0 %v4813
    %6742 = vmatpush.bf16.msra.mxu0 %v4809
    %6743 = vmatpush.bf16.msra.mxu0 %v4805
    %6744 = vmatpush.bf16.msra.mxu0 %v4801
    %6745 = vmatmul.bf16.gmra.mxu0 %v6577
    %v6746 = vpop.f32.mrf.mxu0
    %v6747 = vadd.f32 %v4409, %v6746
    %v6748 = vpop.f32.mrf.mxu0
    %6749 = vdwg.mxu0
    %6750 = vmatpush.bf16.msra.mxu0 %v4861
    %6751 = vmatpush.bf16.msra.mxu0 %v4857
    %6752 = vmatpush.bf16.msra.mxu0 %v4853
    %6753 = vmatpush.bf16.msra.mxu0 %v4849
    %6754 = vmatpush.bf16.msra.mxu0 %v4845
    %6755 = vmatpush.bf16.msra.mxu0 %v4841
    %6756 = vmatpush.bf16.msra.mxu0 %v4837
    %6757 = vmatpush.bf16.msra.mxu0 %v4833
    %6758 = vmatmul.bf16.gmra.mxu0 %v6578
    %v6759 = vpop.f32.mrf.mxu0
    %v6760 = vadd.f32 %v6747, %v6759
    %v6761 = vpop.f32.mrf.mxu0
    %6762 = vdwg.mxu0
    %6763 = vmatpush.bf16.msra.mxu0 %v4893
    %6764 = vmatpush.bf16.msra.mxu0 %v4889
    %6765 = vmatpush.bf16.msra.mxu0 %v4885
    %6766 = vmatpush.bf16.msra.mxu0 %v4881
    %6767 = vmatpush.bf16.msra.mxu0 %v4877
    %6768 = vmatpush.bf16.msra.mxu0 %v4873
    %6769 = vmatpush.bf16.msra.mxu0 %v4869
    %6770 = vmatpush.bf16.msra.mxu0 %v4865
    %6771 = vmatmul.bf16.gmra.mxu0 %v6579
    %v6772 = vpop.f32.mrf.mxu0
    %v6773 = vadd.f32 %v6760, %v6772
    %v6774 = vpop.f32.mrf.mxu0
    %6775 = vdwg.mxu0
    %6776 = vmatpush.bf16.msra.mxu0 %v4925
    %6777 = vmatpush.bf16.msra.mxu0 %v4921
    %6778 = vmatpush.bf16.msra.mxu0 %v4917
    %6779 = vmatpush.bf16.msra.mxu0 %v4913
    %6780 = vmatpush.bf16.msra.mxu0 %v4909
    %6781 = vmatpush.bf16.msra.mxu0 %v4905
    %6782 = vmatpush.bf16.msra.mxu0 %v4901
    %6783 = vmatpush.bf16.msra.mxu0 %v4897
    %6784 = vmatmul.bf16.gmra.mxu0 %v6580
    %v6785 = vpop.f32.mrf.mxu0
    %v6786 = vadd.f32 %v6773, %v6785
    %v6787 = vpop.f32.mrf.mxu0
    %6788 = vdwg.mxu0
    %v6789 = vsub.f32 %v6734, 5.0
    %v6790 = vsub.f32 %v6786, 5.0
    %v6791 = vmax.f32 %v6789, 0.0
    %v6792 = vmax.f32 %v6790, 0.0
    %v6793 = vand.u32 2147483647, %v6789
    %v6794 = vand.u32 2147483647, %v6790
    %v6795 = vsub.f32 0.0, %v6793
    %v6796 = vsub.f32 0.0, %v6794
    %v6797 = vmul.f32 %v6795, 1.442695
    %v6798 = vpow.pop %v6797
    %v6799 = vmul.f32 %v6796, 1.442695
    %v6800 = vpow.pop %v6799
    %v6801 = vadd.f32 %v6798, 1.0
    %v6802 = vlog2.pop %v6801
    %v6803 = vmul.f32 %v6802, 0.6931472
    %v6804 = vmul.f32 -0.5, %v6798
    %v6805 = vadd.f32 %v6804, 1.0
    %v6806 = vmul.f32 %v6805, %v6798
    %v6807 = vand.u32 2147483647, %v6798
    %vm6808 = vcmp.lt.f32.partialorder %v6807, 0.0004427343
    %v6809 = vsel %vm6808, %v6806, %v6803
    %v6810 = vadd.f32 %v6800, 1.0
    %v6811 = vlog2.pop %v6810
    %v6812 = vmul.f32 %v6811, 0.6931472
    %v6813 = vmul.f32 -0.5, %v6800
    %v6814 = vadd.f32 %v6813, 1.0
    %v6815 = vmul.f32 %v6814, %v6800
    %v6816 = vand.u32 2147483647, %v6800
    %vm6817 = vcmp.lt.f32.partialorder %v6816, 0.0004427343
    %v6818 = vsel %vm6817, %v6815, %v6812
    %v6819 = vadd.f32 %v6791, %v6809
    %v6820 = vadd.f32 %v6792, %v6818
    %v6821 = vld [vmem:[#allocation24] sm:$0xf]
    %v6824 = vrot.slane %v6820, 6
    %v6825 = vsel %vm5298, %v6819, %v6824
    %v6827 = vmul.f32 %v6821, %v6825
    %6829 = vst [vmem:[#allocation1] ss:$4 sm:$0xff] %v6827
    %v6830 = vld.sshfl [vmem:[#allocation1] sm:$0xff pattern:$0x73625140]
    %v6831 = vld.sshfl [vmem:[#allocation1 + $0x8] sm:$0xff pattern:$0x73625140]
    %v6834 = vadd.f32 %v6630, %v6830
    %v6835 = vadd.f32 %v6682, %v6831
    %v6838 = vrot.slane %v5309, 6
    %v6839 = vsel %vm5298, %v5308, %v6838
    %6841 = vst [vmem:[#allocation26] sm:$0xf] %v6839
    %v6844 = vrot.slane %v6835, 6
    %v6845 = vsel %vm5298, %v6834, %v6844
    %6847 = vst [vmem:[#allocation27] sm:$0xf] %v6845
    %v6848 = vsub.f32 %v5308, %v6834
    %v6849 = vsub.f32 %v5309, %v6835
    %v6850 = vand.u32 2147483647, %v6848
    %v6851 = vand.u32 2147483647, %v6849
    %v6852 = vsel %vm5298, %v6850, 0.0
    %v6853 = vsel %vm5298, %v6851, 0.0
    %v6854 = vadd.f32 %v6852, %v6853
    %6855 = vadd.xlane.f32.xlu0 %v6854
    %v6856 = vpop.xlane.xlu0 %6855
    %v6857 = vrot.slane %v6856, 4
    %v6858 = vadd.f32 %v6856, %v6857
    %v6859 = vrot.slane %v6858, 2
    %v6860 = vadd.f32 %v6858, %v6859
    %v6861 = vrot.slane %v6860, 1
    %v6862 = vadd.f32 %v6860, %v6861
    %s6863 = vtos %v6862
    %v6864 = vrcp.pop 512.0
    %v6865 = vmul.f32 512.0, %v6864
    %v6866 = vsub.f32 1.0, %v6865
    %v6867 = vmul.f32 %v6864, %v6866
    %v6868 = vadd.f32 %v6864, %v6867
    %vm6869 = vweird.f32 %v6864
    %v6870 = vsel %vm6869, %v6864, %v6868
    %s6871 = vtos %v6870
    %s6872 = smul.f32 %s6863, %s6871
    %s6873 = scalar_lea.smem [#allocation29], 0
    %6874 = sst [smem:[%s6873]] %s6872
    // Predicated region
    $region114: #{tpu_custom_call.1} parent=1 // pred_check
      _
    $region115: #{tpu_custom_call.1} parent=1 // pred_check_branch
      %6876 = sbr.rel (0) target = $region117
    $region116: #{tpu_custom_call.1} parent=1 // pred_region
      %6878 = vsyncadd [#allocation4], 0
      %s6880 = sshll.u32 [#allocation26], 4
      %s6881 = int_to_ptr.vmem [resolvable:$true] %s6880
      %s6882 = sshll.u32 %s14, 4
      %s6883 = int_to_ptr.hbm [resolvable:$true] %s6882
      %6885 = dma.vmem_to_hbm [thread:$0]  %s6881, 64, %s6883, [#allocation4]
    $region117: #{tpu_custom_call.1} parent=1 // pred_fallthru
      _
    // Predicated region
    $region118: #{tpu_custom_call.1} parent=1 // pred_check
      _
    $region119: #{tpu_custom_call.1} parent=1 // pred_check_branch
      %6887 = sbr.rel (0) target = $region121
    $region120: #{tpu_custom_call.1} parent=1 // pred_region
      %6889 = vsyncadd [#allocation28], 0
      %s6891 = sshll.u32 [#allocation27], 4
      %s6892 = int_to_ptr.vmem [resolvable:$true] %s6891
      %s6893 = sshll.u32 %s15, 4
      %s6894 = int_to_ptr.hbm [resolvable:$true] %s6893
      %6896 = dma.vmem_to_hbm [thread:$0]  %s6892, 64, %s6894, [#allocation28]
    $region121: #{tpu_custom_call.1} parent=1 // pred_fallthru
      _
    // Predicated region
    $region122: #{tpu_custom_call.1} parent=1 // pred_check
      _
    $region123: #{tpu_custom_call.1} parent=1 // pred_check_branch
      %6898 = sbr.rel (0) target = $region125
    $region124: #{tpu_custom_call.1} parent=1 // pred_region
      %6900 = vsyncadd [#allocation5], 0
      %s6902 = sshll.u32 %s16, 4
      %s6903 = int_to_ptr.hbm [resolvable:$true] %s6902
      %6905 = dma.smem_to_hbm [#allocation29], 16, %s6903, [#allocation5]
    $region125: #{tpu_custom_call.1} parent=1 // pred_fallthru
      _
    // Predicated region
    $region126: #{tpu_custom_call.1} parent=1 // pred_check
      _
    $region127: #{tpu_custom_call.1} parent=1 // pred_check_branch
      %6907 = sbr.rel (0) target = $region129
    $region128: #{tpu_custom_call.1} parent=1 // pred_region
      %6909 = dma.done [#allocation4], 64
    $region129: #{tpu_custom_call.1} parent=1 // pred_fallthru
      _
    // Predicated region
    $region130: #{tpu_custom_call.1} parent=1 // pred_check
      _
    $region131: #{tpu_custom_call.1} parent=1 // pred_check_branch
      %6911 = sbr.rel (0) target = $region133
    $region132: #{tpu_custom_call.1} parent=1 // pred_region
      %6913 = dma.done [#allocation28], 64
    $region133: #{tpu_custom_call.1} parent=1 // pred_fallthru
      _
    // Predicated region
    $region134: #{tpu_custom_call.1} parent=1 // pred_check
      _
    $region135: #{tpu_custom_call.1} parent=1 // pred_check_branch
      %6915 = sbr.rel (0) target = $region137
    $region136: #{tpu_custom_call.1} parent=1 // pred_region
      %6917 = dma.done [#allocation5], 16
    $region137: #{tpu_custom_call.1} parent=1 // pred_fallthru
      _
    %6918 = sfence
    %6919 = vsyncpa [#allocation3], 1
    %6920 = vsyncpa [#allocation7], 1
    %6921 = vsyncpa [#allocation10], 1
    %6922 = vsyncpa [#allocation13], 1
    %6923 = vsyncpa [#allocation16], 1
    %6924 = vsyncpa [#allocation19], 1
    %6925 = vsyncpa [#allocation22], 1
    %6926 = vsyncpa [#allocation25], 1
    %6927 = vsyncpa [#allocation4], 1
    %6928 = vsyncpa [#allocation28], 1
    %6929 = vsyncpa [#allocation5], 1

</llo_original>
